<compile_context>
chip_gen: v5e
topology: v5e:2x2
jax: 0.10.0
libtpu: 0.0.40
codegen_flags: <defaults>
</compile_context>

<pallas_src>
import functools
import math

import jax
import jax.numpy as jnp
from jax.experimental import pallas as pl
from jax.experimental.pallas import tpu as pltpu


# ----------------------------------------------------------------------------
# In-kernel helpers
# ----------------------------------------------------------------------------
def _layernorm(x, g, b, eps=1e-5):
    mu = jnp.mean(x, axis=-1, keepdims=True)
    xc = x - mu
    var = jnp.mean(xc * xc, axis=-1, keepdims=True)
    return xc * jax.lax.rsqrt(var + eps) * g + b


# ----------------------------------------------------------------------------
# Pallas kernels
# ----------------------------------------------------------------------------
def _tower_kernel(x_ref, kv_ref, bias_ref,
                  wq_ref, bq_ref, wk_ref, bk_ref, wv_ref, bv_ref,
                  wo_ref, bo_ref, g1_ref, b1_ref,
                  wf1_ref, bf1_ref, wf2_ref, bf2_ref, g2_ref, b2_ref,
                  a1_ref, a2_ref, o_ref,
                  *, n_layers, heads, scale, self_attn):
    """Runs `n_layers` transformer blocks for one tower entirely in VMEM."""
    x = x_ref[...]                      # (M, D) f32 activations (M = B*L)
    kv_fixed = kv_ref[...]              # (M, D) fixed KV (cross-attn only)
    bias = bias_ref[...]                # (M, M) additive mask (block-diagonal)
    M, D = x.shape
    Dh = D // heads
    lane = jax.lax.broadcasted_iota(jnp.int32, (M, D), 1)

    for l in range(n_layers):
        kv = x if self_attn else kv_fixed
        xb = x.astype(jnp.bfloat16)
        kvb = kv.astype(jnp.bfloat16)

        q = jnp.dot(xb, wq_ref[l], preferred_element_type=jnp.float32) + bq_ref[l]
        k = jnp.dot(kvb, wk_ref[l], preferred_element_type=jnp.float32) + bk_ref[l]
        v = jnp.dot(kvb, wv_ref[l], preferred_element_type=jnp.float32) + bv_ref[l]
        kb = k.astype(jnp.bfloat16)
        vb = v.astype(jnp.bfloat16)

        # Multi-head attention: heads are contiguous Dh-lane groups of D.
        # Per-head contraction is obtained by zeroing the other heads' lanes
        # (no sub-vreg slicing / transposes / head reshapes needed).
        attn = jnp.zeros((M, D), jnp.float32)
        for h in range(heads):
            hm = (lane >= h * Dh) & (lane < (h + 1) * Dh)
            qh = jnp.where(hm, q, 0.0).astype(jnp.bfloat16)
            s = jax.lax.dot_general(qh, kb, (((1,), (1,)), ((), ())),
                                    preferred_element_type=jnp.float32)
            s = s * scale + bias
            m = jnp.max(s, axis=-1, keepdims=True)
            e = jnp.exp(s - m)
            p = e * pl.reciprocal(jnp.sum(e, axis=-1, keepdims=True), approx=True)
            oh = jnp.dot(p.astype(jnp.bfloat16), vb,
                         preferred_element_type=jnp.float32)
            attn = attn + jnp.where(hm, oh, 0.0)

        attn_o = jnp.dot(attn.astype(jnp.bfloat16), wo_ref[l],
                         preferred_element_type=jnp.float32) + bo_ref[l]

        h1 = _layernorm(x + a1_ref[l] * attn_o, g1_ref[l], b1_ref[l])

        # TODO(synk): PyTorch nn.GELU default is the exact erf form; tanh
        # approximation is used here (matches previous accepted behaviour).
        f = jnp.dot(h1.astype(jnp.bfloat16), wf1_ref[l],
                    preferred_element_type=jnp.float32) + bf1_ref[l]
        f = jax.nn.gelu(f, approximate=True)
        f = jnp.dot(f.astype(jnp.bfloat16), wf2_ref[l],
                    preferred_element_type=jnp.float32) + bf2_ref[l]

        x = _layernorm(h1 + a2_ref[l] * f, g2_ref[l], b2_ref[l])

    o_ref[...] = x


def _fused_linear_kernel(x_ref, w_ref, b_ref, o_ref):
    o_ref[...] = (jnp.dot(x_ref[...].astype(jnp.bfloat16), w_ref[...],
                          preferred_element_type=jnp.float32) + b_ref[...])


def _gate_pred_kernel(x_ref, y_ref, wcx_ref, wcy_ref, bc_ref, wp_ref, bp_ref,
                      o_ref):
    x = x_ref[...]
    y = y_ref[...]
    z = (jnp.dot(x.astype(jnp.bfloat16), wcx_ref[...],
                 preferred_element_type=jnp.float32)
         + jnp.dot(y.astype(jnp.bfloat16), wcy_ref[...],
                   preferred_element_type=jnp.float32)
         + bc_ref[...])
    g = jax.nn.sigmoid(z)
    e = g * x + (1.0 - g) * y
    o_ref[...] = (jnp.dot(e.astype(jnp.bfloat16), wp_ref[...],
                          preferred_element_type=jnp.float32) + bp_ref[...])


# ----------------------------------------------------------------------------
# Pallas wrappers
# ----------------------------------------------------------------------------
def fused_linear(x2d, w_bf16, b_f32):
    M, K = x2d.shape
    N = w_bf16.shape[1]
    return pl.pallas_call(
        _fused_linear_kernel,
        out_shape=jax.ShapeDtypeStruct((M, N), jnp.float32),
        grid=(1,),
        in_specs=[pl.BlockSpec((M, K), lambda i: (0, 0)),
                  pl.BlockSpec((K, N), lambda i: (0, 0)),
                  pl.BlockSpec((1, N), lambda i: (0, 0))],
        out_specs=pl.BlockSpec((M, N), lambda i: (0, 0)),
    )(x2d, w_bf16, b_f32.reshape(1, N))


def gate_pred(x2d, y2d, wcx, wcy, bc, wp_pad, bp_pad):
    M, D = x2d.shape
    P = wp_pad.shape[1]
    return pl.pallas_call(
        _gate_pred_kernel,
        out_shape=jax.ShapeDtypeStruct((M, P), jnp.float32),
        grid=(1,),
        in_specs=[pl.BlockSpec((M, D), lambda i: (0, 0)),
                  pl.BlockSpec((M, D), lambda i: (0, 0)),
                  pl.BlockSpec((D, D), lambda i: (0, 0)),
                  pl.BlockSpec((D, D), lambda i: (0, 0)),
                  pl.BlockSpec((1, D), lambda i: (0, 0)),
                  pl.BlockSpec((D, P), lambda i: (0, 0)),
                  pl.BlockSpec((1, P), lambda i: (0, 0))],
        out_specs=pl.BlockSpec((M, P), lambda i: (0, 0)),
    )(x2d, y2d, wcx, wcy, bc.reshape(1, D), wp_pad, bp_pad.reshape(1, P))


def run_towers(x0, kv0, bias, tw, *, heads, self_attn):
    """Run two independent transformer stacks as a 2-wide parallel grid."""
    T, M, D = x0.shape
    n_layers = tw['wq'].shape[1]
    F = tw['wf1'].shape[-1]
    scale = 1.0 / math.sqrt(D // heads)

    act = pl.BlockSpec((None, M, D), lambda i: (i, 0, 0))

    def wspec(r, c):
        return pl.BlockSpec((None, n_layers, r, c), lambda i: (i, 0, 0, 0))

    in_specs = [act, act, pl.BlockSpec((M, M), lambda i: (0, 0)),
                wspec(D, D), wspec(1, D),     # q
                wspec(D, D), wspec(1, D),     # k
                wspec(D, D), wspec(1, D),     # v
                wspec(D, D), wspec(1, D),     # o
                wspec(1, D), wspec(1, D),     # ln1
                wspec(D, F), wspec(1, F),     # ffn l1
                wspec(F, D), wspec(1, D),     # ffn l2
                wspec(1, D), wspec(1, D),     # ln2
                wspec(1, 1), wspec(1, 1)]     # a1, a2

    kern = functools.partial(_tower_kernel, n_layers=n_layers, heads=heads,
                             scale=scale, self_attn=self_attn)
    return pl.pallas_call(
        kern,
        out_shape=jax.ShapeDtypeStruct((T, M, D), jnp.float32),
        grid=(T,),
        in_specs=in_specs,
        out_specs=pl.BlockSpec((None, M, D), lambda i: (i, 0, 0)),
        compiler_params=pltpu.CompilerParams(dimension_semantics=("parallel",)),
    )(x0, kv0, bias,
      tw['wq'], tw['bq'], tw['wk'], tw['bk'], tw['wv'], tw['bv'],
      tw['wo'], tw['bo'], tw['g1'], tw['b1'],
      tw['wf1'], tw['bf1'], tw['wf2'], tw['bf2'], tw['g2'], tw['b2'],
      tw['a1'], tw['a2'])


def stack_towers(block_lists):
    """Stack per-layer params of two towers into [T, n_layers, ...] arrays."""
    bf = jnp.bfloat16

    def stk(fn, dtype=jnp.float32):
        return jnp.stack([jnp.stack([fn(bp) for bp in blocks])
                          for blocks in block_lists]).astype(dtype)

    row = lambda v: v.reshape(1, -1)
    return dict(
        wq=stk(lambda p: p['attn']['q']['w'], bf),
        bq=stk(lambda p: row(p['attn']['q']['b'])),
        wk=stk(lambda p: p['attn']['k']['w'], bf),
        bk=stk(lambda p: row(p['attn']['k']['b'])),
        wv=stk(lambda p: p['attn']['v']['w'], bf),
        bv=stk(lambda p: row(p['attn']['v']['b'])),
        wo=stk(lambda p: p['attn']['o']['w'], bf),
        bo=stk(lambda p: row(p['attn']['o']['b'])),
        g1=stk(lambda p: row(p['ln1']['g'])),
        b1=stk(lambda p: row(p['ln1']['b'])),
        wf1=stk(lambda p: p['ffn']['l1']['w'], bf),
        bf1=stk(lambda p: row(p['ffn']['l1']['b'])),
        wf2=stk(lambda p: p['ffn']['l2']['w'], bf),
        bf2=stk(lambda p: row(p['ffn']['l2']['b'])),
        g2=stk(lambda p: row(p['ln2']['g'])),
        b2=stk(lambda p: row(p['ln2']['b'])),
        a1=stk(lambda p: p['a1']),
        a2=stk(lambda p: p['a2']),
    )


# ----------------------------------------------------------------------------
# Model forward (composition of fused Pallas kernels)
# ----------------------------------------------------------------------------
def tssr_forward(params, x_ids, content, *, heads, test=True):
    B, L = x_ids.shape
    D = params['pos'].shape[-1]
    num_item = params['pred']['w'].shape[1]
    M = B * L

    # Additive attention-mask bias, block-diagonal over (B*L, B*L):
    #   in-batch masked positions -> -1e9 (matches the PyTorch additive mask),
    #   cross-batch positions     -> -1e30 (never attended).
    tril = jnp.tril(jnp.ones((L, L), dtype=bool))
    keep = (x_ids > 0)[:, None, :] & tril[None]                       # (B, L, L)
    inb = jnp.where(keep, 0.0, -1e9).astype(jnp.float32)
    bsel = (jnp.arange(B)[:, None, None, None] ==
            jnp.arange(B)[None, None, :, None])                        # (B,1,B,1)
    bias = jnp.where(bsel, inb[:, :, None, :], -1e30).reshape(M, M)
    bias = bias.astype(jnp.float32)

    pos = params['pos'][:L][None]                                      # (1, L, D)

    # ---- content tower input ----
    # TODO(synk): pretrained ResNet50 backbone (checkpoint load) is replaced by
    # a deterministic linear projection; it is folded with dense_vis into one
    # (C*H*W, D) weight so the 2048-wide intermediate never leaves VMEM.
    w_vis = jnp.dot(params['content_proj']['w'], params['dense_vis']['w'])
    b_vis = (jnp.dot(params['content_proj']['b'], params['dense_vis']['w'])
             + params['dense_vis']['b'])
    flat = content.reshape(M, -1)
    content_embd_ = fused_linear(flat, w_vis.astype(jnp.bfloat16), b_vis)   # (M, D)
    content_in = (content_embd_.reshape(B, L, D) + pos).reshape(M, D)

    # ---- id tower input (embedding lookup is an XLA gather) ----
    id_embd_ = params['token'][x_ids]                                   # (B, L, D)
    id_in = (id_embd_ + pos).reshape(M, D)

    # ---- the two self-attention towers run as one 2-wide parallel grid ----
    self_w = stack_towers([params['trm_id'], params['trm_content']])
    x0 = jnp.stack([id_in, content_in])                                 # (2, M, D)
    towers = run_towers(x0, x0, bias, self_w, heads=heads, self_attn=True)
    id_embd, content_embd = towers[0], towers[1]

    # ---- the two cross-attention stacks, likewise ----
    cross_w = stack_towers([params['cross_vid'], params['cross_vcontent']])
    q0 = jnp.stack([id_embd, content_embd])
    kv0 = jnp.stack([content_embd, id_embd])
    crossed = run_towers(q0, kv0, bias, cross_w, heads=heads, self_attn=False)
    xx, yy = crossed[0], crossed[1]

    # ---- gated fusion + prediction (lane-dense padded output) ----
    wc = params['concat']['w']                                          # (2D, D)
    P = ((num_item + 127) // 128) * 128
    wp = jnp.pad(params['pred']['w'], ((0, 0), (0, P - num_item)))
    bp = jnp.pad(params['pred']['b'], (0, P - num_item))
    pre = gate_pred(xx, yy,
                    wc[:D].astype(jnp.bfloat16), wc[D:].astype(jnp.bfloat16),
                    params['concat']['b'],
                    wp.astype(jnp.bfloat16), bp)
    pre = pre[:, :num_item].reshape(B, L, num_item)

    if test:
        return pre
    return (pre, id_embd.reshape(B, L, D), content_embd.reshape(B, L, D),
            id_embd_, content_embd_.reshape(B, L, D))


# ----------------------------------------------------------------------------
# Deterministic parameter construction (mirrors _init_weights)
# ----------------------------------------------------------------------------
class KeyGen:
    def __init__(self, seed):
        self.key = jax.random.PRNGKey(seed)

    def __call__(self):
        self.key, k = jax.random.split(self.key)
        return k


def xavier_normal(key, fan_in, fan_out):
    std = math.sqrt(2.0 / (fan_in + fan_out))
    return std * jax.random.normal(key, (fan_in, fan_out), dtype=jnp.float32)


def make_linear(kg, din, dout):
    return {'w': xavier_normal(kg(), din, dout),
            'b': jnp.full((dout,), 0.1, jnp.float32)}


def make_mha(kg, d):
    return {'q': make_linear(kg, d, d), 'k': make_linear(kg, d, d),
            'v': make_linear(kg, d, d), 'o': make_linear(kg, d, d)}


def make_block(kg, d, dff):
    return {'attn': make_mha(kg, d),
            'ffn': {'l1': make_linear(kg, d, dff), 'l2': make_linear(kg, dff, d)},
            'a1': jnp.full((1, 1), 1e-8, jnp.float32),
            'a2': jnp.full((1, 1), 1e-8, jnp.float32),
            'ln1': {'g': jnp.ones((d,), jnp.float32), 'b': jnp.zeros((d,), jnp.float32)},
            'ln2': {'g': jnp.ones((d,), jnp.float32), 'b': jnp.zeros((d,), jnp.float32)}}


def make_params(kg, *, num_item, d_model, d_ffn, max_len, layers, cross_layers,
                content_dim):
    stdv = math.sqrt(1.0 / num_item)
    return {
        'content_proj': make_linear(kg, content_dim, 2048),   # ResNet50 stand-in
        'dense_vis': make_linear(kg, 2048, d_model),
        'token': jax.random.uniform(kg(), (num_item, d_model), jnp.float32, -stdv, stdv),
        'pos': jax.random.uniform(kg(), (max_len, d_model), jnp.float32, -stdv, stdv),
        'trm_id': [make_block(kg, d_model, d_ffn) for _ in range(layers)],
        'trm_content': [make_block(kg, d_model, d_ffn) for _ in range(layers)],
        'cross_vid': [make_block(kg, d_model, d_ffn) for _ in range(cross_layers)],
        'cross_vcontent': [make_block(kg, d_model, d_ffn) for _ in range(cross_layers)],
        'concat': make_linear(kg, 2 * d_model, d_model),
        'pred': make_linear(kg, d_model, num_item),
    }


# ----------------------------------------------------------------------------
if __name__ == "__main__":
    B, L = 2, 8                       # batch, max_len
    d_model, heads, d_ffn = 32, 4, 64
    layers, cross_layers = 2, 1
    num_item = 50 + 1                 # args.num_item + 1
    C, H, W = 3, 16, 16

    kg = KeyGen(0)
    params = make_params(kg, num_item=num_item, d_model=d_model, d_ffn=d_ffn,
                         max_len=L, layers=layers, cross_layers=cross_layers,
                         content_dim=C * H * W)

    kx, kc = jax.random.split(jax.random.PRNGKey(0))
    x_ids = jax.random.randint(kx, (B, L), 0, num_item)               # 0 = padding id
    content = jax.random.normal(kc, (B, L, C, H, W), jnp.float32)     # NCHW images

    fwd = jax.jit(functools.partial(tssr_forward, heads=heads, test=True))
    pre = fwd(params, x_ids, content)
    jax.block_until_ready(pre)
    assert pre.shape == (B, L, num_item) and pre.dtype == jnp.float32
    print("KERNEL_OK")
</pallas_src>

<mosaic_0001>
module attributes {stable_mosaic.version = 11 : i64} {
  func.func @_fused_linear_kernel(%arg0: i32, %arg1: memref<16x768xf32, #tpu.memory_space<vmem>>, %arg2: memref<768x32xbf16, #tpu.memory_space<vmem>>, %arg3: memref<1x32xf32, #tpu.memory_space<vmem>>, %arg4: memref<16x32xf32, #tpu.memory_space<vmem>>) attributes {dimension_semantics = [#tpu.dimension_semantics<arbitrary>], iteration_bounds = array<i64: 1>, scalar_prefetch = 0 : i64, scratch_operands = 0 : i64, tpu.core_type = #tpu.core_type<tc>, window_params = [{pipeline_mode = #tpu.pipeline_mode<synchronous>, transform_indices = @transform_0, window_bounds = array<i64: 16, 768>}, {pipeline_mode = #tpu.pipeline_mode<synchronous>, transform_indices = @transform_1, window_bounds = array<i64: 768, 32>}, {pipeline_mode = #tpu.pipeline_mode<synchronous>, transform_indices = @transform_2, window_bounds = array<i64: 1, 32>}, {pipeline_mode = #tpu.pipeline_mode<synchronous>, transform_indices = @transform_3, window_bounds = array<i64: 16, 32>}]} {
    %c0 = arith.constant 0 : index
    %c0_0 = arith.constant 0 : index
    %0 = vector.load %arg1[%c0, %c0_0] : memref<16x768xf32, #tpu.memory_space<vmem>>, vector<16x768xf32>
    %1 = arith.truncf %0 : vector<16x768xf32> to vector<16x768xbf16>
    %c0_1 = arith.constant 0 : index
    %c0_2 = arith.constant 0 : index
    %2 = vector.load %arg2[%c0_1, %c0_2] : memref<768x32xbf16, #tpu.memory_space<vmem>>, vector<768x32xbf16>
    %cst = arith.constant dense<0.000000e+00> : vector<16x32xf32>
    %3 = tpu.matmul %1, %2, %cst {dimension_numbers = #tpu.dot_dimension_numbers<[1], [0], [0], [1], [0, 0, 1, 1], [], []>} : vector<16x768xbf16>, vector<768x32xbf16>, vector<16x32xf32> -> vector<16x32xf32>
    %c0_3 = arith.constant 0 : index
    %c0_4 = arith.constant 0 : index
    %4 = vector.load %arg3[%c0_3, %c0_4] : memref<1x32xf32, #tpu.memory_space<vmem>>, vector<1x32xf32>
    %5 = vector.broadcast %4 : vector<1x32xf32> to vector<16x32xf32>
    %6 = arith.addf %3, %5 : vector<16x32xf32>
    %c0_5 = arith.constant 0 : index
    %c0_6 = arith.constant 0 : index
    %7 = vector.load %arg4[%c0_5, %c0_6] : memref<16x32xf32, #tpu.memory_space<vmem>>, vector<16x32xf32>
    tpu.vector_store %arg4[%c0_5, %c0_6], %6 {strides = array<i32>} : memref<16x32xf32, #tpu.memory_space<vmem>>, vector<16x32xf32>,
    return
  }
  func.func @transform_0(%arg0: i32) -> (i32, i32) {
    %c0_i32 = arith.constant 0 : i32
    %c0_i32_0 = arith.constant 0 : i32
    %c0_i32_1 = arith.constant 0 : i32
    return %c0_i32, %c0_i32_0 : i32, i32
  }
  func.func @transform_1(%arg0: i32) -> (i32, i32) {
    %c0_i32 = arith.constant 0 : i32
    %c0_i32_0 = arith.constant 0 : i32
    %c0_i32_1 = arith.constant 0 : i32
    return %c0_i32, %c0_i32_0 : i32, i32
  }
  func.func @transform_2(%arg0: i32) -> (i32, i32) {
    %c0_i32 = arith.constant 0 : i32
    %c0_i32_0 = arith.constant 0 : i32
    %c0_i32_1 = arith.constant 0 : i32
    return %c0_i32, %c0_i32_0 : i32, i32
  }
  func.func @transform_3(%arg0: i32) -> (i32, i32) {
    %c0_i32 = arith.constant 0 : i32
    %c0_i32_0 = arith.constant 0 : i32
    %c0_i32_1 = arith.constant 0 : i32
    return %c0_i32, %c0_i32_0 : i32, i32
  }
}

module attributes {stable_mosaic.version = 11 : i64} {
  func.func @_tower_kernel(%arg0: i32, %arg1: memref<1x16x32xf32, #tpu.memory_space<vmem>>, %arg2: memref<1x16x32xf32, #tpu.memory_space<vmem>>, %arg3: memref<16x16xf32, #tpu.memory_space<vmem>>, %arg4: memref<1x2x32x32xbf16, #tpu.memory_space<vmem>>, %arg5: memref<1x2x1x32xf32, #tpu.memory_space<vmem>>, %arg6: memref<1x2x32x32xbf16, #tpu.memory_space<vmem>>, %arg7: memref<1x2x1x32xf32, #tpu.memory_space<vmem>>, %arg8: memref<1x2x32x32xbf16, #tpu.memory_space<vmem>>, %arg9: memref<1x2x1x32xf32, #tpu.memory_space<vmem>>, %arg10: memref<1x2x32x32xbf16, #tpu.memory_space<vmem>>, %arg11: memref<1x2x1x32xf32, #tpu.memory_space<vmem>>, %arg12: memref<1x2x1x32xf32, #tpu.memory_space<vmem>>, %arg13: memref<1x2x1x32xf32, #tpu.memory_space<vmem>>, %arg14: memref<1x2x32x64xbf16, #tpu.memory_space<vmem>>, %arg15: memref<1x2x1x64xf32, #tpu.memory_space<vmem>>, %arg16: memref<1x2x64x32xbf16, #tpu.memory_space<vmem>>, %arg17: memref<1x2x1x32xf32, #tpu.memory_space<vmem>>, %arg18: memref<1x2x1x32xf32, #tpu.memory_space<vmem>>, %arg19: memref<1x2x1x32xf32, #tpu.memory_space<vmem>>, %arg20: memref<1x2x1x1xf32, #tpu.memory_space<vmem>>, %arg21: memref<1x2x1x1xf32, #tpu.memory_space<vmem>>, %arg22: memref<1x16x32xf32, #tpu.memory_space<vmem>>) attributes {dimension_semantics = [#tpu.dimension_semantics<parallel>], iteration_bounds = array<i64: 2>, scalar_prefetch = 0 : i64, scratch_operands = 0 : i64, tpu.core_type = #tpu.core_type<tc>, window_params = [{transform_indices = @transform_0, window_bounds = array<i64: 1, 16, 32>}, {transform_indices = @transform_1, window_bounds = array<i64: 1, 16, 32>}, {pipeline_mode = #tpu.pipeline_mode<synchronous>, transform_indices = @transform_2, window_bounds = array<i64: 16, 16>}, {transform_indices = @transform_3, window_bounds = array<i64: 1, 2, 32, 32>}, {transform_indices = @transform_4, window_bounds = array<i64: 1, 2, 1, 32>}, {transform_indices = @transform_5, window_bounds = array<i64: 1, 2, 32, 32>}, {transform_indices = @transform_6, window_bounds = array<i64: 1, 2, 1, 32>}, {transform_indices = @transform_7, window_bounds = array<i64: 1, 2, 32, 32>}, {transform_indices = @transform_8, window_bounds = array<i64: 1, 2, 1, 32>}, {transform_indices = @transform_9, window_bounds = array<i64: 1, 2, 32, 32>}, {transform_indices = @transform_10, window_bounds = array<i64: 1, 2, 1, 32>}, {transform_indices = @transform_11, window_bounds = array<i64: 1, 2, 1, 32>}, {transform_indices = @transform_12, window_bounds = array<i64: 1, 2, 1, 32>}, {transform_indices = @transform_13, window_bounds = array<i64: 1, 2, 32, 64>}, {transform_indices = @transform_14, window_bounds = array<i64: 1, 2, 1, 64>}, {transform_indices = @transform_15, window_bounds = array<i64: 1, 2, 64, 32>}, {transform_indices = @transform_16, window_bounds = array<i64: 1, 2, 1, 32>}, {transform_indices = @transform_17, window_bounds = array<i64: 1, 2, 1, 32>}, {transform_indices = @transform_18, window_bounds = array<i64: 1, 2, 1, 32>}, {transform_indices = @transform_19, window_bounds = array<i64: 1, 2, 1, 1>}, {transform_indices = @transform_20, window_bounds = array<i64: 1, 2, 1, 1>}, {transform_indices = @transform_21, window_bounds = array<i64: 1, 16, 32>}]} {
    %c0 = arith.constant 0 : index
    %c0_0 = arith.constant 0 : index
    %c0_1 = arith.constant 0 : index
    %0 = vector.load %arg1[%c0, %c0_0, %c0_1] : memref<1x16x32xf32, #tpu.memory_space<vmem>>, vector<1x16x32xf32>
    %1 = vector.shape_cast %0 : vector<1x16x32xf32> to vector<16x32xf32>
    %c0_2 = arith.constant 0 : index
    %c0_3 = arith.constant 0 : index
    %2 = vector.load %arg3[%c0_2, %c0_3] : memref<16x16xf32, #tpu.memory_space<vmem>>, vector<16x16xf32>
    %3 = tpu.iota {dimensions = array<i32: 1>} : vector<16x32xi32>
    %4 = arith.truncf %1 : vector<16x32xf32> to vector<16x32xbf16>
    %5 = arith.truncf %1 : vector<16x32xf32> to vector<16x32xbf16>
    %c0_4 = arith.constant 0 : index
    %c0_5 = arith.constant 0 : index
    %c0_6 = arith.constant 0 : index
    %c0_7 = arith.constant 0 : index
    %6 = vector.load %arg4[%c0_4, %c0_5, %c0_6, %c0_7] : memref<1x2x32x32xbf16, #tpu.memory_space<vmem>>, vector<1x1x32x32xbf16>
    %7 = vector.shape_cast %6 : vector<1x1x32x32xbf16> to vector<32x32xbf16>
    %cst = arith.constant dense<0.000000e+00> : vector<16x32xf32>
    %8 = tpu.matmul %4, %7, %cst {dimension_numbers = #tpu.dot_dimension_numbers<[1], [0], [0], [1], [0, 0, 1, 1], [], []>} : vector<16x32xbf16>, vector<32x32xbf16>, vector<16x32xf32> -> vector<16x32xf32>
    %c0_8 = arith.constant 0 : index
    %c0_9 = arith.constant 0 : index
    %c0_10 = arith.constant 0 : index
    %c0_11 = arith.constant 0 : index
    %9 = vector.load %arg5[%c0_8, %c0_9, %c0_10, %c0_11] : memref<1x2x1x32xf32, #tpu.memory_space<vmem>>, vector<1x1x1x32xf32>
    %10 = vector.shape_cast %9 : vector<1x1x1x32xf32> to vector<1x32xf32>
    %11 = vector.broadcast %10 : vector<1x32xf32> to vector<16x32xf32>
    %12 = arith.addf %8, %11 : vector<16x32xf32>
    %c0_12 = arith.constant 0 : index
    %c0_13 = arith.constant 0 : index
    %c0_14 = arith.constant 0 : index
    %c0_15 = arith.constant 0 : index
    %13 = vector.load %arg6[%c0_12, %c0_13, %c0_14, %c0_15] : memref<1x2x32x32xbf16, #tpu.memory_space<vmem>>, vector<1x1x32x32xbf16>
    %14 = vector.shape_cast %13 : vector<1x1x32x32xbf16> to vector<32x32xbf16>
    %cst_16 = arith.constant dense<0.000000e+00> : vector<16x32xf32>
    %15 = tpu.matmul %5, %14, %cst_16 {dimension_numbers = #tpu.dot_dimension_numbers<[1], [0], [0], [1], [0, 0, 1, 1], [], []>} : vector<16x32xbf16>, vector<32x32xbf16>, vector<16x32xf32> -> vector<16x32xf32>
    %c0_17 = arith.constant 0 : index
    %c0_18 = arith.constant 0 : index
    %c0_19 = arith.constant 0 : index
    %c0_20 = arith.constant 0 : index
    %16 = vector.load %arg7[%c0_17, %c0_18, %c0_19, %c0_20] : memref<1x2x1x32xf32, #tpu.memory_space<vmem>>, vector<1x1x1x32xf32>
    %17 = vector.shape_cast %16 : vector<1x1x1x32xf32> to vector<1x32xf32>
    %18 = vector.broadcast %17 : vector<1x32xf32> to vector<16x32xf32>
    %19 = arith.addf %15, %18 : vector<16x32xf32>
    %c0_21 = arith.constant 0 : index
    %c0_22 = arith.constant 0 : index
    %c0_23 = arith.constant 0 : index
    %c0_24 = arith.constant 0 : index
    %20 = vector.load %arg8[%c0_21, %c0_22, %c0_23, %c0_24] : memref<1x2x32x32xbf16, #tpu.memory_space<vmem>>, vector<1x1x32x32xbf16>
    %21 = vector.shape_cast %20 : vector<1x1x32x32xbf16> to vector<32x32xbf16>
    %cst_25 = arith.constant dense<0.000000e+00> : vector<16x32xf32>
    %22 = tpu.matmul %5, %21, %cst_25 {dimension_numbers = #tpu.dot_dimension_numbers<[1], [0], [0], [1], [0, 0, 1, 1], [], []>} : vector<16x32xbf16>, vector<32x32xbf16>, vector<16x32xf32> -> vector<16x32xf32>
    %c0_26 = arith.constant 0 : index
    %c0_27 = arith.constant 0 : index
    %c0_28 = arith.constant 0 : index
    %c0_29 = arith.constant 0 : index
    %23 = vector.load %arg9[%c0_26, %c0_27, %c0_28, %c0_29] : memref<1x2x1x32xf32, #tpu.memory_space<vmem>>, vector<1x1x1x32xf32>
    %24 = vector.shape_cast %23 : vector<1x1x1x32xf32> to vector<1x32xf32>
    %25 = vector.broadcast %24 : vector<1x32xf32> to vector<16x32xf32>
    %26 = arith.addf %22, %25 : vector<16x32xf32>
    %27 = arith.truncf %19 : vector<16x32xf32> to vector<16x32xbf16>
    %28 = arith.truncf %26 : vector<16x32xf32> to vector<16x32xbf16>
    %cst_30 = arith.constant 0.000000e+00 : f32
    %29 = vector.broadcast %cst_30 : f32 to vector<16x32xf32>
    %c0_i32 = arith.constant 0 : i32
    %30 = vector.broadcast %c0_i32 : i32 to vector<16x32xi32>
    %31 = arith.cmpi sge, %3, %30 : vector<16x32xi32>
    %c8_i32 = arith.constant 8 : i32
    %32 = vector.broadcast %c8_i32 : i32 to vector<16x32xi32>
    %33 = arith.cmpi slt, %3, %32 : vector<16x32xi32>
    %34 = arith.andi %31, %33 : vector<16x32xi1>
    %cst_31 = arith.constant 0.000000e+00 : f32
    %35 = vector.broadcast %cst_31 : f32 to vector<16x32xf32>
    %36 = arith.select %34, %12, %35 : vector<16x32xi1>, vector<16x32xf32>
    %37 = arith.truncf %36 : vector<16x32xf32> to vector<16x32xbf16>
    %cst_32 = arith.constant dense<0.000000e+00> : vector<16x16xf32>
    %38 = tpu.matmul %37, %27, %cst_32 {dimension_numbers = #tpu.dot_dimension_numbers<[1], [1], [0], [0], [0, 0, 1, 0], [], []>} : vector<16x32xbf16>, vector<16x32xbf16>, vector<16x16xf32> -> vector<16x16xf32>
    %cst_33 = arith.constant 0.353553385 : f32
    %39 = vector.broadcast %cst_33 : f32 to vector<16x16xf32>
    %40 = arith.mulf %38, %39 : vector<16x16xf32>
    %41 = arith.addf %40, %2 : vector<16x16xf32>
    %cst_34 = arith.constant dense<0xFF800000> : vector<16xf32>
    %42 = vector.multi_reduction <maximumf>, %41, %cst_34 [1] : vector<16x16xf32> to vector<16xf32>
    %43 = vector.shape_cast %42 : vector<16xf32> to vector<16x1xf32>
    %44 = vector.broadcast %43 : vector<16x1xf32> to vector<16x16xf32>
    %45 = arith.subf %41, %44 : vector<16x16xf32>
    %46 = math.exp %45 : vector<16x16xf32>
    %cst_35 = arith.constant dense<0.000000e+00> : vector<16xf32>
    %47 = vector.multi_reduction <add>, %46, %cst_35 [1] : vector<16x16xf32> to vector<16xf32>
    %48 = vector.shape_cast %47 : vector<16xf32> to vector<16x1xf32>
    %49 = tpu.reciprocal %48 {approx = true} : vector<16x1xf32> -> vector<16x1xf32>
    %50 = vector.broadcast %49 : vector<16x1xf32> to vector<16x16xf32>
    %51 = arith.mulf %46, %50 : vector<16x16xf32>
    %52 = arith.truncf %51 : vector<16x16xf32> to vector<16x16xbf16>
    %cst_36 = arith.constant dense<0.000000e+00> : vector<16x32xf32>
    %53 = tpu.matmul %52, %28, %cst_36 {dimension_numbers = #tpu.dot_dimension_numbers<[1], [0], [0], [1], [0, 0, 1, 1], [], []>} : vector<16x16xbf16>, vector<16x32xbf16>, vector<16x32xf32> -> vector<16x32xf32>
    %cst_37 = arith.constant 0.000000e+00 : f32
    %54 = vector.broadcast %cst_37 : f32 to vector<16x32xf32>
    %55 = arith.select %34, %53, %54 : vector<16x32xi1>, vector<16x32xf32>
    %56 = arith.addf %29, %55 : vector<16x32xf32>
    %c8_i32_38 = arith.constant 8 : i32
    %57 = vector.broadcast %c8_i32_38 : i32 to vector<16x32xi32>
    %58 = arith.cmpi sge, %3, %57 : vector<16x32xi32>
    %c16_i32 = arith.constant 16 : i32
    %59 = vector.broadcast %c16_i32 : i32 to vector<16x32xi32>
    %60 = arith.cmpi slt, %3, %59 : vector<16x32xi32>
    %61 = arith.andi %58, %60 : vector<16x32xi1>
    %cst_39 = arith.constant 0.000000e+00 : f32
    %62 = vector.broadcast %cst_39 : f32 to vector<16x32xf32>
    %63 = arith.select %61, %12, %62 : vector<16x32xi1>, vector<16x32xf32>
    %64 = arith.truncf %63 : vector<16x32xf32> to vector<16x32xbf16>
    %cst_40 = arith.constant dense<0.000000e+00> : vector<16x16xf32>
    %65 = tpu.matmul %64, %27, %cst_40 {dimension_numbers = #tpu.dot_dimension_numbers<[1], [1], [0], [0], [0, 0, 1, 0], [], []>} : vector<16x32xbf16>, vector<16x32xbf16>, vector<16x16xf32> -> vector<16x16xf32>
    %cst_41 = arith.constant 0.353553385 : f32
    %66 = vector.broadcast %cst_41 : f32 to vector<16x16xf32>
    %67 = arith.mulf %65, %66 : vector<16x16xf32>
    %68 = arith.addf %67, %2 : vector<16x16xf32>
    %cst_42 = arith.constant dense<0xFF800000> : vector<16xf32>
    %69 = vector.multi_reduction <maximumf>, %68, %cst_42 [1] : vector<16x16xf32> to vector<16xf32>
    %70 = vector.shape_cast %69 : vector<16xf32> to vector<16x1xf32>
    %71 = vector.broadcast %70 : vector<16x1xf32> to vector<16x16xf32>
    %72 = arith.subf %68, %71 : vector<16x16xf32>
    %73 = math.exp %72 : vector<16x16xf32>
    %cst_43 = arith.constant dense<0.000000e+00> : vector<16xf32>
    %74 = vector.multi_reduction <add>, %73, %cst_43 [1] : vector<16x16xf32> to vector<16xf32>
    %75 = vector.shape_cast %74 : vector<16xf32> to vector<16x1xf32>
    %76 = tpu.reciprocal %75 {approx = true} : vector<16x1xf32> -> vector<16x1xf32>
    %77 = vector.broadcast %76 : vector<16x1xf32> to vector<16x16xf32>
    %78 = arith.mulf %73, %77 : vector<16x16xf32>
    %79 = arith.truncf %78 : vector<16x16xf32> to vector<16x16xbf16>
    %cst_44 = arith.constant dense<0.000000e+00> : vector<16x32xf32>
    %80 = tpu.matmul %79, %28, %cst_44 {dimension_numbers = #tpu.dot_dimension_numbers<[1], [0], [0], [1], [0, 0, 1, 1], [], []>} : vector<16x16xbf16>, vector<16x32xbf16>, vector<16x32xf32> -> vector<16x32xf32>
    %cst_45 = arith.constant 0.000000e+00 : f32
    %81 = vector.broadcast %cst_45 : f32 to vector<16x32xf32>
    %82 = arith.select %61, %80, %81 : vector<16x32xi1>, vector<16x32xf32>
    %83 = arith.addf %56, %82 : vector<16x32xf32>
    %c16_i32_46 = arith.constant 16 : i32
    %84 = vector.broadcast %c16_i32_46 : i32 to vector<16x32xi32>
    %85 = arith.cmpi sge, %3, %84 : vector<16x32xi32>
    %c24_i32 = arith.constant 24 : i32
    %86 = vector.broadcast %c24_i32 : i32 to vector<16x32xi32>
    %87 = arith.cmpi slt, %3, %86 : vector<16x32xi32>
    %88 = arith.andi %85, %87 : vector<16x32xi1>
    %cst_47 = arith.constant 0.000000e+00 : f32
    %89 = vector.broadcast %cst_47 : f32 to vector<16x32xf32>
    %90 = arith.select %88, %12, %89 : vector<16x32xi1>, vector<16x32xf32>
    %91 = arith.truncf %90 : vector<16x32xf32> to vector<16x32xbf16>
    %cst_48 = arith.constant dense<0.000000e+00> : vector<16x16xf32>
    %92 = tpu.matmul %91, %27, %cst_48 {dimension_numbers = #tpu.dot_dimension_numbers<[1], [1], [0], [0], [0, 0, 1, 0], [], []>} : vector<16x32xbf16>, vector<16x32xbf16>, vector<16x16xf32> -> vector<16x16xf32>
    %cst_49 = arith.constant 0.353553385 : f32
    %93 = vector.broadcast %cst_49 : f32 to vector<16x16xf32>
    %94 = arith.mulf %92, %93 : vector<16x16xf32>
    %95 = arith.addf %94, %2 : vector<16x16xf32>
    %cst_50 = arith.constant dense<0xFF800000> : vector<16xf32>
    %96 = vector.multi_reduction <maximumf>, %95, %cst_50 [1] : vector<16x16xf32> to vector<16xf32>
    %97 = vector.shape_cast %96 : vector<16xf32> to vector<16x1xf32>
    %98 = vector.broadcast %97 : vector<16x1xf32> to vector<16x16xf32>
    %99 = arith.subf %95, %98 : vector<16x16xf32>
    %100 = math.exp %99 : vector<16x16xf32>
    %cst_51 = arith.constant dense<0.000000e+00> : vector<16xf32>
    %101 = vector.multi_reduction <add>, %100, %cst_51 [1] : vector<16x16xf32> to vector<16xf32>
    %102 = vector.shape_cast %101 : vector<16xf32> to vector<16x1xf32>
    %103 = tpu.reciprocal %102 {approx = true} : vector<16x1xf32> -> vector<16x1xf32>
    %104 = vector.broadcast %103 : vector<16x1xf32> to vector<16x16xf32>
    %105 = arith.mulf %100, %104 : vector<16x16xf32>
    %106 = arith.truncf %105 : vector<16x16xf32> to vector<16x16xbf16>
    %cst_52 = arith.constant dense<0.000000e+00> : vector<16x32xf32>
    %107 = tpu.matmul %106, %28, %cst_52 {dimension_numbers = #tpu.dot_dimension_numbers<[1], [0], [0], [1], [0, 0, 1, 1], [], []>} : vector<16x16xbf16>, vector<16x32xbf16>, vector<16x32xf32> -> vector<16x32xf32>
    %cst_53 = arith.constant 0.000000e+00 : f32
    %108 = vector.broadcast %cst_53 : f32 to vector<16x32xf32>
    %109 = arith.select %88, %107, %108 : vector<16x32xi1>, vector<16x32xf32>
    %110 = arith.addf %83, %109 : vector<16x32xf32>
    %c24_i32_54 = arith.constant 24 : i32
    %111 = vector.broadcast %c24_i32_54 : i32 to vector<16x32xi32>
    %112 = arith.cmpi sge, %3, %111 : vector<16x32xi32>
    %c32_i32 = arith.constant 32 : i32
    %113 = vector.broadcast %c32_i32 : i32 to vector<16x32xi32>
    %114 = arith.cmpi slt, %3, %113 : vector<16x32xi32>
    %115 = arith.andi %112, %114 : vector<16x32xi1>
    %cst_55 = arith.constant 0.000000e+00 : f32
    %116 = vector.broadcast %cst_55 : f32 to vector<16x32xf32>
    %117 = arith.select %115, %12, %116 : vector<16x32xi1>, vector<16x32xf32>
    %118 = arith.truncf %117 : vector<16x32xf32> to vector<16x32xbf16>
    %cst_56 = arith.constant dense<0.000000e+00> : vector<16x16xf32>
    %119 = tpu.matmul %118, %27, %cst_56 {dimension_numbers = #tpu.dot_dimension_numbers<[1], [1], [0], [0], [0, 0, 1, 0], [], []>} : vector<16x32xbf16>, vector<16x32xbf16>, vector<16x16xf32> -> vector<16x16xf32>
    %cst_57 = arith.constant 0.353553385 : f32
    %120 = vector.broadcast %cst_57 : f32 to vector<16x16xf32>
    %121 = arith.mulf %119, %120 : vector<16x16xf32>
    %122 = arith.addf %121, %2 : vector<16x16xf32>
    %cst_58 = arith.constant dense<0xFF800000> : vector<16xf32>
    %123 = vector.multi_reduction <maximumf>, %122, %cst_58 [1] : vector<16x16xf32> to vector<16xf32>
    %124 = vector.shape_cast %123 : vector<16xf32> to vector<16x1xf32>
    %125 = vector.broadcast %124 : vector<16x1xf32> to vector<16x16xf32>
    %126 = arith.subf %122, %125 : vector<16x16xf32>
    %127 = math.exp %126 : vector<16x16xf32>
    %cst_59 = arith.constant dense<0.000000e+00> : vector<16xf32>
    %128 = vector.multi_reduction <add>, %127, %cst_59 [1] : vector<16x16xf32> to vector<16xf32>
    %129 = vector.shape_cast %128 : vector<16xf32> to vector<16x1xf32>
    %130 = tpu.reciprocal %129 {approx = true} : vector<16x1xf32> -> vector<16x1xf32>
    %131 = vector.broadcast %130 : vector<16x1xf32> to vector<16x16xf32>
    %132 = arith.mulf %127, %131 : vector<16x16xf32>
    %133 = arith.truncf %132 : vector<16x16xf32> to vector<16x16xbf16>
    %cst_60 = arith.constant dense<0.000000e+00> : vector<16x32xf32>
    %134 = tpu.matmul %133, %28, %cst_60 {dimension_numbers = #tpu.dot_dimension_numbers<[1], [0], [0], [1], [0, 0, 1, 1], [], []>} : vector<16x16xbf16>, vector<16x32xbf16>, vector<16x32xf32> -> vector<16x32xf32>
    %cst_61 = arith.constant 0.000000e+00 : f32
    %135 = vector.broadcast %cst_61 : f32 to vector<16x32xf32>
    %136 = arith.select %115, %134, %135 : vector<16x32xi1>, vector<16x32xf32>
    %137 = arith.addf %110, %136 : vector<16x32xf32>
    %138 = arith.truncf %137 : vector<16x32xf32> to vector<16x32xbf16>
    %c0_62 = arith.constant 0 : index
    %c0_63 = arith.constant 0 : index
    %c0_64 = arith.constant 0 : index
    %c0_65 = arith.constant 0 : index
    %139 = vector.load %arg10[%c0_62, %c0_63, %c0_64, %c0_65] : memref<1x2x32x32xbf16, #tpu.memory_space<vmem>>, vector<1x1x32x32xbf16>
    %140 = vector.shape_cast %139 : vector<1x1x32x32xbf16> to vector<32x32xbf16>
    %cst_66 = arith.constant dense<0.000000e+00> : vector<16x32xf32>
    %141 = tpu.matmul %138, %140, %cst_66 {dimension_numbers = #tpu.dot_dimension_numbers<[1], [0], [0], [1], [0, 0, 1, 1], [], []>} : vector<16x32xbf16>, vector<32x32xbf16>, vector<16x32xf32> -> vector<16x32xf32>
    %c0_67 = arith.constant 0 : index
    %c0_68 = arith.constant 0 : index
    %c0_69 = arith.constant 0 : index
    %c0_70 = arith.constant 0 : index
    %142 = vector.load %arg11[%c0_67, %c0_68, %c0_69, %c0_70] : memref<1x2x1x32xf32, #tpu.memory_space<vmem>>, vector<1x1x1x32xf32>
    %143 = vector.shape_cast %142 : vector<1x1x1x32xf32> to vector<1x32xf32>
    %144 = vector.broadcast %143 : vector<1x32xf32> to vector<16x32xf32>
    %145 = arith.addf %141, %144 : vector<16x32xf32>
    %c0_71 = arith.constant 0 : index
    %c0_72 = arith.constant 0 : index
    %c0_73 = arith.constant 0 : index
    %c0_74 = arith.constant 0 : index
    %146 = vector.load %arg20[%c0_71, %c0_72, %c0_73, %c0_74] : memref<1x2x1x1xf32, #tpu.memory_space<vmem>>, vector<1x1x1x1xf32>
    %147 = vector.shape_cast %146 : vector<1x1x1x1xf32> to vector<1x1xf32>
    %148 = vector.broadcast %147 : vector<1x1xf32> to vector<16x32xf32>
    %149 = arith.mulf %148, %145 : vector<16x32xf32>
    %150 = arith.addf %1, %149 : vector<16x32xf32>
    %c0_75 = arith.constant 0 : index
    %c0_76 = arith.constant 0 : index
    %c0_77 = arith.constant 0 : index
    %c0_78 = arith.constant 0 : index
    %151 = vector.load %arg12[%c0_75, %c0_76, %c0_77, %c0_78] : memref<1x2x1x32xf32, #tpu.memory_space<vmem>>, vector<1x1x1x32xf32>
    %152 = vector.shape_cast %151 : vector<1x1x1x32xf32> to vector<1x32xf32>
    %c0_79 = arith.constant 0 : index
    %c0_80 = arith.constant 0 : index
    %c0_81 = arith.constant 0 : index
    %c0_82 = arith.constant 0 : index
    %153 = vector.load %arg13[%c0_79, %c0_80, %c0_81, %c0_82] : memref<1x2x1x32xf32, #tpu.memory_space<vmem>>, vector<1x1x1x32xf32>
    %154 = vector.shape_cast %153 : vector<1x1x1x32xf32> to vector<1x32xf32>
    %cst_83 = arith.constant dense<0.000000e+00> : vector<16xf32>
    %155 = vector.multi_reduction <add>, %150, %cst_83 [1] : vector<16x32xf32> to vector<16xf32>
    %156 = vector.shape_cast %155 : vector<16xf32> to vector<16x1xf32>
    %cst_84 = arith.constant 3.200000e+01 : f32
    %157 = vector.broadcast %cst_84 : f32 to vector<16x1xf32>
    %158 = arith.divf %156, %157 : vector<16x1xf32>
    %159 = vector.broadcast %158 : vector<16x1xf32> to vector<16x32xf32>
    %160 = arith.subf %150, %159 : vector<16x32xf32>
    %161 = arith.mulf %160, %160 : vector<16x32xf32>
    %cst_85 = arith.constant dense<0.000000e+00> : vector<16xf32>
    %162 = vector.multi_reduction <add>, %161, %cst_85 [1] : vector<16x32xf32> to vector<16xf32>
    %163 = vector.shape_cast %162 : vector<16xf32> to vector<16x1xf32>
    %cst_86 = arith.constant 3.200000e+01 : f32
    %164 = vector.broadcast %cst_86 : f32 to vector<16x1xf32>
    %165 = arith.divf %163, %164 : vector<16x1xf32>
    %cst_87 = arith.constant 9.99999974E-6 : f32
    %166 = vector.broadcast %cst_87 : f32 to vector<16x1xf32>
    %167 = arith.addf %165, %166 : vector<16x1xf32>
    %168 = math.rsqrt %167 : vector<16x1xf32>
    %169 = vector.broadcast %168 : vector<16x1xf32> to vector<16x32xf32>
    %170 = arith.mulf %160, %169 : vector<16x32xf32>
    %171 = vector.broadcast %152 : vector<1x32xf32> to vector<16x32xf32>
    %172 = arith.mulf %170, %171 : vector<16x32xf32>
    %173 = vector.broadcast %154 : vector<1x32xf32> to vector<16x32xf32>
    %174 = arith.addf %172, %173 : vector<16x32xf32>
    %175 = arith.truncf %174 : vector<16x32xf32> to vector<16x32xbf16>
    %c0_88 = arith.constant 0 : index
    %c0_89 = arith.constant 0 : index
    %c0_90 = arith.constant 0 : index
    %c0_91 = arith.constant 0 : index
    %176 = vector.load %arg14[%c0_88, %c0_89, %c0_90, %c0_91] : memref<1x2x32x64xbf16, #tpu.memory_space<vmem>>, vector<1x1x32x64xbf16>
    %177 = vector.shape_cast %176 : vector<1x1x32x64xbf16> to vector<32x64xbf16>
    %cst_92 = arith.constant dense<0.000000e+00> : vector<16x64xf32>
    %178 = tpu.matmul %175, %177, %cst_92 {dimension_numbers = #tpu.dot_dimension_numbers<[1], [0], [0], [1], [0, 0, 1, 1], [], []>} : vector<16x32xbf16>, vector<32x64xbf16>, vector<16x64xf32> -> vector<16x64xf32>
    %c0_93 = arith.constant 0 : index
    %c0_94 = arith.constant 0 : index
    %c0_95 = arith.constant 0 : index
    %c0_96 = arith.constant 0 : index
    %179 = vector.load %arg15[%c0_93, %c0_94, %c0_95, %c0_96] : memref<1x2x1x64xf32, #tpu.memory_space<vmem>>, vector<1x1x1x64xf32>
    %180 = vector.shape_cast %179 : vector<1x1x1x64xf32> to vector<1x64xf32>
    %181 = vector.broadcast %180 : vector<1x64xf32> to vector<16x64xf32>
    %182 = arith.addf %178, %181 : vector<16x64xf32>
    %183 = arith.mulf %182, %182 : vector<16x64xf32>
    %184 = arith.mulf %182, %183 : vector<16x64xf32>
    %cst_97 = arith.constant 4.471500e-02 : f32
    %185 = vector.broadcast %cst_97 : f32 to vector<16x64xf32>
    %186 = arith.mulf %185, %184 : vector<16x64xf32>
    %187 = arith.addf %182, %186 : vector<16x64xf32>
    %cst_98 = arith.constant 0.797884583 : f32
    %188 = vector.broadcast %cst_98 : f32 to vector<16x64xf32>
    %189 = arith.mulf %188, %187 : vector<16x64xf32>
    %190 = math.tanh %189 : vector<16x64xf32>
    %cst_99 = arith.constant 1.000000e+00 : f32
    %191 = vector.broadcast %cst_99 : f32 to vector<16x64xf32>
    %192 = arith.addf %191, %190 : vector<16x64xf32>
    %cst_100 = arith.constant 5.000000e-01 : f32
    %193 = vector.broadcast %cst_100 : f32 to vector<16x64xf32>
    %194 = arith.mulf %193, %192 : vector<16x64xf32>
    %195 = arith.mulf %182, %194 : vector<16x64xf32>
    %196 = arith.truncf %195 : vector<16x64xf32> to vector<16x64xbf16>
    %c0_101 = arith.constant 0 : index
    %c0_102 = arith.constant 0 : index
    %c0_103 = arith.constant 0 : index
    %c0_104 = arith.constant 0 : index
    %197 = vector.load %arg16[%c0_101, %c0_102, %c0_103, %c0_104] : memref<1x2x64x32xbf16, #tpu.memory_space<vmem>>, vector<1x1x64x32xbf16>
    %198 = vector.shape_cast %197 : vector<1x1x64x32xbf16> to vector<64x32xbf16>
    %cst_105 = arith.constant dense<0.000000e+00> : vector<16x32xf32>
    %199 = tpu.matmul %196, %198, %cst_105 {dimension_numbers = #tpu.dot_dimension_numbers<[1], [0], [0], [1], [0, 0, 1, 1], [], []>} : vector<16x64xbf16>, vector<64x32xbf16>, vector<16x32xf32> -> vector<16x32xf32>
    %c0_106 = arith.constant 0 : index
    %c0_107 = arith.constant 0 : index
    %c0_108 = arith.constant 0 : index
    %c0_109 = arith.constant 0 : index
    %200 = vector.load %arg17[%c0_106, %c0_107, %c0_108, %c0_109] : memref<1x2x1x32xf32, #tpu.memory_space<vmem>>, vector<1x1x1x32xf32>
    %201 = vector.shape_cast %200 : vector<1x1x1x32xf32> to vector<1x32xf32>
    %202 = vector.broadcast %201 : vector<1x32xf32> to vector<16x32xf32>
    %203 = arith.addf %199, %202 : vector<16x32xf32>
    %c0_110 = arith.constant 0 : index
    %c0_111 = arith.constant 0 : index
    %c0_112 = arith.constant 0 : index
    %c0_113 = arith.constant 0 : index
    %204 = vector.load %arg21[%c0_110, %c0_111, %c0_112, %c0_113] : memref<1x2x1x1xf32, #tpu.memory_space<vmem>>, vector<1x1x1x1xf32>
    %205 = vector.shape_cast %204 : vector<1x1x1x1xf32> to vector<1x1xf32>
    %206 = vector.broadcast %205 : vector<1x1xf32> to vector<16x32xf32>
    %207 = arith.mulf %206, %203 : vector<16x32xf32>
    %208 = arith.addf %174, %207 : vector<16x32xf32>
    %c0_114 = arith.constant 0 : index
    %c0_115 = arith.constant 0 : index
    %c0_116 = arith.constant 0 : index
    %c0_117 = arith.constant 0 : index
    %209 = vector.load %arg18[%c0_114, %c0_115, %c0_116, %c0_117] : memref<1x2x1x32xf32, #tpu.memory_space<vmem>>, vector<1x1x1x32xf32>
    %210 = vector.shape_cast %209 : vector<1x1x1x32xf32> to vector<1x32xf32>
    %c0_118 = arith.constant 0 : index
    %c0_119 = arith.constant 0 : index
    %c0_120 = arith.constant 0 : index
    %c0_121 = arith.constant 0 : index
    %211 = vector.load %arg19[%c0_118, %c0_119, %c0_120, %c0_121] : memref<1x2x1x32xf32, #tpu.memory_space<vmem>>, vector<1x1x1x32xf32>
    %212 = vector.shape_cast %211 : vector<1x1x1x32xf32> to vector<1x32xf32>
    %cst_122 = arith.constant dense<0.000000e+00> : vector<16xf32>
    %213 = vector.multi_reduction <add>, %208, %cst_122 [1] : vector<16x32xf32> to vector<16xf32>
    %214 = vector.shape_cast %213 : vector<16xf32> to vector<16x1xf32>
    %cst_123 = arith.constant 3.200000e+01 : f32
    %215 = vector.broadcast %cst_123 : f32 to vector<16x1xf32>
    %216 = arith.divf %214, %215 : vector<16x1xf32>
    %217 = vector.broadcast %216 : vector<16x1xf32> to vector<16x32xf32>
    %218 = arith.subf %208, %217 : vector<16x32xf32>
    %219 = arith.mulf %218, %218 : vector<16x32xf32>
    %cst_124 = arith.constant dense<0.000000e+00> : vector<16xf32>
    %220 = vector.multi_reduction <add>, %219, %cst_124 [1] : vector<16x32xf32> to vector<16xf32>
    %221 = vector.shape_cast %220 : vector<16xf32> to vector<16x1xf32>
    %cst_125 = arith.constant 3.200000e+01 : f32
    %222 = vector.broadcast %cst_125 : f32 to vector<16x1xf32>
    %223 = arith.divf %221, %222 : vector<16x1xf32>
    %cst_126 = arith.constant 9.99999974E-6 : f32
    %224 = vector.broadcast %cst_126 : f32 to vector<16x1xf32>
    %225 = arith.addf %223, %224 : vector<16x1xf32>
    %226 = math.rsqrt %225 : vector<16x1xf32>
    %227 = vector.broadcast %226 : vector<16x1xf32> to vector<16x32xf32>
    %228 = arith.mulf %218, %227 : vector<16x32xf32>
    %229 = vector.broadcast %210 : vector<1x32xf32> to vector<16x32xf32>
    %230 = arith.mulf %228, %229 : vector<16x32xf32>
    %231 = vector.broadcast %212 : vector<1x32xf32> to vector<16x32xf32>
    %232 = arith.addf %230, %231 : vector<16x32xf32>
    %233 = arith.truncf %232 : vector<16x32xf32> to vector<16x32xbf16>
    %234 = arith.truncf %232 : vector<16x32xf32> to vector<16x32xbf16>
    %c0_127 = arith.constant 0 : index
    %c1 = arith.constant 1 : index
    %c0_128 = arith.constant 0 : index
    %c0_129 = arith.constant 0 : index
    %235 = vector.load %arg4[%c0_127, %c1, %c0_128, %c0_129] : memref<1x2x32x32xbf16, #tpu.memory_space<vmem>>, vector<1x1x32x32xbf16>
    %236 = vector.shape_cast %235 : vector<1x1x32x32xbf16> to vector<32x32xbf16>
    %cst_130 = arith.constant dense<0.000000e+00> : vector<16x32xf32>
    %237 = tpu.matmul %233, %236, %cst_130 {dimension_numbers = #tpu.dot_dimension_numbers<[1], [0], [0], [1], [0, 0, 1, 1], [], []>} : vector<16x32xbf16>, vector<32x32xbf16>, vector<16x32xf32> -> vector<16x32xf32>
    %c0_131 = arith.constant 0 : index
    %c1_132 = arith.constant 1 : index
    %c0_133 = arith.constant 0 : index
    %c0_134 = arith.constant 0 : index
    %238 = vector.load %arg5[%c0_131, %c1_132, %c0_133, %c0_134] : memref<1x2x1x32xf32, #tpu.memory_space<vmem>>, vector<1x1x1x32xf32>
    %239 = vector.shape_cast %238 : vector<1x1x1x32xf32> to vector<1x32xf32>
    %240 = vector.broadcast %239 : vector<1x32xf32> to vector<16x32xf32>
    %241 = arith.addf %237, %240 : vector<16x32xf32>
    %c0_135 = arith.constant 0 : index
    %c1_136 = arith.constant 1 : index
    %c0_137 = arith.constant 0 : index
    %c0_138 = arith.constant 0 : index
    %242 = vector.load %arg6[%c0_135, %c1_136, %c0_137, %c0_138] : memref<1x2x32x32xbf16, #tpu.memory_space<vmem>>, vector<1x1x32x32xbf16>
    %243 = vector.shape_cast %242 : vector<1x1x32x32xbf16> to vector<32x32xbf16>
    %cst_139 = arith.constant dense<0.000000e+00> : vector<16x32xf32>
    %244 = tpu.matmul %234, %243, %cst_139 {dimension_numbers = #tpu.dot_dimension_numbers<[1], [0], [0], [1], [0, 0, 1, 1], [], []>} : vector<16x32xbf16>, vector<32x32xbf16>, vector<16x32xf32> -> vector<16x32xf32>
    %c0_140 = arith.constant 0 : index
    %c1_141 = arith.constant 1 : index
    %c0_142 = arith.constant 0 : index
    %c0_143 = arith.constant 0 : index
    %245 = vector.load %arg7[%c0_140, %c1_141, %c0_142, %c0_143] : memref<1x2x1x32xf32, #tpu.memory_space<vmem>>, vector<1x1x1x32xf32>
    %246 = vector.shape_cast %245 : vector<1x1x1x32xf32> to vector<1x32xf32>
    %247 = vector.broadcast %246 : vector<1x32xf32> to vector<16x32xf32>
    %248 = arith.addf %244, %247 : vector<16x32xf32>
    %c0_144 = arith.constant 0 : index
    %c1_145 = arith.constant 1 : index
    %c0_146 = arith.constant 0 : index
    %c0_147 = arith.constant 0 : index
    %249 = vector.load %arg8[%c0_144, %c1_145, %c0_146, %c0_147] : memref<1x2x32x32xbf16, #tpu.memory_space<vmem>>, vector<1x1x32x32xbf16>
    %250 = vector.shape_cast %249 : vector<1x1x32x32xbf16> to vector<32x32xbf16>
    %cst_148 = arith.constant dense<0.000000e+00> : vector<16x32xf32>
    %251 = tpu.matmul %234, %250, %cst_148 {dimension_numbers = #tpu.dot_dimension_numbers<[1], [0], [0], [1], [0, 0, 1, 1], [], []>} : vector<16x32xbf16>, vector<32x32xbf16>, vector<16x32xf32> -> vector<16x32xf32>
    %c0_149 = arith.constant 0 : index
    %c1_150 = arith.constant 1 : index
    %c0_151 = arith.constant 0 : index
    %c0_152 = arith.constant 0 : index
    %252 = vector.load %arg9[%c0_149, %c1_150, %c0_151, %c0_152] : memref<1x2x1x32xf32, #tpu.memory_space<vmem>>, vector<1x1x1x32xf32>
    %253 = vector.shape_cast %252 : vector<1x1x1x32xf32> to vector<1x32xf32>
    %254 = vector.broadcast %253 : vector<1x32xf32> to vector<16x32xf32>
    %255 = arith.addf %251, %254 : vector<16x32xf32>
    %256 = arith.truncf %248 : vector<16x32xf32> to vector<16x32xbf16>
    %257 = arith.truncf %255 : vector<16x32xf32> to vector<16x32xbf16>
    %cst_153 = arith.constant 0.000000e+00 : f32
    %258 = vector.broadcast %cst_153 : f32 to vector<16x32xf32>
    %c0_i32_154 = arith.constant 0 : i32
    %259 = vector.broadcast %c0_i32_154 : i32 to vector<16x32xi32>
    %260 = arith.cmpi sge, %3, %259 : vector<16x32xi32>
    %c8_i32_155 = arith.constant 8 : i32
    %261 = vector.broadcast %c8_i32_155 : i32 to vector<16x32xi32>
    %262 = arith.cmpi slt, %3, %261 : vector<16x32xi32>
    %263 = arith.andi %260, %262 : vector<16x32xi1>
    %cst_156 = arith.constant 0.000000e+00 : f32
    %264 = vector.broadcast %cst_156 : f32 to vector<16x32xf32>
    %265 = arith.select %263, %241, %264 : vector<16x32xi1>, vector<16x32xf32>
    %266 = arith.truncf %265 : vector<16x32xf32> to vector<16x32xbf16>
    %cst_157 = arith.constant dense<0.000000e+00> : vector<16x16xf32>
    %267 = tpu.matmul %266, %256, %cst_157 {dimension_numbers = #tpu.dot_dimension_numbers<[1], [1], [0], [0], [0, 0, 1, 0], [], []>} : vector<16x32xbf16>, vector<16x32xbf16>, vector<16x16xf32> -> vector<16x16xf32>
    %cst_158 = arith.constant 0.353553385 : f32
    %268 = vector.broadcast %cst_158 : f32 to vector<16x16xf32>
    %269 = arith.mulf %267, %268 : vector<16x16xf32>
    %270 = arith.addf %269, %2 : vector<16x16xf32>
    %cst_159 = arith.constant dense<0xFF800000> : vector<16xf32>
    %271 = vector.multi_reduction <maximumf>, %270, %cst_159 [1] : vector<16x16xf32> to vector<16xf32>
    %272 = vector.shape_cast %271 : vector<16xf32> to vector<16x1xf32>
    %273 = vector.broadcast %272 : vector<16x1xf32> to vector<16x16xf32>
    %274 = arith.subf %270, %273 : vector<16x16xf32>
    %275 = math.exp %274 : vector<16x16xf32>
    %cst_160 = arith.constant dense<0.000000e+00> : vector<16xf32>
    %276 = vector.multi_reduction <add>, %275, %cst_160 [1] : vector<16x16xf32> to vector<16xf32>
    %277 = vector.shape_cast %276 : vector<16xf32> to vector<16x1xf32>
    %278 = tpu.reciprocal %277 {approx = true} : vector<16x1xf32> -> vector<16x1xf32>
    %279 = vector.broadcast %278 : vector<16x1xf32> to vector<16x16xf32>
    %280 = arith.mulf %275, %279 : vector<16x16xf32>
    %281 = arith.truncf %280 : vector<16x16xf32> to vector<16x16xbf16>
    %cst_161 = arith.constant dense<0.000000e+00> : vector<16x32xf32>
    %282 = tpu.matmul %281, %257, %cst_161 {dimension_numbers = #tpu.dot_dimension_numbers<[1], [0], [0], [1], [0, 0, 1, 1], [], []>} : vector<16x16xbf16>, vector<16x32xbf16>, vector<16x32xf32> -> vector<16x32xf32>
    %cst_162 = arith.constant 0.000000e+00 : f32
    %283 = vector.broadcast %cst_162 : f32 to vector<16x32xf32>
    %284 = arith.select %263, %282, %283 : vector<16x32xi1>, vector<16x32xf32>
    %285 = arith.addf %258, %284 : vector<16x32xf32>
    %c8_i32_163 = arith.constant 8 : i32
    %286 = vector.broadcast %c8_i32_163 : i32 to vector<16x32xi32>
    %287 = arith.cmpi sge, %3, %286 : vector<16x32xi32>
    %c16_i32_164 = arith.constant 16 : i32
    %288 = vector.broadcast %c16_i32_164 : i32 to vector<16x32xi32>
    %289 = arith.cmpi slt, %3, %288 : vector<16x32xi32>
    %290 = arith.andi %287, %289 : vector<16x32xi1>
    %cst_165 = arith.constant 0.000000e+00 : f32
    %291 = vector.broadcast %cst_165 : f32 to vector<16x32xf32>
    %292 = arith.select %290, %241, %291 : vector<16x32xi1>, vector<16x32xf32>
    %293 = arith.truncf %292 : vector<16x32xf32> to vector<16x32xbf16>
    %cst_166 = arith.constant dense<0.000000e+00> : vector<16x16xf32>
    %294 = tpu.matmul %293, %256, %cst_166 {dimension_numbers = #tpu.dot_dimension_numbers<[1], [1], [0], [0], [0, 0, 1, 0], [], []>} : vector<16x32xbf16>, vector<16x32xbf16>, vector<16x16xf32> -> vector<16x16xf32>
    %cst_167 = arith.constant 0.353553385 : f32
    %295 = vector.broadcast %cst_167 : f32 to vector<16x16xf32>
    %296 = arith.mulf %294, %295 : vector<16x16xf32>
    %297 = arith.addf %296, %2 : vector<16x16xf32>
    %cst_168 = arith.constant dense<0xFF800000> : vector<16xf32>
    %298 = vector.multi_reduction <maximumf>, %297, %cst_168 [1] : vector<16x16xf32> to vector<16xf32>
    %299 = vector.shape_cast %298 : vector<16xf32> to vector<16x1xf32>
    %300 = vector.broadcast %299 : vector<16x1xf32> to vector<16x16xf32>
    %301 = arith.subf %297, %300 : vector<16x16xf32>
    %302 = math.exp %301 : vector<16x16xf32>
    %cst_169 = arith.constant dense<0.000000e+00> : vector<16xf32>
    %303 = vector.multi_reduction <add>, %302, %cst_169 [1] : vector<16x16xf32> to vector<16xf32>
    %304 = vector.shape_cast %303 : vector<16xf32> to vector<16x1xf32>
    %305 = tpu.reciprocal %304 {approx = true} : vector<16x1xf32> -> vector<16x1xf32>
    %306 = vector.broadcast %305 : vector<16x1xf32> to vector<16x16xf32>
    %307 = arith.mulf %302, %306 : vector<16x16xf32>
    %308 = arith.truncf %307 : vector<16x16xf32> to vector<16x16xbf16>
    %cst_170 = arith.constant dense<0.000000e+00> : vector<16x32xf32>
    %309 = tpu.matmul %308, %257, %cst_170 {dimension_numbers = #tpu.dot_dimension_numbers<[1], [0], [0], [1], [0, 0, 1, 1], [], []>} : vector<16x16xbf16>, vector<16x32xbf16>, vector<16x32xf32> -> vector<16x32xf32>
    %cst_171 = arith.constant 0.000000e+00 : f32
    %310 = vector.broadcast %cst_171 : f32 to vector<16x32xf32>
    %311 = arith.select %290, %309, %310 : vector<16x32xi1>, vector<16x32xf32>
    %312 = arith.addf %285, %311 : vector<16x32xf32>
    %c16_i32_172 = arith.constant 16 : i32
    %313 = vector.broadcast %c16_i32_172 : i32 to vector<16x32xi32>
    %314 = arith.cmpi sge, %3, %313 : vector<16x32xi32>
    %c24_i32_173 = arith.constant 24 : i32
    %315 = vector.broadcast %c24_i32_173 : i32 to vector<16x32xi32>
    %316 = arith.cmpi slt, %3, %315 : vector<16x32xi32>
    %317 = arith.andi %314, %316 : vector<16x32xi1>
    %cst_174 = arith.constant 0.000000e+00 : f32
    %318 = vector.broadcast %cst_174 : f32 to vector<16x32xf32>
    %319 = arith.select %317, %241, %318 : vector<16x32xi1>, vector<16x32xf32>
    %320 = arith.truncf %319 : vector<16x32xf32> to vector<16x32xbf16>
    %cst_175 = arith.constant dense<0.000000e+00> : vector<16x16xf32>
    %321 = tpu.matmul %320, %256, %cst_175 {dimension_numbers = #tpu.dot_dimension_numbers<[1], [1], [0], [0], [0, 0, 1, 0], [], []>} : vector<16x32xbf16>, vector<16x32xbf16>, vector<16x16xf32> -> vector<16x16xf32>
    %cst_176 = arith.constant 0.353553385 : f32
    %322 = vector.broadcast %cst_176 : f32 to vector<16x16xf32>
    %323 = arith.mulf %321, %322 : vector<16x16xf32>
    %324 = arith.addf %323, %2 : vector<16x16xf32>
    %cst_177 = arith.constant dense<0xFF800000> : vector<16xf32>
    %325 = vector.multi_reduction <maximumf>, %324, %cst_177 [1] : vector<16x16xf32> to vector<16xf32>
    %326 = vector.shape_cast %325 : vector<16xf32> to vector<16x1xf32>
    %327 = vector.broadcast %326 : vector<16x1xf32> to vector<16x16xf32>
    %328 = arith.subf %324, %327 : vector<16x16xf32>
    %329 = math.exp %328 : vector<16x16xf32>
    %cst_178 = arith.constant dense<0.000000e+00> : vector<16xf32>
    %330 = vector.multi_reduction <add>, %329, %cst_178 [1] : vector<16x16xf32> to vector<16xf32>
    %331 = vector.shape_cast %330 : vector<16xf32> to vector<16x1xf32>
    %332 = tpu.reciprocal %331 {approx = true} : vector<16x1xf32> -> vector<16x1xf32>
    %333 = vector.broadcast %332 : vector<16x1xf32> to vector<16x16xf32>
    %334 = arith.mulf %329, %333 : vector<16x16xf32>
    %335 = arith.truncf %334 : vector<16x16xf32> to vector<16x16xbf16>
    %cst_179 = arith.constant dense<0.000000e+00> : vector<16x32xf32>
    %336 = tpu.matmul %335, %257, %cst_179 {dimension_numbers = #tpu.dot_dimension_numbers<[1], [0], [0], [1], [0, 0, 1, 1], [], []>} : vector<16x16xbf16>, vector<16x32xbf16>, vector<16x32xf32> -> vector<16x32xf32>
    %cst_180 = arith.constant 0.000000e+00 : f32
    %337 = vector.broadcast %cst_180 : f32 to vector<16x32xf32>
    %338 = arith.select %317, %336, %337 : vector<16x32xi1>, vector<16x32xf32>
    %339 = arith.addf %312, %338 : vector<16x32xf32>
    %c24_i32_181 = arith.constant 24 : i32
    %340 = vector.broadcast %c24_i32_181 : i32 to vector<16x32xi32>
    %341 = arith.cmpi sge, %3, %340 : vector<16x32xi32>
    %c32_i32_182 = arith.constant 32 : i32
    %342 = vector.broadcast %c32_i32_182 : i32 to vector<16x32xi32>
    %343 = arith.cmpi slt, %3, %342 : vector<16x32xi32>
    %344 = arith.andi %341, %343 : vector<16x32xi1>
    %cst_183 = arith.constant 0.000000e+00 : f32
    %345 = vector.broadcast %cst_183 : f32 to vector<16x32xf32>
    %346 = arith.select %344, %241, %345 : vector<16x32xi1>, vector<16x32xf32>
    %347 = arith.truncf %346 : vector<16x32xf32> to vector<16x32xbf16>
    %cst_184 = arith.constant dense<0.000000e+00> : vector<16x16xf32>
    %348 = tpu.matmul %347, %256, %cst_184 {dimension_numbers = #tpu.dot_dimension_numbers<[1], [1], [0], [0], [0, 0, 1, 0], [], []>} : vector<16x32xbf16>, vector<16x32xbf16>, vector<16x16xf32> -> vector<16x16xf32>
    %cst_185 = arith.constant 0.353553385 : f32
    %349 = vector.broadcast %cst_185 : f32 to vector<16x16xf32>
    %350 = arith.mulf %348, %349 : vector<16x16xf32>
    %351 = arith.addf %350, %2 : vector<16x16xf32>
    %cst_186 = arith.constant dense<0xFF800000> : vector<16xf32>
    %352 = vector.multi_reduction <maximumf>, %351, %cst_186 [1] : vector<16x16xf32> to vector<16xf32>
    %353 = vector.shape_cast %352 : vector<16xf32> to vector<16x1xf32>
    %354 = vector.broadcast %353 : vector<16x1xf32> to vector<16x16xf32>
    %355 = arith.subf %351, %354 : vector<16x16xf32>
    %356 = math.exp %355 : vector<16x16xf32>
    %cst_187 = arith.constant dense<0.000000e+00> : vector<16xf32>
    %357 = vector.multi_reduction <add>, %356, %cst_187 [1] : vector<16x16xf32> to vector<16xf32>
    %358 = vector.shape_cast %357 : vector<16xf32> to vector<16x1xf32>
    %359 = tpu.reciprocal %358 {approx = true} : vector<16x1xf32> -> vector<16x1xf32>
    %360 = vector.broadcast %359 : vector<16x1xf32> to vector<16x16xf32>
    %361 = arith.mulf %356, %360 : vector<16x16xf32>
    %362 = arith.truncf %361 : vector<16x16xf32> to vector<16x16xbf16>
    %cst_188 = arith.constant dense<0.000000e+00> : vector<16x32xf32>
    %363 = tpu.matmul %362, %257, %cst_188 {dimension_numbers = #tpu.dot_dimension_numbers<[1], [0], [0], [1], [0, 0, 1, 1], [], []>} : vector<16x16xbf16>, vector<16x32xbf16>, vector<16x32xf32> -> vector<16x32xf32>
    %cst_189 = arith.constant 0.000000e+00 : f32
    %364 = vector.broadcast %cst_189 : f32 to vector<16x32xf32>
    %365 = arith.select %344, %363, %364 : vector<16x32xi1>, vector<16x32xf32>
    %366 = arith.addf %339, %365 : vector<16x32xf32>
    %367 = arith.truncf %366 : vector<16x32xf32> to vector<16x32xbf16>
    %c0_190 = arith.constant 0 : index
    %c1_191 = arith.constant 1 : index
    %c0_192 = arith.constant 0 : index
    %c0_193 = arith.constant 0 : index
    %368 = vector.load %arg10[%c0_190, %c1_191, %c0_192, %c0_193] : memref<1x2x32x32xbf16, #tpu.memory_space<vmem>>, vector<1x1x32x32xbf16>
    %369 = vector.shape_cast %368 : vector<1x1x32x32xbf16> to vector<32x32xbf16>
    %cst_194 = arith.constant dense<0.000000e+00> : vector<16x32xf32>
    %370 = tpu.matmul %367, %369, %cst_194 {dimension_numbers = #tpu.dot_dimension_numbers<[1], [0], [0], [1], [0, 0, 1, 1], [], []>} : vector<16x32xbf16>, vector<32x32xbf16>, vector<16x32xf32> -> vector<16x32xf32>
    %c0_195 = arith.constant 0 : index
    %c1_196 = arith.constant 1 : index
    %c0_197 = arith.constant 0 : index
    %c0_198 = arith.constant 0 : index
    %371 = vector.load %arg11[%c0_195, %c1_196, %c0_197, %c0_198] : memref<1x2x1x32xf32, #tpu.memory_space<vmem>>, vector<1x1x1x32xf32>
    %372 = vector.shape_cast %371 : vector<1x1x1x32xf32> to vector<1x32xf32>
    %373 = vector.broadcast %372 : vector<1x32xf32> to vector<16x32xf32>
    %374 = arith.addf %370, %373 : vector<16x32xf32>
    %c0_199 = arith.constant 0 : index
    %c1_200 = arith.constant 1 : index
    %c0_201 = arith.constant 0 : index
    %c0_202 = arith.constant 0 : index
    %375 = vector.load %arg20[%c0_199, %c1_200, %c0_201, %c0_202] : memref<1x2x1x1xf32, #tpu.memory_space<vmem>>, vector<1x1x1x1xf32>
    %376 = vector.shape_cast %375 : vector<1x1x1x1xf32> to vector<1x1xf32>
    %377 = vector.broadcast %376 : vector<1x1xf32> to vector<16x32xf32>
    %378 = arith.mulf %377, %374 : vector<16x32xf32>
    %379 = arith.addf %232, %378 : vector<16x32xf32>
    %c0_203 = arith.constant 0 : index
    %c1_204 = arith.constant 1 : index
    %c0_205 = arith.constant 0 : index
    %c0_206 = arith.constant 0 : index
    %380 = vector.load %arg12[%c0_203, %c1_204, %c0_205, %c0_206] : memref<1x2x1x32xf32, #tpu.memory_space<vmem>>, vector<1x1x1x32xf32>
    %381 = vector.shape_cast %380 : vector<1x1x1x32xf32> to vector<1x32xf32>
    %c0_207 = arith.constant 0 : index
    %c1_208 = arith.constant 1 : index
    %c0_209 = arith.constant 0 : index
    %c0_210 = arith.constant 0 : index
    %382 = vector.load %arg13[%c0_207, %c1_208, %c0_209, %c0_210] : memref<1x2x1x32xf32, #tpu.memory_space<vmem>>, vector<1x1x1x32xf32>
    %383 = vector.shape_cast %382 : vector<1x1x1x32xf32> to vector<1x32xf32>
    %cst_211 = arith.constant dense<0.000000e+00> : vector<16xf32>
    %384 = vector.multi_reduction <add>, %379, %cst_211 [1] : vector<16x32xf32> to vector<16xf32>
    %385 = vector.shape_cast %384 : vector<16xf32> to vector<16x1xf32>
    %cst_212 = arith.constant 3.200000e+01 : f32
    %386 = vector.broadcast %cst_212 : f32 to vector<16x1xf32>
    %387 = arith.divf %385, %386 : vector<16x1xf32>
    %388 = vector.broadcast %387 : vector<16x1xf32> to vector<16x32xf32>
    %389 = arith.subf %379, %388 : vector<16x32xf32>
    %390 = arith.mulf %389, %389 : vector<16x32xf32>
    %cst_213 = arith.constant dense<0.000000e+00> : vector<16xf32>
    %391 = vector.multi_reduction <add>, %390, %cst_213 [1] : vector<16x32xf32> to vector<16xf32>
    %392 = vector.shape_cast %391 : vector<16xf32> to vector<16x1xf32>
    %cst_214 = arith.constant 3.200000e+01 : f32
    %393 = vector.broadcast %cst_214 : f32 to vector<16x1xf32>
    %394 = arith.divf %392, %393 : vector<16x1xf32>
    %cst_215 = arith.constant 9.99999974E-6 : f32
    %395 = vector.broadcast %cst_215 : f32 to vector<16x1xf32>
    %396 = arith.addf %394, %395 : vector<16x1xf32>
    %397 = math.rsqrt %396 : vector<16x1xf32>
    %398 = vector.broadcast %397 : vector<16x1xf32> to vector<16x32xf32>
    %399 = arith.mulf %389, %398 : vector<16x32xf32>
    %400 = vector.broadcast %381 : vector<1x32xf32> to vector<16x32xf32>
    %401 = arith.mulf %399, %400 : vector<16x32xf32>
    %402 = vector.broadcast %383 : vector<1x32xf32> to vector<16x32xf32>
    %403 = arith.addf %401, %402 : vector<16x32xf32>
    %404 = arith.truncf %403 : vector<16x32xf32> to vector<16x32xbf16>
    %c0_216 = arith.constant 0 : index
    %c1_217 = arith.constant 1 : index
    %c0_218 = arith.constant 0 : index
    %c0_219 = arith.constant 0 : index
    %405 = vector.load %arg14[%c0_216, %c1_217, %c0_218, %c0_219] : memref<1x2x32x64xbf16, #tpu.memory_space<vmem>>, vector<1x1x32x64xbf16>
    %406 = vector.shape_cast %405 : vector<1x1x32x64xbf16> to vector<32x64xbf16>
    %cst_220 = arith.constant dense<0.000000e+00> : vector<16x64xf32>
    %407 = tpu.matmul %404, %406, %cst_220 {dimension_numbers = #tpu.dot_dimension_numbers<[1], [0], [0], [1], [0, 0, 1, 1], [], []>} : vector<16x32xbf16>, vector<32x64xbf16>, vector<16x64xf32> -> vector<16x64xf32>
    %c0_221 = arith.constant 0 : index
    %c1_222 = arith.constant 1 : index
    %c0_223 = arith.constant 0 : index
    %c0_224 = arith.constant 0 : index
    %408 = vector.load %arg15[%c0_221, %c1_222, %c0_223, %c0_224] : memref<1x2x1x64xf32, #tpu.memory_space<vmem>>, vector<1x1x1x64xf32>
    %409 = vector.shape_cast %408 : vector<1x1x1x64xf32> to vector<1x64xf32>
    %410 = vector.broadcast %409 : vector<1x64xf32> to vector<16x64xf32>
    %411 = arith.addf %407, %410 : vector<16x64xf32>
    %412 = arith.mulf %411, %411 : vector<16x64xf32>
    %413 = arith.mulf %411, %412 : vector<16x64xf32>
    %cst_225 = arith.constant 4.471500e-02 : f32
    %414 = vector.broadcast %cst_225 : f32 to vector<16x64xf32>
    %415 = arith.mulf %414, %413 : vector<16x64xf32>
    %416 = arith.addf %411, %415 : vector<16x64xf32>
    %cst_226 = arith.constant 0.797884583 : f32
    %417 = vector.broadcast %cst_226 : f32 to vector<16x64xf32>
    %418 = arith.mulf %417, %416 : vector<16x64xf32>
    %419 = math.tanh %418 : vector<16x64xf32>
    %cst_227 = arith.constant 1.000000e+00 : f32
    %420 = vector.broadcast %cst_227 : f32 to vector<16x64xf32>
    %421 = arith.addf %420, %419 : vector<16x64xf32>
    %cst_228 = arith.constant 5.000000e-01 : f32
    %422 = vector.broadcast %cst_228 : f32 to vector<16x64xf32>
    %423 = arith.mulf %422, %421 : vector<16x64xf32>
    %424 = arith.mulf %411, %423 : vector<16x64xf32>
    %425 = arith.truncf %424 : vector<16x64xf32> to vector<16x64xbf16>
    %c0_229 = arith.constant 0 : index
    %c1_230 = arith.constant 1 : index
    %c0_231 = arith.constant 0 : index
    %c0_232 = arith.constant 0 : index
    %426 = vector.load %arg16[%c0_229, %c1_230, %c0_231, %c0_232] : memref<1x2x64x32xbf16, #tpu.memory_space<vmem>>, vector<1x1x64x32xbf16>
    %427 = vector.shape_cast %426 : vector<1x1x64x32xbf16> to vector<64x32xbf16>
    %cst_233 = arith.constant dense<0.000000e+00> : vector<16x32xf32>
    %428 = tpu.matmul %425, %427, %cst_233 {dimension_numbers = #tpu.dot_dimension_numbers<[1], [0], [0], [1], [0, 0, 1, 1], [], []>} : vector<16x64xbf16>, vector<64x32xbf16>, vector<16x32xf32> -> vector<16x32xf32>
    %c0_234 = arith.constant 0 : index
    %c1_235 = arith.constant 1 : index
    %c0_236 = arith.constant 0 : index
    %c0_237 = arith.constant 0 : index
    %429 = vector.load %arg17[%c0_234, %c1_235, %c0_236, %c0_237] : memref<1x2x1x32xf32, #tpu.memory_space<vmem>>, vector<1x1x1x32xf32>
    %430 = vector.shape_cast %429 : vector<1x1x1x32xf32> to vector<1x32xf32>
    %431 = vector.broadcast %430 : vector<1x32xf32> to vector<16x32xf32>
    %432 = arith.addf %428, %431 : vector<16x32xf32>
    %c0_238 = arith.constant 0 : index
    %c1_239 = arith.constant 1 : index
    %c0_240 = arith.constant 0 : index
    %c0_241 = arith.constant 0 : index
    %433 = vector.load %arg21[%c0_238, %c1_239, %c0_240, %c0_241] : memref<1x2x1x1xf32, #tpu.memory_space<vmem>>, vector<1x1x1x1xf32>
    %434 = vector.shape_cast %433 : vector<1x1x1x1xf32> to vector<1x1xf32>
    %435 = vector.broadcast %434 : vector<1x1xf32> to vector<16x32xf32>
    %436 = arith.mulf %435, %432 : vector<16x32xf32>
    %437 = arith.addf %403, %436 : vector<16x32xf32>
    %c0_242 = arith.constant 0 : index
    %c1_243 = arith.constant 1 : index
    %c0_244 = arith.constant 0 : index
    %c0_245 = arith.constant 0 : index
    %438 = vector.load %arg18[%c0_242, %c1_243, %c0_244, %c0_245] : memref<1x2x1x32xf32, #tpu.memory_space<vmem>>, vector<1x1x1x32xf32>
    %439 = vector.shape_cast %438 : vector<1x1x1x32xf32> to vector<1x32xf32>
    %c0_246 = arith.constant 0 : index
    %c1_247 = arith.constant 1 : index
    %c0_248 = arith.constant 0 : index
    %c0_249 = arith.constant 0 : index
    %440 = vector.load %arg19[%c0_246, %c1_247, %c0_248, %c0_249] : memref<1x2x1x32xf32, #tpu.memory_space<vmem>>, vector<1x1x1x32xf32>
    %441 = vector.shape_cast %440 : vector<1x1x1x32xf32> to vector<1x32xf32>
    %cst_250 = arith.constant dense<0.000000e+00> : vector<16xf32>
    %442 = vector.multi_reduction <add>, %437, %cst_250 [1] : vector<16x32xf32> to vector<16xf32>
    %443 = vector.shape_cast %442 : vector<16xf32> to vector<16x1xf32>
    %cst_251 = arith.constant 3.200000e+01 : f32
    %444 = vector.broadcast %cst_251 : f32 to vector<16x1xf32>
    %445 = arith.divf %443, %444 : vector<16x1xf32>
    %446 = vector.broadcast %445 : vector<16x1xf32> to vector<16x32xf32>
    %447 = arith.subf %437, %446 : vector<16x32xf32>
    %448 = arith.mulf %447, %447 : vector<16x32xf32>
    %cst_252 = arith.constant dense<0.000000e+00> : vector<16xf32>
    %449 = vector.multi_reduction <add>, %448, %cst_252 [1] : vector<16x32xf32> to vector<16xf32>
    %450 = vector.shape_cast %449 : vector<16xf32> to vector<16x1xf32>
    %cst_253 = arith.constant 3.200000e+01 : f32
    %451 = vector.broadcast %cst_253 : f32 to vector<16x1xf32>
    %452 = arith.divf %450, %451 : vector<16x1xf32>
    %cst_254 = arith.constant 9.99999974E-6 : f32
    %453 = vector.broadcast %cst_254 : f32 to vector<16x1xf32>
    %454 = arith.addf %452, %453 : vector<16x1xf32>
    %455 = math.rsqrt %454 : vector<16x1xf32>
    %456 = vector.broadcast %455 : vector<16x1xf32> to vector<16x32xf32>
    %457 = arith.mulf %447, %456 : vector<16x32xf32>
    %458 = vector.broadcast %439 : vector<1x32xf32> to vector<16x32xf32>
    %459 = arith.mulf %457, %458 : vector<16x32xf32>
    %460 = vector.broadcast %441 : vector<1x32xf32> to vector<16x32xf32>
    %461 = arith.addf %459, %460 : vector<16x32xf32>
    %c0_255 = arith.constant 0 : index
    %c0_256 = arith.constant 0 : index
    %c0_257 = arith.constant 0 : index
    %462 = vector.load %arg22[%c0_255, %c0_256, %c0_257] : memref<1x16x32xf32, #tpu.memory_space<vmem>>, vector<1x16x32xf32>
    %463 = vector.shape_cast %462 : vector<1x16x32xf32> to vector<16x32xf32>
    %464 = vector.shape_cast %461 : vector<16x32xf32> to vector<1x16x32xf32>
    tpu.vector_store %arg22[%c0_255, %c0_256, %c0_257], %464 {strides = array<i32>} : memref<1x16x32xf32, #tpu.memory_space<vmem>>, vector<1x16x32xf32>,
    return
  }
  func.func @transform_0(%arg0: i32) -> (i32, i32, i32) {
    %c0_i32 = arith.constant 0 : i32
    %c0_i32_0 = arith.constant 0 : i32
    %c0_i32_1 = arith.constant 0 : i32
    return %arg0, %c0_i32, %c0_i32_0 : i32, i32, i32
  }
  func.func @transform_1(%arg0: i32) -> (i32, i32, i32) {
    %c0_i32 = arith.constant 0 : i32
    %c0_i32_0 = arith.constant 0 : i32
    %c0_i32_1 = arith.constant 0 : i32
    return %arg0, %c0_i32, %c0_i32_0 : i32, i32, i32
  }
  func.func @transform_2(%arg0: i32) -> (i32, i32) {
    %c0_i32 = arith.constant 0 : i32
    %c0_i32_0 = arith.constant 0 : i32
    %c0_i32_1 = arith.constant 0 : i32
    return %c0_i32, %c0_i32_0 : i32, i32
  }
  func.func @transform_3(%arg0: i32) -> (i32, i32, i32, i32) {
    %c0_i32 = arith.constant 0 : i32
    %c0_i32_0 = arith.constant 0 : i32
    %c0_i32_1 = arith.constant 0 : i32
    %c0_i32_2 = arith.constant 0 : i32
    return %arg0, %c0_i32, %c0_i32_0, %c0_i32_1 : i32, i32, i32, i32
  }
  func.func @transform_4(%arg0: i32) -> (i32, i32, i32, i32) {
    %c0_i32 = arith.constant 0 : i32
    %c0_i32_0 = arith.constant 0 : i32
    %c0_i32_1 = arith.constant 0 : i32
    %c0_i32_2 = arith.constant 0 : i32
    return %arg0, %c0_i32, %c0_i32_0, %c0_i32_1 : i32, i32, i32, i32
  }
  func.func @transform_5(%arg0: i32) -> (i32, i32, i32, i32) {
    %c0_i32 = arith.constant 0 : i32
    %c0_i32_0 = arith.constant 0 : i32
    %c0_i32_1 = arith.constant 0 : i32
    %c0_i32_2 = arith.constant 0 : i32
    return %arg0, %c0_i32, %c0_i32_0, %c0_i32_1 : i32, i32, i32, i32
  }
  func.func @transform_6(%arg0: i32) -> (i32, i32, i32, i32) {
    %c0_i32 = arith.constant 0 : i32
    %c0_i32_0 = arith.constant 0 : i32
    %c0_i32_1 = arith.constant 0 : i32
    %c0_i32_2 = arith.constant 0 : i32
    return %arg0, %c0_i32, %c0_i32_0, %c0_i32_1 : i32, i32, i32, i32
  }
  func.func @transform_7(%arg0: i32) -> (i32, i32, i32, i32) {
    %c0_i32 = arith.constant 0 : i32
    %c0_i32_0 = arith.constant 0 : i32
    %c0_i32_1 = arith.constant 0 : i32
    %c0_i32_2 = arith.constant 0 : i32
    return %arg0, %c0_i32, %c0_i32_0, %c0_i32_1 : i32, i32, i32, i32
  }
  func.func @transform_8(%arg0: i32) -> (i32, i32, i32, i32) {
    %c0_i32 = arith.constant 0 : i32
    %c0_i32_0 = arith.constant 0 : i32
    %c0_i32_1 = arith.constant 0 : i32
    %c0_i32_2 = arith.constant 0 : i32
    return %arg0, %c0_i32, %c0_i32_0, %c0_i32_1 : i32, i32, i32, i32
  }
  func.func @transform_9(%arg0: i32) -> (i32, i32, i32, i32) {
    %c0_i32 = arith.constant 0 : i32
    %c0_i32_0 = arith.constant 0 : i32
    %c0_i32_1 = arith.constant 0 : i32
    %c0_i32_2 = arith.constant 0 : i32
    return %arg0, %c0_i32, %c0_i32_0, %c0_i32_1 : i32, i32, i32, i32
  }
  func.func @transform_10(%arg0: i32) -> (i32, i32, i32, i32) {
    %c0_i32 = arith.constant 0 : i32
    %c0_i32_0 = arith.constant 0 : i32
    %c0_i32_1 = arith.constant 0 : i32
    %c0_i32_2 = arith.constant 0 : i32
    return %arg0, %c0_i32, %c0_i32_0, %c0_i32_1 : i32, i32, i32, i32
  }
  func.func @transform_11(%arg0: i32) -> (i32, i32, i32, i32) {
    %c0_i32 = arith.constant 0 : i32
    %c0_i32_0 = arith.constant 0 : i32
    %c0_i32_1 = arith.constant 0 : i32
    %c0_i32_2 = arith.constant 0 : i32
    return %arg0, %c0_i32, %c0_i32_0, %c0_i32_1 : i32, i32, i32, i32
  }
  func.func @transform_12(%arg0: i32) -> (i32, i32, i32, i32) {
    %c0_i32 = arith.constant 0 : i32
    %c0_i32_0 = arith.constant 0 : i32
    %c0_i32_1 = arith.constant 0 : i32
    %c0_i32_2 = arith.constant 0 : i32
    return %arg0, %c0_i32, %c0_i32_0, %c0_i32_1 : i32, i32, i32, i32
  }
  func.func @transform_13(%arg0: i32) -> (i32, i32, i32, i32) {
    %c0_i32 = arith.constant 0 : i32
    %c0_i32_0 = arith.constant 0 : i32
    %c0_i32_1 = arith.constant 0 : i32
    %c0_i32_2 = arith.constant 0 : i32
    return %arg0, %c0_i32, %c0_i32_0, %c0_i32_1 : i32, i32, i32, i32
  }
  func.func @transform_14(%arg0: i32) -> (i32, i32, i32, i32) {
    %c0_i32 = arith.constant 0 : i32
    %c0_i32_0 = arith.constant 0 : i32
    %c0_i32_1 = arith.constant 0 : i32
    %c0_i32_2 = arith.constant 0 : i32
    return %arg0, %c0_i32, %c0_i32_0, %c0_i32_1 : i32, i32, i32, i32
  }
  func.func @transform_15(%arg0: i32) -> (i32, i32, i32, i32) {
    %c0_i32 = arith.constant 0 : i32
    %c0_i32_0 = arith.constant 0 : i32
    %c0_i32_1 = arith.constant 0 : i32
    %c0_i32_2 = arith.constant 0 : i32
    return %arg0, %c0_i32, %c0_i32_0, %c0_i32_1 : i32, i32, i32, i32
  }
  func.func @transform_16(%arg0: i32) -> (i32, i32, i32, i32) {
    %c0_i32 = arith.constant 0 : i32
    %c0_i32_0 = arith.constant 0 : i32
    %c0_i32_1 = arith.constant 0 : i32
    %c0_i32_2 = arith.constant 0 : i32
    return %arg0, %c0_i32, %c0_i32_0, %c0_i32_1 : i32, i32, i32, i32
  }
  func.func @transform_17(%arg0: i32) -> (i32, i32, i32, i32) {
    %c0_i32 = arith.constant 0 : i32
    %c0_i32_0 = arith.constant 0 : i32
    %c0_i32_1 = arith.constant 0 : i32
    %c0_i32_2 = arith.constant 0 : i32
    return %arg0, %c0_i32, %c0_i32_0, %c0_i32_1 : i32, i32, i32, i32
  }
  func.func @transform_18(%arg0: i32) -> (i32, i32, i32, i32) {
    %c0_i32 = arith.constant 0 : i32
    %c0_i32_0 = arith.constant 0 : i32
    %c0_i32_1 = arith.constant 0 : i32
    %c0_i32_2 = arith.constant 0 : i32
    return %arg0, %c0_i32, %c0_i32_0, %c0_i32_1 : i32, i32, i32, i32
  }
  func.func @transform_19(%arg0: i32) -> (i32, i32, i32, i32) {
    %c0_i32 = arith.constant 0 : i32
    %c0_i32_0 = arith.constant 0 : i32
    %c0_i32_1 = arith.constant 0 : i32
    %c0_i32_2 = arith.constant 0 : i32
    return %arg0, %c0_i32, %c0_i32_0, %c0_i32_1 : i32, i32, i32, i32
  }
  func.func @transform_20(%arg0: i32) -> (i32, i32, i32, i32) {
    %c0_i32 = arith.constant 0 : i32
    %c0_i32_0 = arith.constant 0 : i32
    %c0_i32_1 = arith.constant 0 : i32
    %c0_i32_2 = arith.constant 0 : i32
    return %arg0, %c0_i32, %c0_i32_0, %c0_i32_1 : i32, i32, i32, i32
  }
  func.func @transform_21(%arg0: i32) -> (i32, i32, i32) {
    %c0_i32 = arith.constant 0 : i32
    %c0_i32_0 = arith.constant 0 : i32
    %c0_i32_1 = arith.constant 0 : i32
    return %arg0, %c0_i32, %c0_i32_0 : i32, i32, i32
  }
}

module attributes {stable_mosaic.version = 11 : i64} {
  func.func @_gate_pred_kernel(%arg0: i32, %arg1: memref<16x32xf32, #tpu.memory_space<vmem>>, %arg2: memref<16x32xf32, #tpu.memory_space<vmem>>, %arg3: memref<32x32xbf16, #tpu.memory_space<vmem>>, %arg4: memref<32x32xbf16, #tpu.memory_space<vmem>>, %arg5: memref<1x32xf32, #tpu.memory_space<vmem>>, %arg6: memref<32x128xbf16, #tpu.memory_space<vmem>>, %arg7: memref<1x128xf32, #tpu.memory_space<vmem>>, %arg8: memref<16x128xf32, #tpu.memory_space<vmem>>) attributes {dimension_semantics = [#tpu.dimension_semantics<arbitrary>], iteration_bounds = array<i64: 1>, scalar_prefetch = 0 : i64, scratch_operands = 0 : i64, tpu.core_type = #tpu.core_type<tc>, window_params = [{pipeline_mode = #tpu.pipeline_mode<synchronous>, transform_indices = @transform_0, window_bounds = array<i64: 16, 32>}, {pipeline_mode = #tpu.pipeline_mode<synchronous>, transform_indices = @transform_1, window_bounds = array<i64: 16, 32>}, {pipeline_mode = #tpu.pipeline_mode<synchronous>, transform_indices = @transform_2, window_bounds = array<i64: 32, 32>}, {pipeline_mode = #tpu.pipeline_mode<synchronous>, transform_indices = @transform_3, window_bounds = array<i64: 32, 32>}, {pipeline_mode = #tpu.pipeline_mode<synchronous>, transform_indices = @transform_4, window_bounds = array<i64: 1, 32>}, {pipeline_mode = #tpu.pipeline_mode<synchronous>, transform_indices = @transform_5, window_bounds = array<i64: 32, 128>}, {pipeline_mode = #tpu.pipeline_mode<synchronous>, transform_indices = @transform_6, window_bounds = array<i64: 1, 128>}, {pipeline_mode = #tpu.pipeline_mode<synchronous>, transform_indices = @transform_7, window_bounds = array<i64: 16, 128>}]} {
    %c0 = arith.constant 0 : index
    %c0_0 = arith.constant 0 : index
    %0 = vector.load %arg1[%c0, %c0_0] : memref<16x32xf32, #tpu.memory_space<vmem>>, vector<16x32xf32>
    %c0_1 = arith.constant 0 : index
    %c0_2 = arith.constant 0 : index
    %1 = vector.load %arg2[%c0_1, %c0_2] : memref<16x32xf32, #tpu.memory_space<vmem>>, vector<16x32xf32>
    %2 = arith.truncf %0 : vector<16x32xf32> to vector<16x32xbf16>
    %c0_3 = arith.constant 0 : index
    %c0_4 = arith.constant 0 : index
    %3 = vector.load %arg3[%c0_3, %c0_4] : memref<32x32xbf16, #tpu.memory_space<vmem>>, vector<32x32xbf16>
    %cst = arith.constant dense<0.000000e+00> : vector<16x32xf32>
    %4 = tpu.matmul %2, %3, %cst {dimension_numbers = #tpu.dot_dimension_numbers<[1], [0], [0], [1], [0, 0, 1, 1], [], []>} : vector<16x32xbf16>, vector<32x32xbf16>, vector<16x32xf32> -> vector<16x32xf32>
    %5 = arith.truncf %1 : vector<16x32xf32> to vector<16x32xbf16>
    %c0_5 = arith.constant 0 : index
    %c0_6 = arith.constant 0 : index
    %6 = vector.load %arg4[%c0_5, %c0_6] : memref<32x32xbf16, #tpu.memory_space<vmem>>, vector<32x32xbf16>
    %cst_7 = arith.constant dense<0.000000e+00> : vector<16x32xf32>
    %7 = tpu.matmul %5, %6, %cst_7 {dimension_numbers = #tpu.dot_dimension_numbers<[1], [0], [0], [1], [0, 0, 1, 1], [], []>} : vector<16x32xbf16>, vector<32x32xbf16>, vector<16x32xf32> -> vector<16x32xf32>
    %8 = arith.addf %4, %7 : vector<16x32xf32>
    %c0_8 = arith.constant 0 : index
    %c0_9 = arith.constant 0 : index
    %9 = vector.load %arg5[%c0_8, %c0_9] : memref<1x32xf32, #tpu.memory_space<vmem>>, vector<1x32xf32>
    %10 = vector.broadcast %9 : vector<1x32xf32> to vector<16x32xf32>
    %11 = arith.addf %8, %10 : vector<16x32xf32>
    %12 = arith.negf %11 : vector<16x32xf32>
    %13 = math.exp %12 : vector<16x32xf32>
    %cst_10 = arith.constant 1.000000e+00 : f32
    %14 = vector.broadcast %cst_10 : f32 to vector<16x32xf32>
    %15 = arith.addf %14, %13 : vector<16x32xf32>
    %16 = arith.divf %14, %15 : vector<16x32xf32>
    %17 = arith.mulf %16, %0 : vector<16x32xf32>
    %cst_11 = arith.constant 1.000000e+00 : f32
    %18 = vector.broadcast %cst_11 : f32 to vector<16x32xf32>
    %19 = arith.subf %18, %16 : vector<16x32xf32>
    %20 = arith.mulf %19, %1 : vector<16x32xf32>
    %21 = arith.addf %17, %20 : vector<16x32xf32>
    %22 = arith.truncf %21 : vector<16x32xf32> to vector<16x32xbf16>
    %c0_12 = arith.constant 0 : index
    %c0_13 = arith.constant 0 : index
    %23 = vector.load %arg6[%c0_12, %c0_13] : memref<32x128xbf16, #tpu.memory_space<vmem>>, vector<32x128xbf16>
    %cst_14 = arith.constant dense<0.000000e+00> : vector<16x128xf32>
    %24 = tpu.matmul %22, %23, %cst_14 {dimension_numbers = #tpu.dot_dimension_numbers<[1], [0], [0], [1], [0, 0, 1, 1], [], []>} : vector<16x32xbf16>, vector<32x128xbf16>, vector<16x128xf32> -> vector<16x128xf32>
    %c0_15 = arith.constant 0 : index
    %c0_16 = arith.constant 0 : index
    %25 = vector.load %arg7[%c0_15, %c0_16] : memref<1x128xf32, #tpu.memory_space<vmem>>, vector<1x128xf32>
    %26 = vector.broadcast %25 : vector<1x128xf32> to vector<16x128xf32>
    %27 = arith.addf %24, %26 : vector<16x128xf32>
    %c0_17 = arith.constant 0 : index
    %c0_18 = arith.constant 0 : index
    %28 = vector.load %arg8[%c0_17, %c0_18] : memref<16x128xf32, #tpu.memory_space<vmem>>, vector<16x128xf32>
    tpu.vector_store %arg8[%c0_17, %c0_18], %27 {strides = array<i32>} : memref<16x128xf32, #tpu.memory_space<vmem>>, vector<16x128xf32>,
    return
  }
  func.func @transform_0(%arg0: i32) -> (i32, i32) {
    %c0_i32 = arith.constant 0 : i32
    %c0_i32_0 = arith.constant 0 : i32
    %c0_i32_1 = arith.constant 0 : i32
    return %c0_i32, %c0_i32_0 : i32, i32
  }
  func.func @transform_1(%arg0: i32) -> (i32, i32) {
    %c0_i32 = arith.constant 0 : i32
    %c0_i32_0 = arith.constant 0 : i32
    %c0_i32_1 = arith.constant 0 : i32
    return %c0_i32, %c0_i32_0 : i32, i32
  }
  func.func @transform_2(%arg0: i32) -> (i32, i32) {
    %c0_i32 = arith.constant 0 : i32
    %c0_i32_0 = arith.constant 0 : i32
    %c0_i32_1 = arith.constant 0 : i32
    return %c0_i32, %c0_i32_0 : i32, i32
  }
  func.func @transform_3(%arg0: i32) -> (i32, i32) {
    %c0_i32 = arith.constant 0 : i32
    %c0_i32_0 = arith.constant 0 : i32
    %c0_i32_1 = arith.constant 0 : i32
    return %c0_i32, %c0_i32_0 : i32, i32
  }
  func.func @transform_4(%arg0: i32) -> (i32, i32) {
    %c0_i32 = arith.constant 0 : i32
    %c0_i32_0 = arith.constant 0 : i32
    %c0_i32_1 = arith.constant 0 : i32
    return %c0_i32, %c0_i32_0 : i32, i32
  }
  func.func @transform_5(%arg0: i32) -> (i32, i32) {
    %c0_i32 = arith.constant 0 : i32
    %c0_i32_0 = arith.constant 0 : i32
    %c0_i32_1 = arith.constant 0 : i32
    return %c0_i32, %c0_i32_0 : i32, i32
  }
  func.func @transform_6(%arg0: i32) -> (i32, i32) {
    %c0_i32 = arith.constant 0 : i32
    %c0_i32_0 = arith.constant 0 : i32
    %c0_i32_1 = arith.constant 0 : i32
    return %c0_i32, %c0_i32_0 : i32, i32
  }
  func.func @transform_7(%arg0: i32) -> (i32, i32) {
    %c0_i32 = arith.constant 0 : i32
    %c0_i32_0 = arith.constant 0 : i32
    %c0_i32_1 = arith.constant 0 : i32
    return %c0_i32, %c0_i32_0 : i32, i32
  }
}

module attributes {stable_mosaic.version = 11 : i64} {
  func.func @_tower_kernel(%arg0: i32, %arg1: memref<1x16x32xf32, #tpu.memory_space<vmem>>, %arg2: memref<1x16x32xf32, #tpu.memory_space<vmem>>, %arg3: memref<16x16xf32, #tpu.memory_space<vmem>>, %arg4: memref<1x1x32x32xbf16, #tpu.memory_space<vmem>>, %arg5: memref<1x1x1x32xf32, #tpu.memory_space<vmem>>, %arg6: memref<1x1x32x32xbf16, #tpu.memory_space<vmem>>, %arg7: memref<1x1x1x32xf32, #tpu.memory_space<vmem>>, %arg8: memref<1x1x32x32xbf16, #tpu.memory_space<vmem>>, %arg9: memref<1x1x1x32xf32, #tpu.memory_space<vmem>>, %arg10: memref<1x1x32x32xbf16, #tpu.memory_space<vmem>>, %arg11: memref<1x1x1x32xf32, #tpu.memory_space<vmem>>, %arg12: memref<1x1x1x32xf32, #tpu.memory_space<vmem>>, %arg13: memref<1x1x1x32xf32, #tpu.memory_space<vmem>>, %arg14: memref<1x1x32x64xbf16, #tpu.memory_space<vmem>>, %arg15: memref<1x1x1x64xf32, #tpu.memory_space<vmem>>, %arg16: memref<1x1x64x32xbf16, #tpu.memory_space<vmem>>, %arg17: memref<1x1x1x32xf32, #tpu.memory_space<vmem>>, %arg18: memref<1x1x1x32xf32, #tpu.memory_space<vmem>>, %arg19: memref<1x1x1x32xf32, #tpu.memory_space<vmem>>, %arg20: memref<1x1x1x1xf32, #tpu.memory_space<vmem>>, %arg21: memref<1x1x1x1xf32, #tpu.memory_space<vmem>>, %arg22: memref<1x16x32xf32, #tpu.memory_space<vmem>>) attributes {dimension_semantics = [#tpu.dimension_semantics<parallel>], iteration_bounds = array<i64: 2>, scalar_prefetch = 0 : i64, scratch_operands = 0 : i64, tpu.core_type = #tpu.core_type<tc>, window_params = [{transform_indices = @transform_0, window_bounds = array<i64: 1, 16, 32>}, {transform_indices = @transform_1, window_bounds = array<i64: 1, 16, 32>}, {pipeline_mode = #tpu.pipeline_mode<synchronous>, transform_indices = @transform_2, window_bounds = array<i64: 16, 16>}, {transform_indices = @transform_3, window_bounds = array<i64: 1, 1, 32, 32>}, {transform_indices = @transform_4, window_bounds = array<i64: 1, 1, 1, 32>}, {transform_indices = @transform_5, window_bounds = array<i64: 1, 1, 32, 32>}, {transform_indices = @transform_6, window_bounds = array<i64: 1, 1, 1, 32>}, {transform_indices = @transform_7, window_bounds = array<i64: 1, 1, 32, 32>}, {transform_indices = @transform_8, window_bounds = array<i64: 1, 1, 1, 32>}, {transform_indices = @transform_9, window_bounds = array<i64: 1, 1, 32, 32>}, {transform_indices = @transform_10, window_bounds = array<i64: 1, 1, 1, 32>}, {transform_indices = @transform_11, window_bounds = array<i64: 1, 1, 1, 32>}, {transform_indices = @transform_12, window_bounds = array<i64: 1, 1, 1, 32>}, {transform_indices = @transform_13, window_bounds = array<i64: 1, 1, 32, 64>}, {transform_indices = @transform_14, window_bounds = array<i64: 1, 1, 1, 64>}, {transform_indices = @transform_15, window_bounds = array<i64: 1, 1, 64, 32>}, {transform_indices = @transform_16, window_bounds = array<i64: 1, 1, 1, 32>}, {transform_indices = @transform_17, window_bounds = array<i64: 1, 1, 1, 32>}, {transform_indices = @transform_18, window_bounds = array<i64: 1, 1, 1, 32>}, {transform_indices = @transform_19, window_bounds = array<i64: 1, 1, 1, 1>}, {transform_indices = @transform_20, window_bounds = array<i64: 1, 1, 1, 1>}, {transform_indices = @transform_21, window_bounds = array<i64: 1, 16, 32>}]} {
    %c0 = arith.constant 0 : index
    %c0_0 = arith.constant 0 : index
    %c0_1 = arith.constant 0 : index
    %0 = vector.load %arg1[%c0, %c0_0, %c0_1] : memref<1x16x32xf32, #tpu.memory_space<vmem>>, vector<1x16x32xf32>
    %1 = vector.shape_cast %0 : vector<1x16x32xf32> to vector<16x32xf32>
    %c0_2 = arith.constant 0 : index
    %c0_3 = arith.constant 0 : index
    %c0_4 = arith.constant 0 : index
    %2 = vector.load %arg2[%c0_2, %c0_3, %c0_4] : memref<1x16x32xf32, #tpu.memory_space<vmem>>, vector<1x16x32xf32>
    %3 = vector.shape_cast %2 : vector<1x16x32xf32> to vector<16x32xf32>
    %c0_5 = arith.constant 0 : index
    %c0_6 = arith.constant 0 : index
    %4 = vector.load %arg3[%c0_5, %c0_6] : memref<16x16xf32, #tpu.memory_space<vmem>>, vector<16x16xf32>
    %5 = tpu.iota {dimensions = array<i32: 1>} : vector<16x32xi32>
    %6 = arith.truncf %1 : vector<16x32xf32> to vector<16x32xbf16>
    %7 = arith.truncf %3 : vector<16x32xf32> to vector<16x32xbf16>
    %c0_7 = arith.constant 0 : index
    %c0_8 = arith.constant 0 : index
    %c0_9 = arith.constant 0 : index
    %c0_10 = arith.constant 0 : index
    %8 = vector.load %arg4[%c0_7, %c0_8, %c0_9, %c0_10] : memref<1x1x32x32xbf16, #tpu.memory_space<vmem>>, vector<1x1x32x32xbf16>
    %9 = vector.shape_cast %8 : vector<1x1x32x32xbf16> to vector<32x32xbf16>
    %cst = arith.constant dense<0.000000e+00> : vector<16x32xf32>
    %10 = tpu.matmul %6, %9, %cst {dimension_numbers = #tpu.dot_dimension_numbers<[1], [0], [0], [1], [0, 0, 1, 1], [], []>} : vector<16x32xbf16>, vector<32x32xbf16>, vector<16x32xf32> -> vector<16x32xf32>
    %c0_11 = arith.constant 0 : index
    %c0_12 = arith.constant 0 : index
    %c0_13 = arith.constant 0 : index
    %c0_14 = arith.constant 0 : index
    %11 = vector.load %arg5[%c0_11, %c0_12, %c0_13, %c0_14] : memref<1x1x1x32xf32, #tpu.memory_space<vmem>>, vector<1x1x1x32xf32>
    %12 = vector.shape_cast %11 : vector<1x1x1x32xf32> to vector<1x32xf32>
    %13 = vector.broadcast %12 : vector<1x32xf32> to vector<16x32xf32>
    %14 = arith.addf %10, %13 : vector<16x32xf32>
    %c0_15 = arith.constant 0 : index
    %c0_16 = arith.constant 0 : index
    %c0_17 = arith.constant 0 : index
    %c0_18 = arith.constant 0 : index
    %15 = vector.load %arg6[%c0_15, %c0_16, %c0_17, %c0_18] : memref<1x1x32x32xbf16, #tpu.memory_space<vmem>>, vector<1x1x32x32xbf16>
    %16 = vector.shape_cast %15 : vector<1x1x32x32xbf16> to vector<32x32xbf16>
    %cst_19 = arith.constant dense<0.000000e+00> : vector<16x32xf32>
    %17 = tpu.matmul %7, %16, %cst_19 {dimension_numbers = #tpu.dot_dimension_numbers<[1], [0], [0], [1], [0, 0, 1, 1], [], []>} : vector<16x32xbf16>, vector<32x32xbf16>, vector<16x32xf32> -> vector<16x32xf32>
    %c0_20 = arith.constant 0 : index
    %c0_21 = arith.constant 0 : index
    %c0_22 = arith.constant 0 : index
    %c0_23 = arith.constant 0 : index
    %18 = vector.load %arg7[%c0_20, %c0_21, %c0_22, %c0_23] : memref<1x1x1x32xf32, #tpu.memory_space<vmem>>, vector<1x1x1x32xf32>
    %19 = vector.shape_cast %18 : vector<1x1x1x32xf32> to vector<1x32xf32>
    %20 = vector.broadcast %19 : vector<1x32xf32> to vector<16x32xf32>
    %21 = arith.addf %17, %20 : vector<16x32xf32>
    %c0_24 = arith.constant 0 : index
    %c0_25 = arith.constant 0 : index
    %c0_26 = arith.constant 0 : index
    %c0_27 = arith.constant 0 : index
    %22 = vector.load %arg8[%c0_24, %c0_25, %c0_26, %c0_27] : memref<1x1x32x32xbf16, #tpu.memory_space<vmem>>, vector<1x1x32x32xbf16>
    %23 = vector.shape_cast %22 : vector<1x1x32x32xbf16> to vector<32x32xbf16>
    %cst_28 = arith.constant dense<0.000000e+00> : vector<16x32xf32>
    %24 = tpu.matmul %7, %23, %cst_28 {dimension_numbers = #tpu.dot_dimension_numbers<[1], [0], [0], [1], [0, 0, 1, 1], [], []>} : vector<16x32xbf16>, vector<32x32xbf16>, vector<16x32xf32> -> vector<16x32xf32>
    %c0_29 = arith.constant 0 : index
    %c0_30 = arith.constant 0 : index
    %c0_31 = arith.constant 0 : index
    %c0_32 = arith.constant 0 : index
    %25 = vector.load %arg9[%c0_29, %c0_30, %c0_31, %c0_32] : memref<1x1x1x32xf32, #tpu.memory_space<vmem>>, vector<1x1x1x32xf32>
    %26 = vector.shape_cast %25 : vector<1x1x1x32xf32> to vector<1x32xf32>
    %27 = vector.broadcast %26 : vector<1x32xf32> to vector<16x32xf32>
    %28 = arith.addf %24, %27 : vector<16x32xf32>
    %29 = arith.truncf %21 : vector<16x32xf32> to vector<16x32xbf16>
    %30 = arith.truncf %28 : vector<16x32xf32> to vector<16x32xbf16>
    %cst_33 = arith.constant 0.000000e+00 : f32
    %31 = vector.broadcast %cst_33 : f32 to vector<16x32xf32>
    %c0_i32 = arith.constant 0 : i32
    %32 = vector.broadcast %c0_i32 : i32 to vector<16x32xi32>
    %33 = arith.cmpi sge, %5, %32 : vector<16x32xi32>
    %c8_i32 = arith.constant 8 : i32
    %34 = vector.broadcast %c8_i32 : i32 to vector<16x32xi32>
    %35 = arith.cmpi slt, %5, %34 : vector<16x32xi32>
    %36 = arith.andi %33, %35 : vector<16x32xi1>
    %cst_34 = arith.constant 0.000000e+00 : f32
    %37 = vector.broadcast %cst_34 : f32 to vector<16x32xf32>
    %38 = arith.select %36, %14, %37 : vector<16x32xi1>, vector<16x32xf32>
    %39 = arith.truncf %38 : vector<16x32xf32> to vector<16x32xbf16>
    %cst_35 = arith.constant dense<0.000000e+00> : vector<16x16xf32>
    %40 = tpu.matmul %39, %29, %cst_35 {dimension_numbers = #tpu.dot_dimension_numbers<[1], [1], [0], [0], [0, 0, 1, 0], [], []>} : vector<16x32xbf16>, vector<16x32xbf16>, vector<16x16xf32> -> vector<16x16xf32>
    %cst_36 = arith.constant 0.353553385 : f32
    %41 = vector.broadcast %cst_36 : f32 to vector<16x16xf32>
    %42 = arith.mulf %40, %41 : vector<16x16xf32>
    %43 = arith.addf %42, %4 : vector<16x16xf32>
    %cst_37 = arith.constant dense<0xFF800000> : vector<16xf32>
    %44 = vector.multi_reduction <maximumf>, %43, %cst_37 [1] : vector<16x16xf32> to vector<16xf32>
    %45 = vector.shape_cast %44 : vector<16xf32> to vector<16x1xf32>
    %46 = vector.broadcast %45 : vector<16x1xf32> to vector<16x16xf32>
    %47 = arith.subf %43, %46 : vector<16x16xf32>
    %48 = math.exp %47 : vector<16x16xf32>
    %cst_38 = arith.constant dense<0.000000e+00> : vector<16xf32>
    %49 = vector.multi_reduction <add>, %48, %cst_38 [1] : vector<16x16xf32> to vector<16xf32>
    %50 = vector.shape_cast %49 : vector<16xf32> to vector<16x1xf32>
    %51 = tpu.reciprocal %50 {approx = true} : vector<16x1xf32> -> vector<16x1xf32>
    %52 = vector.broadcast %51 : vector<16x1xf32> to vector<16x16xf32>
    %53 = arith.mulf %48, %52 : vector<16x16xf32>
    %54 = arith.truncf %53 : vector<16x16xf32> to vector<16x16xbf16>
    %cst_39 = arith.constant dense<0.000000e+00> : vector<16x32xf32>
    %55 = tpu.matmul %54, %30, %cst_39 {dimension_numbers = #tpu.dot_dimension_numbers<[1], [0], [0], [1], [0, 0, 1, 1], [], []>} : vector<16x16xbf16>, vector<16x32xbf16>, vector<16x32xf32> -> vector<16x32xf32>
    %cst_40 = arith.constant 0.000000e+00 : f32
    %56 = vector.broadcast %cst_40 : f32 to vector<16x32xf32>
    %57 = arith.select %36, %55, %56 : vector<16x32xi1>, vector<16x32xf32>
    %58 = arith.addf %31, %57 : vector<16x32xf32>
    %c8_i32_41 = arith.constant 8 : i32
    %59 = vector.broadcast %c8_i32_41 : i32 to vector<16x32xi32>
    %60 = arith.cmpi sge, %5, %59 : vector<16x32xi32>
    %c16_i32 = arith.constant 16 : i32
    %61 = vector.broadcast %c16_i32 : i32 to vector<16x32xi32>
    %62 = arith.cmpi slt, %5, %61 : vector<16x32xi32>
    %63 = arith.andi %60, %62 : vector<16x32xi1>
    %cst_42 = arith.constant 0.000000e+00 : f32
    %64 = vector.broadcast %cst_42 : f32 to vector<16x32xf32>
    %65 = arith.select %63, %14, %64 : vector<16x32xi1>, vector<16x32xf32>
    %66 = arith.truncf %65 : vector<16x32xf32> to vector<16x32xbf16>
    %cst_43 = arith.constant dense<0.000000e+00> : vector<16x16xf32>
    %67 = tpu.matmul %66, %29, %cst_43 {dimension_numbers = #tpu.dot_dimension_numbers<[1], [1], [0], [0], [0, 0, 1, 0], [], []>} : vector<16x32xbf16>, vector<16x32xbf16>, vector<16x16xf32> -> vector<16x16xf32>
    %cst_44 = arith.constant 0.353553385 : f32
    %68 = vector.broadcast %cst_44 : f32 to vector<16x16xf32>
    %69 = arith.mulf %67, %68 : vector<16x16xf32>
    %70 = arith.addf %69, %4 : vector<16x16xf32>
    %cst_45 = arith.constant dense<0xFF800000> : vector<16xf32>
    %71 = vector.multi_reduction <maximumf>, %70, %cst_45 [1] : vector<16x16xf32> to vector<16xf32>
    %72 = vector.shape_cast %71 : vector<16xf32> to vector<16x1xf32>
    %73 = vector.broadcast %72 : vector<16x1xf32> to vector<16x16xf32>
    %74 = arith.subf %70, %73 : vector<16x16xf32>
    %75 = math.exp %74 : vector<16x16xf32>
    %cst_46 = arith.constant dense<0.000000e+00> : vector<16xf32>
    %76 = vector.multi_reduction <add>, %75, %cst_46 [1] : vector<16x16xf32> to vector<16xf32>
    %77 = vector.shape_cast %76 : vector<16xf32> to vector<16x1xf32>
    %78 = tpu.reciprocal %77 {approx = true} : vector<16x1xf32> -> vector<16x1xf32>
    %79 = vector.broadcast %78 : vector<16x1xf32> to vector<16x16xf32>
    %80 = arith.mulf %75, %79 : vector<16x16xf32>
    %81 = arith.truncf %80 : vector<16x16xf32> to vector<16x16xbf16>
    %cst_47 = arith.constant dense<0.000000e+00> : vector<16x32xf32>
    %82 = tpu.matmul %81, %30, %cst_47 {dimension_numbers = #tpu.dot_dimension_numbers<[1], [0], [0], [1], [0, 0, 1, 1], [], []>} : vector<16x16xbf16>, vector<16x32xbf16>, vector<16x32xf32> -> vector<16x32xf32>
    %cst_48 = arith.constant 0.000000e+00 : f32
    %83 = vector.broadcast %cst_48 : f32 to vector<16x32xf32>
    %84 = arith.select %63, %82, %83 : vector<16x32xi1>, vector<16x32xf32>
    %85 = arith.addf %58, %84 : vector<16x32xf32>
    %c16_i32_49 = arith.constant 16 : i32
    %86 = vector.broadcast %c16_i32_49 : i32 to vector<16x32xi32>
    %87 = arith.cmpi sge, %5, %86 : vector<16x32xi32>
    %c24_i32 = arith.constant 24 : i32
    %88 = vector.broadcast %c24_i32 : i32 to vector<16x32xi32>
    %89 = arith.cmpi slt, %5, %88 : vector<16x32xi32>
    %90 = arith.andi %87, %89 : vector<16x32xi1>
    %cst_50 = arith.constant 0.000000e+00 : f32
    %91 = vector.broadcast %cst_50 : f32 to vector<16x32xf32>
    %92 = arith.select %90, %14, %91 : vector<16x32xi1>, vector<16x32xf32>
    %93 = arith.truncf %92 : vector<16x32xf32> to vector<16x32xbf16>
    %cst_51 = arith.constant dense<0.000000e+00> : vector<16x16xf32>
    %94 = tpu.matmul %93, %29, %cst_51 {dimension_numbers = #tpu.dot_dimension_numbers<[1], [1], [0], [0], [0, 0, 1, 0], [], []>} : vector<16x32xbf16>, vector<16x32xbf16>, vector<16x16xf32> -> vector<16x16xf32>
    %cst_52 = arith.constant 0.353553385 : f32
    %95 = vector.broadcast %cst_52 : f32 to vector<16x16xf32>
    %96 = arith.mulf %94, %95 : vector<16x16xf32>
    %97 = arith.addf %96, %4 : vector<16x16xf32>
    %cst_53 = arith.constant dense<0xFF800000> : vector<16xf32>
    %98 = vector.multi_reduction <maximumf>, %97, %cst_53 [1] : vector<16x16xf32> to vector<16xf32>
    %99 = vector.shape_cast %98 : vector<16xf32> to vector<16x1xf32>
    %100 = vector.broadcast %99 : vector<16x1xf32> to vector<16x16xf32>
    %101 = arith.subf %97, %100 : vector<16x16xf32>
    %102 = math.exp %101 : vector<16x16xf32>
    %cst_54 = arith.constant dense<0.000000e+00> : vector<16xf32>
    %103 = vector.multi_reduction <add>, %102, %cst_54 [1] : vector<16x16xf32> to vector<16xf32>
    %104 = vector.shape_cast %103 : vector<16xf32> to vector<16x1xf32>
    %105 = tpu.reciprocal %104 {approx = true} : vector<16x1xf32> -> vector<16x1xf32>
    %106 = vector.broadcast %105 : vector<16x1xf32> to vector<16x16xf32>
    %107 = arith.mulf %102, %106 : vector<16x16xf32>
    %108 = arith.truncf %107 : vector<16x16xf32> to vector<16x16xbf16>
    %cst_55 = arith.constant dense<0.000000e+00> : vector<16x32xf32>
    %109 = tpu.matmul %108, %30, %cst_55 {dimension_numbers = #tpu.dot_dimension_numbers<[1], [0], [0], [1], [0, 0, 1, 1], [], []>} : vector<16x16xbf16>, vector<16x32xbf16>, vector<16x32xf32> -> vector<16x32xf32>
    %cst_56 = arith.constant 0.000000e+00 : f32
    %110 = vector.broadcast %cst_56 : f32 to vector<16x32xf32>
    %111 = arith.select %90, %109, %110 : vector<16x32xi1>, vector<16x32xf32>
    %112 = arith.addf %85, %111 : vector<16x32xf32>
    %c24_i32_57 = arith.constant 24 : i32
    %113 = vector.broadcast %c24_i32_57 : i32 to vector<16x32xi32>
    %114 = arith.cmpi sge, %5, %113 : vector<16x32xi32>
    %c32_i32 = arith.constant 32 : i32
    %115 = vector.broadcast %c32_i32 : i32 to vector<16x32xi32>
    %116 = arith.cmpi slt, %5, %115 : vector<16x32xi32>
    %117 = arith.andi %114, %116 : vector<16x32xi1>
    %cst_58 = arith.constant 0.000000e+00 : f32
    %118 = vector.broadcast %cst_58 : f32 to vector<16x32xf32>
    %119 = arith.select %117, %14, %118 : vector<16x32xi1>, vector<16x32xf32>
    %120 = arith.truncf %119 : vector<16x32xf32> to vector<16x32xbf16>
    %cst_59 = arith.constant dense<0.000000e+00> : vector<16x16xf32>
    %121 = tpu.matmul %120, %29, %cst_59 {dimension_numbers = #tpu.dot_dimension_numbers<[1], [1], [0], [0], [0, 0, 1, 0], [], []>} : vector<16x32xbf16>, vector<16x32xbf16>, vector<16x16xf32> -> vector<16x16xf32>
    %cst_60 = arith.constant 0.353553385 : f32
    %122 = vector.broadcast %cst_60 : f32 to vector<16x16xf32>
    %123 = arith.mulf %121, %122 : vector<16x16xf32>
    %124 = arith.addf %123, %4 : vector<16x16xf32>
    %cst_61 = arith.constant dense<0xFF800000> : vector<16xf32>
    %125 = vector.multi_reduction <maximumf>, %124, %cst_61 [1] : vector<16x16xf32> to vector<16xf32>
    %126 = vector.shape_cast %125 : vector<16xf32> to vector<16x1xf32>
    %127 = vector.broadcast %126 : vector<16x1xf32> to vector<16x16xf32>
    %128 = arith.subf %124, %127 : vector<16x16xf32>
    %129 = math.exp %128 : vector<16x16xf32>
    %cst_62 = arith.constant dense<0.000000e+00> : vector<16xf32>
    %130 = vector.multi_reduction <add>, %129, %cst_62 [1] : vector<16x16xf32> to vector<16xf32>
    %131 = vector.shape_cast %130 : vector<16xf32> to vector<16x1xf32>
    %132 = tpu.reciprocal %131 {approx = true} : vector<16x1xf32> -> vector<16x1xf32>
    %133 = vector.broadcast %132 : vector<16x1xf32> to vector<16x16xf32>
    %134 = arith.mulf %129, %133 : vector<16x16xf32>
    %135 = arith.truncf %134 : vector<16x16xf32> to vector<16x16xbf16>
    %cst_63 = arith.constant dense<0.000000e+00> : vector<16x32xf32>
    %136 = tpu.matmul %135, %30, %cst_63 {dimension_numbers = #tpu.dot_dimension_numbers<[1], [0], [0], [1], [0, 0, 1, 1], [], []>} : vector<16x16xbf16>, vector<16x32xbf16>, vector<16x32xf32> -> vector<16x32xf32>
    %cst_64 = arith.constant 0.000000e+00 : f32
    %137 = vector.broadcast %cst_64 : f32 to vector<16x32xf32>
    %138 = arith.select %117, %136, %137 : vector<16x32xi1>, vector<16x32xf32>
    %139 = arith.addf %112, %138 : vector<16x32xf32>
    %140 = arith.truncf %139 : vector<16x32xf32> to vector<16x32xbf16>
    %c0_65 = arith.constant 0 : index
    %c0_66 = arith.constant 0 : index
    %c0_67 = arith.constant 0 : index
    %c0_68 = arith.constant 0 : index
    %141 = vector.load %arg10[%c0_65, %c0_66, %c0_67, %c0_68] : memref<1x1x32x32xbf16, #tpu.memory_space<vmem>>, vector<1x1x32x32xbf16>
    %142 = vector.shape_cast %141 : vector<1x1x32x32xbf16> to vector<32x32xbf16>
    %cst_69 = arith.constant dense<0.000000e+00> : vector<16x32xf32>
    %143 = tpu.matmul %140, %142, %cst_69 {dimension_numbers = #tpu.dot_dimension_numbers<[1], [0], [0], [1], [0, 0, 1, 1], [], []>} : vector<16x32xbf16>, vector<32x32xbf16>, vector<16x32xf32> -> vector<16x32xf32>
    %c0_70 = arith.constant 0 : index
    %c0_71 = arith.constant 0 : index
    %c0_72 = arith.constant 0 : index
    %c0_73 = arith.constant 0 : index
    %144 = vector.load %arg11[%c0_70, %c0_71, %c0_72, %c0_73] : memref<1x1x1x32xf32, #tpu.memory_space<vmem>>, vector<1x1x1x32xf32>
    %145 = vector.shape_cast %144 : vector<1x1x1x32xf32> to vector<1x32xf32>
    %146 = vector.broadcast %145 : vector<1x32xf32> to vector<16x32xf32>
    %147 = arith.addf %143, %146 : vector<16x32xf32>
    %c0_74 = arith.constant 0 : index
    %c0_75 = arith.constant 0 : index
    %c0_76 = arith.constant 0 : index
    %c0_77 = arith.constant 0 : index
    %148 = vector.load %arg20[%c0_74, %c0_75, %c0_76, %c0_77] : memref<1x1x1x1xf32, #tpu.memory_space<vmem>>, vector<1x1x1x1xf32>
    %149 = vector.shape_cast %148 : vector<1x1x1x1xf32> to vector<1x1xf32>
    %150 = vector.broadcast %149 : vector<1x1xf32> to vector<16x32xf32>
    %151 = arith.mulf %150, %147 : vector<16x32xf32>
    %152 = arith.addf %1, %151 : vector<16x32xf32>
    %c0_78 = arith.constant 0 : index
    %c0_79 = arith.constant 0 : index
    %c0_80 = arith.constant 0 : index
    %c0_81 = arith.constant 0 : index
    %153 = vector.load %arg12[%c0_78, %c0_79, %c0_80, %c0_81] : memref<1x1x1x32xf32, #tpu.memory_space<vmem>>, vector<1x1x1x32xf32>
    %154 = vector.shape_cast %153 : vector<1x1x1x32xf32> to vector<1x32xf32>
    %c0_82 = arith.constant 0 : index
    %c0_83 = arith.constant 0 : index
    %c0_84 = arith.constant 0 : index
    %c0_85 = arith.constant 0 : index
    %155 = vector.load %arg13[%c0_82, %c0_83, %c0_84, %c0_85] : memref<1x1x1x32xf32, #tpu.memory_space<vmem>>, vector<1x1x1x32xf32>
    %156 = vector.shape_cast %155 : vector<1x1x1x32xf32> to vector<1x32xf32>
    %cst_86 = arith.constant dense<0.000000e+00> : vector<16xf32>
    %157 = vector.multi_reduction <add>, %152, %cst_86 [1] : vector<16x32xf32> to vector<16xf32>
    %158 = vector.shape_cast %157 : vector<16xf32> to vector<16x1xf32>
    %cst_87 = arith.constant 3.200000e+01 : f32
    %159 = vector.broadcast %cst_87 : f32 to vector<16x1xf32>
    %160 = arith.divf %158, %159 : vector<16x1xf32>
    %161 = vector.broadcast %160 : vector<16x1xf32> to vector<16x32xf32>
    %162 = arith.subf %152, %161 : vector<16x32xf32>
    %163 = arith.mulf %162, %162 : vector<16x32xf32>
    %cst_88 = arith.constant dense<0.000000e+00> : vector<16xf32>
    %164 = vector.multi_reduction <add>, %163, %cst_88 [1] : vector<16x32xf32> to vector<16xf32>
    %165 = vector.shape_cast %164 : vector<16xf32> to vector<16x1xf32>
    %cst_89 = arith.constant 3.200000e+01 : f32
    %166 = vector.broadcast %cst_89 : f32 to vector<16x1xf32>
    %167 = arith.divf %165, %166 : vector<16x1xf32>
    %cst_90 = arith.constant 9.99999974E-6 : f32
    %168 = vector.broadcast %cst_90 : f32 to vector<16x1xf32>
    %169 = arith.addf %167, %168 : vector<16x1xf32>
    %170 = math.rsqrt %169 : vector<16x1xf32>
    %171 = vector.broadcast %170 : vector<16x1xf32> to vector<16x32xf32>
    %172 = arith.mulf %162, %171 : vector<16x32xf32>
    %173 = vector.broadcast %154 : vector<1x32xf32> to vector<16x32xf32>
    %174 = arith.mulf %172, %173 : vector<16x32xf32>
    %175 = vector.broadcast %156 : vector<1x32xf32> to vector<16x32xf32>
    %176 = arith.addf %174, %175 : vector<16x32xf32>
    %177 = arith.truncf %176 : vector<16x32xf32> to vector<16x32xbf16>
    %c0_91 = arith.constant 0 : index
    %c0_92 = arith.constant 0 : index
    %c0_93 = arith.constant 0 : index
    %c0_94 = arith.constant 0 : index
    %178 = vector.load %arg14[%c0_91, %c0_92, %c0_93, %c0_94] : memref<1x1x32x64xbf16, #tpu.memory_space<vmem>>, vector<1x1x32x64xbf16>
    %179 = vector.shape_cast %178 : vector<1x1x32x64xbf16> to vector<32x64xbf16>
    %cst_95 = arith.constant dense<0.000000e+00> : vector<16x64xf32>
    %180 = tpu.matmul %177, %179, %cst_95 {dimension_numbers = #tpu.dot_dimension_numbers<[1], [0], [0], [1], [0, 0, 1, 1], [], []>} : vector<16x32xbf16>, vector<32x64xbf16>, vector<16x64xf32> -> vector<16x64xf32>
    %c0_96 = arith.constant 0 : index
    %c0_97 = arith.constant 0 : index
    %c0_98 = arith.constant 0 : index
    %c0_99 = arith.constant 0 : index
    %181 = vector.load %arg15[%c0_96, %c0_97, %c0_98, %c0_99] : memref<1x1x1x64xf32, #tpu.memory_space<vmem>>, vector<1x1x1x64xf32>
    %182 = vector.shape_cast %181 : vector<1x1x1x64xf32> to vector<1x64xf32>
    %183 = vector.broadcast %182 : vector<1x64xf32> to vector<16x64xf32>
    %184 = arith.addf %180, %183 : vector<16x64xf32>
    %185 = arith.mulf %184, %184 : vector<16x64xf32>
    %186 = arith.mulf %184, %185 : vector<16x64xf32>
    %cst_100 = arith.constant 4.471500e-02 : f32
    %187 = vector.broadcast %cst_100 : f32 to vector<16x64xf32>
    %188 = arith.mulf %187, %186 : vector<16x64xf32>
    %189 = arith.addf %184, %188 : vector<16x64xf32>
    %cst_101 = arith.constant 0.797884583 : f32
    %190 = vector.broadcast %cst_101 : f32 to vector<16x64xf32>
    %191 = arith.mulf %190, %189 : vector<16x64xf32>
    %192 = math.tanh %191 : vector<16x64xf32>
    %cst_102 = arith.constant 1.000000e+00 : f32
    %193 = vector.broadcast %cst_102 : f32 to vector<16x64xf32>
    %194 = arith.addf %193, %192 : vector<16x64xf32>
    %cst_103 = arith.constant 5.000000e-01 : f32
    %195 = vector.broadcast %cst_103 : f32 to vector<16x64xf32>
    %196 = arith.mulf %195, %194 : vector<16x64xf32>
    %197 = arith.mulf %184, %196 : vector<16x64xf32>
    %198 = arith.truncf %197 : vector<16x64xf32> to vector<16x64xbf16>
    %c0_104 = arith.constant 0 : index
    %c0_105 = arith.constant 0 : index
    %c0_106 = arith.constant 0 : index
    %c0_107 = arith.constant 0 : index
    %199 = vector.load %arg16[%c0_104, %c0_105, %c0_106, %c0_107] : memref<1x1x64x32xbf16, #tpu.memory_space<vmem>>, vector<1x1x64x32xbf16>
    %200 = vector.shape_cast %199 : vector<1x1x64x32xbf16> to vector<64x32xbf16>
    %cst_108 = arith.constant dense<0.000000e+00> : vector<16x32xf32>
    %201 = tpu.matmul %198, %200, %cst_108 {dimension_numbers = #tpu.dot_dimension_numbers<[1], [0], [0], [1], [0, 0, 1, 1], [], []>} : vector<16x64xbf16>, vector<64x32xbf16>, vector<16x32xf32> -> vector<16x32xf32>
    %c0_109 = arith.constant 0 : index
    %c0_110 = arith.constant 0 : index
    %c0_111 = arith.constant 0 : index
    %c0_112 = arith.constant 0 : index
    %202 = vector.load %arg17[%c0_109, %c0_110, %c0_111, %c0_112] : memref<1x1x1x32xf32, #tpu.memory_space<vmem>>, vector<1x1x1x32xf32>
    %203 = vector.shape_cast %202 : vector<1x1x1x32xf32> to vector<1x32xf32>
    %204 = vector.broadcast %203 : vector<1x32xf32> to vector<16x32xf32>
    %205 = arith.addf %201, %204 : vector<16x32xf32>
    %c0_113 = arith.constant 0 : index
    %c0_114 = arith.constant 0 : index
    %c0_115 = arith.constant 0 : index
    %c0_116 = arith.constant 0 : index
    %206 = vector.load %arg21[%c0_113, %c0_114, %c0_115, %c0_116] : memref<1x1x1x1xf32, #tpu.memory_space<vmem>>, vector<1x1x1x1xf32>
    %207 = vector.shape_cast %206 : vector<1x1x1x1xf32> to vector<1x1xf32>
    %208 = vector.broadcast %207 : vector<1x1xf32> to vector<16x32xf32>
    %209 = arith.mulf %208, %205 : vector<16x32xf32>
    %210 = arith.addf %176, %209 : vector<16x32xf32>
    %c0_117 = arith.constant 0 : index
    %c0_118 = arith.constant 0 : index
    %c0_119 = arith.constant 0 : index
    %c0_120 = arith.constant 0 : index
    %211 = vector.load %arg18[%c0_117, %c0_118, %c0_119, %c0_120] : memref<1x1x1x32xf32, #tpu.memory_space<vmem>>, vector<1x1x1x32xf32>
    %212 = vector.shape_cast %211 : vector<1x1x1x32xf32> to vector<1x32xf32>
    %c0_121 = arith.constant 0 : index
    %c0_122 = arith.constant 0 : index
    %c0_123 = arith.constant 0 : index
    %c0_124 = arith.constant 0 : index
    %213 = vector.load %arg19[%c0_121, %c0_122, %c0_123, %c0_124] : memref<1x1x1x32xf32, #tpu.memory_space<vmem>>, vector<1x1x1x32xf32>
    %214 = vector.shape_cast %213 : vector<1x1x1x32xf32> to vector<1x32xf32>
    %cst_125 = arith.constant dense<0.000000e+00> : vector<16xf32>
    %215 = vector.multi_reduction <add>, %210, %cst_125 [1] : vector<16x32xf32> to vector<16xf32>
    %216 = vector.shape_cast %215 : vector<16xf32> to vector<16x1xf32>
    %cst_126 = arith.constant 3.200000e+01 : f32
    %217 = vector.broadcast %cst_126 : f32 to vector<16x1xf32>
    %218 = arith.divf %216, %217 : vector<16x1xf32>
    %219 = vector.broadcast %218 : vector<16x1xf32> to vector<16x32xf32>
    %220 = arith.subf %210, %219 : vector<16x32xf32>
    %221 = arith.mulf %220, %220 : vector<16x32xf32>
    %cst_127 = arith.constant dense<0.000000e+00> : vector<16xf32>
    %222 = vector.multi_reduction <add>, %221, %cst_127 [1] : vector<16x32xf32> to vector<16xf32>
    %223 = vector.shape_cast %222 : vector<16xf32> to vector<16x1xf32>
    %cst_128 = arith.constant 3.200000e+01 : f32
    %224 = vector.broadcast %cst_128 : f32 to vector<16x1xf32>
    %225 = arith.divf %223, %224 : vector<16x1xf32>
    %cst_129 = arith.constant 9.99999974E-6 : f32
    %226 = vector.broadcast %cst_129 : f32 to vector<16x1xf32>
    %227 = arith.addf %225, %226 : vector<16x1xf32>
    %228 = math.rsqrt %227 : vector<16x1xf32>
    %229 = vector.broadcast %228 : vector<16x1xf32> to vector<16x32xf32>
    %230 = arith.mulf %220, %229 : vector<16x32xf32>
    %231 = vector.broadcast %212 : vector<1x32xf32> to vector<16x32xf32>
    %232 = arith.mulf %230, %231 : vector<16x32xf32>
    %233 = vector.broadcast %214 : vector<1x32xf32> to vector<16x32xf32>
    %234 = arith.addf %232, %233 : vector<16x32xf32>
    %c0_130 = arith.constant 0 : index
    %c0_131 = arith.constant 0 : index
    %c0_132 = arith.constant 0 : index
    %235 = vector.load %arg22[%c0_130, %c0_131, %c0_132] : memref<1x16x32xf32, #tpu.memory_space<vmem>>, vector<1x16x32xf32>
    %236 = vector.shape_cast %235 : vector<1x16x32xf32> to vector<16x32xf32>
    %237 = vector.shape_cast %234 : vector<16x32xf32> to vector<1x16x32xf32>
    tpu.vector_store %arg22[%c0_130, %c0_131, %c0_132], %237 {strides = array<i32>} : memref<1x16x32xf32, #tpu.memory_space<vmem>>, vector<1x16x32xf32>,
    return
  }
  func.func @transform_0(%arg0: i32) -> (i32, i32, i32) {
    %c0_i32 = arith.constant 0 : i32
    %c0_i32_0 = arith.constant 0 : i32
    %c0_i32_1 = arith.constant 0 : i32
    return %arg0, %c0_i32, %c0_i32_0 : i32, i32, i32
  }
  func.func @transform_1(%arg0: i32) -> (i32, i32, i32) {
    %c0_i32 = arith.constant 0 : i32
    %c0_i32_0 = arith.constant 0 : i32
    %c0_i32_1 = arith.constant 0 : i32
    return %arg0, %c0_i32, %c0_i32_0 : i32, i32, i32
  }
  func.func @transform_2(%arg0: i32) -> (i32, i32) {
    %c0_i32 = arith.constant 0 : i32
    %c0_i32_0 = arith.constant 0 : i32
    %c0_i32_1 = arith.constant 0 : i32
    return %c0_i32, %c0_i32_0 : i32, i32
  }
  func.func @transform_3(%arg0: i32) -> (i32, i32, i32, i32) {
    %c0_i32 = arith.constant 0 : i32
    %c0_i32_0 = arith.constant 0 : i32
    %c0_i32_1 = arith.constant 0 : i32
    %c0_i32_2 = arith.constant 0 : i32
    return %arg0, %c0_i32, %c0_i32_0, %c0_i32_1 : i32, i32, i32, i32
  }
  func.func @transform_4(%arg0: i32) -> (i32, i32, i32, i32) {
    %c0_i32 = arith.constant 0 : i32
    %c0_i32_0 = arith.constant 0 : i32
    %c0_i32_1 = arith.constant 0 : i32
    %c0_i32_2 = arith.constant 0 : i32
    return %arg0, %c0_i32, %c0_i32_0, %c0_i32_1 : i32, i32, i32, i32
  }
  func.func @transform_5(%arg0: i32) -> (i32, i32, i32, i32) {
    %c0_i32 = arith.constant 0 : i32
    %c0_i32_0 = arith.constant 0 : i32
    %c0_i32_1 = arith.constant 0 : i32
    %c0_i32_2 = arith.constant 0 : i32
    return %arg0, %c0_i32, %c0_i32_0, %c0_i32_1 : i32, i32, i32, i32
  }
  func.func @transform_6(%arg0: i32) -> (i32, i32, i32, i32) {
    %c0_i32 = arith.constant 0 : i32
    %c0_i32_0 = arith.constant 0 : i32
    %c0_i32_1 = arith.constant 0 : i32
    %c0_i32_2 = arith.constant 0 : i32
    return %arg0, %c0_i32, %c0_i32_0, %c0_i32_1 : i32, i32, i32, i32
  }
  func.func @transform_7(%arg0: i32) -> (i32, i32, i32, i32) {
    %c0_i32 = arith.constant 0 : i32
    %c0_i32_0 = arith.constant 0 : i32
    %c0_i32_1 = arith.constant 0 : i32
    %c0_i32_2 = arith.constant 0 : i32
    return %arg0, %c0_i32, %c0_i32_0, %c0_i32_1 : i32, i32, i32, i32
  }
  func.func @transform_8(%arg0: i32) -> (i32, i32, i32, i32) {
    %c0_i32 = arith.constant 0 : i32
    %c0_i32_0 = arith.constant 0 : i32
    %c0_i32_1 = arith.constant 0 : i32
    %c0_i32_2 = arith.constant 0 : i32
    return %arg0, %c0_i32, %c0_i32_0, %c0_i32_1 : i32, i32, i32, i32
  }
  func.func @transform_9(%arg0: i32) -> (i32, i32, i32, i32) {
    %c0_i32 = arith.constant 0 : i32
    %c0_i32_0 = arith.constant 0 : i32
    %c0_i32_1 = arith.constant 0 : i32
    %c0_i32_2 = arith.constant 0 : i32
    return %arg0, %c0_i32, %c0_i32_0, %c0_i32_1 : i32, i32, i32, i32
  }
  func.func @transform_10(%arg0: i32) -> (i32, i32, i32, i32) {
    %c0_i32 = arith.constant 0 : i32
    %c0_i32_0 = arith.constant 0 : i32
    %c0_i32_1 = arith.constant 0 : i32
    %c0_i32_2 = arith.constant 0 : i32
    return %arg0, %c0_i32, %c0_i32_0, %c0_i32_1 : i32, i32, i32, i32
  }
  func.func @transform_11(%arg0: i32) -> (i32, i32, i32, i32) {
    %c0_i32 = arith.constant 0 : i32
    %c0_i32_0 = arith.constant 0 : i32
    %c0_i32_1 = arith.constant 0 : i32
    %c0_i32_2 = arith.constant 0 : i32
    return %arg0, %c0_i32, %c0_i32_0, %c0_i32_1 : i32, i32, i32, i32
  }
  func.func @transform_12(%arg0: i32) -> (i32, i32, i32, i32) {
    %c0_i32 = arith.constant 0 : i32
    %c0_i32_0 = arith.constant 0 : i32
    %c0_i32_1 = arith.constant 0 : i32
    %c0_i32_2 = arith.constant 0 : i32
    return %arg0, %c0_i32, %c0_i32_0, %c0_i32_1 : i32, i32, i32, i32
  }
  func.func @transform_13(%arg0: i32) -> (i32, i32, i32, i32) {
    %c0_i32 = arith.constant 0 : i32
    %c0_i32_0 = arith.constant 0 : i32
    %c0_i32_1 = arith.constant 0 : i32
    %c0_i32_2 = arith.constant 0 : i32
    return %arg0, %c0_i32, %c0_i32_0, %c0_i32_1 : i32, i32, i32, i32
  }
  func.func @transform_14(%arg0: i32) -> (i32, i32, i32, i32) {
    %c0_i32 = arith.constant 0 : i32
    %c0_i32_0 = arith.constant 0 : i32
    %c0_i32_1 = arith.constant 0 : i32
    %c0_i32_2 = arith.constant 0 : i32
    return %arg0, %c0_i32, %c0_i32_0, %c0_i32_1 : i32, i32, i32, i32
  }
  func.func @transform_15(%arg0: i32) -> (i32, i32, i32, i32) {
    %c0_i32 = arith.constant 0 : i32
    %c0_i32_0 = arith.constant 0 : i32
    %c0_i32_1 = arith.constant 0 : i32
    %c0_i32_2 = arith.constant 0 : i32
    return %arg0, %c0_i32, %c0_i32_0, %c0_i32_1 : i32, i32, i32, i32
  }
  func.func @transform_16(%arg0: i32) -> (i32, i32, i32, i32) {
    %c0_i32 = arith.constant 0 : i32
    %c0_i32_0 = arith.constant 0 : i32
    %c0_i32_1 = arith.constant 0 : i32
    %c0_i32_2 = arith.constant 0 : i32
    return %arg0, %c0_i32, %c0_i32_0, %c0_i32_1 : i32, i32, i32, i32
  }
  func.func @transform_17(%arg0: i32) -> (i32, i32, i32, i32) {
    %c0_i32 = arith.constant 0 : i32
    %c0_i32_0 = arith.constant 0 : i32
    %c0_i32_1 = arith.constant 0 : i32
    %c0_i32_2 = arith.constant 0 : i32
    return %arg0, %c0_i32, %c0_i32_0, %c0_i32_1 : i32, i32, i32, i32
  }
  func.func @transform_18(%arg0: i32) -> (i32, i32, i32, i32) {
    %c0_i32 = arith.constant 0 : i32
    %c0_i32_0 = arith.constant 0 : i32
    %c0_i32_1 = arith.constant 0 : i32
    %c0_i32_2 = arith.constant 0 : i32
    return %arg0, %c0_i32, %c0_i32_0, %c0_i32_1 : i32, i32, i32, i32
  }
  func.func @transform_19(%arg0: i32) -> (i32, i32, i32, i32) {
    %c0_i32 = arith.constant 0 : i32
    %c0_i32_0 = arith.constant 0 : i32
    %c0_i32_1 = arith.constant 0 : i32
    %c0_i32_2 = arith.constant 0 : i32
    return %arg0, %c0_i32, %c0_i32_0, %c0_i32_1 : i32, i32, i32, i32
  }
  func.func @transform_20(%arg0: i32) -> (i32, i32, i32, i32) {
    %c0_i32 = arith.constant 0 : i32
    %c0_i32_0 = arith.constant 0 : i32
    %c0_i32_1 = arith.constant 0 : i32
    %c0_i32_2 = arith.constant 0 : i32
    return %arg0, %c0_i32, %c0_i32_0, %c0_i32_1 : i32, i32, i32, i32
  }
  func.func @transform_21(%arg0: i32) -> (i32, i32, i32) {
    %c0_i32 = arith.constant 0 : i32
    %c0_i32_0 = arith.constant 0 : i32
    %c0_i32_1 = arith.constant 0 : i32
    return %arg0, %c0_i32, %c0_i32_0 : i32, i32, i32
  }
}

</mosaic_0001>

<llo_original>
// kernel: tssr_forward.4
$region0: #{tssr_forward.4}
  #allocation0 [shape = 'u32[]', space=smem, size = 0x4, offset = 0x4, fixed_abs, tag = 'smem constant byte address 0x4 - core index']
  #allocation1 [shape = 'u32[72,128]{1,0:T(1,128)}', space=vmem, size = 0x9000, scoped, tag = 'internal scratch']
  %s0 = inlined_call_operand.vmem [shape: f32[16,768], index: 0, kind: input, shape index: {}]
  %s1 = inlined_call_operand.vmem [shape: bf16[768,32], index: 1, kind: input, shape index: {}]
  %s2 = inlined_call_operand.vmem [shape: f32[1,32], index: 2, kind: input, shape index: {}]
  %s3 = inlined_call_operand.vmem [shape: f32[16,32], index: 3, kind: output, shape index: {}]
  %s4 = sld [smem:[#allocation0]]
  $region22: #{tssr_forward.4} parent=0
    _
  %s6 = ssub.s32 1, %s4
  %s7 = scalar_select 0, %s6, %s4
  // Predicated region
  $region2: #{tssr_forward.4} parent=0 // pred_check
    _
  $region3: #{tssr_forward.4} parent=0 // pred_check_branch
    %9 = sbr.rel (0) target = $region5
  $region4: #{tssr_forward.4} parent=0 // pred_region
    _
  $region5: #{tssr_forward.4} parent=0 // pred_fallthru
    _
  // Predicated region
  $region6: #{tssr_forward.4} parent=0 // pred_check
    _
  $region7: #{tssr_forward.4} parent=0 // pred_check_branch
    %11 = sbr.rel (0) target = $region9
  $region8: #{tssr_forward.4} parent=0 // pred_region
    _
  $region9: #{tssr_forward.4} parent=0 // pred_fallthru
    _
  // Predicated region
  $region10: #{tssr_forward.4} parent=0 // pred_check
    _
  $region11: #{tssr_forward.4} parent=0 // pred_check_branch
    %13 = sbr.rel (0) target = $region13
  $region12: #{tssr_forward.4} parent=0 // pred_region
    _
  $region13: #{tssr_forward.4} parent=0 // pred_fallthru
    _
  %v14 = vld [vmem:[%s0] sm:$0xff]
  %v15 = vld [vmem:[%s0 + $0x8] sm:$0xff]
  %v16 = vld [vmem:[%s0 + $0x10] sm:$0xff]
  %v17 = vld [vmem:[%s0 + $0x18] sm:$0xff]
  %v18 = vld [vmem:[%s0 + $0x20] sm:$0xff]
  %v19 = vld [vmem:[%s0 + $0x28] sm:$0xff]
  %v20 = vld [vmem:[%s0 + $0x30] sm:$0xff]
  %v21 = vld [vmem:[%s0 + $0x38] sm:$0xff]
  %v22 = vld [vmem:[%s0 + $0x40] sm:$0xff]
  %v23 = vld [vmem:[%s0 + $0x48] sm:$0xff]
  %v24 = vld [vmem:[%s0 + $0x50] sm:$0xff]
  %v25 = vld [vmem:[%s0 + $0x58] sm:$0xff]
  %v26 = vpack.c.bf16 %v20, %v14
  %v27 = vpack.c.bf16 %v21, %v15
  %v28 = vpack.c.bf16 %v22, %v16
  %v29 = vpack.c.bf16 %v23, %v17
  %v30 = vpack.c.bf16 %v24, %v18
  %v31 = vpack.c.bf16 %v25, %v19
  %v32 = vld [vmem:[%s1] sm:$0xf]
  %v33 = vld [vmem:[%s1 + $0x4] sm:$0xf]
  %v34 = vld [vmem:[%s1 + $0x8] sm:$0xf]
  %v35 = vld [vmem:[%s1 + $0xc] sm:$0xf]
  %v36 = vld [vmem:[%s1 + $0x10] sm:$0xf]
  %v37 = vld [vmem:[%s1 + $0x14] sm:$0xf]
  %v38 = vld [vmem:[%s1 + $0x18] sm:$0xf]
  %v39 = vld [vmem:[%s1 + $0x1c] sm:$0xf]
  %v40 = vld [vmem:[%s1 + $0x20] sm:$0xf]
  %v41 = vld [vmem:[%s1 + $0x24] sm:$0xf]
  %v42 = vld [vmem:[%s1 + $0x28] sm:$0xf]
  %v43 = vld [vmem:[%s1 + $0x2c] sm:$0xf]
  %v44 = vld [vmem:[%s1 + $0x30] sm:$0xf]
  %v45 = vld [vmem:[%s1 + $0x34] sm:$0xf]
  %v46 = vld [vmem:[%s1 + $0x38] sm:$0xf]
  %v47 = vld [vmem:[%s1 + $0x3c] sm:$0xf]
  %v48 = vld [vmem:[%s1 + $0x40] sm:$0xf]
  %v49 = vld [vmem:[%s1 + $0x44] sm:$0xf]
  %v50 = vld [vmem:[%s1 + $0x48] sm:$0xf]
  %v51 = vld [vmem:[%s1 + $0x4c] sm:$0xf]
  %v52 = vld [vmem:[%s1 + $0x50] sm:$0xf]
  %v53 = vld [vmem:[%s1 + $0x54] sm:$0xf]
  %v54 = vld [vmem:[%s1 + $0x58] sm:$0xf]
  %v55 = vld [vmem:[%s1 + $0x5c] sm:$0xf]
  %v56 = vld [vmem:[%s1 + $0x60] sm:$0xf]
  %v57 = vld [vmem:[%s1 + $0x64] sm:$0xf]
  %v58 = vld [vmem:[%s1 + $0x68] sm:$0xf]
  %v59 = vld [vmem:[%s1 + $0x6c] sm:$0xf]
  %v60 = vld [vmem:[%s1 + $0x70] sm:$0xf]
  %v61 = vld [vmem:[%s1 + $0x74] sm:$0xf]
  %v62 = vld [vmem:[%s1 + $0x78] sm:$0xf]
  %v63 = vld [vmem:[%s1 + $0x7c] sm:$0xf]
  %v64 = vld [vmem:[%s1 + $0x80] sm:$0xf]
  %v65 = vld [vmem:[%s1 + $0x84] sm:$0xf]
  %v66 = vld [vmem:[%s1 + $0x88] sm:$0xf]
  %v67 = vld [vmem:[%s1 + $0x8c] sm:$0xf]
  %v68 = vld [vmem:[%s1 + $0x90] sm:$0xf]
  %v69 = vld [vmem:[%s1 + $0x94] sm:$0xf]
  %v70 = vld [vmem:[%s1 + $0x98] sm:$0xf]
  %v71 = vld [vmem:[%s1 + $0x9c] sm:$0xf]
  %v72 = vld [vmem:[%s1 + $0xa0] sm:$0xf]
  %v73 = vld [vmem:[%s1 + $0xa4] sm:$0xf]
  %v74 = vld [vmem:[%s1 + $0xa8] sm:$0xf]
  %v75 = vld [vmem:[%s1 + $0xac] sm:$0xf]
  %v76 = vld [vmem:[%s1 + $0xb0] sm:$0xf]
  %v77 = vld [vmem:[%s1 + $0xb4] sm:$0xf]
  %v78 = vld [vmem:[%s1 + $0xb8] sm:$0xf]
  %v79 = vld [vmem:[%s1 + $0xbc] sm:$0xf]
  %v80 = vld [vmem:[%s1 + $0xc0] sm:$0xf]
  %v81 = vld [vmem:[%s1 + $0xc4] sm:$0xf]
  %v82 = vld [vmem:[%s1 + $0xc8] sm:$0xf]
  %v83 = vld [vmem:[%s1 + $0xcc] sm:$0xf]
  %v84 = vld [vmem:[%s1 + $0xd0] sm:$0xf]
  %v85 = vld [vmem:[%s1 + $0xd4] sm:$0xf]
  %v86 = vld [vmem:[%s1 + $0xd8] sm:$0xf]
  %v87 = vld [vmem:[%s1 + $0xdc] sm:$0xf]
  %v88 = vld [vmem:[%s1 + $0xe0] sm:$0xf]
  %v89 = vld [vmem:[%s1 + $0xe4] sm:$0xf]
  %v90 = vld [vmem:[%s1 + $0xe8] sm:$0xf]
  %v91 = vld [vmem:[%s1 + $0xec] sm:$0xf]
  %v92 = vld [vmem:[%s1 + $0xf0] sm:$0xf]
  %v93 = vld [vmem:[%s1 + $0xf4] sm:$0xf]
  %v94 = vld [vmem:[%s1 + $0xf8] sm:$0xf]
  %v95 = vld [vmem:[%s1 + $0xfc] sm:$0xf]
  %v96 = vld [vmem:[%s1 + $0x100] sm:$0xf]
  %v97 = vld [vmem:[%s1 + $0x104] sm:$0xf]
  %v98 = vld [vmem:[%s1 + $0x108] sm:$0xf]
  %v99 = vld [vmem:[%s1 + $0x10c] sm:$0xf]
  %v100 = vld [vmem:[%s1 + $0x110] sm:$0xf]
  %v101 = vld [vmem:[%s1 + $0x114] sm:$0xf]
  %v102 = vld [vmem:[%s1 + $0x118] sm:$0xf]
  %v103 = vld [vmem:[%s1 + $0x11c] sm:$0xf]
  %v104 = vld [vmem:[%s1 + $0x120] sm:$0xf]
  %v105 = vld [vmem:[%s1 + $0x124] sm:$0xf]
  %v106 = vld [vmem:[%s1 + $0x128] sm:$0xf]
  %v107 = vld [vmem:[%s1 + $0x12c] sm:$0xf]
  %v108 = vld [vmem:[%s1 + $0x130] sm:$0xf]
  %v109 = vld [vmem:[%s1 + $0x134] sm:$0xf]
  %v110 = vld [vmem:[%s1 + $0x138] sm:$0xf]
  %v111 = vld [vmem:[%s1 + $0x13c] sm:$0xf]
  %v112 = vld [vmem:[%s1 + $0x140] sm:$0xf]
  %v113 = vld [vmem:[%s1 + $0x144] sm:$0xf]
  %v114 = vld [vmem:[%s1 + $0x148] sm:$0xf]
  %v115 = vld [vmem:[%s1 + $0x14c] sm:$0xf]
  %v116 = vld [vmem:[%s1 + $0x150] sm:$0xf]
  %v117 = vld [vmem:[%s1 + $0x154] sm:$0xf]
  %v118 = vld [vmem:[%s1 + $0x158] sm:$0xf]
  %v119 = vld [vmem:[%s1 + $0x15c] sm:$0xf]
  %v120 = vld [vmem:[%s1 + $0x160] sm:$0xf]
  %v121 = vld [vmem:[%s1 + $0x164] sm:$0xf]
  %v122 = vld [vmem:[%s1 + $0x168] sm:$0xf]
  %v123 = vld [vmem:[%s1 + $0x16c] sm:$0xf]
  %v124 = vld [vmem:[%s1 + $0x170] sm:$0xf]
  %v125 = vld [vmem:[%s1 + $0x174] sm:$0xf]
  %v126 = vld [vmem:[%s1 + $0x178] sm:$0xf]
  %v127 = vld [vmem:[%s1 + $0x17c] sm:$0xf]
  %v128 = vld [vmem:[%s2] sm:$0x1]
  %v130 = vperm.slane %v128, 0
  %v228 = vunpack.c.l.b16 %v32
  %v229 = vunpack.c.l.b16 %v33
  %v230 = vunpack.c.l.b16 %v34
  %v231 = vunpack.c.l.b16 %v35
  %v232 = vunpack.c.l.b16 %v36
  %v233 = vunpack.c.l.b16 %v37
  %v234 = vunpack.c.l.b16 %v38
  %v235 = vunpack.c.l.b16 %v39
  %v236 = vunpack.c.l.b16 %v40
  %v237 = vunpack.c.l.b16 %v41
  %v238 = vunpack.c.l.b16 %v42
  %v239 = vunpack.c.l.b16 %v43
  %v240 = vunpack.c.l.b16 %v44
  %v241 = vunpack.c.l.b16 %v45
  %v242 = vunpack.c.l.b16 %v46
  %v243 = vunpack.c.l.b16 %v47
  %v244 = vunpack.c.l.b16 %v48
  %v245 = vunpack.c.l.b16 %v49
  %v246 = vunpack.c.l.b16 %v50
  %v247 = vunpack.c.l.b16 %v51
  %v248 = vunpack.c.l.b16 %v52
  %v249 = vunpack.c.l.b16 %v53
  %v250 = vunpack.c.l.b16 %v54
  %v251 = vunpack.c.l.b16 %v55
  %v252 = vunpack.c.l.b16 %v56
  %v253 = vunpack.c.l.b16 %v57
  %v254 = vunpack.c.l.b16 %v58
  %v255 = vunpack.c.l.b16 %v59
  %v256 = vunpack.c.l.b16 %v60
  %v257 = vunpack.c.l.b16 %v61
  %v258 = vunpack.c.l.b16 %v62
  %v259 = vunpack.c.l.b16 %v63
  %v260 = vunpack.c.l.b16 %v64
  %v261 = vunpack.c.l.b16 %v65
  %v262 = vunpack.c.l.b16 %v66
  %v263 = vunpack.c.l.b16 %v67
  %v264 = vunpack.c.l.b16 %v68
  %v265 = vunpack.c.l.b16 %v69
  %v266 = vunpack.c.l.b16 %v70
  %v267 = vunpack.c.l.b16 %v71
  %v268 = vunpack.c.l.b16 %v72
  %v269 = vunpack.c.l.b16 %v73
  %v270 = vunpack.c.l.b16 %v74
  %v271 = vunpack.c.l.b16 %v75
  %v272 = vunpack.c.l.b16 %v76
  %v273 = vunpack.c.l.b16 %v77
  %v274 = vunpack.c.l.b16 %v78
  %v275 = vunpack.c.l.b16 %v79
  %v276 = vunpack.c.l.b16 %v80
  %v277 = vunpack.c.l.b16 %v81
  %v278 = vunpack.c.l.b16 %v82
  %v279 = vunpack.c.l.b16 %v83
  %v280 = vunpack.c.l.b16 %v84
  %v281 = vunpack.c.l.b16 %v85
  %v282 = vunpack.c.l.b16 %v86
  %v283 = vunpack.c.l.b16 %v87
  %v284 = vunpack.c.l.b16 %v88
  %v285 = vunpack.c.l.b16 %v89
  %v286 = vunpack.c.l.b16 %v90
  %v287 = vunpack.c.l.b16 %v91
  %v288 = vunpack.c.l.b16 %v92
  %v289 = vunpack.c.l.b16 %v93
  %v290 = vunpack.c.l.b16 %v94
  %v291 = vunpack.c.l.b16 %v95
  %v292 = vunpack.c.l.b16 %v96
  %v293 = vunpack.c.l.b16 %v97
  %v294 = vunpack.c.l.b16 %v98
  %v295 = vunpack.c.l.b16 %v99
  %v296 = vunpack.c.l.b16 %v100
  %v297 = vunpack.c.l.b16 %v101
  %v298 = vunpack.c.l.b16 %v102
  %v299 = vunpack.c.l.b16 %v103
  %v300 = vunpack.c.l.b16 %v104
  %v301 = vunpack.c.l.b16 %v105
  %v302 = vunpack.c.l.b16 %v106
  %v303 = vunpack.c.l.b16 %v107
  %v304 = vunpack.c.l.b16 %v108
  %v305 = vunpack.c.l.b16 %v109
  %v306 = vunpack.c.l.b16 %v110
  %v307 = vunpack.c.l.b16 %v111
  %v308 = vunpack.c.l.b16 %v112
  %v309 = vunpack.c.l.b16 %v113
  %v310 = vunpack.c.l.b16 %v114
  %v311 = vunpack.c.l.b16 %v115
  %v312 = vunpack.c.l.b16 %v116
  %v313 = vunpack.c.l.b16 %v117
  %v314 = vunpack.c.l.b16 %v118
  %v315 = vunpack.c.l.b16 %v119
  %v316 = vunpack.c.l.b16 %v120
  %v317 = vunpack.c.l.b16 %v121
  %v318 = vunpack.c.l.b16 %v122
  %v319 = vunpack.c.l.b16 %v123
  %v320 = vunpack.c.l.b16 %v124
  %v321 = vunpack.c.l.b16 %v125
  %v322 = vunpack.c.l.b16 %v126
  %v323 = vunpack.c.l.b16 %v127
  %v324 = vpack.c.b16 %v229, %v228
  %v325 = vpack.c.b16 %v231, %v230
  %v326 = vpack.c.b16 %v233, %v232
  %v327 = vpack.c.b16 %v235, %v234
  %v328 = vpack.c.b16 %v237, %v236
  %v329 = vpack.c.b16 %v239, %v238
  %v330 = vpack.c.b16 %v241, %v240
  %v331 = vpack.c.b16 %v243, %v242
  %v332 = vpack.c.b16 %v245, %v244
  %v333 = vpack.c.b16 %v247, %v246
  %v334 = vpack.c.b16 %v249, %v248
  %v335 = vpack.c.b16 %v251, %v250
  %v336 = vpack.c.b16 %v253, %v252
  %v337 = vpack.c.b16 %v255, %v254
  %v338 = vpack.c.b16 %v257, %v256
  %v339 = vpack.c.b16 %v259, %v258
  %v340 = vpack.c.b16 %v261, %v260
  %v341 = vpack.c.b16 %v263, %v262
  %v342 = vpack.c.b16 %v265, %v264
  %v343 = vpack.c.b16 %v267, %v266
  %v344 = vpack.c.b16 %v269, %v268
  %v345 = vpack.c.b16 %v271, %v270
  %v346 = vpack.c.b16 %v273, %v272
  %v347 = vpack.c.b16 %v275, %v274
  %v348 = vpack.c.b16 %v277, %v276
  %v349 = vpack.c.b16 %v279, %v278
  %v350 = vpack.c.b16 %v281, %v280
  %v351 = vpack.c.b16 %v283, %v282
  %v352 = vpack.c.b16 %v285, %v284
  %v353 = vpack.c.b16 %v287, %v286
  %v354 = vpack.c.b16 %v289, %v288
  %v355 = vpack.c.b16 %v291, %v290
  %v356 = vpack.c.b16 %v293, %v292
  %v357 = vpack.c.b16 %v295, %v294
  %v358 = vpack.c.b16 %v297, %v296
  %v359 = vpack.c.b16 %v299, %v298
  %v360 = vpack.c.b16 %v301, %v300
  %v361 = vpack.c.b16 %v303, %v302
  %v362 = vpack.c.b16 %v305, %v304
  %v363 = vpack.c.b16 %v307, %v306
  %v364 = vpack.c.b16 %v309, %v308
  %v365 = vpack.c.b16 %v311, %v310
  %v366 = vpack.c.b16 %v313, %v312
  %v367 = vpack.c.b16 %v315, %v314
  %v368 = vpack.c.b16 %v317, %v316
  %v369 = vpack.c.b16 %v319, %v318
  %v370 = vpack.c.b16 %v321, %v320
  %v371 = vpack.c.b16 %v323, %v322
  %420 = vmatpush.bf16.msra.mxu0 %v331
  %421 = vmatpush.bf16.msra.mxu0 %v330
  %422 = vmatpush.bf16.msra.mxu0 %v329
  %423 = vmatpush.bf16.msra.mxu0 %v328
  %424 = vmatpush.bf16.msra.mxu0 %v327
  %425 = vmatpush.bf16.msra.mxu0 %v326
  %426 = vmatpush.bf16.msra.mxu0 %v325
  %427 = vmatpush.bf16.msra.mxu0 %v324
  %428 = vmatmul.bf16.gmra.mxu0 %v26
  %v429 = vpop.f32.mrf.mxu0
  %v430 = vadd.f32 %v130, %v429
  %v431 = vpop.f32.mrf.mxu0
  %v432 = vadd.f32 %v130, %v431
  %433 = vdwg.mxu0
  %434 = vmatpush.bf16.msra.mxu0 %v339
  %435 = vmatpush.bf16.msra.mxu0 %v338
  %436 = vmatpush.bf16.msra.mxu0 %v337
  %437 = vmatpush.bf16.msra.mxu0 %v336
  %438 = vmatpush.bf16.msra.mxu0 %v335
  %439 = vmatpush.bf16.msra.mxu0 %v334
  %440 = vmatpush.bf16.msra.mxu0 %v333
  %441 = vmatpush.bf16.msra.mxu0 %v332
  %442 = vmatmul.bf16.gmra.mxu0 %v27
  %v443 = vpop.f32.mrf.mxu0
  %v444 = vadd.f32 %v430, %v443
  %v445 = vpop.f32.mrf.mxu0
  %v446 = vadd.f32 %v432, %v445
  %447 = vdwg.mxu0
  %448 = vmatpush.bf16.msra.mxu0 %v347
  %449 = vmatpush.bf16.msra.mxu0 %v346
  %450 = vmatpush.bf16.msra.mxu0 %v345
  %451 = vmatpush.bf16.msra.mxu0 %v344
  %452 = vmatpush.bf16.msra.mxu0 %v343
  %453 = vmatpush.bf16.msra.mxu0 %v342
  %454 = vmatpush.bf16.msra.mxu0 %v341
  %455 = vmatpush.bf16.msra.mxu0 %v340
  %456 = vmatmul.bf16.gmra.mxu0 %v28
  %v457 = vpop.f32.mrf.mxu0
  %v458 = vadd.f32 %v444, %v457
  %v459 = vpop.f32.mrf.mxu0
  %v460 = vadd.f32 %v446, %v459
  %461 = vdwg.mxu0
  %462 = vmatpush.bf16.msra.mxu0 %v355
  %463 = vmatpush.bf16.msra.mxu0 %v354
  %464 = vmatpush.bf16.msra.mxu0 %v353
  %465 = vmatpush.bf16.msra.mxu0 %v352
  %466 = vmatpush.bf16.msra.mxu0 %v351
  %467 = vmatpush.bf16.msra.mxu0 %v350
  %468 = vmatpush.bf16.msra.mxu0 %v349
  %469 = vmatpush.bf16.msra.mxu0 %v348
  %470 = vmatmul.bf16.gmra.mxu0 %v29
  %v471 = vpop.f32.mrf.mxu0
  %v472 = vadd.f32 %v458, %v471
  %v473 = vpop.f32.mrf.mxu0
  %v474 = vadd.f32 %v460, %v473
  %475 = vdwg.mxu0
  %476 = vmatpush.bf16.msra.mxu0 %v363
  %477 = vmatpush.bf16.msra.mxu0 %v362
  %478 = vmatpush.bf16.msra.mxu0 %v361
  %479 = vmatpush.bf16.msra.mxu0 %v360
  %480 = vmatpush.bf16.msra.mxu0 %v359
  %481 = vmatpush.bf16.msra.mxu0 %v358
  %482 = vmatpush.bf16.msra.mxu0 %v357
  %483 = vmatpush.bf16.msra.mxu0 %v356
  %484 = vmatmul.bf16.gmra.mxu0 %v30
  %v485 = vpop.f32.mrf.mxu0
  %v486 = vadd.f32 %v472, %v485
  %v487 = vpop.f32.mrf.mxu0
  %v488 = vadd.f32 %v474, %v487
  %489 = vdwg.mxu0
  %490 = vmatpush.bf16.msra.mxu0 %v371
  %491 = vmatpush.bf16.msra.mxu0 %v370
  %492 = vmatpush.bf16.msra.mxu0 %v369
  %493 = vmatpush.bf16.msra.mxu0 %v368
  %494 = vmatpush.bf16.msra.mxu0 %v367
  %495 = vmatpush.bf16.msra.mxu0 %v366
  %496 = vmatpush.bf16.msra.mxu0 %v365
  %497 = vmatpush.bf16.msra.mxu0 %v364
  %498 = vmatmul.bf16.gmra.mxu0 %v31
  %v499 = vpop.f32.mrf.mxu0
  %v500 = vadd.f32 %v486, %v499
  %v501 = vpop.f32.mrf.mxu0
  %v502 = vadd.f32 %v488, %v501
  %503 = vdwg.mxu0
  %vm504 = vcmask 261120
  %505 = vst.msk [vmem:[%s3] sm:$0xff] %vm504, %v500
  %506 = vst.msk [vmem:[%s3 + $0x8] sm:$0xff] %vm504, %v502
  // Predicated region
  $region14: #{tssr_forward.4} parent=0 // pred_check
    _
  $region15: #{tssr_forward.4} parent=0 // pred_check_branch
    %508 = sbr.rel (0) target = $region17
  $region16: #{tssr_forward.4} parent=0 // pred_region
    _
  $region17: #{tssr_forward.4} parent=0 // pred_fallthru
    _
  // Predicated region
  $region18: #{tssr_forward.4} parent=0 // pred_check
    _
  $region19: #{tssr_forward.4} parent=0 // pred_check_branch
    %510 = sbr.rel (0) target = $region21
  $region20: #{tssr_forward.4} parent=0 // pred_region
    _
  $region21: #{tssr_forward.4} parent=0 // pred_fallthru
    _

// kernel: tssr_forward.7
$region0: #{tssr_forward.7}
  #allocation0 [shape = 'u32[]', space=smem, size = 0x4, offset = 0x4, fixed_abs, tag = 'smem constant byte address 0x4 - core index']
  #allocation1 [shape = 'u32[72,128]{1,0:T(1,128)}', space=vmem, size = 0x9000, scoped, tag = 'internal scratch']
  %s0 = inlined_call_operand.vmem [shape: f32[16,32], index: 0, kind: input, shape index: {}]
  %s1 = inlined_call_operand.vmem [shape: f32[16,32], index: 1, kind: input, shape index: {}]
  %s2 = inlined_call_operand.vmem [shape: bf16[32,32], index: 2, kind: input, shape index: {}]
  %s3 = inlined_call_operand.vmem [shape: bf16[32,32], index: 3, kind: input, shape index: {}]
  %s4 = inlined_call_operand.hbm [shape: f32[1,32], index: 4, kind: input, shape index: {}]
  %s5 = inlined_call_operand.vmem [shape: bf16[32,128], index: 5, kind: input, shape index: {}]
  %s6 = inlined_call_operand.vmem [shape: f32[1,128], index: 6, kind: input, shape index: {}]
  %s7 = inlined_call_operand.vmem [shape: f32[16,128], index: 7, kind: output, shape index: {}]
  %s8 = sld [smem:[#allocation0]]
  $region42: #{tssr_forward.7} parent=0
    _
  %s10 = ssub.s32 1, %s8
  %s11 = scalar_select 0, %s10, %s8
  $region1: #{tssr_forward.7} parent=0
    #allocation2 [shape = 'u8[512]{0}', space=vmem, size = 0x400, scoped, tag = 'input window, operand 4, single buffered']
    #allocation3 [shape = 's32[1]{0}', space=sflag, size = 0x4, scoped, tag = 'scoped memory for tssr_forward.7']
    %12 = vsyncpa [#allocation3], 0
    // Predicated region
    $region2: #{tssr_forward.7} parent=1 // pred_check
      _
    $region3: #{tssr_forward.7} parent=1 // pred_check_branch
      %14 = sbr.rel (0) target = $region5
    $region4: #{tssr_forward.7} parent=1 // pred_region
      _
    $region5: #{tssr_forward.7} parent=1 // pred_fallthru
      _
    // Predicated region
    $region6: #{tssr_forward.7} parent=1 // pred_check
      _
    $region7: #{tssr_forward.7} parent=1 // pred_check_branch
      %16 = sbr.rel (0) target = $region9
    $region8: #{tssr_forward.7} parent=1 // pred_region
      _
    $region9: #{tssr_forward.7} parent=1 // pred_fallthru
      _
    // Predicated region
    $region10: #{tssr_forward.7} parent=1 // pred_check
      _
    $region11: #{tssr_forward.7} parent=1 // pred_check_branch
      %18 = sbr.rel (0) target = $region13
    $region12: #{tssr_forward.7} parent=1 // pred_region
      _
    $region13: #{tssr_forward.7} parent=1 // pred_fallthru
      _
    // Predicated region
    $region14: #{tssr_forward.7} parent=1 // pred_check
      _
    $region15: #{tssr_forward.7} parent=1 // pred_check_branch
      %20 = sbr.rel (0) target = $region17
    $region16: #{tssr_forward.7} parent=1 // pred_region
      _
    $region17: #{tssr_forward.7} parent=1 // pred_fallthru
      _
    // Predicated region
    $region18: #{tssr_forward.7} parent=1 // pred_check
      _
    $region19: #{tssr_forward.7} parent=1 // pred_check_branch
      %22 = sbr.rel (0) target = $region21
    $region20: #{tssr_forward.7} parent=1 // pred_region
      %24 = vsyncadd [#allocation3], 0
      %s26 = sshll.u32 %s4, 4
      %s27 = int_to_ptr.hbm [resolvable:$true] %s26
      %s28 = sshll.u32 [#allocation2], 4
      %s29 = int_to_ptr.vmem [resolvable:$true] %s28
      %31 = dma.hbm_to_vmem [thread:$0]  %s27, 16, %s29, [#allocation3]
    $region21: #{tssr_forward.7} parent=1 // pred_fallthru
      _
    // Predicated region
    $region22: #{tssr_forward.7} parent=1 // pred_check
      _
    $region23: #{tssr_forward.7} parent=1 // pred_check_branch
      %33 = sbr.rel (0) target = $region25
    $region24: #{tssr_forward.7} parent=1 // pred_region
      _
    $region25: #{tssr_forward.7} parent=1 // pred_fallthru
      _
    // Predicated region
    $region26: #{tssr_forward.7} parent=1 // pred_check
      _
    $region27: #{tssr_forward.7} parent=1 // pred_check_branch
      %35 = sbr.rel (0) target = $region29
    $region28: #{tssr_forward.7} parent=1 // pred_region
      _
    $region29: #{tssr_forward.7} parent=1 // pred_fallthru
      _
    // Predicated region
    $region30: #{tssr_forward.7} parent=1 // pred_check
      _
    $region31: #{tssr_forward.7} parent=1 // pred_check_branch
      %37 = sbr.rel (0) target = $region33
    $region32: #{tssr_forward.7} parent=1 // pred_region
      %39 = dma.done [#allocation3], 16
    $region33: #{tssr_forward.7} parent=1 // pred_fallthru
      _
    %v41 = vld [vmem:[%s0] sm:$0xff]
    %v42 = vld [vmem:[%s0 + $0x8] sm:$0xff]
    %v43 = vld [vmem:[%s1] sm:$0xff]
    %v44 = vld [vmem:[%s1 + $0x8] sm:$0xff]
    %v45 = vpack.c.bf16 %v42, %v41
    %v46 = vld [vmem:[%s2] sm:$0xf]
    %v47 = vld [vmem:[%s2 + $0x4] sm:$0xf]
    %v48 = vld [vmem:[%s2 + $0x8] sm:$0xf]
    %v49 = vld [vmem:[%s2 + $0xc] sm:$0xf]
    %v50 = vpack.c.bf16 %v44, %v43
    %v51 = vld [vmem:[%s3] sm:$0xf]
    %v52 = vld [vmem:[%s3 + $0x4] sm:$0xf]
    %v53 = vld [vmem:[%s3 + $0x8] sm:$0xf]
    %v54 = vld [vmem:[%s3 + $0xc] sm:$0xf]
    %v59 = vunpack.c.l.b16 %v51
    %v60 = vunpack.c.l.b16 %v52
    %v61 = vunpack.c.l.b16 %v53
    %v62 = vunpack.c.l.b16 %v54
    %v63 = vpack.c.b16 %v60, %v59
    %v64 = vpack.c.b16 %v62, %v61
    %vm67 = vcmask 261120
    %v69 = vsel %vm67, %v50, 0
    %71 = vmatpush.bf16.msra.mxu0 0
    %72 = vmatpush.bf16.msra.mxu0 0
    %73 = vmatpush.bf16.msra.mxu0 0
    %74 = vmatpush.bf16.msra.mxu0 0
    %75 = vmatpush.bf16.msra.mxu0 0
    %76 = vmatpush.bf16.msra.mxu0 0
    %77 = vmatpush.bf16.msra.mxu0 %v64
    %78 = vmatpush.bf16.msra.mxu0 %v63
    %79 = vmatmul.bf16.gmra.mxu0 %v69
    %v80 = vpop.f32.mrf.mxu0
    %v81 = vadd.f32 0.0, %v80
    %v82 = vpop.f32.mrf.mxu0
    %v83 = vadd.f32 0.0, %v82
    %84 = vdwg.mxu0
    %v89 = vunpack.c.l.b16 %v46
    %v90 = vunpack.c.l.b16 %v47
    %v91 = vunpack.c.l.b16 %v48
    %v92 = vunpack.c.l.b16 %v49
    %v93 = vpack.c.b16 %v90, %v89
    %v94 = vpack.c.b16 %v92, %v91
    %v98 = vsel %vm67, %v45, 0
    %100 = vmatpush.bf16.msra.mxu0 0
    %101 = vmatpush.bf16.msra.mxu0 0
    %102 = vmatpush.bf16.msra.mxu0 0
    %103 = vmatpush.bf16.msra.mxu0 0
    %104 = vmatpush.bf16.msra.mxu0 0
    %105 = vmatpush.bf16.msra.mxu0 0
    %106 = vmatpush.bf16.msra.mxu0 %v94
    %107 = vmatpush.bf16.msra.mxu0 %v93
    %108 = vmatmul.bf16.gmra.mxu0 %v98
    %v109 = vpop.f32.mrf.mxu0
    %v110 = vadd.f32 %v81, %v109
    %v111 = vpop.f32.mrf.mxu0
    %v112 = vadd.f32 %v83, %v111
    %113 = vdwg.mxu0
    %v114 = vld [vmem:[#allocation2] sm:$0x1]
    %v116 = vperm.slane %v114, 0
    %v118 = vadd.f32 %v110, %v116
    %v119 = vadd.f32 %v112, %v116
    %v120 = vxor.u32 %v118, 2147483648
    %v121 = vxor.u32 %v119, 2147483648
    %v122 = vmul.f32 %v120, 1.442695
    %v123 = vpow.pop %v122
    %v124 = vmul.f32 %v121, 1.442695
    %v125 = vpow.pop %v124
    %v126 = vadd.f32 %v123, 1.0
    %v127 = vadd.f32 %v125, 1.0
    %v128 = vrcp.pop %v126
    %v129 = vmul.f32 %v126, %v128
    %v130 = vsub.f32 1.0, %v129
    %v131 = vmul.f32 %v128, %v130
    %v132 = vadd.f32 %v128, %v131
    %vm133 = vweird.f32 %v126
    %vm134 = vweird.f32 %v128
    %vm135 = vmor %vm133, %vm134
    %v136 = vsel %vm135, %v128, %v132
    %v137 = vand.u32 2147483647, %v126
    %vm138 = vcmp.eq.f32.partialorder %v137, 8.507059e+37
    %v139 = vand.u32 %v126, 2147483648
    %v140 = vor.u32 1.1754944e-38, %v139
    %v141 = vsel %vm138, %v140, %v136
    %v142 = vmul.f32 1.0, %v141
    %v143 = vrcp.pop %v127
    %v144 = vmul.f32 %v127, %v143
    %v145 = vsub.f32 1.0, %v144
    %v146 = vmul.f32 %v143, %v145
    %v147 = vadd.f32 %v143, %v146
    %vm148 = vweird.f32 %v127
    %vm149 = vweird.f32 %v143
    %vm150 = vmor %vm148, %vm149
    %v151 = vsel %vm150, %v143, %v147
    %v152 = vand.u32 2147483647, %v127
    %vm153 = vcmp.eq.f32.partialorder %v152, 8.507059e+37
    %v154 = vand.u32 %v127, 2147483648
    %v155 = vor.u32 1.1754944e-38, %v154
    %v156 = vsel %vm153, %v155, %v151
    %v157 = vmul.f32 1.0, %v156
    %v158 = vmul.f32 %v142, %v41
    %v159 = vmul.f32 %v157, %v42
    %v160 = vsub.f32 1.0, %v142
    %v161 = vsub.f32 1.0, %v157
    %v162 = vmul.f32 %v160, %v43
    %v163 = vmul.f32 %v161, %v44
    %v164 = vadd.f32 %v158, %v162
    %v165 = vadd.f32 %v159, %v163
    %v166 = vpack.c.bf16 %v165, %v164
    %v167 = vld [vmem:[%s5] sm:$0xf]
    %v168 = vld [vmem:[%s5 + $0x4] sm:$0xf]
    %v169 = vld [vmem:[%s5 + $0x8] sm:$0xf]
    %v170 = vld [vmem:[%s5 + $0xc] sm:$0xf]
    %v171 = vld [vmem:[%s6] sm:$0x1]
    %v173 = vperm.slane %v171, 0
    %v179 = vunpack.c.l.b16 %v167
    %v180 = vunpack.c.l.b16 %v168
    %v181 = vunpack.c.l.b16 %v169
    %v182 = vunpack.c.l.b16 %v170
    %v183 = vpack.c.b16 %v180, %v179
    %v184 = vpack.c.b16 %v182, %v181
    %v188 = vsel %vm67, %v166, 0
    %190 = vmatpush.bf16.msra.mxu0 0
    %191 = vmatpush.bf16.msra.mxu0 0
    %192 = vmatpush.bf16.msra.mxu0 0
    %193 = vmatpush.bf16.msra.mxu0 0
    %194 = vmatpush.bf16.msra.mxu0 0
    %195 = vmatpush.bf16.msra.mxu0 0
    %196 = vmatpush.bf16.msra.mxu0 %v184
    %197 = vmatpush.bf16.msra.mxu0 %v183
    %198 = vmatmul.bf16.gmra.mxu0 %v188
    %v199 = vpop.f32.mrf.mxu0
    %v200 = vadd.f32 %v173, %v199
    %v201 = vpop.f32.mrf.mxu0
    %v202 = vadd.f32 %v173, %v201
    %203 = vdwg.mxu0
    %204 = vst [vmem:[%s7] sm:$0xff] %v200
    %205 = vst [vmem:[%s7 + $0x8] sm:$0xff] %v202
    // Predicated region
    $region34: #{tssr_forward.7} parent=1 // pred_check
      _
    $region35: #{tssr_forward.7} parent=1 // pred_check_branch
      %207 = sbr.rel (0) target = $region37
    $region36: #{tssr_forward.7} parent=1 // pred_region
      _
    $region37: #{tssr_forward.7} parent=1 // pred_fallthru
      _
    // Predicated region
    $region38: #{tssr_forward.7} parent=1 // pred_check
      _
    $region39: #{tssr_forward.7} parent=1 // pred_check_branch
      %209 = sbr.rel (0) target = $region41
    $region40: #{tssr_forward.7} parent=1 // pred_region
      _
    $region41: #{tssr_forward.7} parent=1 // pred_fallthru
      _
    %210 = vsyncpa [#allocation3], 1

// kernel: tssr_forward.5
$region0: #{tssr_forward.5}
  #allocation0 [shape = 'u32[]', space=smem, size = 0x4, offset = 0x4, fixed_abs, tag = 'smem constant byte address 0x4 - core index']
  #allocation1 [shape = 'u32[72,128]{1,0:T(1,128)}', space=vmem, size = 0x9000, scoped, tag = 'internal scratch']
  %s0 = inlined_call_operand.vmem [shape: f32[2,16,32], index: 0, kind: input, shape index: {}, may-alias: {0,1}]
  %s1 = inlined_call_operand.vmem [shape: f32[2,16,32], index: 1, kind: input, shape index: {}, may-alias: {0,1}]
  %s2 = inlined_call_operand.vmem [shape: f32[16,16], index: 2, kind: input, shape index: {}]
  %s3 = inlined_call_operand.vmem [shape: bf16[2,2,32,32], index: 3, kind: input, shape index: {}]
  %s4 = inlined_call_operand.vmem [shape: f32[2,2,1,32], index: 4, kind: input, shape index: {}]
  %s5 = inlined_call_operand.vmem [shape: bf16[2,2,32,32], index: 5, kind: input, shape index: {}]
  %s6 = inlined_call_operand.vmem [shape: f32[2,2,1,32], index: 6, kind: input, shape index: {}]
  %s7 = inlined_call_operand.vmem [shape: bf16[2,2,32,32], index: 7, kind: input, shape index: {}]
  %s8 = inlined_call_operand.vmem [shape: f32[2,2,1,32], index: 8, kind: input, shape index: {}]
  %s9 = inlined_call_operand.vmem [shape: bf16[2,2,32,32], index: 9, kind: input, shape index: {}]
  %s10 = inlined_call_operand.vmem [shape: f32[2,2,1,32], index: 10, kind: input, shape index: {}]
  %s11 = inlined_call_operand.vmem [shape: f32[2,2,1,32], index: 11, kind: input, shape index: {}]
  %s12 = inlined_call_operand.vmem [shape: f32[2,2,1,32], index: 12, kind: input, shape index: {}]
  %s13 = inlined_call_operand.vmem [shape: bf16[2,2,32,64], index: 13, kind: input, shape index: {}]
  %s14 = inlined_call_operand.vmem [shape: f32[2,2,1,64], index: 14, kind: input, shape index: {}]
  %s15 = inlined_call_operand.vmem [shape: bf16[2,2,64,32], index: 15, kind: input, shape index: {}]
  %s16 = inlined_call_operand.vmem [shape: f32[2,2,1,32], index: 16, kind: input, shape index: {}]
  %s17 = inlined_call_operand.vmem [shape: f32[2,2,1,32], index: 17, kind: input, shape index: {}]
  %s18 = inlined_call_operand.vmem [shape: f32[2,2,1,32], index: 18, kind: input, shape index: {}]
  %s19 = inlined_call_operand.vmem [shape: f32[2,2,1,1], index: 19, kind: input, shape index: {}]
  %s20 = inlined_call_operand.vmem [shape: f32[2,2,1,1], index: 20, kind: input, shape index: {}]
  %s21 = inlined_call_operand.vmem [shape: f32[2,16,32], index: 21, kind: output, shape index: {}]
  %s22 = sld [smem:[#allocation0]]
  $region117: #{tssr_forward.5} parent=0
    _
  %s24 = ssub.s32 1, %s22
  %s25 = scalar_select 0, %s24, %s22
  loop: start=0, step=1, limit=4
  $region2: #{tssr_forward.5} parent=0 // loop_pre_header
    _
  $region3: #{tssr_forward.5} parent=0 // loop_header
    %s27 = sphi 0, %s31
    %p28 = scmp.ge.s32.totalorder %s27, 4
    %s37 = sphi 0, %s39
    %s40 = sphi 0, %s37
    %s41 = sphi 0, %s40
    %s57 = sphi 0, %s41
    %s63 = sphi 0, %s65
    %s66 = sphi 0, %s63
    %s67 = sphi 0, %s66
    %s83 = sphi 0, %s67
    %s87 = sphi 0, %s87
    %s89 = sphi 0, %s87
    %s90 = sphi 0, %s89
    %s104 = sphi 0, %s90
    %s110 = sphi 0, %s112
    %s113 = sphi 0, %s110
    %s114 = sphi 0, %s113
    %s130 = sphi 0, %s114
    %s136 = sphi 0, %s138
    %s139 = sphi 0, %s136
    %s140 = sphi 0, %s139
    %s156 = sphi 0, %s140
    %s162 = sphi 0, %s164
    %s165 = sphi 0, %s162
    %s166 = sphi 0, %s165
    %s182 = sphi 0, %s166
    %s188 = sphi 0, %s190
    %s191 = sphi 0, %s188
    %s192 = sphi 0, %s191
    %s208 = sphi 0, %s192
    %s214 = sphi 0, %s216
    %s217 = sphi 0, %s214
    %s218 = sphi 0, %s217
    %s234 = sphi 0, %s218
    %s240 = sphi 0, %s242
    %s243 = sphi 0, %s240
    %s244 = sphi 0, %s243
    %s260 = sphi 0, %s244
    %s266 = sphi 0, %s268
    %s269 = sphi 0, %s266
    %s270 = sphi 0, %s269
    %s286 = sphi 0, %s270
    %s292 = sphi 0, %s294
    %s295 = sphi 0, %s292
    %s296 = sphi 0, %s295
    %s312 = sphi 0, %s296
    %s318 = sphi 0, %s320
    %s321 = sphi 0, %s318
    %s322 = sphi 0, %s321
    %s338 = sphi 0, %s322
    %s344 = sphi 0, %s346
    %s347 = sphi 0, %s344
    %s348 = sphi 0, %s347
    %s364 = sphi 0, %s348
    %s370 = sphi 0, %s372
    %s373 = sphi 0, %s370
    %s374 = sphi 0, %s373
    %s390 = sphi 0, %s374
    %s396 = sphi 0, %s398
    %s399 = sphi 0, %s396
    %s400 = sphi 0, %s399
    %s416 = sphi 0, %s400
    %s422 = sphi 0, %s424
    %s425 = sphi 0, %s422
    %s426 = sphi 0, %s425
    %s442 = sphi 0, %s426
    %s448 = sphi 0, %s450
    %s451 = sphi 0, %s448
    %s452 = sphi 0, %s451
    %s468 = sphi 0, %s452
    %s474 = sphi 0, %s476
    %s477 = sphi 0, %s474
    %s478 = sphi 0, %s477
    %s494 = sphi 0, %s478
    %s500 = sphi 0, %s502
    %s503 = sphi 0, %s500
    %s504 = sphi 0, %s503
    %s520 = sphi 0, %s504
    %s526 = sphi 0, %s528
    %s529 = sphi 0, %s526
    %s530 = sphi 0, %s529
    %s546 = sphi 0, %s530
    %s552 = sphi 0, %s554
    %s555 = sphi 0, %s552
    %s556 = sphi 0, %s555
    %s572 = sphi 0, %s556
    %s578 = sphi 0, %s580
    %s581 = sphi 0, %s578
    %s582 = sphi 0, %s581
    %s598 = sphi 0, %s582
  $region4: #{tssr_forward.5} parent=0 // loop_header_branch
    %30 = sbr.rel (%p28) target = $region8
  $region5: #{tssr_forward.5} parent=0 // loop_body
    %s32 = ssub.s32 %s27, 1
    %s33 = ssub.s32 %s27, 2
    %s34 = sadd.s32 %s27, 1
    %s35 = ssub.s32 %s27, %s34
    %p36 = scmp.eq.s32.totalorder %s35, 0
    %s38 = sadd.s32 %s37, 1
    %s39 = scalar_select %p36, %s37, %s38
    %p42 = pneg %p36
    %p43 = scmp.eq.s32.totalorder %s27, 1
    %p44 = por %p42, %p43
    %p45 = scmp.ne.s32.totalorder %s37, %s40
    %p46 = scmp.eq.s32.totalorder %s27, 0
    %p47 = por %p45, %p46
    %p48 = scmp.ne.s32.totalorder %s37, %s40
    %p49 = scmp.eq.s32.totalorder %s32, 1
    %p50 = por %p48, %p49
    %p51 = scmp.ne.s32.totalorder %s40, %s41
    %p52 = scmp.eq.s32.totalorder %s32, 0
    %p53 = por %p51, %p52
    %p54 = scmp.ne.s32.totalorder %s40, %s41
    %p55 = scmp.eq.s32.totalorder %s33, 1
    %p56 = por %p54, %p55
    %p58 = scmp.ne.s32.totalorder %s41, %s57
    %p59 = scmp.eq.s32.totalorder %s33, 0
    %p60 = por %p58, %p59
    %s61 = ssub.s32 %s27, %s34
    %p62 = scmp.eq.s32.totalorder %s61, 0
    %s64 = sadd.s32 %s63, 1
    %s65 = scalar_select %p62, %s63, %s64
    %p68 = pneg %p62
    %p69 = scmp.eq.s32.totalorder %s27, 1
    %p70 = por %p68, %p69
    %p71 = scmp.ne.s32.totalorder %s63, %s66
    %p72 = scmp.eq.s32.totalorder %s27, 0
    %p73 = por %p71, %p72
    %p74 = scmp.ne.s32.totalorder %s63, %s66
    %p75 = scmp.eq.s32.totalorder %s32, 1
    %p76 = por %p74, %p75
    %p77 = scmp.ne.s32.totalorder %s66, %s67
    %p78 = scmp.eq.s32.totalorder %s32, 0
    %p79 = por %p77, %p78
    %p80 = scmp.ne.s32.totalorder %s66, %s67
    %p81 = scmp.eq.s32.totalorder %s33, 1
    %p82 = por %p80, %p81
    %p84 = scmp.ne.s32.totalorder %s67, %s83
    %p85 = scmp.eq.s32.totalorder %s33, 0
    %p86 = por %p84, %p85
    %s88 = sadd.s32 %s87, 1
    %p91 = scmp.eq.s32.totalorder %s27, 1
    %p92 = scmp.ne.s32.totalorder %s87, %s89
    %p93 = scmp.eq.s32.totalorder %s27, 0
    %p94 = por %p92, %p93
    %p95 = scmp.ne.s32.totalorder %s87, %s89
    %p96 = scmp.eq.s32.totalorder %s32, 1
    %p97 = por %p95, %p96
    %p98 = scmp.ne.s32.totalorder %s89, %s90
    %p99 = scmp.eq.s32.totalorder %s32, 0
    %p100 = por %p98, %p99
    %p101 = scmp.ne.s32.totalorder %s89, %s90
    %p102 = scmp.eq.s32.totalorder %s33, 1
    %p103 = por %p101, %p102
    %p105 = scmp.ne.s32.totalorder %s90, %s104
    %p106 = scmp.eq.s32.totalorder %s33, 0
    %p107 = por %p105, %p106
    %s108 = ssub.s32 %s27, %s34
    %p109 = scmp.eq.s32.totalorder %s108, 0
    %s111 = sadd.s32 %s110, 1
    %s112 = scalar_select %p109, %s110, %s111
    %p115 = pneg %p109
    %p116 = scmp.eq.s32.totalorder %s27, 1
    %p117 = por %p115, %p116
    %p118 = scmp.ne.s32.totalorder %s110, %s113
    %p119 = scmp.eq.s32.totalorder %s27, 0
    %p120 = por %p118, %p119
    %p121 = scmp.ne.s32.totalorder %s110, %s113
    %p122 = scmp.eq.s32.totalorder %s32, 1
    %p123 = por %p121, %p122
    %p124 = scmp.ne.s32.totalorder %s113, %s114
    %p125 = scmp.eq.s32.totalorder %s32, 0
    %p126 = por %p124, %p125
    %p127 = scmp.ne.s32.totalorder %s113, %s114
    %p128 = scmp.eq.s32.totalorder %s33, 1
    %p129 = por %p127, %p128
    %p131 = scmp.ne.s32.totalorder %s114, %s130
    %p132 = scmp.eq.s32.totalorder %s33, 0
    %p133 = por %p131, %p132
    %s134 = ssub.s32 %s27, %s34
    %p135 = scmp.eq.s32.totalorder %s134, 0
    %s137 = sadd.s32 %s136, 1
    %s138 = scalar_select %p135, %s136, %s137
    %p141 = pneg %p135
    %p142 = scmp.eq.s32.totalorder %s27, 1
    %p143 = por %p141, %p142
    %p144 = scmp.ne.s32.totalorder %s136, %s139
    %p145 = scmp.eq.s32.totalorder %s27, 0
    %p146 = por %p144, %p145
    %p147 = scmp.ne.s32.totalorder %s136, %s139
    %p148 = scmp.eq.s32.totalorder %s32, 1
    %p149 = por %p147, %p148
    %p150 = scmp.ne.s32.totalorder %s139, %s140
    %p151 = scmp.eq.s32.totalorder %s32, 0
    %p152 = por %p150, %p151
    %p153 = scmp.ne.s32.totalorder %s139, %s140
    %p154 = scmp.eq.s32.totalorder %s33, 1
    %p155 = por %p153, %p154
    %p157 = scmp.ne.s32.totalorder %s140, %s156
    %p158 = scmp.eq.s32.totalorder %s33, 0
    %p159 = por %p157, %p158
    %s160 = ssub.s32 %s27, %s34
    %p161 = scmp.eq.s32.totalorder %s160, 0
    %s163 = sadd.s32 %s162, 1
    %s164 = scalar_select %p161, %s162, %s163
    %p167 = pneg %p161
    %p168 = scmp.eq.s32.totalorder %s27, 1
    %p169 = por %p167, %p168
    %p170 = scmp.ne.s32.totalorder %s162, %s165
    %p171 = scmp.eq.s32.totalorder %s27, 0
    %p172 = por %p170, %p171
    %p173 = scmp.ne.s32.totalorder %s162, %s165
    %p174 = scmp.eq.s32.totalorder %s32, 1
    %p175 = por %p173, %p174
    %p176 = scmp.ne.s32.totalorder %s165, %s166
    %p177 = scmp.eq.s32.totalorder %s32, 0
    %p178 = por %p176, %p177
    %p179 = scmp.ne.s32.totalorder %s165, %s166
    %p180 = scmp.eq.s32.totalorder %s33, 1
    %p181 = por %p179, %p180
    %p183 = scmp.ne.s32.totalorder %s166, %s182
    %p184 = scmp.eq.s32.totalorder %s33, 0
    %p185 = por %p183, %p184
    %s186 = ssub.s32 %s27, %s34
    %p187 = scmp.eq.s32.totalorder %s186, 0
    %s189 = sadd.s32 %s188, 1
    %s190 = scalar_select %p187, %s188, %s189
    %p193 = pneg %p187
    %p194 = scmp.eq.s32.totalorder %s27, 1
    %p195 = por %p193, %p194
    %p196 = scmp.ne.s32.totalorder %s188, %s191
    %p197 = scmp.eq.s32.totalorder %s27, 0
    %p198 = por %p196, %p197
    %p199 = scmp.ne.s32.totalorder %s188, %s191
    %p200 = scmp.eq.s32.totalorder %s32, 1
    %p201 = por %p199, %p200
    %p202 = scmp.ne.s32.totalorder %s191, %s192
    %p203 = scmp.eq.s32.totalorder %s32, 0
    %p204 = por %p202, %p203
    %p205 = scmp.ne.s32.totalorder %s191, %s192
    %p206 = scmp.eq.s32.totalorder %s33, 1
    %p207 = por %p205, %p206
    %p209 = scmp.ne.s32.totalorder %s192, %s208
    %p210 = scmp.eq.s32.totalorder %s33, 0
    %p211 = por %p209, %p210
    %s212 = ssub.s32 %s27, %s34
    %p213 = scmp.eq.s32.totalorder %s212, 0
    %s215 = sadd.s32 %s214, 1
    %s216 = scalar_select %p213, %s214, %s215
    %p219 = pneg %p213
    %p220 = scmp.eq.s32.totalorder %s27, 1
    %p221 = por %p219, %p220
    %p222 = scmp.ne.s32.totalorder %s214, %s217
    %p223 = scmp.eq.s32.totalorder %s27, 0
    %p224 = por %p222, %p223
    %p225 = scmp.ne.s32.totalorder %s214, %s217
    %p226 = scmp.eq.s32.totalorder %s32, 1
    %p227 = por %p225, %p226
    %p228 = scmp.ne.s32.totalorder %s217, %s218
    %p229 = scmp.eq.s32.totalorder %s32, 0
    %p230 = por %p228, %p229
    %p231 = scmp.ne.s32.totalorder %s217, %s218
    %p232 = scmp.eq.s32.totalorder %s33, 1
    %p233 = por %p231, %p232
    %p235 = scmp.ne.s32.totalorder %s218, %s234
    %p236 = scmp.eq.s32.totalorder %s33, 0
    %p237 = por %p235, %p236
    %s238 = ssub.s32 %s27, %s34
    %p239 = scmp.eq.s32.totalorder %s238, 0
    %s241 = sadd.s32 %s240, 1
    %s242 = scalar_select %p239, %s240, %s241
    %p245 = pneg %p239
    %p246 = scmp.eq.s32.totalorder %s27, 1
    %p247 = por %p245, %p246
    %p248 = scmp.ne.s32.totalorder %s240, %s243
    %p249 = scmp.eq.s32.totalorder %s27, 0
    %p250 = por %p248, %p249
    %p251 = scmp.ne.s32.totalorder %s240, %s243
    %p252 = scmp.eq.s32.totalorder %s32, 1
    %p253 = por %p251, %p252
    %p254 = scmp.ne.s32.totalorder %s243, %s244
    %p255 = scmp.eq.s32.totalorder %s32, 0
    %p256 = por %p254, %p255
    %p257 = scmp.ne.s32.totalorder %s243, %s244
    %p258 = scmp.eq.s32.totalorder %s33, 1
    %p259 = por %p257, %p258
    %p261 = scmp.ne.s32.totalorder %s244, %s260
    %p262 = scmp.eq.s32.totalorder %s33, 0
    %p263 = por %p261, %p262
    %s264 = ssub.s32 %s27, %s34
    %p265 = scmp.eq.s32.totalorder %s264, 0
    %s267 = sadd.s32 %s266, 1
    %s268 = scalar_select %p265, %s266, %s267
    %p271 = pneg %p265
    %p272 = scmp.eq.s32.totalorder %s27, 1
    %p273 = por %p271, %p272
    %p274 = scmp.ne.s32.totalorder %s266, %s269
    %p275 = scmp.eq.s32.totalorder %s27, 0
    %p276 = por %p274, %p275
    %p277 = scmp.ne.s32.totalorder %s266, %s269
    %p278 = scmp.eq.s32.totalorder %s32, 1
    %p279 = por %p277, %p278
    %p280 = scmp.ne.s32.totalorder %s269, %s270
    %p281 = scmp.eq.s32.totalorder %s32, 0
    %p282 = por %p280, %p281
    %p283 = scmp.ne.s32.totalorder %s269, %s270
    %p284 = scmp.eq.s32.totalorder %s33, 1
    %p285 = por %p283, %p284
    %p287 = scmp.ne.s32.totalorder %s270, %s286
    %p288 = scmp.eq.s32.totalorder %s33, 0
    %p289 = por %p287, %p288
    %s290 = ssub.s32 %s27, %s34
    %p291 = scmp.eq.s32.totalorder %s290, 0
    %s293 = sadd.s32 %s292, 1
    %s294 = scalar_select %p291, %s292, %s293
    %p297 = pneg %p291
    %p298 = scmp.eq.s32.totalorder %s27, 1
    %p299 = por %p297, %p298
    %p300 = scmp.ne.s32.totalorder %s292, %s295
    %p301 = scmp.eq.s32.totalorder %s27, 0
    %p302 = por %p300, %p301
    %p303 = scmp.ne.s32.totalorder %s292, %s295
    %p304 = scmp.eq.s32.totalorder %s32, 1
    %p305 = por %p303, %p304
    %p306 = scmp.ne.s32.totalorder %s295, %s296
    %p307 = scmp.eq.s32.totalorder %s32, 0
    %p308 = por %p306, %p307
    %p309 = scmp.ne.s32.totalorder %s295, %s296
    %p310 = scmp.eq.s32.totalorder %s33, 1
    %p311 = por %p309, %p310
    %p313 = scmp.ne.s32.totalorder %s296, %s312
    %p314 = scmp.eq.s32.totalorder %s33, 0
    %p315 = por %p313, %p314
    %s316 = ssub.s32 %s27, %s34
    %p317 = scmp.eq.s32.totalorder %s316, 0
    %s319 = sadd.s32 %s318, 1
    %s320 = scalar_select %p317, %s318, %s319
    %p323 = pneg %p317
    %p324 = scmp.eq.s32.totalorder %s27, 1
    %p325 = por %p323, %p324
    %p326 = scmp.ne.s32.totalorder %s318, %s321
    %p327 = scmp.eq.s32.totalorder %s27, 0
    %p328 = por %p326, %p327
    %p329 = scmp.ne.s32.totalorder %s318, %s321
    %p330 = scmp.eq.s32.totalorder %s32, 1
    %p331 = por %p329, %p330
    %p332 = scmp.ne.s32.totalorder %s321, %s322
    %p333 = scmp.eq.s32.totalorder %s32, 0
    %p334 = por %p332, %p333
    %p335 = scmp.ne.s32.totalorder %s321, %s322
    %p336 = scmp.eq.s32.totalorder %s33, 1
    %p337 = por %p335, %p336
    %p339 = scmp.ne.s32.totalorder %s322, %s338
    %p340 = scmp.eq.s32.totalorder %s33, 0
    %p341 = por %p339, %p340
    %s342 = ssub.s32 %s27, %s34
    %p343 = scmp.eq.s32.totalorder %s342, 0
    %s345 = sadd.s32 %s344, 1
    %s346 = scalar_select %p343, %s344, %s345
    %p349 = pneg %p343
    %p350 = scmp.eq.s32.totalorder %s27, 1
    %p351 = por %p349, %p350
    %p352 = scmp.ne.s32.totalorder %s344, %s347
    %p353 = scmp.eq.s32.totalorder %s27, 0
    %p354 = por %p352, %p353
    %p355 = scmp.ne.s32.totalorder %s344, %s347
    %p356 = scmp.eq.s32.totalorder %s32, 1
    %p357 = por %p355, %p356
    %p358 = scmp.ne.s32.totalorder %s347, %s348
    %p359 = scmp.eq.s32.totalorder %s32, 0
    %p360 = por %p358, %p359
    %p361 = scmp.ne.s32.totalorder %s347, %s348
    %p362 = scmp.eq.s32.totalorder %s33, 1
    %p363 = por %p361, %p362
    %p365 = scmp.ne.s32.totalorder %s348, %s364
    %p366 = scmp.eq.s32.totalorder %s33, 0
    %p367 = por %p365, %p366
    %s368 = ssub.s32 %s27, %s34
    %p369 = scmp.eq.s32.totalorder %s368, 0
    %s371 = sadd.s32 %s370, 1
    %s372 = scalar_select %p369, %s370, %s371
    %p375 = pneg %p369
    %p376 = scmp.eq.s32.totalorder %s27, 1
    %p377 = por %p375, %p376
    %p378 = scmp.ne.s32.totalorder %s370, %s373
    %p379 = scmp.eq.s32.totalorder %s27, 0
    %p380 = por %p378, %p379
    %p381 = scmp.ne.s32.totalorder %s370, %s373
    %p382 = scmp.eq.s32.totalorder %s32, 1
    %p383 = por %p381, %p382
    %p384 = scmp.ne.s32.totalorder %s373, %s374
    %p385 = scmp.eq.s32.totalorder %s32, 0
    %p386 = por %p384, %p385
    %p387 = scmp.ne.s32.totalorder %s373, %s374
    %p388 = scmp.eq.s32.totalorder %s33, 1
    %p389 = por %p387, %p388
    %p391 = scmp.ne.s32.totalorder %s374, %s390
    %p392 = scmp.eq.s32.totalorder %s33, 0
    %p393 = por %p391, %p392
    %s394 = ssub.s32 %s27, %s34
    %p395 = scmp.eq.s32.totalorder %s394, 0
    %s397 = sadd.s32 %s396, 1
    %s398 = scalar_select %p395, %s396, %s397
    %p401 = pneg %p395
    %p402 = scmp.eq.s32.totalorder %s27, 1
    %p403 = por %p401, %p402
    %p404 = scmp.ne.s32.totalorder %s396, %s399
    %p405 = scmp.eq.s32.totalorder %s27, 0
    %p406 = por %p404, %p405
    %p407 = scmp.ne.s32.totalorder %s396, %s399
    %p408 = scmp.eq.s32.totalorder %s32, 1
    %p409 = por %p407, %p408
    %p410 = scmp.ne.s32.totalorder %s399, %s400
    %p411 = scmp.eq.s32.totalorder %s32, 0
    %p412 = por %p410, %p411
    %p413 = scmp.ne.s32.totalorder %s399, %s400
    %p414 = scmp.eq.s32.totalorder %s33, 1
    %p415 = por %p413, %p414
    %p417 = scmp.ne.s32.totalorder %s400, %s416
    %p418 = scmp.eq.s32.totalorder %s33, 0
    %p419 = por %p417, %p418
    %s420 = ssub.s32 %s27, %s34
    %p421 = scmp.eq.s32.totalorder %s420, 0
    %s423 = sadd.s32 %s422, 1
    %s424 = scalar_select %p421, %s422, %s423
    %p427 = pneg %p421
    %p428 = scmp.eq.s32.totalorder %s27, 1
    %p429 = por %p427, %p428
    %p430 = scmp.ne.s32.totalorder %s422, %s425
    %p431 = scmp.eq.s32.totalorder %s27, 0
    %p432 = por %p430, %p431
    %p433 = scmp.ne.s32.totalorder %s422, %s425
    %p434 = scmp.eq.s32.totalorder %s32, 1
    %p435 = por %p433, %p434
    %p436 = scmp.ne.s32.totalorder %s425, %s426
    %p437 = scmp.eq.s32.totalorder %s32, 0
    %p438 = por %p436, %p437
    %p439 = scmp.ne.s32.totalorder %s425, %s426
    %p440 = scmp.eq.s32.totalorder %s33, 1
    %p441 = por %p439, %p440
    %p443 = scmp.ne.s32.totalorder %s426, %s442
    %p444 = scmp.eq.s32.totalorder %s33, 0
    %p445 = por %p443, %p444
    %s446 = ssub.s32 %s27, %s34
    %p447 = scmp.eq.s32.totalorder %s446, 0
    %s449 = sadd.s32 %s448, 1
    %s450 = scalar_select %p447, %s448, %s449
    %p453 = pneg %p447
    %p454 = scmp.eq.s32.totalorder %s27, 1
    %p455 = por %p453, %p454
    %p456 = scmp.ne.s32.totalorder %s448, %s451
    %p457 = scmp.eq.s32.totalorder %s27, 0
    %p458 = por %p456, %p457
    %p459 = scmp.ne.s32.totalorder %s448, %s451
    %p460 = scmp.eq.s32.totalorder %s32, 1
    %p461 = por %p459, %p460
    %p462 = scmp.ne.s32.totalorder %s451, %s452
    %p463 = scmp.eq.s32.totalorder %s32, 0
    %p464 = por %p462, %p463
    %p465 = scmp.ne.s32.totalorder %s451, %s452
    %p466 = scmp.eq.s32.totalorder %s33, 1
    %p467 = por %p465, %p466
    %p469 = scmp.ne.s32.totalorder %s452, %s468
    %p470 = scmp.eq.s32.totalorder %s33, 0
    %p471 = por %p469, %p470
    %s472 = ssub.s32 %s27, %s34
    %p473 = scmp.eq.s32.totalorder %s472, 0
    %s475 = sadd.s32 %s474, 1
    %s476 = scalar_select %p473, %s474, %s475
    %p479 = pneg %p473
    %p480 = scmp.eq.s32.totalorder %s27, 1
    %p481 = por %p479, %p480
    %p482 = scmp.ne.s32.totalorder %s474, %s477
    %p483 = scmp.eq.s32.totalorder %s27, 0
    %p484 = por %p482, %p483
    %p485 = scmp.ne.s32.totalorder %s474, %s477
    %p486 = scmp.eq.s32.totalorder %s32, 1
    %p487 = por %p485, %p486
    %p488 = scmp.ne.s32.totalorder %s477, %s478
    %p489 = scmp.eq.s32.totalorder %s32, 0
    %p490 = por %p488, %p489
    %p491 = scmp.ne.s32.totalorder %s477, %s478
    %p492 = scmp.eq.s32.totalorder %s33, 1
    %p493 = por %p491, %p492
    %p495 = scmp.ne.s32.totalorder %s478, %s494
    %p496 = scmp.eq.s32.totalorder %s33, 0
    %p497 = por %p495, %p496
    %s498 = ssub.s32 %s27, %s34
    %p499 = scmp.eq.s32.totalorder %s498, 0
    %s501 = sadd.s32 %s500, 1
    %s502 = scalar_select %p499, %s500, %s501
    %p505 = pneg %p499
    %p506 = scmp.eq.s32.totalorder %s27, 1
    %p507 = por %p505, %p506
    %p508 = scmp.ne.s32.totalorder %s500, %s503
    %p509 = scmp.eq.s32.totalorder %s27, 0
    %p510 = por %p508, %p509
    %p511 = scmp.ne.s32.totalorder %s500, %s503
    %p512 = scmp.eq.s32.totalorder %s32, 1
    %p513 = por %p511, %p512
    %p514 = scmp.ne.s32.totalorder %s503, %s504
    %p515 = scmp.eq.s32.totalorder %s32, 0
    %p516 = por %p514, %p515
    %p517 = scmp.ne.s32.totalorder %s503, %s504
    %p518 = scmp.eq.s32.totalorder %s33, 1
    %p519 = por %p517, %p518
    %p521 = scmp.ne.s32.totalorder %s504, %s520
    %p522 = scmp.eq.s32.totalorder %s33, 0
    %p523 = por %p521, %p522
    %s524 = ssub.s32 %s27, %s34
    %p525 = scmp.eq.s32.totalorder %s524, 0
    %s527 = sadd.s32 %s526, 1
    %s528 = scalar_select %p525, %s526, %s527
    %p531 = pneg %p525
    %p532 = scmp.eq.s32.totalorder %s27, 1
    %p533 = por %p531, %p532
    %p534 = scmp.ne.s32.totalorder %s526, %s529
    %p535 = scmp.eq.s32.totalorder %s27, 0
    %p536 = por %p534, %p535
    %p537 = scmp.ne.s32.totalorder %s526, %s529
    %p538 = scmp.eq.s32.totalorder %s32, 1
    %p539 = por %p537, %p538
    %p540 = scmp.ne.s32.totalorder %s529, %s530
    %p541 = scmp.eq.s32.totalorder %s32, 0
    %p542 = por %p540, %p541
    %p543 = scmp.ne.s32.totalorder %s529, %s530
    %p544 = scmp.eq.s32.totalorder %s33, 1
    %p545 = por %p543, %p544
    %p547 = scmp.ne.s32.totalorder %s530, %s546
    %p548 = scmp.eq.s32.totalorder %s33, 0
    %p549 = por %p547, %p548
    %s550 = ssub.s32 %s27, %s34
    %p551 = scmp.eq.s32.totalorder %s550, 0
    %s553 = sadd.s32 %s552, 1
    %s554 = scalar_select %p551, %s552, %s553
    %p557 = pneg %p551
    %p558 = scmp.eq.s32.totalorder %s27, 1
    %p559 = por %p557, %p558
    %p560 = scmp.ne.s32.totalorder %s552, %s555
    %p561 = scmp.eq.s32.totalorder %s27, 0
    %p562 = por %p560, %p561
    %p563 = scmp.ne.s32.totalorder %s552, %s555
    %p564 = scmp.eq.s32.totalorder %s32, 1
    %p565 = por %p563, %p564
    %p566 = scmp.ne.s32.totalorder %s555, %s556
    %p567 = scmp.eq.s32.totalorder %s32, 0
    %p568 = por %p566, %p567
    %p569 = scmp.ne.s32.totalorder %s555, %s556
    %p570 = scmp.eq.s32.totalorder %s33, 1
    %p571 = por %p569, %p570
    %p573 = scmp.ne.s32.totalorder %s556, %s572
    %p574 = scmp.eq.s32.totalorder %s33, 0
    %p575 = por %p573, %p574
    %s576 = ssub.s32 %s27, %s34
    %p577 = scmp.eq.s32.totalorder %s576, 0
    %s579 = sadd.s32 %s578, 1
    %s580 = scalar_select %p577, %s578, %s579
    %p583 = pneg %p577
    %p584 = scmp.eq.s32.totalorder %s27, 1
    %p585 = por %p583, %p584
    %p586 = scmp.ne.s32.totalorder %s578, %s581
    %p587 = scmp.eq.s32.totalorder %s27, 0
    %p588 = por %p586, %p587
    %p589 = scmp.ne.s32.totalorder %s578, %s581
    %p590 = scmp.eq.s32.totalorder %s32, 1
    %p591 = por %p589, %p590
    %p592 = scmp.ne.s32.totalorder %s581, %s582
    %p593 = scmp.eq.s32.totalorder %s32, 0
    %p594 = por %p592, %p593
    %p595 = scmp.ne.s32.totalorder %s581, %s582
    %p596 = scmp.eq.s32.totalorder %s33, 1
    %p597 = por %p595, %p596
    %p599 = scmp.ne.s32.totalorder %s582, %s598
    %p600 = scmp.eq.s32.totalorder %s33, 0
    %p601 = por %p599, %p600
    %p602 = scmp.le.s32.totalorder 1, %s27
    %p603 = scmp.lt.s32.totalorder %s27, 3
    %p604 = pnand %p602, %p603
    %p605 = pneg %p604
    // Predicated region
    $region9: #{tssr_forward.5} parent=5 // pred_check
      _
    $region10: #{tssr_forward.5} parent=5 // pred_check_branch
      %607 = sbr.rel (%p604) target = $region12
    $region11: #{tssr_forward.5} parent=5 // pred_region
      %s608 = ssub.s32 %s27, 1
      // Predicated region
      $region13: #{tssr_forward.5} parent=11 // pred_check
        %p609 = pneg %p100
      $region14: #{tssr_forward.5} parent=11 // pred_check_branch
        %611 = sbr.rel (%p609) target = $region16
      $region15: #{tssr_forward.5} parent=11 // pred_region
        _
      $region16: #{tssr_forward.5} parent=11 // pred_fallthru
        _
    $region12: #{tssr_forward.5} parent=5 // pred_fallthru
      _
    %p612 = scmp.lt.s32.totalorder %s27, 2
    // Predicated region
    $region17: #{tssr_forward.5} parent=5 // pred_check
      %p613 = pneg %p612
    $region18: #{tssr_forward.5} parent=5 // pred_check_branch
      %615 = sbr.rel (%p613) target = $region20
    $region19: #{tssr_forward.5} parent=5 // pred_region
      // Predicated region
      $region21: #{tssr_forward.5} parent=19 // pred_check
        %p616 = pneg %p47
      $region22: #{tssr_forward.5} parent=19 // pred_check_branch
        %618 = sbr.rel (%p616) target = $region24
      $region23: #{tssr_forward.5} parent=19 // pred_region
        %p619 = scmp.lt.s32.totalorder %s27, 1
        %s620 = scalar_select %p619, %s27, 1
        %s621 = smul.addr %s620, 2
        %s622 = smul.addr %s621, 8
        %s623 = scalar_lea.vmem %s0, %s622
      $region24: #{tssr_forward.5} parent=19 // pred_fallthru
        _
      // Predicated region
      $region25: #{tssr_forward.5} parent=19 // pred_check
        %p624 = pneg %p73
      $region26: #{tssr_forward.5} parent=19 // pred_check_branch
        %626 = sbr.rel (%p624) target = $region28
      $region27: #{tssr_forward.5} parent=19 // pred_region
        %p627 = scmp.lt.s32.totalorder %s27, 1
        %s628 = scalar_select %p627, %s27, 1
        %s629 = smul.addr %s628, 2
        %s630 = smul.addr %s629, 8
        %s631 = scalar_lea.vmem %s1, %s630
      $region28: #{tssr_forward.5} parent=19 // pred_fallthru
        _
      // Predicated region
      $region29: #{tssr_forward.5} parent=19 // pred_check
        %p632 = pneg %p120
      $region30: #{tssr_forward.5} parent=19 // pred_check_branch
        %634 = sbr.rel (%p632) target = $region32
      $region31: #{tssr_forward.5} parent=19 // pred_region
        %p635 = scmp.lt.s32.totalorder %s27, 1
        %s636 = scalar_select %p635, %s27, 1
        %s637 = smul.addr %s636, 8
        %s638 = smul.addr %s637, 4
        %s639 = scalar_lea.vmem %s3, %s638
      $region32: #{tssr_forward.5} parent=19 // pred_fallthru
        _
      // Predicated region
      $region33: #{tssr_forward.5} parent=19 // pred_check
        %p640 = pneg %p146
      $region34: #{tssr_forward.5} parent=19 // pred_check_branch
        %642 = sbr.rel (%p640) target = $region36
      $region35: #{tssr_forward.5} parent=19 // pred_region
        %p643 = scmp.lt.s32.totalorder %s27, 1
        %s644 = scalar_select %p643, %s27, 1
        %s645 = smul.addr %s644, 2
        %s646 = scalar_lea.vmem %s4, %s645
      $region36: #{tssr_forward.5} parent=19 // pred_fallthru
        _
      // Predicated region
      $region37: #{tssr_forward.5} parent=19 // pred_check
        %p647 = pneg %p172
      $region38: #{tssr_forward.5} parent=19 // pred_check_branch
        %649 = sbr.rel (%p647) target = $region40
      $region39: #{tssr_forward.5} parent=19 // pred_region
        %p650 = scmp.lt.s32.totalorder %s27, 1
        %s651 = scalar_select %p650, %s27, 1
        %s652 = smul.addr %s651, 8
        %s653 = smul.addr %s652, 4
        %s654 = scalar_lea.vmem %s5, %s653
      $region40: #{tssr_forward.5} parent=19 // pred_fallthru
        _
      // Predicated region
      $region41: #{tssr_forward.5} parent=19 // pred_check
        %p655 = pneg %p198
      $region42: #{tssr_forward.5} parent=19 // pred_check_branch
        %657 = sbr.rel (%p655) target = $region44
      $region43: #{tssr_forward.5} parent=19 // pred_region
        %p658 = scmp.lt.s32.totalorder %s27, 1
        %s659 = scalar_select %p658, %s27, 1
        %s660 = smul.addr %s659, 2
        %s661 = scalar_lea.vmem %s6, %s660
      $region44: #{tssr_forward.5} parent=19 // pred_fallthru
        _
      // Predicated region
      $region45: #{tssr_forward.5} parent=19 // pred_check
        %p662 = pneg %p224
      $region46: #{tssr_forward.5} parent=19 // pred_check_branch
        %664 = sbr.rel (%p662) target = $region48
      $region47: #{tssr_forward.5} parent=19 // pred_region
        %p665 = scmp.lt.s32.totalorder %s27, 1
        %s666 = scalar_select %p665, %s27, 1
        %s667 = smul.addr %s666, 8
        %s668 = smul.addr %s667, 4
        %s669 = scalar_lea.vmem %s7, %s668
      $region48: #{tssr_forward.5} parent=19 // pred_fallthru
        _
      // Predicated region
      $region49: #{tssr_forward.5} parent=19 // pred_check
        %p670 = pneg %p250
      $region50: #{tssr_forward.5} parent=19 // pred_check_branch
        %672 = sbr.rel (%p670) target = $region52
      $region51: #{tssr_forward.5} parent=19 // pred_region
        %p673 = scmp.lt.s32.totalorder %s27, 1
        %s674 = scalar_select %p673, %s27, 1
        %s675 = smul.addr %s674, 2
        %s676 = scalar_lea.vmem %s8, %s675
      $region52: #{tssr_forward.5} parent=19 // pred_fallthru
        _
      // Predicated region
      $region53: #{tssr_forward.5} parent=19 // pred_check
        %p677 = pneg %p276
      $region54: #{tssr_forward.5} parent=19 // pred_check_branch
        %679 = sbr.rel (%p677) target = $region56
      $region55: #{tssr_forward.5} parent=19 // pred_region
        %p680 = scmp.lt.s32.totalorder %s27, 1
        %s681 = scalar_select %p680, %s27, 1
        %s682 = smul.addr %s681, 8
        %s683 = smul.addr %s682, 4
        %s684 = scalar_lea.vmem %s9, %s683
      $region56: #{tssr_forward.5} parent=19 // pred_fallthru
        _
      // Predicated region
      $region57: #{tssr_forward.5} parent=19 // pred_check
        %p685 = pneg %p302
      $region58: #{tssr_forward.5} parent=19 // pred_check_branch
        %687 = sbr.rel (%p685) target = $region60
      $region59: #{tssr_forward.5} parent=19 // pred_region
        %p688 = scmp.lt.s32.totalorder %s27, 1
        %s689 = scalar_select %p688, %s27, 1
        %s690 = smul.addr %s689, 2
        %s691 = scalar_lea.vmem %s10, %s690
      $region60: #{tssr_forward.5} parent=19 // pred_fallthru
        _
      // Predicated region
      $region61: #{tssr_forward.5} parent=19 // pred_check
        %p692 = pneg %p328
      $region62: #{tssr_forward.5} parent=19 // pred_check_branch
        %694 = sbr.rel (%p692) target = $region64
      $region63: #{tssr_forward.5} parent=19 // pred_region
        %p695 = scmp.lt.s32.totalorder %s27, 1
        %s696 = scalar_select %p695, %s27, 1
        %s697 = smul.addr %s696, 2
        %s698 = scalar_lea.vmem %s11, %s697
      $region64: #{tssr_forward.5} parent=19 // pred_fallthru
        _
      // Predicated region
      $region65: #{tssr_forward.5} parent=19 // pred_check
        %p699 = pneg %p354
      $region66: #{tssr_forward.5} parent=19 // pred_check_branch
        %701 = sbr.rel (%p699) target = $region68
      $region67: #{tssr_forward.5} parent=19 // pred_region
        %p702 = scmp.lt.s32.totalorder %s27, 1
        %s703 = scalar_select %p702, %s27, 1
        %s704 = smul.addr %s703, 2
        %s705 = scalar_lea.vmem %s12, %s704
      $region68: #{tssr_forward.5} parent=19 // pred_fallthru
        _
      // Predicated region
      $region69: #{tssr_forward.5} parent=19 // pred_check
        %p706 = pneg %p380
      $region70: #{tssr_forward.5} parent=19 // pred_check_branch
        %708 = sbr.rel (%p706) target = $region72
      $region71: #{tssr_forward.5} parent=19 // pred_region
        %p709 = scmp.lt.s32.totalorder %s27, 1
        %s710 = scalar_select %p709, %s27, 1
        %s711 = smul.addr %s710, 8
        %s712 = smul.addr %s711, 4
        %s713 = scalar_lea.vmem %s13, %s712
      $region72: #{tssr_forward.5} parent=19 // pred_fallthru
        _
      // Predicated region
      $region73: #{tssr_forward.5} parent=19 // pred_check
        %p714 = pneg %p406
      $region74: #{tssr_forward.5} parent=19 // pred_check_branch
        %716 = sbr.rel (%p714) target = $region76
      $region75: #{tssr_forward.5} parent=19 // pred_region
        %p717 = scmp.lt.s32.totalorder %s27, 1
        %s718 = scalar_select %p717, %s27, 1
        %s719 = smul.addr %s718, 2
        %s720 = scalar_lea.vmem %s14, %s719
      $region76: #{tssr_forward.5} parent=19 // pred_fallthru
        _
      // Predicated region
      $region77: #{tssr_forward.5} parent=19 // pred_check
        %p721 = pneg %p432
      $region78: #{tssr_forward.5} parent=19 // pred_check_branch
        %723 = sbr.rel (%p721) target = $region80
      $region79: #{tssr_forward.5} parent=19 // pred_region
        %p724 = scmp.lt.s32.totalorder %s27, 1
        %s725 = scalar_select %p724, %s27, 1
        %s726 = smul.addr %s725, 16
        %s727 = smul.addr %s726, 4
        %s728 = scalar_lea.vmem %s15, %s727
      $region80: #{tssr_forward.5} parent=19 // pred_fallthru
        _
      // Predicated region
      $region81: #{tssr_forward.5} parent=19 // pred_check
        %p729 = pneg %p458
      $region82: #{tssr_forward.5} parent=19 // pred_check_branch
        %731 = sbr.rel (%p729) target = $region84
      $region83: #{tssr_forward.5} parent=19 // pred_region
        %p732 = scmp.lt.s32.totalorder %s27, 1
        %s733 = scalar_select %p732, %s27, 1
        %s734 = smul.addr %s733, 2
        %s735 = scalar_lea.vmem %s16, %s734
      $region84: #{tssr_forward.5} parent=19 // pred_fallthru
        _
      // Predicated region
      $region85: #{tssr_forward.5} parent=19 // pred_check
        %p736 = pneg %p484
      $region86: #{tssr_forward.5} parent=19 // pred_check_branch
        %738 = sbr.rel (%p736) target = $region88
      $region87: #{tssr_forward.5} parent=19 // pred_region
        %p739 = scmp.lt.s32.totalorder %s27, 1
        %s740 = scalar_select %p739, %s27, 1
        %s741 = smul.addr %s740, 2
        %s742 = scalar_lea.vmem %s17, %s741
      $region88: #{tssr_forward.5} parent=19 // pred_fallthru
        _
      // Predicated region
      $region89: #{tssr_forward.5} parent=19 // pred_check
        %p743 = pneg %p510
      $region90: #{tssr_forward.5} parent=19 // pred_check_branch
        %745 = sbr.rel (%p743) target = $region92
      $region91: #{tssr_forward.5} parent=19 // pred_region
        %p746 = scmp.lt.s32.totalorder %s27, 1
        %s747 = scalar_select %p746, %s27, 1
        %s748 = smul.addr %s747, 2
        %s749 = scalar_lea.vmem %s18, %s748
      $region92: #{tssr_forward.5} parent=19 // pred_fallthru
        _
      // Predicated region
      $region93: #{tssr_forward.5} parent=19 // pred_check
        %p750 = pneg %p536
      $region94: #{tssr_forward.5} parent=19 // pred_check_branch
        %752 = sbr.rel (%p750) target = $region96
      $region95: #{tssr_forward.5} parent=19 // pred_region
        %p753 = scmp.lt.s32.totalorder %s27, 1
        %s754 = scalar_select %p753, %s27, 1
        %s755 = smul.addr %s754, 2
        %s756 = scalar_lea.vmem %s19, %s755
      $region96: #{tssr_forward.5} parent=19 // pred_fallthru
        _
      // Predicated region
      $region97: #{tssr_forward.5} parent=19 // pred_check
        %p757 = pneg %p562
      $region98: #{tssr_forward.5} parent=19 // pred_check_branch
        %759 = sbr.rel (%p757) target = $region100
      $region99: #{tssr_forward.5} parent=19 // pred_region
        %p760 = scmp.lt.s32.totalorder %s27, 1
        %s761 = scalar_select %p760, %s27, 1
        %s762 = smul.addr %s761, 2
        %s763 = scalar_lea.vmem %s20, %s762
      $region100: #{tssr_forward.5} parent=19 // pred_fallthru
        _
    $region20: #{tssr_forward.5} parent=5 // pred_fallthru
      _
    %p764 = scmp.le.s32.totalorder 1, %s27
    %p765 = scmp.lt.s32.totalorder %s27, 3
    %p766 = pnand %p764, %p765
    %p767 = pneg %p766
    // Predicated region
    $region101: #{tssr_forward.5} parent=5 // pred_check
      _
    $region102: #{tssr_forward.5} parent=5 // pred_check_branch
      %769 = sbr.rel (%p766) target = $region104
    $region103: #{tssr_forward.5} parent=5 // pred_region
      %s770 = ssub.s32 %s27, 1
      %p771 = scmp.lt.s32.totalorder %s32, 1
      %s772 = scalar_select %p771, %s32, 1
      %s773 = smul.addr %s772, 2
      %s774 = smul.addr %s773, 8
      %s775 = scalar_lea.vmem %s0, %s774
      %p776 = pneg %p53
      %p777 = pneg %p50
      %p778 = scmp.lt.s32.totalorder %s32, 1
      %s779 = scalar_select %p778, %s32, 1
      %s780 = smul.addr %s779, 2
      %s781 = smul.addr %s780, 8
      %s782 = scalar_lea.vmem %s1, %s781
      %p783 = pneg %p79
      %p784 = pneg %p76
      %p785 = pneg %p100
      %p786 = pneg %p97
      %p787 = scmp.lt.s32.totalorder %s32, 1
      %s788 = scalar_select %p787, %s32, 1
      %s789 = smul.addr %s788, 8
      %s790 = smul.addr %s789, 4
      %s791 = scalar_lea.vmem %s3, %s790
      %p792 = pneg %p126
      %p793 = pneg %p123
      %p794 = scmp.lt.s32.totalorder %s32, 1
      %s795 = scalar_select %p794, %s32, 1
      %s796 = smul.addr %s795, 2
      %s797 = scalar_lea.vmem %s4, %s796
      %p798 = pneg %p152
      %p799 = pneg %p149
      %p800 = scmp.lt.s32.totalorder %s32, 1
      %s801 = scalar_select %p800, %s32, 1
      %s802 = smul.addr %s801, 8
      %s803 = smul.addr %s802, 4
      %s804 = scalar_lea.vmem %s5, %s803
      %p805 = pneg %p178
      %p806 = pneg %p175
      %p807 = scmp.lt.s32.totalorder %s32, 1
      %s808 = scalar_select %p807, %s32, 1
      %s809 = smul.addr %s808, 2
      %s810 = scalar_lea.vmem %s6, %s809
      %p811 = pneg %p204
      %p812 = pneg %p201
      %p813 = scmp.lt.s32.totalorder %s32, 1
      %s814 = scalar_select %p813, %s32, 1
      %s815 = smul.addr %s814, 8
      %s816 = smul.addr %s815, 4
      %s817 = scalar_lea.vmem %s7, %s816
      %p818 = pneg %p230
      %p819 = pneg %p227
      %p820 = scmp.lt.s32.totalorder %s32, 1
      %s821 = scalar_select %p820, %s32, 1
      %s822 = smul.addr %s821, 2
      %s823 = scalar_lea.vmem %s8, %s822
      %p824 = pneg %p256
      %p825 = pneg %p253
      %p826 = scmp.lt.s32.totalorder %s32, 1
      %s827 = scalar_select %p826, %s32, 1
      %s828 = smul.addr %s827, 8
      %s829 = smul.addr %s828, 4
      %s830 = scalar_lea.vmem %s9, %s829
      %p831 = pneg %p282
      %p832 = pneg %p279
      %p833 = scmp.lt.s32.totalorder %s32, 1
      %s834 = scalar_select %p833, %s32, 1
      %s835 = smul.addr %s834, 2
      %s836 = scalar_lea.vmem %s10, %s835
      %p837 = pneg %p308
      %p838 = pneg %p305
      %p839 = scmp.lt.s32.totalorder %s32, 1
      %s840 = scalar_select %p839, %s32, 1
      %s841 = smul.addr %s840, 2
      %s842 = scalar_lea.vmem %s11, %s841
      %p843 = pneg %p334
      %p844 = pneg %p331
      %p845 = scmp.lt.s32.totalorder %s32, 1
      %s846 = scalar_select %p845, %s32, 1
      %s847 = smul.addr %s846, 2
      %s848 = scalar_lea.vmem %s12, %s847
      %p849 = pneg %p360
      %p850 = pneg %p357
      %p851 = scmp.lt.s32.totalorder %s32, 1
      %s852 = scalar_select %p851, %s32, 1
      %s853 = smul.addr %s852, 8
      %s854 = smul.addr %s853, 4
      %s855 = scalar_lea.vmem %s13, %s854
      %p856 = pneg %p386
      %p857 = pneg %p383
      %p858 = scmp.lt.s32.totalorder %s32, 1
      %s859 = scalar_select %p858, %s32, 1
      %s860 = smul.addr %s859, 2
      %s861 = scalar_lea.vmem %s14, %s860
      %p862 = pneg %p412
      %p863 = pneg %p409
      %p864 = scmp.lt.s32.totalorder %s32, 1
      %s865 = scalar_select %p864, %s32, 1
      %s866 = smul.addr %s865, 16
      %s867 = smul.addr %s866, 4
      %s868 = scalar_lea.vmem %s15, %s867
      %p869 = pneg %p438
      %p870 = pneg %p435
      %p871 = scmp.lt.s32.totalorder %s32, 1
      %s872 = scalar_select %p871, %s32, 1
      %s873 = smul.addr %s872, 2
      %s874 = scalar_lea.vmem %s16, %s873
      %p875 = pneg %p464
      %p876 = pneg %p461
      %p877 = scmp.lt.s32.totalorder %s32, 1
      %s878 = scalar_select %p877, %s32, 1
      %s879 = smul.addr %s878, 2
      %s880 = scalar_lea.vmem %s17, %s879
      %p881 = pneg %p490
      %p882 = pneg %p487
      %p883 = scmp.lt.s32.totalorder %s32, 1
      %s884 = scalar_select %p883, %s32, 1
      %s885 = smul.addr %s884, 2
      %s886 = scalar_lea.vmem %s18, %s885
      %p887 = pneg %p516
      %p888 = pneg %p513
      %p889 = scmp.lt.s32.totalorder %s32, 1
      %s890 = scalar_select %p889, %s32, 1
      %s891 = smul.addr %s890, 2
      %s892 = scalar_lea.vmem %s19, %s891
      %p893 = pneg %p542
      %p894 = pneg %p539
      %p895 = scmp.lt.s32.totalorder %s32, 1
      %s896 = scalar_select %p895, %s32, 1
      %s897 = smul.addr %s896, 2
      %s898 = scalar_lea.vmem %s20, %s897
      %p899 = pneg %p568
      %p900 = pneg %p565
      %p901 = pneg %p594
      %p902 = pneg %p591
      %p903 = scmp.lt.s32.totalorder %s32, 1
      %s904 = scalar_select %p903, %s32, 1
      %s905 = smul.addr %s904, 2
      %s906 = smul.addr %s905, 8
      %s907 = scalar_lea.vmem %s21, %s906
      %p908 = scmp.lt.s32.totalorder %s32, 1
      %s909 = scalar_select %p908, %s32, 1
      %s910 = smul.addr %s909, 2
      %s911 = smul.addr %s910, 8
      %s912 = scalar_lea.vmem %s0, %s911
      %p913 = scmp.lt.s32.totalorder %s32, 1
      %s914 = scalar_select %p913, %s32, 1
      %s915 = smul.addr %s914, 2
      %s916 = smul.addr %s915, 8
      %s917 = scalar_lea.vmem %s1, %s916
      %p918 = scmp.lt.s32.totalorder %s32, 1
      %s919 = scalar_select %p918, %s32, 1
      %s920 = smul.addr %s919, 8
      %s921 = smul.addr %s920, 4
      %s922 = scalar_lea.vmem %s3, %s921
      %p923 = scmp.lt.s32.totalorder %s32, 1
      %s924 = scalar_select %p923, %s32, 1
      %s925 = smul.addr %s924, 2
      %s926 = scalar_lea.vmem %s4, %s925
      %p927 = scmp.lt.s32.totalorder %s32, 1
      %s928 = scalar_select %p927, %s32, 1
      %s929 = smul.addr %s928, 8
      %s930 = smul.addr %s929, 4
      %s931 = scalar_lea.vmem %s5, %s930
      %p932 = scmp.lt.s32.totalorder %s32, 1
      %s933 = scalar_select %p932, %s32, 1
      %s934 = smul.addr %s933, 2
      %s935 = scalar_lea.vmem %s6, %s934
      %p936 = scmp.lt.s32.totalorder %s32, 1
      %s937 = scalar_select %p936, %s32, 1
      %s938 = smul.addr %s937, 8
      %s939 = smul.addr %s938, 4
      %s940 = scalar_lea.vmem %s7, %s939
      %p941 = scmp.lt.s32.totalorder %s32, 1
      %s942 = scalar_select %p941, %s32, 1
      %s943 = smul.addr %s942, 2
      %s944 = scalar_lea.vmem %s8, %s943
      %p945 = scmp.lt.s32.totalorder %s32, 1
      %s946 = scalar_select %p945, %s32, 1
      %s947 = smul.addr %s946, 8
      %s948 = smul.addr %s947, 4
      %s949 = scalar_lea.vmem %s9, %s948
      %p950 = scmp.lt.s32.totalorder %s32, 1
      %s951 = scalar_select %p950, %s32, 1
      %s952 = smul.addr %s951, 2
      %s953 = scalar_lea.vmem %s10, %s952
      %p954 = scmp.lt.s32.totalorder %s32, 1
      %s955 = scalar_select %p954, %s32, 1
      %s956 = smul.addr %s955, 2
      %s957 = scalar_lea.vmem %s11, %s956
      %p958 = scmp.lt.s32.totalorder %s32, 1
      %s959 = scalar_select %p958, %s32, 1
      %s960 = smul.addr %s959, 2
      %s961 = scalar_lea.vmem %s12, %s960
      %p962 = scmp.lt.s32.totalorder %s32, 1
      %s963 = scalar_select %p962, %s32, 1
      %s964 = smul.addr %s963, 8
      %s965 = smul.addr %s964, 4
      %s966 = scalar_lea.vmem %s13, %s965
      %p967 = scmp.lt.s32.totalorder %s32, 1
      %s968 = scalar_select %p967, %s32, 1
      %s969 = smul.addr %s968, 2
      %s970 = scalar_lea.vmem %s14, %s969
      %p971 = scmp.lt.s32.totalorder %s32, 1
      %s972 = scalar_select %p971, %s32, 1
      %s973 = smul.addr %s972, 16
      %s974 = smul.addr %s973, 4
      %s975 = scalar_lea.vmem %s15, %s974
      %p976 = scmp.lt.s32.totalorder %s32, 1
      %s977 = scalar_select %p976, %s32, 1
      %s978 = smul.addr %s977, 2
      %s979 = scalar_lea.vmem %s16, %s978
      %p980 = scmp.lt.s32.totalorder %s32, 1
      %s981 = scalar_select %p980, %s32, 1
      %s982 = smul.addr %s981, 2
      %s983 = scalar_lea.vmem %s17, %s982
      %p984 = scmp.lt.s32.totalorder %s32, 1
      %s985 = scalar_select %p984, %s32, 1
      %s986 = smul.addr %s985, 2
      %s987 = scalar_lea.vmem %s18, %s986
      %p988 = scmp.lt.s32.totalorder %s32, 1
      %s989 = scalar_select %p988, %s32, 1
      %s990 = smul.addr %s989, 2
      %s991 = scalar_lea.vmem %s19, %s990
      %p992 = scmp.lt.s32.totalorder %s32, 1
      %s993 = scalar_select %p992, %s32, 1
      %s994 = smul.addr %s993, 2
      %s995 = scalar_lea.vmem %s20, %s994
      %p996 = scmp.lt.s32.totalorder %s32, 1
      %s997 = scalar_select %p996, %s32, 1
      %s998 = smul.addr %s997, 2
      %s999 = smul.addr %s998, 8
      %s1000 = scalar_lea.vmem %s21, %s999
      %v1002 = vld [vmem:[%s912] sm:$0xff]
      %v1003 = vld [vmem:[%s912 + $0x8] sm:$0xff]
      %v1004 = vld [vmem:[%s2] sm:$0xff]
      %v1005 = vld [vmem:[%s2 + $0x8] sm:$0xff]
      %v1006 = vlaneseq
      %v1007 = vand.u32 %v1006, 127
      %v1008 = vpack.c.bf16 %v1003, %v1002
      %v1009 = vld [vmem:[%s922] sm:$0xf]
      %v1010 = vld [vmem:[%s922 + $0x4] sm:$0xf]
      %v1011 = vld [vmem:[%s922 + $0x8] sm:$0xf]
      %v1012 = vld [vmem:[%s922 + $0xc] sm:$0xf]
      %v1013 = vld [vmem:[%s926] sm:$0x1]
      %v1015 = vperm.slane %v1013, 0
      %v1021 = vunpack.c.l.b16 %v1009
      %v1022 = vunpack.c.l.b16 %v1010
      %v1023 = vunpack.c.l.b16 %v1011
      %v1024 = vunpack.c.l.b16 %v1012
      %v1025 = vpack.c.b16 %v1022, %v1021
      %v1026 = vpack.c.b16 %v1024, %v1023
      %vm1029 = vcmask 261120
      %v1031 = vsel %vm1029, %v1008, 0
      %1033 = vmatpush.bf16.msra.mxu0 0
      %1034 = vmatpush.bf16.msra.mxu0 0
      %1035 = vmatpush.bf16.msra.mxu0 0
      %1036 = vmatpush.bf16.msra.mxu0 0
      %1037 = vmatpush.bf16.msra.mxu0 0
      %1038 = vmatpush.bf16.msra.mxu0 0
      %1039 = vmatpush.bf16.msra.mxu0 %v1026
      %1040 = vmatpush.bf16.msra.mxu0 %v1025
      %1041 = vmatmul.bf16.gmra.mxu0 %v1031
      %v1042 = vpop.f32.mrf.mxu0
      %v1043 = vadd.f32 %v1015, %v1042
      %v1044 = vpop.f32.mrf.mxu0
      %v1045 = vadd.f32 %v1015, %v1044
      %1046 = vdwg.mxu0
      %v1047 = vld [vmem:[%s931] sm:$0xf]
      %v1048 = vld [vmem:[%s931 + $0x4] sm:$0xf]
      %v1049 = vld [vmem:[%s931 + $0x8] sm:$0xf]
      %v1050 = vld [vmem:[%s931 + $0xc] sm:$0xf]
      %v1051 = vld [vmem:[%s935] sm:$0x1]
      %v1053 = vperm.slane %v1051, 0
      %v1059 = vunpack.c.l.b16 %v1047
      %v1060 = vunpack.c.l.b16 %v1048
      %v1061 = vunpack.c.l.b16 %v1049
      %v1062 = vunpack.c.l.b16 %v1050
      %v1063 = vpack.c.b16 %v1060, %v1059
      %v1064 = vpack.c.b16 %v1062, %v1061
      %1067 = vmatpush.bf16.msra.mxu0 0
      %1068 = vmatpush.bf16.msra.mxu0 0
      %1069 = vmatpush.bf16.msra.mxu0 0
      %1070 = vmatpush.bf16.msra.mxu0 0
      %1071 = vmatpush.bf16.msra.mxu0 0
      %1072 = vmatpush.bf16.msra.mxu0 0
      %1073 = vmatpush.bf16.msra.mxu0 %v1064
      %1074 = vmatpush.bf16.msra.mxu0 %v1063
      %1075 = vmatmul.bf16.gmra.mxu0 %v1031
      %v1076 = vpop.f32.mrf.mxu0
      %v1077 = vadd.f32 %v1053, %v1076
      %v1078 = vpop.f32.mrf.mxu0
      %v1079 = vadd.f32 %v1053, %v1078
      %1080 = vdwg.mxu0
      %v1081 = vld [vmem:[%s940] sm:$0xf]
      %v1082 = vld [vmem:[%s940 + $0x4] sm:$0xf]
      %v1083 = vld [vmem:[%s940 + $0x8] sm:$0xf]
      %v1084 = vld [vmem:[%s940 + $0xc] sm:$0xf]
      %v1085 = vld [vmem:[%s944] sm:$0x1]
      %v1087 = vperm.slane %v1085, 0
      %v1093 = vunpack.c.l.b16 %v1081
      %v1094 = vunpack.c.l.b16 %v1082
      %v1095 = vunpack.c.l.b16 %v1083
      %v1096 = vunpack.c.l.b16 %v1084
      %v1097 = vpack.c.b16 %v1094, %v1093
      %v1098 = vpack.c.b16 %v1096, %v1095
      %1101 = vmatpush.bf16.msra.mxu0 0
      %1102 = vmatpush.bf16.msra.mxu0 0
      %1103 = vmatpush.bf16.msra.mxu0 0
      %1104 = vmatpush.bf16.msra.mxu0 0
      %1105 = vmatpush.bf16.msra.mxu0 0
      %1106 = vmatpush.bf16.msra.mxu0 0
      %1107 = vmatpush.bf16.msra.mxu0 %v1098
      %1108 = vmatpush.bf16.msra.mxu0 %v1097
      %1109 = vmatmul.bf16.gmra.mxu0 %v1031
      %v1110 = vpop.f32.mrf.mxu0
      %v1111 = vadd.f32 %v1087, %v1110
      %v1112 = vpop.f32.mrf.mxu0
      %v1113 = vadd.f32 %v1087, %v1112
      %1114 = vdwg.mxu0
      %v1115 = vpack.c.bf16 %v1079, %v1077
      %v1116 = vpack.c.bf16 %v1113, %v1111
      %vm1117 = vcmp.ge.s32.totalorder %v1007, 0
      %vm1118 = vcmp.lt.s32.totalorder %v1007, 8
      %vm1119 = vmand %vm1117, %vm1118
      %v1120 = vsel %vm1119, %v1043, 0.0
      %v1121 = vsel %vm1119, %v1045, 0.0
      %v1122 = vpack.c.bf16 %v1121, %v1120
      %v1124 = vsel %vm1029, %v1122, 0
      %v1127 = vsel %vm1029, %v1115, 0
      %1129 = vmatpush.bf16.xpose.msra.mxu0 0
      %1130 = vmatpush.bf16.xpose.msra.mxu0 0
      %1131 = vmatpush.bf16.xpose.msra.mxu0 0
      %1132 = vmatpush.bf16.xpose.msra.mxu0 0
      %1133 = vmatpush.bf16.xpose.msra.mxu0 0
      %1134 = vmatpush.bf16.xpose.msra.mxu0 0
      %1135 = vmatpush.bf16.xpose.msra.mxu0 0
      %1136 = vmatpush.bf16.xpose.msra.mxu0 %v1127
      %1137 = vmatmul.bf16.gmra.mxu0 %v1124
      %v1138 = vpop.f32.mrf.mxu0
      %v1139 = vadd.f32 0.0, %v1138
      %v1140 = vpop.f32.mrf.mxu0
      %v1141 = vadd.f32 0.0, %v1140
      %1142 = vdwg.mxu0
      %v1143 = vmul.f32 %v1139, 0.35355338
      %v1144 = vmul.f32 %v1141, 0.35355338
      %v1145 = vadd.f32 %v1143, %v1004
      %v1146 = vadd.f32 %v1144, %v1005
      %vm1147 = vcmask 130048
      %v1148 = vsel %vm1147, %v1145, -inf
      %1149 = vmax.xlane.f32.xlu0 %v1148
      %v1150 = vpop.xlane.xlu0 %1149
      %v1151 = vsel %vm1147, %v1146, -inf
      %1152 = vmax.xlane.f32.xlu0 %v1151
      %v1153 = vpop.xlane.xlu0 %1152
      %v1154 = vsub.f32 %v1145, %v1150
      %v1155 = vsub.f32 %v1146, %v1153
      %v1156 = vmul.f32 %v1154, 1.442695
      %v1157 = vpow.pop %v1156
      %v1158 = vmul.f32 %v1155, 1.442695
      %v1159 = vpow.pop %v1158
      %v1160 = vsel %vm1147, %v1157, 0.0
      %1161 = vadd.xlane.f32.xlu0 %v1160
      %v1162 = vpop.xlane.xlu0 %1161
      %v1163 = vsel %vm1147, %v1159, 0.0
      %1164 = vadd.xlane.f32.xlu0 %v1163
      %v1165 = vpop.xlane.xlu0 %1164
      %v1166 = vrcp.pop %v1162
      %v1167 = vrcp.pop %v1165
      %v1168 = vmul.f32 %v1157, %v1166
      %v1169 = vmul.f32 %v1159, %v1167
      %v1170 = vpack.c.bf16 %v1169, %v1168
      %v1172 = vsel %vm1147, %v1170, 0
      %1174 = vmatpush.bf16.msra.mxu0 0
      %1175 = vmatpush.bf16.msra.mxu0 0
      %1176 = vmatpush.bf16.msra.mxu0 0
      %1177 = vmatpush.bf16.msra.mxu0 0
      %1178 = vmatpush.bf16.msra.mxu0 0
      %1179 = vmatpush.bf16.msra.mxu0 0
      %1180 = vmatpush.bf16.msra.mxu0 0
      %1181 = vmatpush.bf16.msra.mxu0 %v1116
      %1182 = vmatmul.bf16.gmra.mxu0 %v1172
      %v1183 = vpop.f32.mrf.mxu0
      %v1184 = vadd.f32 0.0, %v1183
      %v1185 = vpop.f32.mrf.mxu0
      %v1186 = vadd.f32 0.0, %v1185
      %1187 = vdwg.mxu0
      %v1188 = vsel %vm1119, %v1184, 0.0
      %v1189 = vsel %vm1119, %v1186, 0.0
      %v1190 = vadd.f32 %v1188, 0.0
      %v1191 = vadd.f32 %v1189, 0.0
      %vm1192 = vcmp.ge.s32.totalorder %v1007, 8
      %vm1193 = vcmp.lt.s32.totalorder %v1007, 16
      %vm1194 = vmand %vm1192, %vm1193
      %v1195 = vsel %vm1194, %v1043, 0.0
      %v1196 = vsel %vm1194, %v1045, 0.0
      %v1197 = vpack.c.bf16 %v1196, %v1195
      %v1199 = vsel %vm1029, %v1197, 0
      %1201 = vmatpush.bf16.xpose.msra.mxu0 0
      %1202 = vmatpush.bf16.xpose.msra.mxu0 0
      %1203 = vmatpush.bf16.xpose.msra.mxu0 0
      %1204 = vmatpush.bf16.xpose.msra.mxu0 0
      %1205 = vmatpush.bf16.xpose.msra.mxu0 0
      %1206 = vmatpush.bf16.xpose.msra.mxu0 0
      %1207 = vmatpush.bf16.xpose.msra.mxu0 0
      %1208 = vmatpush.bf16.xpose.msra.mxu0 %v1127
      %1209 = vmatmul.bf16.gmra.mxu0 %v1199
      %v1210 = vpop.f32.mrf.mxu0
      %v1211 = vadd.f32 0.0, %v1210
      %v1212 = vpop.f32.mrf.mxu0
      %v1213 = vadd.f32 0.0, %v1212
      %1214 = vdwg.mxu0
      %v1215 = vmul.f32 %v1211, 0.35355338
      %v1216 = vmul.f32 %v1213, 0.35355338
      %v1217 = vadd.f32 %v1215, %v1004
      %v1218 = vadd.f32 %v1216, %v1005
      %v1219 = vsel %vm1147, %v1217, -inf
      %1220 = vmax.xlane.f32.xlu0 %v1219
      %v1221 = vpop.xlane.xlu0 %1220
      %v1222 = vsel %vm1147, %v1218, -inf
      %1223 = vmax.xlane.f32.xlu0 %v1222
      %v1224 = vpop.xlane.xlu0 %1223
      %v1225 = vsub.f32 %v1217, %v1221
      %v1226 = vsub.f32 %v1218, %v1224
      %v1227 = vmul.f32 %v1225, 1.442695
      %v1228 = vpow.pop %v1227
      %v1229 = vmul.f32 %v1226, 1.442695
      %v1230 = vpow.pop %v1229
      %v1231 = vsel %vm1147, %v1228, 0.0
      %1232 = vadd.xlane.f32.xlu0 %v1231
      %v1233 = vpop.xlane.xlu0 %1232
      %v1234 = vsel %vm1147, %v1230, 0.0
      %1235 = vadd.xlane.f32.xlu0 %v1234
      %v1236 = vpop.xlane.xlu0 %1235
      %v1237 = vrcp.pop %v1233
      %v1238 = vrcp.pop %v1236
      %v1239 = vmul.f32 %v1228, %v1237
      %v1240 = vmul.f32 %v1230, %v1238
      %v1241 = vpack.c.bf16 %v1240, %v1239
      %v1243 = vsel %vm1147, %v1241, 0
      %1245 = vmatpush.bf16.msra.mxu0 0
      %1246 = vmatpush.bf16.msra.mxu0 0
      %1247 = vmatpush.bf16.msra.mxu0 0
      %1248 = vmatpush.bf16.msra.mxu0 0
      %1249 = vmatpush.bf16.msra.mxu0 0
      %1250 = vmatpush.bf16.msra.mxu0 0
      %1251 = vmatpush.bf16.msra.mxu0 0
      %1252 = vmatpush.bf16.msra.mxu0 %v1116
      %1253 = vmatmul.bf16.gmra.mxu0 %v1243
      %v1254 = vpop.f32.mrf.mxu0
      %v1255 = vadd.f32 0.0, %v1254
      %v1256 = vpop.f32.mrf.mxu0
      %v1257 = vadd.f32 0.0, %v1256
      %1258 = vdwg.mxu0
      %v1259 = vsel %vm1194, %v1255, 0.0
      %v1260 = vsel %vm1194, %v1257, 0.0
      %v1261 = vadd.f32 %v1190, %v1259
      %v1262 = vadd.f32 %v1191, %v1260
      %vm1263 = vcmp.ge.s32.totalorder %v1007, 16
      %vm1264 = vcmp.lt.s32.totalorder %v1007, 24
      %vm1265 = vmand %vm1263, %vm1264
      %v1266 = vsel %vm1265, %v1043, 0.0
      %v1267 = vsel %vm1265, %v1045, 0.0
      %v1268 = vpack.c.bf16 %v1267, %v1266
      %v1270 = vsel %vm1029, %v1268, 0
      %1272 = vmatpush.bf16.xpose.msra.mxu0 0
      %1273 = vmatpush.bf16.xpose.msra.mxu0 0
      %1274 = vmatpush.bf16.xpose.msra.mxu0 0
      %1275 = vmatpush.bf16.xpose.msra.mxu0 0
      %1276 = vmatpush.bf16.xpose.msra.mxu0 0
      %1277 = vmatpush.bf16.xpose.msra.mxu0 0
      %1278 = vmatpush.bf16.xpose.msra.mxu0 0
      %1279 = vmatpush.bf16.xpose.msra.mxu0 %v1127
      %1280 = vmatmul.bf16.gmra.mxu0 %v1270
      %v1281 = vpop.f32.mrf.mxu0
      %v1282 = vadd.f32 0.0, %v1281
      %v1283 = vpop.f32.mrf.mxu0
      %v1284 = vadd.f32 0.0, %v1283
      %1285 = vdwg.mxu0
      %v1286 = vmul.f32 %v1282, 0.35355338
      %v1287 = vmul.f32 %v1284, 0.35355338
      %v1288 = vadd.f32 %v1286, %v1004
      %v1289 = vadd.f32 %v1287, %v1005
      %v1290 = vsel %vm1147, %v1288, -inf
      %1291 = vmax.xlane.f32.xlu0 %v1290
      %v1292 = vpop.xlane.xlu0 %1291
      %v1293 = vsel %vm1147, %v1289, -inf
      %1294 = vmax.xlane.f32.xlu0 %v1293
      %v1295 = vpop.xlane.xlu0 %1294
      %v1296 = vsub.f32 %v1288, %v1292
      %v1297 = vsub.f32 %v1289, %v1295
      %v1298 = vmul.f32 %v1296, 1.442695
      %v1299 = vpow.pop %v1298
      %v1300 = vmul.f32 %v1297, 1.442695
      %v1301 = vpow.pop %v1300
      %v1302 = vsel %vm1147, %v1299, 0.0
      %1303 = vadd.xlane.f32.xlu0 %v1302
      %v1304 = vpop.xlane.xlu0 %1303
      %v1305 = vsel %vm1147, %v1301, 0.0
      %1306 = vadd.xlane.f32.xlu0 %v1305
      %v1307 = vpop.xlane.xlu0 %1306
      %v1308 = vrcp.pop %v1304
      %v1309 = vrcp.pop %v1307
      %v1310 = vmul.f32 %v1299, %v1308
      %v1311 = vmul.f32 %v1301, %v1309
      %v1312 = vpack.c.bf16 %v1311, %v1310
      %v1314 = vsel %vm1147, %v1312, 0
      %1316 = vmatpush.bf16.msra.mxu0 0
      %1317 = vmatpush.bf16.msra.mxu0 0
      %1318 = vmatpush.bf16.msra.mxu0 0
      %1319 = vmatpush.bf16.msra.mxu0 0
      %1320 = vmatpush.bf16.msra.mxu0 0
      %1321 = vmatpush.bf16.msra.mxu0 0
      %1322 = vmatpush.bf16.msra.mxu0 0
      %1323 = vmatpush.bf16.msra.mxu0 %v1116
      %1324 = vmatmul.bf16.gmra.mxu0 %v1314
      %v1325 = vpop.f32.mrf.mxu0
      %v1326 = vadd.f32 0.0, %v1325
      %v1327 = vpop.f32.mrf.mxu0
      %v1328 = vadd.f32 0.0, %v1327
      %1329 = vdwg.mxu0
      %v1330 = vsel %vm1265, %v1326, 0.0
      %v1331 = vsel %vm1265, %v1328, 0.0
      %v1332 = vadd.f32 %v1261, %v1330
      %v1333 = vadd.f32 %v1262, %v1331
      %vm1334 = vcmp.ge.s32.totalorder %v1007, 24
      %vm1335 = vcmp.lt.s32.totalorder %v1007, 32
      %vm1336 = vmand %vm1334, %vm1335
      %v1337 = vsel %vm1336, %v1043, 0.0
      %v1338 = vsel %vm1336, %v1045, 0.0
      %v1339 = vpack.c.bf16 %v1338, %v1337
      %v1341 = vsel %vm1029, %v1339, 0
      %1343 = vmatpush.bf16.xpose.msra.mxu0 0
      %1344 = vmatpush.bf16.xpose.msra.mxu0 0
      %1345 = vmatpush.bf16.xpose.msra.mxu0 0
      %1346 = vmatpush.bf16.xpose.msra.mxu0 0
      %1347 = vmatpush.bf16.xpose.msra.mxu0 0
      %1348 = vmatpush.bf16.xpose.msra.mxu0 0
      %1349 = vmatpush.bf16.xpose.msra.mxu0 0
      %1350 = vmatpush.bf16.xpose.msra.mxu0 %v1127
      %1351 = vmatmul.bf16.gmra.mxu0 %v1341
      %v1352 = vpop.f32.mrf.mxu0
      %v1353 = vadd.f32 0.0, %v1352
      %v1354 = vpop.f32.mrf.mxu0
      %v1355 = vadd.f32 0.0, %v1354
      %1356 = vdwg.mxu0
      %v1357 = vmul.f32 %v1353, 0.35355338
      %v1358 = vmul.f32 %v1355, 0.35355338
      %v1359 = vadd.f32 %v1357, %v1004
      %v1360 = vadd.f32 %v1358, %v1005
      %v1361 = vsel %vm1147, %v1359, -inf
      %1362 = vmax.xlane.f32.xlu0 %v1361
      %v1363 = vpop.xlane.xlu0 %1362
      %v1364 = vsel %vm1147, %v1360, -inf
      %1365 = vmax.xlane.f32.xlu0 %v1364
      %v1366 = vpop.xlane.xlu0 %1365
      %v1367 = vsub.f32 %v1359, %v1363
      %v1368 = vsub.f32 %v1360, %v1366
      %v1369 = vmul.f32 %v1367, 1.442695
      %v1370 = vpow.pop %v1369
      %v1371 = vmul.f32 %v1368, 1.442695
      %v1372 = vpow.pop %v1371
      %v1373 = vsel %vm1147, %v1370, 0.0
      %1374 = vadd.xlane.f32.xlu0 %v1373
      %v1375 = vpop.xlane.xlu0 %1374
      %v1376 = vsel %vm1147, %v1372, 0.0
      %1377 = vadd.xlane.f32.xlu0 %v1376
      %v1378 = vpop.xlane.xlu0 %1377
      %v1379 = vrcp.pop %v1375
      %v1380 = vrcp.pop %v1378
      %v1381 = vmul.f32 %v1370, %v1379
      %v1382 = vmul.f32 %v1372, %v1380
      %v1383 = vpack.c.bf16 %v1382, %v1381
      %v1385 = vsel %vm1147, %v1383, 0
      %1387 = vmatpush.bf16.msra.mxu0 0
      %1388 = vmatpush.bf16.msra.mxu0 0
      %1389 = vmatpush.bf16.msra.mxu0 0
      %1390 = vmatpush.bf16.msra.mxu0 0
      %1391 = vmatpush.bf16.msra.mxu0 0
      %1392 = vmatpush.bf16.msra.mxu0 0
      %1393 = vmatpush.bf16.msra.mxu0 0
      %1394 = vmatpush.bf16.msra.mxu0 %v1116
      %1395 = vmatmul.bf16.gmra.mxu0 %v1385
      %v1396 = vpop.f32.mrf.mxu0
      %v1397 = vadd.f32 0.0, %v1396
      %v1398 = vpop.f32.mrf.mxu0
      %v1399 = vadd.f32 0.0, %v1398
      %1400 = vdwg.mxu0
      %v1401 = vsel %vm1336, %v1397, 0.0
      %v1402 = vsel %vm1336, %v1399, 0.0
      %v1403 = vadd.f32 %v1332, %v1401
      %v1404 = vadd.f32 %v1333, %v1402
      %v1405 = vpack.c.bf16 %v1404, %v1403
      %v1406 = vld [vmem:[%s949] sm:$0xf]
      %v1407 = vld [vmem:[%s949 + $0x4] sm:$0xf]
      %v1408 = vld [vmem:[%s949 + $0x8] sm:$0xf]
      %v1409 = vld [vmem:[%s949 + $0xc] sm:$0xf]
      %v1410 = vld [vmem:[%s953] sm:$0x1]
      %v1412 = vperm.slane %v1410, 0
      %v1418 = vunpack.c.l.b16 %v1406
      %v1419 = vunpack.c.l.b16 %v1407
      %v1420 = vunpack.c.l.b16 %v1408
      %v1421 = vunpack.c.l.b16 %v1409
      %v1422 = vpack.c.b16 %v1419, %v1418
      %v1423 = vpack.c.b16 %v1421, %v1420
      %v1427 = vsel %vm1029, %v1405, 0
      %1429 = vmatpush.bf16.msra.mxu0 0
      %1430 = vmatpush.bf16.msra.mxu0 0
      %1431 = vmatpush.bf16.msra.mxu0 0
      %1432 = vmatpush.bf16.msra.mxu0 0
      %1433 = vmatpush.bf16.msra.mxu0 0
      %1434 = vmatpush.bf16.msra.mxu0 0
      %1435 = vmatpush.bf16.msra.mxu0 %v1423
      %1436 = vmatpush.bf16.msra.mxu0 %v1422
      %1437 = vmatmul.bf16.gmra.mxu0 %v1427
      %v1438 = vpop.f32.mrf.mxu0
      %v1439 = vadd.f32 %v1412, %v1438
      %v1440 = vpop.f32.mrf.mxu0
      %v1441 = vadd.f32 %v1412, %v1440
      %1442 = vdwg.mxu0
      %v1443 = vld [vmem:[%s991] sm:$0x1]
      %v1445 = vperm.slane %v1443, 0
      %1446 = vset.pattern.permute.xlu0 0
      %1447 = vperm.xlu0 %1446, %v1445
      %v1448 = vpop.permute.xlu0 %1447
      %v1450 = vmul.f32 %v1448, %v1439
      %v1451 = vmul.f32 %v1448, %v1441
      %v1452 = vadd.f32 %v1002, %v1450
      %v1453 = vadd.f32 %v1003, %v1451
      %v1454 = vld [vmem:[%s957] sm:$0x1]
      %v1455 = vld [vmem:[%s961] sm:$0x1]
      %v1456 = vsel %vm1029, %v1452, 0.0
      %1457 = vadd.xlane.f32.xlu0 %v1456
      %v1458 = vpop.xlane.xlu0 %1457
      %v1459 = vsel %vm1029, %v1453, 0.0
      %1460 = vadd.xlane.f32.xlu0 %v1459
      %v1461 = vpop.xlane.xlu0 %1460
      %v1462 = vrcp.pop 32.0
      %v1463 = vmul.f32 32.0, %v1462
      %v1464 = vsub.f32 1.0, %v1463
      %v1465 = vmul.f32 %v1462, %v1464
      %v1466 = vadd.f32 %v1462, %v1465
      %vm1467 = vweird.f32 %v1462
      %v1468 = vsel %vm1467, %v1462, %v1466
      %v1469 = vmul.f32 %v1458, %v1468
      %v1470 = vmul.f32 %v1461, %v1468
      %v1471 = vsub.f32 %v1452, %v1469
      %v1472 = vsub.f32 %v1453, %v1470
      %v1473 = vmul.f32 %v1471, %v1471
      %v1474 = vmul.f32 %v1472, %v1472
      %v1475 = vsel %vm1029, %v1473, 0.0
      %1476 = vadd.xlane.f32.xlu0 %v1475
      %v1477 = vpop.xlane.xlu0 %1476
      %v1478 = vsel %vm1029, %v1474, 0.0
      %1479 = vadd.xlane.f32.xlu0 %v1478
      %v1480 = vpop.xlane.xlu0 %1479
      %v1481 = vmul.f32 %v1477, %v1468
      %v1482 = vmul.f32 %v1480, %v1468
      %v1483 = vadd.f32 %v1481, 1e-05
      %v1484 = vadd.f32 %v1482, 1e-05
      %v1485 = vrsqrt.pop %v1483
      %v1486 = vmul.f32 %v1485, %v1483
      %v1487 = vmul.f32 %v1486, %v1485
      %v1488 = vmul.f32 0.5, %v1487
      %v1489 = vsub.f32 1.5, %v1488
      %v1490 = vmul.f32 %v1485, %v1489
      %vm1491 = vweird.f32 %v1483
      %vm1492 = vweird.f32 %v1485
      %vm1493 = vmor %vm1491, %vm1492
      %v1494 = vsel %vm1493, %v1485, %v1490
      %v1495 = vrsqrt.pop %v1484
      %v1496 = vmul.f32 %v1495, %v1484
      %v1497 = vmul.f32 %v1496, %v1495
      %v1498 = vmul.f32 0.5, %v1497
      %v1499 = vsub.f32 1.5, %v1498
      %v1500 = vmul.f32 %v1495, %v1499
      %vm1501 = vweird.f32 %v1484
      %vm1502 = vweird.f32 %v1495
      %vm1503 = vmor %vm1501, %vm1502
      %v1504 = vsel %vm1503, %v1495, %v1500
      %v1505 = vmul.f32 %v1471, %v1494
      %v1506 = vmul.f32 %v1472, %v1504
      %v1508 = vperm.slane %v1454, 0
      %v1510 = vmul.f32 %v1505, %v1508
      %v1511 = vmul.f32 %v1506, %v1508
      %v1513 = vperm.slane %v1455, 0
      %v1515 = vadd.f32 %v1510, %v1513
      %v1516 = vadd.f32 %v1511, %v1513
      %v1517 = vpack.c.bf16 %v1516, %v1515
      %v1518 = vld [vmem:[%s966] sm:$0xf]
      %v1519 = vld [vmem:[%s966 + $0x4] sm:$0xf]
      %v1520 = vld [vmem:[%s966 + $0x8] sm:$0xf]
      %v1521 = vld [vmem:[%s966 + $0xc] sm:$0xf]
      %v1522 = vld [vmem:[%s970] sm:$0x1]
      %v1524 = vperm.slane %v1522, 0
      %v1530 = vunpack.c.l.b16 %v1518
      %v1531 = vunpack.c.l.b16 %v1519
      %v1532 = vunpack.c.l.b16 %v1520
      %v1533 = vunpack.c.l.b16 %v1521
      %v1534 = vpack.c.b16 %v1531, %v1530
      %v1535 = vpack.c.b16 %v1533, %v1532
      %v1539 = vsel %vm1029, %v1517, 0
      %1541 = vmatpush.bf16.msra.mxu0 0
      %1542 = vmatpush.bf16.msra.mxu0 0
      %1543 = vmatpush.bf16.msra.mxu0 0
      %1544 = vmatpush.bf16.msra.mxu0 0
      %1545 = vmatpush.bf16.msra.mxu0 0
      %1546 = vmatpush.bf16.msra.mxu0 0
      %1547 = vmatpush.bf16.msra.mxu0 %v1535
      %1548 = vmatpush.bf16.msra.mxu0 %v1534
      %1549 = vmatmul.bf16.gmra.mxu0 %v1539
      %v1550 = vpop.f32.mrf.mxu0
      %v1551 = vadd.f32 %v1524, %v1550
      %v1552 = vpop.f32.mrf.mxu0
      %v1553 = vadd.f32 %v1524, %v1552
      %1554 = vdwg.mxu0
      %v1555 = vmul.f32 %v1551, %v1551
      %v1556 = vmul.f32 %v1553, %v1553
      %v1557 = vmul.f32 %v1551, %v1555
      %v1558 = vmul.f32 %v1553, %v1556
      %v1559 = vmul.f32 %v1557, 0.044715
      %v1560 = vmul.f32 %v1558, 0.044715
      %v1561 = vadd.f32 %v1551, %v1559
      %v1562 = vadd.f32 %v1553, %v1560
      %v1563 = vmul.f32 %v1561, 0.7978846
      %v1564 = vmul.f32 %v1562, 0.7978846
      %v1565 = vtanh.pop %v1563
      %v1566 = vtanh.pop %v1564
      %v1567 = vadd.f32 %v1565, 1.0
      %v1568 = vadd.f32 %v1566, 1.0
      %v1569 = vmul.f32 %v1567, 0.5
      %v1570 = vmul.f32 %v1568, 0.5
      %v1571 = vmul.f32 %v1551, %v1569
      %v1572 = vmul.f32 %v1553, %v1570
      %v1573 = vpack.c.bf16 %v1572, %v1571
      %v1574 = vld [vmem:[%s975] sm:$0xf]
      %v1575 = vld [vmem:[%s975 + $0x4] sm:$0xf]
      %v1576 = vld [vmem:[%s975 + $0x8] sm:$0xf]
      %v1577 = vld [vmem:[%s975 + $0xc] sm:$0xf]
      %v1578 = vld [vmem:[%s975 + $0x10] sm:$0xf]
      %v1579 = vld [vmem:[%s975 + $0x14] sm:$0xf]
      %v1580 = vld [vmem:[%s975 + $0x18] sm:$0xf]
      %v1581 = vld [vmem:[%s975 + $0x1c] sm:$0xf]
      %v1582 = vld [vmem:[%s979] sm:$0x1]
      %v1584 = vperm.slane %v1582, 0
      %v1594 = vunpack.c.l.b16 %v1574
      %v1595 = vunpack.c.l.b16 %v1575
      %v1596 = vunpack.c.l.b16 %v1576
      %v1597 = vunpack.c.l.b16 %v1577
      %v1598 = vunpack.c.l.b16 %v1578
      %v1599 = vunpack.c.l.b16 %v1579
      %v1600 = vunpack.c.l.b16 %v1580
      %v1601 = vunpack.c.l.b16 %v1581
      %v1602 = vpack.c.b16 %v1595, %v1594
      %v1603 = vpack.c.b16 %v1597, %v1596
      %v1604 = vpack.c.b16 %v1599, %v1598
      %v1605 = vpack.c.b16 %v1601, %v1600
      %vm1610 = vcmask 523264
      %v1612 = vsel %vm1610, %v1573, 0
      %1614 = vmatpush.bf16.msra.mxu0 0
      %1615 = vmatpush.bf16.msra.mxu0 0
      %1616 = vmatpush.bf16.msra.mxu0 0
      %1617 = vmatpush.bf16.msra.mxu0 0
      %1618 = vmatpush.bf16.msra.mxu0 %v1605
      %1619 = vmatpush.bf16.msra.mxu0 %v1604
      %1620 = vmatpush.bf16.msra.mxu0 %v1603
      %1621 = vmatpush.bf16.msra.mxu0 %v1602
      %1622 = vmatmul.bf16.gmra.mxu0 %v1612
      %v1623 = vpop.f32.mrf.mxu0
      %v1624 = vadd.f32 %v1584, %v1623
      %v1625 = vpop.f32.mrf.mxu0
      %v1626 = vadd.f32 %v1584, %v1625
      %1627 = vdwg.mxu0
      %v1628 = vld [vmem:[%s995] sm:$0x1]
      %v1630 = vperm.slane %v1628, 0
      %1631 = vset.pattern.permute.xlu0 0
      %1632 = vperm.xlu0 %1631, %v1630
      %v1633 = vpop.permute.xlu0 %1632
      %v1635 = vmul.f32 %v1633, %v1624
      %v1636 = vmul.f32 %v1633, %v1626
      %v1637 = vadd.f32 %v1515, %v1635
      %v1638 = vadd.f32 %v1516, %v1636
      %v1639 = vld [vmem:[%s983] sm:$0x1]
      %v1640 = vld [vmem:[%s987] sm:$0x1]
      %v1641 = vsel %vm1029, %v1637, 0.0
      %1642 = vadd.xlane.f32.xlu0 %v1641
      %v1643 = vpop.xlane.xlu0 %1642
      %v1644 = vsel %vm1029, %v1638, 0.0
      %1645 = vadd.xlane.f32.xlu0 %v1644
      %v1646 = vpop.xlane.xlu0 %1645
      %v1647 = vmul.f32 %v1643, %v1468
      %v1648 = vmul.f32 %v1646, %v1468
      %v1649 = vsub.f32 %v1637, %v1647
      %v1650 = vsub.f32 %v1638, %v1648
      %v1651 = vmul.f32 %v1649, %v1649
      %v1652 = vmul.f32 %v1650, %v1650
      %v1653 = vsel %vm1029, %v1651, 0.0
      %1654 = vadd.xlane.f32.xlu0 %v1653
      %v1655 = vpop.xlane.xlu0 %1654
      %v1656 = vsel %vm1029, %v1652, 0.0
      %1657 = vadd.xlane.f32.xlu0 %v1656
      %v1658 = vpop.xlane.xlu0 %1657
      %v1659 = vmul.f32 %v1655, %v1468
      %v1660 = vmul.f32 %v1658, %v1468
      %v1661 = vadd.f32 %v1659, 1e-05
      %v1662 = vadd.f32 %v1660, 1e-05
      %v1663 = vrsqrt.pop %v1661
      %v1664 = vmul.f32 %v1663, %v1661
      %v1665 = vmul.f32 %v1664, %v1663
      %v1666 = vmul.f32 0.5, %v1665
      %v1667 = vsub.f32 1.5, %v1666
      %v1668 = vmul.f32 %v1663, %v1667
      %vm1669 = vweird.f32 %v1661
      %vm1670 = vweird.f32 %v1663
      %vm1671 = vmor %vm1669, %vm1670
      %v1672 = vsel %vm1671, %v1663, %v1668
      %v1673 = vrsqrt.pop %v1662
      %v1674 = vmul.f32 %v1673, %v1662
      %v1675 = vmul.f32 %v1674, %v1673
      %v1676 = vmul.f32 0.5, %v1675
      %v1677 = vsub.f32 1.5, %v1676
      %v1678 = vmul.f32 %v1673, %v1677
      %vm1679 = vweird.f32 %v1662
      %vm1680 = vweird.f32 %v1673
      %vm1681 = vmor %vm1679, %vm1680
      %v1682 = vsel %vm1681, %v1673, %v1678
      %v1683 = vmul.f32 %v1649, %v1672
      %v1684 = vmul.f32 %v1650, %v1682
      %v1686 = vperm.slane %v1639, 0
      %v1688 = vmul.f32 %v1683, %v1686
      %v1689 = vmul.f32 %v1684, %v1686
      %v1691 = vperm.slane %v1640, 0
      %v1693 = vadd.f32 %v1688, %v1691
      %v1694 = vadd.f32 %v1689, %v1691
      %v1695 = vpack.c.bf16 %v1694, %v1693
      %s1696 = scalar_lea.vmem %s922, 16
      %v1697 = vld [vmem:[%s1696] sm:$0xf]
      %v1698 = vld [vmem:[%s1696 + $0x4] sm:$0xf]
      %v1699 = vld [vmem:[%s1696 + $0x8] sm:$0xf]
      %v1700 = vld [vmem:[%s1696 + $0xc] sm:$0xf]
      %s1701 = scalar_lea.vmem %s926, 1
      %v1702 = vld [vmem:[%s1701] sm:$0x1]
      %v1704 = vperm.slane %v1702, 0
      %v1710 = vunpack.c.l.b16 %v1697
      %v1711 = vunpack.c.l.b16 %v1698
      %v1712 = vunpack.c.l.b16 %v1699
      %v1713 = vunpack.c.l.b16 %v1700
      %v1714 = vpack.c.b16 %v1711, %v1710
      %v1715 = vpack.c.b16 %v1713, %v1712
      %v1719 = vsel %vm1029, %v1695, 0
      %1721 = vmatpush.bf16.msra.mxu0 0
      %1722 = vmatpush.bf16.msra.mxu0 0
      %1723 = vmatpush.bf16.msra.mxu0 0
      %1724 = vmatpush.bf16.msra.mxu0 0
      %1725 = vmatpush.bf16.msra.mxu0 0
      %1726 = vmatpush.bf16.msra.mxu0 0
      %1727 = vmatpush.bf16.msra.mxu0 %v1715
      %1728 = vmatpush.bf16.msra.mxu0 %v1714
      %1729 = vmatmul.bf16.gmra.mxu0 %v1719
      %v1730 = vpop.f32.mrf.mxu0
      %v1731 = vadd.f32 %v1704, %v1730
      %v1732 = vpop.f32.mrf.mxu0
      %v1733 = vadd.f32 %v1704, %v1732
      %1734 = vdwg.mxu0
      %s1735 = scalar_lea.vmem %s931, 16
      %v1736 = vld [vmem:[%s1735] sm:$0xf]
      %v1737 = vld [vmem:[%s1735 + $0x4] sm:$0xf]
      %v1738 = vld [vmem:[%s1735 + $0x8] sm:$0xf]
      %v1739 = vld [vmem:[%s1735 + $0xc] sm:$0xf]
      %s1740 = scalar_lea.vmem %s935, 1
      %v1741 = vld [vmem:[%s1740] sm:$0x1]
      %v1743 = vperm.slane %v1741, 0
      %v1749 = vunpack.c.l.b16 %v1736
      %v1750 = vunpack.c.l.b16 %v1737
      %v1751 = vunpack.c.l.b16 %v1738
      %v1752 = vunpack.c.l.b16 %v1739
      %v1753 = vpack.c.b16 %v1750, %v1749
      %v1754 = vpack.c.b16 %v1752, %v1751
      %1757 = vmatpush.bf16.msra.mxu0 0
      %1758 = vmatpush.bf16.msra.mxu0 0
      %1759 = vmatpush.bf16.msra.mxu0 0
      %1760 = vmatpush.bf16.msra.mxu0 0
      %1761 = vmatpush.bf16.msra.mxu0 0
      %1762 = vmatpush.bf16.msra.mxu0 0
      %1763 = vmatpush.bf16.msra.mxu0 %v1754
      %1764 = vmatpush.bf16.msra.mxu0 %v1753
      %1765 = vmatmul.bf16.gmra.mxu0 %v1719
      %v1766 = vpop.f32.mrf.mxu0
      %v1767 = vadd.f32 %v1743, %v1766
      %v1768 = vpop.f32.mrf.mxu0
      %v1769 = vadd.f32 %v1743, %v1768
      %1770 = vdwg.mxu0
      %s1771 = scalar_lea.vmem %s940, 16
      %v1772 = vld [vmem:[%s1771] sm:$0xf]
      %v1773 = vld [vmem:[%s1771 + $0x4] sm:$0xf]
      %v1774 = vld [vmem:[%s1771 + $0x8] sm:$0xf]
      %v1775 = vld [vmem:[%s1771 + $0xc] sm:$0xf]
      %s1776 = scalar_lea.vmem %s944, 1
      %v1777 = vld [vmem:[%s1776] sm:$0x1]
      %v1779 = vperm.slane %v1777, 0
      %v1785 = vunpack.c.l.b16 %v1772
      %v1786 = vunpack.c.l.b16 %v1773
      %v1787 = vunpack.c.l.b16 %v1774
      %v1788 = vunpack.c.l.b16 %v1775
      %v1789 = vpack.c.b16 %v1786, %v1785
      %v1790 = vpack.c.b16 %v1788, %v1787
      %1793 = vmatpush.bf16.msra.mxu0 0
      %1794 = vmatpush.bf16.msra.mxu0 0
      %1795 = vmatpush.bf16.msra.mxu0 0
      %1796 = vmatpush.bf16.msra.mxu0 0
      %1797 = vmatpush.bf16.msra.mxu0 0
      %1798 = vmatpush.bf16.msra.mxu0 0
      %1799 = vmatpush.bf16.msra.mxu0 %v1790
      %1800 = vmatpush.bf16.msra.mxu0 %v1789
      %1801 = vmatmul.bf16.gmra.mxu0 %v1719
      %v1802 = vpop.f32.mrf.mxu0
      %v1803 = vadd.f32 %v1779, %v1802
      %v1804 = vpop.f32.mrf.mxu0
      %v1805 = vadd.f32 %v1779, %v1804
      %1806 = vdwg.mxu0
      %v1807 = vpack.c.bf16 %v1769, %v1767
      %v1808 = vpack.c.bf16 %v1805, %v1803
      %v1809 = vsel %vm1119, %v1731, 0.0
      %v1810 = vsel %vm1119, %v1733, 0.0
      %v1811 = vpack.c.bf16 %v1810, %v1809
      %v1813 = vsel %vm1029, %v1811, 0
      %v1816 = vsel %vm1029, %v1807, 0
      %1818 = vmatpush.bf16.xpose.msra.mxu0 0
      %1819 = vmatpush.bf16.xpose.msra.mxu0 0
      %1820 = vmatpush.bf16.xpose.msra.mxu0 0
      %1821 = vmatpush.bf16.xpose.msra.mxu0 0
      %1822 = vmatpush.bf16.xpose.msra.mxu0 0
      %1823 = vmatpush.bf16.xpose.msra.mxu0 0
      %1824 = vmatpush.bf16.xpose.msra.mxu0 0
      %1825 = vmatpush.bf16.xpose.msra.mxu0 %v1816
      %1826 = vmatmul.bf16.gmra.mxu0 %v1813
      %v1827 = vpop.f32.mrf.mxu0
      %v1828 = vadd.f32 0.0, %v1827
      %v1829 = vpop.f32.mrf.mxu0
      %v1830 = vadd.f32 0.0, %v1829
      %1831 = vdwg.mxu0
      %v1832 = vmul.f32 %v1828, 0.35355338
      %v1833 = vmul.f32 %v1830, 0.35355338
      %v1834 = vadd.f32 %v1832, %v1004
      %v1835 = vadd.f32 %v1833, %v1005
      %v1836 = vsel %vm1147, %v1834, -inf
      %1837 = vmax.xlane.f32.xlu0 %v1836
      %v1838 = vpop.xlane.xlu0 %1837
      %v1839 = vsel %vm1147, %v1835, -inf
      %1840 = vmax.xlane.f32.xlu0 %v1839
      %v1841 = vpop.xlane.xlu0 %1840
      %v1842 = vsub.f32 %v1834, %v1838
      %v1843 = vsub.f32 %v1835, %v1841
      %v1844 = vmul.f32 %v1842, 1.442695
      %v1845 = vpow.pop %v1844
      %v1846 = vmul.f32 %v1843, 1.442695
      %v1847 = vpow.pop %v1846
      %v1848 = vsel %vm1147, %v1845, 0.0
      %1849 = vadd.xlane.f32.xlu0 %v1848
      %v1850 = vpop.xlane.xlu0 %1849
      %v1851 = vsel %vm1147, %v1847, 0.0
      %1852 = vadd.xlane.f32.xlu0 %v1851
      %v1853 = vpop.xlane.xlu0 %1852
      %v1854 = vrcp.pop %v1850
      %v1855 = vrcp.pop %v1853
      %v1856 = vmul.f32 %v1845, %v1854
      %v1857 = vmul.f32 %v1847, %v1855
      %v1858 = vpack.c.bf16 %v1857, %v1856
      %v1860 = vsel %vm1147, %v1858, 0
      %1862 = vmatpush.bf16.msra.mxu0 0
      %1863 = vmatpush.bf16.msra.mxu0 0
      %1864 = vmatpush.bf16.msra.mxu0 0
      %1865 = vmatpush.bf16.msra.mxu0 0
      %1866 = vmatpush.bf16.msra.mxu0 0
      %1867 = vmatpush.bf16.msra.mxu0 0
      %1868 = vmatpush.bf16.msra.mxu0 0
      %1869 = vmatpush.bf16.msra.mxu0 %v1808
      %1870 = vmatmul.bf16.gmra.mxu0 %v1860
      %v1871 = vpop.f32.mrf.mxu0
      %v1872 = vadd.f32 0.0, %v1871
      %v1873 = vpop.f32.mrf.mxu0
      %v1874 = vadd.f32 0.0, %v1873
      %1875 = vdwg.mxu0
      %v1876 = vsel %vm1119, %v1872, 0.0
      %v1877 = vsel %vm1119, %v1874, 0.0
      %v1878 = vadd.f32 %v1876, 0.0
      %v1879 = vadd.f32 %v1877, 0.0
      %v1880 = vsel %vm1194, %v1731, 0.0
      %v1881 = vsel %vm1194, %v1733, 0.0
      %v1882 = vpack.c.bf16 %v1881, %v1880
      %v1884 = vsel %vm1029, %v1882, 0
      %1886 = vmatpush.bf16.xpose.msra.mxu0 0
      %1887 = vmatpush.bf16.xpose.msra.mxu0 0
      %1888 = vmatpush.bf16.xpose.msra.mxu0 0
      %1889 = vmatpush.bf16.xpose.msra.mxu0 0
      %1890 = vmatpush.bf16.xpose.msra.mxu0 0
      %1891 = vmatpush.bf16.xpose.msra.mxu0 0
      %1892 = vmatpush.bf16.xpose.msra.mxu0 0
      %1893 = vmatpush.bf16.xpose.msra.mxu0 %v1816
      %1894 = vmatmul.bf16.gmra.mxu0 %v1884
      %v1895 = vpop.f32.mrf.mxu0
      %v1896 = vadd.f32 0.0, %v1895
      %v1897 = vpop.f32.mrf.mxu0
      %v1898 = vadd.f32 0.0, %v1897
      %1899 = vdwg.mxu0
      %v1900 = vmul.f32 %v1896, 0.35355338
      %v1901 = vmul.f32 %v1898, 0.35355338
      %v1902 = vadd.f32 %v1900, %v1004
      %v1903 = vadd.f32 %v1901, %v1005
      %v1904 = vsel %vm1147, %v1902, -inf
      %1905 = vmax.xlane.f32.xlu0 %v1904
      %v1906 = vpop.xlane.xlu0 %1905
      %v1907 = vsel %vm1147, %v1903, -inf
      %1908 = vmax.xlane.f32.xlu0 %v1907
      %v1909 = vpop.xlane.xlu0 %1908
      %v1910 = vsub.f32 %v1902, %v1906
      %v1911 = vsub.f32 %v1903, %v1909
      %v1912 = vmul.f32 %v1910, 1.442695
      %v1913 = vpow.pop %v1912
      %v1914 = vmul.f32 %v1911, 1.442695
      %v1915 = vpow.pop %v1914
      %v1916 = vsel %vm1147, %v1913, 0.0
      %1917 = vadd.xlane.f32.xlu0 %v1916
      %v1918 = vpop.xlane.xlu0 %1917
      %v1919 = vsel %vm1147, %v1915, 0.0
      %1920 = vadd.xlane.f32.xlu0 %v1919
      %v1921 = vpop.xlane.xlu0 %1920
      %v1922 = vrcp.pop %v1918
      %v1923 = vrcp.pop %v1921
      %v1924 = vmul.f32 %v1913, %v1922
      %v1925 = vmul.f32 %v1915, %v1923
      %v1926 = vpack.c.bf16 %v1925, %v1924
      %v1928 = vsel %vm1147, %v1926, 0
      %1930 = vmatpush.bf16.msra.mxu0 0
      %1931 = vmatpush.bf16.msra.mxu0 0
      %1932 = vmatpush.bf16.msra.mxu0 0
      %1933 = vmatpush.bf16.msra.mxu0 0
      %1934 = vmatpush.bf16.msra.mxu0 0
      %1935 = vmatpush.bf16.msra.mxu0 0
      %1936 = vmatpush.bf16.msra.mxu0 0
      %1937 = vmatpush.bf16.msra.mxu0 %v1808
      %1938 = vmatmul.bf16.gmra.mxu0 %v1928
      %v1939 = vpop.f32.mrf.mxu0
      %v1940 = vadd.f32 0.0, %v1939
      %v1941 = vpop.f32.mrf.mxu0
      %v1942 = vadd.f32 0.0, %v1941
      %1943 = vdwg.mxu0
      %v1944 = vsel %vm1194, %v1940, 0.0
      %v1945 = vsel %vm1194, %v1942, 0.0
      %v1946 = vadd.f32 %v1878, %v1944
      %v1947 = vadd.f32 %v1879, %v1945
      %v1948 = vsel %vm1265, %v1731, 0.0
      %v1949 = vsel %vm1265, %v1733, 0.0
      %v1950 = vpack.c.bf16 %v1949, %v1948
      %v1952 = vsel %vm1029, %v1950, 0
      %1954 = vmatpush.bf16.xpose.msra.mxu0 0
      %1955 = vmatpush.bf16.xpose.msra.mxu0 0
      %1956 = vmatpush.bf16.xpose.msra.mxu0 0
      %1957 = vmatpush.bf16.xpose.msra.mxu0 0
      %1958 = vmatpush.bf16.xpose.msra.mxu0 0
      %1959 = vmatpush.bf16.xpose.msra.mxu0 0
      %1960 = vmatpush.bf16.xpose.msra.mxu0 0
      %1961 = vmatpush.bf16.xpose.msra.mxu0 %v1816
      %1962 = vmatmul.bf16.gmra.mxu0 %v1952
      %v1963 = vpop.f32.mrf.mxu0
      %v1964 = vadd.f32 0.0, %v1963
      %v1965 = vpop.f32.mrf.mxu0
      %v1966 = vadd.f32 0.0, %v1965
      %1967 = vdwg.mxu0
      %v1968 = vmul.f32 %v1964, 0.35355338
      %v1969 = vmul.f32 %v1966, 0.35355338
      %v1970 = vadd.f32 %v1968, %v1004
      %v1971 = vadd.f32 %v1969, %v1005
      %v1972 = vsel %vm1147, %v1970, -inf
      %1973 = vmax.xlane.f32.xlu0 %v1972
      %v1974 = vpop.xlane.xlu0 %1973
      %v1975 = vsel %vm1147, %v1971, -inf
      %1976 = vmax.xlane.f32.xlu0 %v1975
      %v1977 = vpop.xlane.xlu0 %1976
      %v1978 = vsub.f32 %v1970, %v1974
      %v1979 = vsub.f32 %v1971, %v1977
      %v1980 = vmul.f32 %v1978, 1.442695
      %v1981 = vpow.pop %v1980
      %v1982 = vmul.f32 %v1979, 1.442695
      %v1983 = vpow.pop %v1982
      %v1984 = vsel %vm1147, %v1981, 0.0
      %1985 = vadd.xlane.f32.xlu0 %v1984
      %v1986 = vpop.xlane.xlu0 %1985
      %v1987 = vsel %vm1147, %v1983, 0.0
      %1988 = vadd.xlane.f32.xlu0 %v1987
      %v1989 = vpop.xlane.xlu0 %1988
      %v1990 = vrcp.pop %v1986
      %v1991 = vrcp.pop %v1989
      %v1992 = vmul.f32 %v1981, %v1990
      %v1993 = vmul.f32 %v1983, %v1991
      %v1994 = vpack.c.bf16 %v1993, %v1992
      %v1996 = vsel %vm1147, %v1994, 0
      %1998 = vmatpush.bf16.msra.mxu0 0
      %1999 = vmatpush.bf16.msra.mxu0 0
      %2000 = vmatpush.bf16.msra.mxu0 0
      %2001 = vmatpush.bf16.msra.mxu0 0
      %2002 = vmatpush.bf16.msra.mxu0 0
      %2003 = vmatpush.bf16.msra.mxu0 0
      %2004 = vmatpush.bf16.msra.mxu0 0
      %2005 = vmatpush.bf16.msra.mxu0 %v1808
      %2006 = vmatmul.bf16.gmra.mxu0 %v1996
      %v2007 = vpop.f32.mrf.mxu0
      %v2008 = vadd.f32 0.0, %v2007
      %v2009 = vpop.f32.mrf.mxu0
      %v2010 = vadd.f32 0.0, %v2009
      %2011 = vdwg.mxu0
      %v2012 = vsel %vm1265, %v2008, 0.0
      %v2013 = vsel %vm1265, %v2010, 0.0
      %v2014 = vadd.f32 %v1946, %v2012
      %v2015 = vadd.f32 %v1947, %v2013
      %v2016 = vsel %vm1336, %v1731, 0.0
      %v2017 = vsel %vm1336, %v1733, 0.0
      %v2018 = vpack.c.bf16 %v2017, %v2016
      %v2020 = vsel %vm1029, %v2018, 0
      %2022 = vmatpush.bf16.xpose.msra.mxu0 0
      %2023 = vmatpush.bf16.xpose.msra.mxu0 0
      %2024 = vmatpush.bf16.xpose.msra.mxu0 0
      %2025 = vmatpush.bf16.xpose.msra.mxu0 0
      %2026 = vmatpush.bf16.xpose.msra.mxu0 0
      %2027 = vmatpush.bf16.xpose.msra.mxu0 0
      %2028 = vmatpush.bf16.xpose.msra.mxu0 0
      %2029 = vmatpush.bf16.xpose.msra.mxu0 %v1816
      %2030 = vmatmul.bf16.gmra.mxu0 %v2020
      %v2031 = vpop.f32.mrf.mxu0
      %v2032 = vadd.f32 0.0, %v2031
      %v2033 = vpop.f32.mrf.mxu0
      %v2034 = vadd.f32 0.0, %v2033
      %2035 = vdwg.mxu0
      %v2036 = vmul.f32 %v2032, 0.35355338
      %v2037 = vmul.f32 %v2034, 0.35355338
      %v2038 = vadd.f32 %v2036, %v1004
      %v2039 = vadd.f32 %v2037, %v1005
      %v2040 = vsel %vm1147, %v2038, -inf
      %2041 = vmax.xlane.f32.xlu0 %v2040
      %v2042 = vpop.xlane.xlu0 %2041
      %v2043 = vsel %vm1147, %v2039, -inf
      %2044 = vmax.xlane.f32.xlu0 %v2043
      %v2045 = vpop.xlane.xlu0 %2044
      %v2046 = vsub.f32 %v2038, %v2042
      %v2047 = vsub.f32 %v2039, %v2045
      %v2048 = vmul.f32 %v2046, 1.442695
      %v2049 = vpow.pop %v2048
      %v2050 = vmul.f32 %v2047, 1.442695
      %v2051 = vpow.pop %v2050
      %v2052 = vsel %vm1147, %v2049, 0.0
      %2053 = vadd.xlane.f32.xlu0 %v2052
      %v2054 = vpop.xlane.xlu0 %2053
      %v2055 = vsel %vm1147, %v2051, 0.0
      %2056 = vadd.xlane.f32.xlu0 %v2055
      %v2057 = vpop.xlane.xlu0 %2056
      %v2058 = vrcp.pop %v2054
      %v2059 = vrcp.pop %v2057
      %v2060 = vmul.f32 %v2049, %v2058
      %v2061 = vmul.f32 %v2051, %v2059
      %v2062 = vpack.c.bf16 %v2061, %v2060
      %v2064 = vsel %vm1147, %v2062, 0
      %2066 = vmatpush.bf16.msra.mxu0 0
      %2067 = vmatpush.bf16.msra.mxu0 0
      %2068 = vmatpush.bf16.msra.mxu0 0
      %2069 = vmatpush.bf16.msra.mxu0 0
      %2070 = vmatpush.bf16.msra.mxu0 0
      %2071 = vmatpush.bf16.msra.mxu0 0
      %2072 = vmatpush.bf16.msra.mxu0 0
      %2073 = vmatpush.bf16.msra.mxu0 %v1808
      %2074 = vmatmul.bf16.gmra.mxu0 %v2064
      %v2075 = vpop.f32.mrf.mxu0
      %v2076 = vadd.f32 0.0, %v2075
      %v2077 = vpop.f32.mrf.mxu0
      %v2078 = vadd.f32 0.0, %v2077
      %2079 = vdwg.mxu0
      %v2080 = vsel %vm1336, %v2076, 0.0
      %v2081 = vsel %vm1336, %v2078, 0.0
      %v2082 = vadd.f32 %v2014, %v2080
      %v2083 = vadd.f32 %v2015, %v2081
      %v2084 = vpack.c.bf16 %v2083, %v2082
      %s2085 = scalar_lea.vmem %s949, 16
      %v2086 = vld [vmem:[%s2085] sm:$0xf]
      %v2087 = vld [vmem:[%s2085 + $0x4] sm:$0xf]
      %v2088 = vld [vmem:[%s2085 + $0x8] sm:$0xf]
      %v2089 = vld [vmem:[%s2085 + $0xc] sm:$0xf]
      %s2090 = scalar_lea.vmem %s953, 1
      %v2091 = vld [vmem:[%s2090] sm:$0x1]
      %v2093 = vperm.slane %v2091, 0
      %v2099 = vunpack.c.l.b16 %v2086
      %v2100 = vunpack.c.l.b16 %v2087
      %v2101 = vunpack.c.l.b16 %v2088
      %v2102 = vunpack.c.l.b16 %v2089
      %v2103 = vpack.c.b16 %v2100, %v2099
      %v2104 = vpack.c.b16 %v2102, %v2101
      %v2108 = vsel %vm1029, %v2084, 0
      %2110 = vmatpush.bf16.msra.mxu0 0
      %2111 = vmatpush.bf16.msra.mxu0 0
      %2112 = vmatpush.bf16.msra.mxu0 0
      %2113 = vmatpush.bf16.msra.mxu0 0
      %2114 = vmatpush.bf16.msra.mxu0 0
      %2115 = vmatpush.bf16.msra.mxu0 0
      %2116 = vmatpush.bf16.msra.mxu0 %v2104
      %2117 = vmatpush.bf16.msra.mxu0 %v2103
      %2118 = vmatmul.bf16.gmra.mxu0 %v2108
      %v2119 = vpop.f32.mrf.mxu0
      %v2120 = vadd.f32 %v2093, %v2119
      %v2121 = vpop.f32.mrf.mxu0
      %v2122 = vadd.f32 %v2093, %v2121
      %2123 = vdwg.mxu0
      %s2124 = scalar_lea.vmem %s991, 1
      %v2125 = vld [vmem:[%s2124] sm:$0x1]
      %v2127 = vperm.slane %v2125, 0
      %2128 = vset.pattern.permute.xlu0 0
      %2129 = vperm.xlu0 %2128, %v2127
      %v2130 = vpop.permute.xlu0 %2129
      %v2132 = vmul.f32 %v2130, %v2120
      %v2133 = vmul.f32 %v2130, %v2122
      %v2134 = vadd.f32 %v1693, %v2132
      %v2135 = vadd.f32 %v1694, %v2133
      %s2136 = scalar_lea.vmem %s957, 1
      %v2137 = vld [vmem:[%s2136] sm:$0x1]
      %s2138 = scalar_lea.vmem %s961, 1
      %v2139 = vld [vmem:[%s2138] sm:$0x1]
      %v2140 = vsel %vm1029, %v2134, 0.0
      %2141 = vadd.xlane.f32.xlu0 %v2140
      %v2142 = vpop.xlane.xlu0 %2141
      %v2143 = vsel %vm1029, %v2135, 0.0
      %2144 = vadd.xlane.f32.xlu0 %v2143
      %v2145 = vpop.xlane.xlu0 %2144
      %v2146 = vmul.f32 %v2142, %v1468
      %v2147 = vmul.f32 %v2145, %v1468
      %v2148 = vsub.f32 %v2134, %v2146
      %v2149 = vsub.f32 %v2135, %v2147
      %v2150 = vmul.f32 %v2148, %v2148
      %v2151 = vmul.f32 %v2149, %v2149
      %v2152 = vsel %vm1029, %v2150, 0.0
      %2153 = vadd.xlane.f32.xlu0 %v2152
      %v2154 = vpop.xlane.xlu0 %2153
      %v2155 = vsel %vm1029, %v2151, 0.0
      %2156 = vadd.xlane.f32.xlu0 %v2155
      %v2157 = vpop.xlane.xlu0 %2156
      %v2158 = vmul.f32 %v2154, %v1468
      %v2159 = vmul.f32 %v2157, %v1468
      %v2160 = vadd.f32 %v2158, 1e-05
      %v2161 = vadd.f32 %v2159, 1e-05
      %v2162 = vrsqrt.pop %v2160
      %v2163 = vmul.f32 %v2162, %v2160
      %v2164 = vmul.f32 %v2163, %v2162
      %v2165 = vmul.f32 0.5, %v2164
      %v2166 = vsub.f32 1.5, %v2165
      %v2167 = vmul.f32 %v2162, %v2166
      %vm2168 = vweird.f32 %v2160
      %vm2169 = vweird.f32 %v2162
      %vm2170 = vmor %vm2168, %vm2169
      %v2171 = vsel %vm2170, %v2162, %v2167
      %v2172 = vrsqrt.pop %v2161
      %v2173 = vmul.f32 %v2172, %v2161
      %v2174 = vmul.f32 %v2173, %v2172
      %v2175 = vmul.f32 0.5, %v2174
      %v2176 = vsub.f32 1.5, %v2175
      %v2177 = vmul.f32 %v2172, %v2176
      %vm2178 = vweird.f32 %v2161
      %vm2179 = vweird.f32 %v2172
      %vm2180 = vmor %vm2178, %vm2179
      %v2181 = vsel %vm2180, %v2172, %v2177
      %v2182 = vmul.f32 %v2148, %v2171
      %v2183 = vmul.f32 %v2149, %v2181
      %v2185 = vperm.slane %v2137, 0
      %v2187 = vmul.f32 %v2182, %v2185
      %v2188 = vmul.f32 %v2183, %v2185
      %v2190 = vperm.slane %v2139, 0
      %v2192 = vadd.f32 %v2187, %v2190
      %v2193 = vadd.f32 %v2188, %v2190
      %v2194 = vpack.c.bf16 %v2193, %v2192
      %s2195 = scalar_lea.vmem %s966, 16
      %v2196 = vld [vmem:[%s2195] sm:$0xf]
      %v2197 = vld [vmem:[%s2195 + $0x4] sm:$0xf]
      %v2198 = vld [vmem:[%s2195 + $0x8] sm:$0xf]
      %v2199 = vld [vmem:[%s2195 + $0xc] sm:$0xf]
      %s2200 = scalar_lea.vmem %s970, 1
      %v2201 = vld [vmem:[%s2200] sm:$0x1]
      %v2203 = vperm.slane %v2201, 0
      %v2209 = vunpack.c.l.b16 %v2196
      %v2210 = vunpack.c.l.b16 %v2197
      %v2211 = vunpack.c.l.b16 %v2198
      %v2212 = vunpack.c.l.b16 %v2199
      %v2213 = vpack.c.b16 %v2210, %v2209
      %v2214 = vpack.c.b16 %v2212, %v2211
      %v2218 = vsel %vm1029, %v2194, 0
      %2220 = vmatpush.bf16.msra.mxu0 0
      %2221 = vmatpush.bf16.msra.mxu0 0
      %2222 = vmatpush.bf16.msra.mxu0 0
      %2223 = vmatpush.bf16.msra.mxu0 0
      %2224 = vmatpush.bf16.msra.mxu0 0
      %2225 = vmatpush.bf16.msra.mxu0 0
      %2226 = vmatpush.bf16.msra.mxu0 %v2214
      %2227 = vmatpush.bf16.msra.mxu0 %v2213
      %2228 = vmatmul.bf16.gmra.mxu0 %v2218
      %v2229 = vpop.f32.mrf.mxu0
      %v2230 = vadd.f32 %v2203, %v2229
      %v2231 = vpop.f32.mrf.mxu0
      %v2232 = vadd.f32 %v2203, %v2231
      %2233 = vdwg.mxu0
      %v2234 = vmul.f32 %v2230, %v2230
      %v2235 = vmul.f32 %v2232, %v2232
      %v2236 = vmul.f32 %v2230, %v2234
      %v2237 = vmul.f32 %v2232, %v2235
      %v2238 = vmul.f32 %v2236, 0.044715
      %v2239 = vmul.f32 %v2237, 0.044715
      %v2240 = vadd.f32 %v2230, %v2238
      %v2241 = vadd.f32 %v2232, %v2239
      %v2242 = vmul.f32 %v2240, 0.7978846
      %v2243 = vmul.f32 %v2241, 0.7978846
      %v2244 = vtanh.pop %v2242
      %v2245 = vtanh.pop %v2243
      %v2246 = vadd.f32 %v2244, 1.0
      %v2247 = vadd.f32 %v2245, 1.0
      %v2248 = vmul.f32 %v2246, 0.5
      %v2249 = vmul.f32 %v2247, 0.5
      %v2250 = vmul.f32 %v2230, %v2248
      %v2251 = vmul.f32 %v2232, %v2249
      %v2252 = vpack.c.bf16 %v2251, %v2250
      %s2253 = scalar_lea.vmem %s975, 32
      %v2254 = vld [vmem:[%s2253] sm:$0xf]
      %v2255 = vld [vmem:[%s2253 + $0x4] sm:$0xf]
      %v2256 = vld [vmem:[%s2253 + $0x8] sm:$0xf]
      %v2257 = vld [vmem:[%s2253 + $0xc] sm:$0xf]
      %v2258 = vld [vmem:[%s2253 + $0x10] sm:$0xf]
      %v2259 = vld [vmem:[%s2253 + $0x14] sm:$0xf]
      %v2260 = vld [vmem:[%s2253 + $0x18] sm:$0xf]
      %v2261 = vld [vmem:[%s2253 + $0x1c] sm:$0xf]
      %s2262 = scalar_lea.vmem %s979, 1
      %v2263 = vld [vmem:[%s2262] sm:$0x1]
      %v2265 = vperm.slane %v2263, 0
      %v2275 = vunpack.c.l.b16 %v2254
      %v2276 = vunpack.c.l.b16 %v2255
      %v2277 = vunpack.c.l.b16 %v2256
      %v2278 = vunpack.c.l.b16 %v2257
      %v2279 = vunpack.c.l.b16 %v2258
      %v2280 = vunpack.c.l.b16 %v2259
      %v2281 = vunpack.c.l.b16 %v2260
      %v2282 = vunpack.c.l.b16 %v2261
      %v2283 = vpack.c.b16 %v2276, %v2275
      %v2284 = vpack.c.b16 %v2278, %v2277
      %v2285 = vpack.c.b16 %v2280, %v2279
      %v2286 = vpack.c.b16 %v2282, %v2281
      %v2292 = vsel %vm1610, %v2252, 0
      %2294 = vmatpush.bf16.msra.mxu0 0
      %2295 = vmatpush.bf16.msra.mxu0 0
      %2296 = vmatpush.bf16.msra.mxu0 0
      %2297 = vmatpush.bf16.msra.mxu0 0
      %2298 = vmatpush.bf16.msra.mxu0 %v2286
      %2299 = vmatpush.bf16.msra.mxu0 %v2285
      %2300 = vmatpush.bf16.msra.mxu0 %v2284
      %2301 = vmatpush.bf16.msra.mxu0 %v2283
      %2302 = vmatmul.bf16.gmra.mxu0 %v2292
      %v2303 = vpop.f32.mrf.mxu0
      %v2304 = vadd.f32 %v2265, %v2303
      %v2305 = vpop.f32.mrf.mxu0
      %v2306 = vadd.f32 %v2265, %v2305
      %2307 = vdwg.mxu0
      %s2308 = scalar_lea.vmem %s995, 1
      %v2309 = vld [vmem:[%s2308] sm:$0x1]
      %v2311 = vperm.slane %v2309, 0
      %2312 = vset.pattern.permute.xlu0 0
      %2313 = vperm.xlu0 %2312, %v2311
      %v2314 = vpop.permute.xlu0 %2313
      %v2316 = vmul.f32 %v2314, %v2304
      %v2317 = vmul.f32 %v2314, %v2306
      %v2318 = vadd.f32 %v2192, %v2316
      %v2319 = vadd.f32 %v2193, %v2317
      %s2320 = scalar_lea.vmem %s983, 1
      %v2321 = vld [vmem:[%s2320] sm:$0x1]
      %s2322 = scalar_lea.vmem %s987, 1
      %v2323 = vld [vmem:[%s2322] sm:$0x1]
      %v2324 = vsel %vm1029, %v2318, 0.0
      %2325 = vadd.xlane.f32.xlu0 %v2324
      %v2326 = vpop.xlane.xlu0 %2325
      %v2327 = vsel %vm1029, %v2319, 0.0
      %2328 = vadd.xlane.f32.xlu0 %v2327
      %v2329 = vpop.xlane.xlu0 %2328
      %v2330 = vmul.f32 %v2326, %v1468
      %v2331 = vmul.f32 %v2329, %v1468
      %v2332 = vsub.f32 %v2318, %v2330
      %v2333 = vsub.f32 %v2319, %v2331
      %v2334 = vmul.f32 %v2332, %v2332
      %v2335 = vmul.f32 %v2333, %v2333
      %v2336 = vsel %vm1029, %v2334, 0.0
      %2337 = vadd.xlane.f32.xlu0 %v2336
      %v2338 = vpop.xlane.xlu0 %2337
      %v2339 = vsel %vm1029, %v2335, 0.0
      %2340 = vadd.xlane.f32.xlu0 %v2339
      %v2341 = vpop.xlane.xlu0 %2340
      %v2342 = vmul.f32 %v2338, %v1468
      %v2343 = vmul.f32 %v2341, %v1468
      %v2344 = vadd.f32 %v2342, 1e-05
      %v2345 = vadd.f32 %v2343, 1e-05
      %v2346 = vrsqrt.pop %v2344
      %v2347 = vmul.f32 %v2346, %v2344
      %v2348 = vmul.f32 %v2347, %v2346
      %v2349 = vmul.f32 0.5, %v2348
      %v2350 = vsub.f32 1.5, %v2349
      %v2351 = vmul.f32 %v2346, %v2350
      %vm2352 = vweird.f32 %v2344
      %vm2353 = vweird.f32 %v2346
      %vm2354 = vmor %vm2352, %vm2353
      %v2355 = vsel %vm2354, %v2346, %v2351
      %v2356 = vrsqrt.pop %v2345
      %v2357 = vmul.f32 %v2356, %v2345
      %v2358 = vmul.f32 %v2357, %v2356
      %v2359 = vmul.f32 0.5, %v2358
      %v2360 = vsub.f32 1.5, %v2359
      %v2361 = vmul.f32 %v2356, %v2360
      %vm2362 = vweird.f32 %v2345
      %vm2363 = vweird.f32 %v2356
      %vm2364 = vmor %vm2362, %vm2363
      %v2365 = vsel %vm2364, %v2356, %v2361
      %v2366 = vmul.f32 %v2332, %v2355
      %v2367 = vmul.f32 %v2333, %v2365
      %v2369 = vperm.slane %v2321, 0
      %v2371 = vmul.f32 %v2366, %v2369
      %v2372 = vmul.f32 %v2367, %v2369
      %v2374 = vperm.slane %v2323, 0
      %v2376 = vadd.f32 %v2371, %v2374
      %v2377 = vadd.f32 %v2372, %v2374
      %2378 = vst.msk [vmem:[%s1000] sm:$0xff] %vm1029, %v2376
      %2379 = vst.msk [vmem:[%s1000 + $0x8] sm:$0xff] %vm1029, %v2377
      %p2380 = scmp.lt.s32.totalorder %s32, 1
      %s2381 = scalar_select %p2380, %s32, 1
      %s2382 = smul.addr %s2381, 2
      %s2383 = smul.addr %s2382, 8
      %s2384 = scalar_lea.vmem %s21, %s2383
      // Predicated region
      $region105: #{tssr_forward.5} parent=103 // pred_check
        %p2385 = pneg %p591
      $region106: #{tssr_forward.5} parent=103 // pred_check_branch
        %2387 = sbr.rel (%p2385) target = $region108
      $region107: #{tssr_forward.5} parent=103 // pred_region
        _
      $region108: #{tssr_forward.5} parent=103 // pred_fallthru
        _
    $region104: #{tssr_forward.5} parent=5 // pred_fallthru
      _
    %p2388 = scmp.le.s32.totalorder 2, %s27
    // Predicated region
    $region109: #{tssr_forward.5} parent=5 // pred_check
      %p2389 = pneg %p2388
    $region110: #{tssr_forward.5} parent=5 // pred_check_branch
      %2391 = sbr.rel (%p2389) target = $region112
    $region111: #{tssr_forward.5} parent=5 // pred_region
      %s2392 = ssub.s32 %s27, 2
      // Predicated region
      $region113: #{tssr_forward.5} parent=111 // pred_check
        %p2393 = pneg %p597
      $region114: #{tssr_forward.5} parent=111 // pred_check_branch
        %2395 = sbr.rel (%p2393) target = $region116
      $region115: #{tssr_forward.5} parent=111 // pred_region
        %p2396 = scmp.lt.s32.totalorder %s33, 1
        %s2397 = scalar_select %p2396, %s33, 1
        %s2398 = smul.addr %s2397, 2
        %s2399 = smul.addr %s2398, 8
        %s2400 = scalar_lea.vmem %s21, %s2399
      $region116: #{tssr_forward.5} parent=111 // pred_fallthru
        _
    $region112: #{tssr_forward.5} parent=5 // pred_fallthru
      _
  $region6: #{tssr_forward.5} parent=0 // loop_footer
    %s31 = sadd.s32 1, %s27
  $region7: #{tssr_forward.5} parent=0 // loop_footer_branch
    %26 = sbr.rel target = $region3
  $region8: #{tssr_forward.5} parent=0 // loop_exit
    _

// kernel: tssr_forward.6
$region0: #{tssr_forward.6}
  #allocation0 [shape = 'u32[]', space=smem, size = 0x4, offset = 0x4, fixed_abs, tag = 'smem constant byte address 0x4 - core index']
  #allocation1 [shape = 'u32[72,128]{1,0:T(1,128)}', space=vmem, size = 0x9000, scoped, tag = 'internal scratch']
  %s0 = inlined_call_operand.vmem [shape: f32[2,16,32], index: 0, kind: input, shape index: {}]
  %s1 = inlined_call_operand.vmem [shape: f32[2,16,32], index: 1, kind: input, shape index: {}]
  %s2 = inlined_call_operand.vmem [shape: f32[16,16], index: 2, kind: input, shape index: {}]
  %s3 = inlined_call_operand.vmem [shape: bf16[2,1,32,32], index: 3, kind: input, shape index: {}]
  %s4 = inlined_call_operand.vmem [shape: f32[2,1,1,32], index: 4, kind: input, shape index: {}]
  %s5 = inlined_call_operand.vmem [shape: bf16[2,1,32,32], index: 5, kind: input, shape index: {}]
  %s6 = inlined_call_operand.vmem [shape: f32[2,1,1,32], index: 6, kind: input, shape index: {}]
  %s7 = inlined_call_operand.vmem [shape: bf16[2,1,32,32], index: 7, kind: input, shape index: {}]
  %s8 = inlined_call_operand.vmem [shape: f32[2,1,1,32], index: 8, kind: input, shape index: {}]
  %s9 = inlined_call_operand.vmem [shape: bf16[2,1,32,32], index: 9, kind: input, shape index: {}]
  %s10 = inlined_call_operand.vmem [shape: f32[2,1,1,32], index: 10, kind: input, shape index: {}]
  %s11 = inlined_call_operand.vmem [shape: f32[2,1,1,32], index: 11, kind: input, shape index: {}]
  %s12 = inlined_call_operand.vmem [shape: f32[2,1,1,32], index: 12, kind: input, shape index: {}]
  %s13 = inlined_call_operand.vmem [shape: bf16[2,1,32,64], index: 13, kind: input, shape index: {}]
  %s14 = inlined_call_operand.vmem [shape: f32[2,1,1,64], index: 14, kind: input, shape index: {}]
  %s15 = inlined_call_operand.vmem [shape: bf16[2,1,64,32], index: 15, kind: input, shape index: {}]
  %s16 = inlined_call_operand.vmem [shape: f32[2,1,1,32], index: 16, kind: input, shape index: {}]
  %s17 = inlined_call_operand.vmem [shape: f32[2,1,1,32], index: 17, kind: input, shape index: {}]
  %s18 = inlined_call_operand.vmem [shape: f32[2,1,1,32], index: 18, kind: input, shape index: {}]
  %s19 = inlined_call_operand.vmem [shape: f32[2,1,1,1], index: 19, kind: input, shape index: {}]
  %s20 = inlined_call_operand.vmem [shape: f32[2,1,1,1], index: 20, kind: input, shape index: {}]
  %s21 = inlined_call_operand.vmem [shape: f32[2,16,32], index: 21, kind: output, shape index: {}]
  %s22 = sld [smem:[#allocation0]]
  $region117: #{tssr_forward.6} parent=0
    _
  %s24 = ssub.s32 1, %s22
  %s25 = scalar_select 0, %s24, %s22
  loop: start=0, step=1, limit=4
  $region2: #{tssr_forward.6} parent=0 // loop_pre_header
    _
  $region3: #{tssr_forward.6} parent=0 // loop_header
    %s27 = sphi 0, %s31
    %p28 = scmp.ge.s32.totalorder %s27, 4
    %s37 = sphi 0, %s39
    %s40 = sphi 0, %s37
    %s41 = sphi 0, %s40
    %s57 = sphi 0, %s41
    %s63 = sphi 0, %s65
    %s66 = sphi 0, %s63
    %s67 = sphi 0, %s66
    %s83 = sphi 0, %s67
    %s87 = sphi 0, %s87
    %s89 = sphi 0, %s87
    %s90 = sphi 0, %s89
    %s104 = sphi 0, %s90
    %s110 = sphi 0, %s112
    %s113 = sphi 0, %s110
    %s114 = sphi 0, %s113
    %s130 = sphi 0, %s114
    %s136 = sphi 0, %s138
    %s139 = sphi 0, %s136
    %s140 = sphi 0, %s139
    %s156 = sphi 0, %s140
    %s162 = sphi 0, %s164
    %s165 = sphi 0, %s162
    %s166 = sphi 0, %s165
    %s182 = sphi 0, %s166
    %s188 = sphi 0, %s190
    %s191 = sphi 0, %s188
    %s192 = sphi 0, %s191
    %s208 = sphi 0, %s192
    %s214 = sphi 0, %s216
    %s217 = sphi 0, %s214
    %s218 = sphi 0, %s217
    %s234 = sphi 0, %s218
    %s240 = sphi 0, %s242
    %s243 = sphi 0, %s240
    %s244 = sphi 0, %s243
    %s260 = sphi 0, %s244
    %s266 = sphi 0, %s268
    %s269 = sphi 0, %s266
    %s270 = sphi 0, %s269
    %s286 = sphi 0, %s270
    %s292 = sphi 0, %s294
    %s295 = sphi 0, %s292
    %s296 = sphi 0, %s295
    %s312 = sphi 0, %s296
    %s318 = sphi 0, %s320
    %s321 = sphi 0, %s318
    %s322 = sphi 0, %s321
    %s338 = sphi 0, %s322
    %s344 = sphi 0, %s346
    %s347 = sphi 0, %s344
    %s348 = sphi 0, %s347
    %s364 = sphi 0, %s348
    %s370 = sphi 0, %s372
    %s373 = sphi 0, %s370
    %s374 = sphi 0, %s373
    %s390 = sphi 0, %s374
    %s396 = sphi 0, %s398
    %s399 = sphi 0, %s396
    %s400 = sphi 0, %s399
    %s416 = sphi 0, %s400
    %s422 = sphi 0, %s424
    %s425 = sphi 0, %s422
    %s426 = sphi 0, %s425
    %s442 = sphi 0, %s426
    %s448 = sphi 0, %s450
    %s451 = sphi 0, %s448
    %s452 = sphi 0, %s451
    %s468 = sphi 0, %s452
    %s474 = sphi 0, %s476
    %s477 = sphi 0, %s474
    %s478 = sphi 0, %s477
    %s494 = sphi 0, %s478
    %s500 = sphi 0, %s502
    %s503 = sphi 0, %s500
    %s504 = sphi 0, %s503
    %s520 = sphi 0, %s504
    %s526 = sphi 0, %s528
    %s529 = sphi 0, %s526
    %s530 = sphi 0, %s529
    %s546 = sphi 0, %s530
    %s552 = sphi 0, %s554
    %s555 = sphi 0, %s552
    %s556 = sphi 0, %s555
    %s572 = sphi 0, %s556
    %s578 = sphi 0, %s580
    %s581 = sphi 0, %s578
    %s582 = sphi 0, %s581
    %s598 = sphi 0, %s582
  $region4: #{tssr_forward.6} parent=0 // loop_header_branch
    %30 = sbr.rel (%p28) target = $region8
  $region5: #{tssr_forward.6} parent=0 // loop_body
    %s32 = ssub.s32 %s27, 1
    %s33 = ssub.s32 %s27, 2
    %s34 = sadd.s32 %s27, 1
    %s35 = ssub.s32 %s27, %s34
    %p36 = scmp.eq.s32.totalorder %s35, 0
    %s38 = sadd.s32 %s37, 1
    %s39 = scalar_select %p36, %s37, %s38
    %p42 = pneg %p36
    %p43 = scmp.eq.s32.totalorder %s27, 1
    %p44 = por %p42, %p43
    %p45 = scmp.ne.s32.totalorder %s37, %s40
    %p46 = scmp.eq.s32.totalorder %s27, 0
    %p47 = por %p45, %p46
    %p48 = scmp.ne.s32.totalorder %s37, %s40
    %p49 = scmp.eq.s32.totalorder %s32, 1
    %p50 = por %p48, %p49
    %p51 = scmp.ne.s32.totalorder %s40, %s41
    %p52 = scmp.eq.s32.totalorder %s32, 0
    %p53 = por %p51, %p52
    %p54 = scmp.ne.s32.totalorder %s40, %s41
    %p55 = scmp.eq.s32.totalorder %s33, 1
    %p56 = por %p54, %p55
    %p58 = scmp.ne.s32.totalorder %s41, %s57
    %p59 = scmp.eq.s32.totalorder %s33, 0
    %p60 = por %p58, %p59
    %s61 = ssub.s32 %s27, %s34
    %p62 = scmp.eq.s32.totalorder %s61, 0
    %s64 = sadd.s32 %s63, 1
    %s65 = scalar_select %p62, %s63, %s64
    %p68 = pneg %p62
    %p69 = scmp.eq.s32.totalorder %s27, 1
    %p70 = por %p68, %p69
    %p71 = scmp.ne.s32.totalorder %s63, %s66
    %p72 = scmp.eq.s32.totalorder %s27, 0
    %p73 = por %p71, %p72
    %p74 = scmp.ne.s32.totalorder %s63, %s66
    %p75 = scmp.eq.s32.totalorder %s32, 1
    %p76 = por %p74, %p75
    %p77 = scmp.ne.s32.totalorder %s66, %s67
    %p78 = scmp.eq.s32.totalorder %s32, 0
    %p79 = por %p77, %p78
    %p80 = scmp.ne.s32.totalorder %s66, %s67
    %p81 = scmp.eq.s32.totalorder %s33, 1
    %p82 = por %p80, %p81
    %p84 = scmp.ne.s32.totalorder %s67, %s83
    %p85 = scmp.eq.s32.totalorder %s33, 0
    %p86 = por %p84, %p85
    %s88 = sadd.s32 %s87, 1
    %p91 = scmp.eq.s32.totalorder %s27, 1
    %p92 = scmp.ne.s32.totalorder %s87, %s89
    %p93 = scmp.eq.s32.totalorder %s27, 0
    %p94 = por %p92, %p93
    %p95 = scmp.ne.s32.totalorder %s87, %s89
    %p96 = scmp.eq.s32.totalorder %s32, 1
    %p97 = por %p95, %p96
    %p98 = scmp.ne.s32.totalorder %s89, %s90
    %p99 = scmp.eq.s32.totalorder %s32, 0
    %p100 = por %p98, %p99
    %p101 = scmp.ne.s32.totalorder %s89, %s90
    %p102 = scmp.eq.s32.totalorder %s33, 1
    %p103 = por %p101, %p102
    %p105 = scmp.ne.s32.totalorder %s90, %s104
    %p106 = scmp.eq.s32.totalorder %s33, 0
    %p107 = por %p105, %p106
    %s108 = ssub.s32 %s27, %s34
    %p109 = scmp.eq.s32.totalorder %s108, 0
    %s111 = sadd.s32 %s110, 1
    %s112 = scalar_select %p109, %s110, %s111
    %p115 = pneg %p109
    %p116 = scmp.eq.s32.totalorder %s27, 1
    %p117 = por %p115, %p116
    %p118 = scmp.ne.s32.totalorder %s110, %s113
    %p119 = scmp.eq.s32.totalorder %s27, 0
    %p120 = por %p118, %p119
    %p121 = scmp.ne.s32.totalorder %s110, %s113
    %p122 = scmp.eq.s32.totalorder %s32, 1
    %p123 = por %p121, %p122
    %p124 = scmp.ne.s32.totalorder %s113, %s114
    %p125 = scmp.eq.s32.totalorder %s32, 0
    %p126 = por %p124, %p125
    %p127 = scmp.ne.s32.totalorder %s113, %s114
    %p128 = scmp.eq.s32.totalorder %s33, 1
    %p129 = por %p127, %p128
    %p131 = scmp.ne.s32.totalorder %s114, %s130
    %p132 = scmp.eq.s32.totalorder %s33, 0
    %p133 = por %p131, %p132
    %s134 = ssub.s32 %s27, %s34
    %p135 = scmp.eq.s32.totalorder %s134, 0
    %s137 = sadd.s32 %s136, 1
    %s138 = scalar_select %p135, %s136, %s137
    %p141 = pneg %p135
    %p142 = scmp.eq.s32.totalorder %s27, 1
    %p143 = por %p141, %p142
    %p144 = scmp.ne.s32.totalorder %s136, %s139
    %p145 = scmp.eq.s32.totalorder %s27, 0
    %p146 = por %p144, %p145
    %p147 = scmp.ne.s32.totalorder %s136, %s139
    %p148 = scmp.eq.s32.totalorder %s32, 1
    %p149 = por %p147, %p148
    %p150 = scmp.ne.s32.totalorder %s139, %s140
    %p151 = scmp.eq.s32.totalorder %s32, 0
    %p152 = por %p150, %p151
    %p153 = scmp.ne.s32.totalorder %s139, %s140
    %p154 = scmp.eq.s32.totalorder %s33, 1
    %p155 = por %p153, %p154
    %p157 = scmp.ne.s32.totalorder %s140, %s156
    %p158 = scmp.eq.s32.totalorder %s33, 0
    %p159 = por %p157, %p158
    %s160 = ssub.s32 %s27, %s34
    %p161 = scmp.eq.s32.totalorder %s160, 0
    %s163 = sadd.s32 %s162, 1
    %s164 = scalar_select %p161, %s162, %s163
    %p167 = pneg %p161
    %p168 = scmp.eq.s32.totalorder %s27, 1
    %p169 = por %p167, %p168
    %p170 = scmp.ne.s32.totalorder %s162, %s165
    %p171 = scmp.eq.s32.totalorder %s27, 0
    %p172 = por %p170, %p171
    %p173 = scmp.ne.s32.totalorder %s162, %s165
    %p174 = scmp.eq.s32.totalorder %s32, 1
    %p175 = por %p173, %p174
    %p176 = scmp.ne.s32.totalorder %s165, %s166
    %p177 = scmp.eq.s32.totalorder %s32, 0
    %p178 = por %p176, %p177
    %p179 = scmp.ne.s32.totalorder %s165, %s166
    %p180 = scmp.eq.s32.totalorder %s33, 1
    %p181 = por %p179, %p180
    %p183 = scmp.ne.s32.totalorder %s166, %s182
    %p184 = scmp.eq.s32.totalorder %s33, 0
    %p185 = por %p183, %p184
    %s186 = ssub.s32 %s27, %s34
    %p187 = scmp.eq.s32.totalorder %s186, 0
    %s189 = sadd.s32 %s188, 1
    %s190 = scalar_select %p187, %s188, %s189
    %p193 = pneg %p187
    %p194 = scmp.eq.s32.totalorder %s27, 1
    %p195 = por %p193, %p194
    %p196 = scmp.ne.s32.totalorder %s188, %s191
    %p197 = scmp.eq.s32.totalorder %s27, 0
    %p198 = por %p196, %p197
    %p199 = scmp.ne.s32.totalorder %s188, %s191
    %p200 = scmp.eq.s32.totalorder %s32, 1
    %p201 = por %p199, %p200
    %p202 = scmp.ne.s32.totalorder %s191, %s192
    %p203 = scmp.eq.s32.totalorder %s32, 0
    %p204 = por %p202, %p203
    %p205 = scmp.ne.s32.totalorder %s191, %s192
    %p206 = scmp.eq.s32.totalorder %s33, 1
    %p207 = por %p205, %p206
    %p209 = scmp.ne.s32.totalorder %s192, %s208
    %p210 = scmp.eq.s32.totalorder %s33, 0
    %p211 = por %p209, %p210
    %s212 = ssub.s32 %s27, %s34
    %p213 = scmp.eq.s32.totalorder %s212, 0
    %s215 = sadd.s32 %s214, 1
    %s216 = scalar_select %p213, %s214, %s215
    %p219 = pneg %p213
    %p220 = scmp.eq.s32.totalorder %s27, 1
    %p221 = por %p219, %p220
    %p222 = scmp.ne.s32.totalorder %s214, %s217
    %p223 = scmp.eq.s32.totalorder %s27, 0
    %p224 = por %p222, %p223
    %p225 = scmp.ne.s32.totalorder %s214, %s217
    %p226 = scmp.eq.s32.totalorder %s32, 1
    %p227 = por %p225, %p226
    %p228 = scmp.ne.s32.totalorder %s217, %s218
    %p229 = scmp.eq.s32.totalorder %s32, 0
    %p230 = por %p228, %p229
    %p231 = scmp.ne.s32.totalorder %s217, %s218
    %p232 = scmp.eq.s32.totalorder %s33, 1
    %p233 = por %p231, %p232
    %p235 = scmp.ne.s32.totalorder %s218, %s234
    %p236 = scmp.eq.s32.totalorder %s33, 0
    %p237 = por %p235, %p236
    %s238 = ssub.s32 %s27, %s34
    %p239 = scmp.eq.s32.totalorder %s238, 0
    %s241 = sadd.s32 %s240, 1
    %s242 = scalar_select %p239, %s240, %s241
    %p245 = pneg %p239
    %p246 = scmp.eq.s32.totalorder %s27, 1
    %p247 = por %p245, %p246
    %p248 = scmp.ne.s32.totalorder %s240, %s243
    %p249 = scmp.eq.s32.totalorder %s27, 0
    %p250 = por %p248, %p249
    %p251 = scmp.ne.s32.totalorder %s240, %s243
    %p252 = scmp.eq.s32.totalorder %s32, 1
    %p253 = por %p251, %p252
    %p254 = scmp.ne.s32.totalorder %s243, %s244
    %p255 = scmp.eq.s32.totalorder %s32, 0
    %p256 = por %p254, %p255
    %p257 = scmp.ne.s32.totalorder %s243, %s244
    %p258 = scmp.eq.s32.totalorder %s33, 1
    %p259 = por %p257, %p258
    %p261 = scmp.ne.s32.totalorder %s244, %s260
    %p262 = scmp.eq.s32.totalorder %s33, 0
    %p263 = por %p261, %p262
    %s264 = ssub.s32 %s27, %s34
    %p265 = scmp.eq.s32.totalorder %s264, 0
    %s267 = sadd.s32 %s266, 1
    %s268 = scalar_select %p265, %s266, %s267
    %p271 = pneg %p265
    %p272 = scmp.eq.s32.totalorder %s27, 1
    %p273 = por %p271, %p272
    %p274 = scmp.ne.s32.totalorder %s266, %s269
    %p275 = scmp.eq.s32.totalorder %s27, 0
    %p276 = por %p274, %p275
    %p277 = scmp.ne.s32.totalorder %s266, %s269
    %p278 = scmp.eq.s32.totalorder %s32, 1
    %p279 = por %p277, %p278
    %p280 = scmp.ne.s32.totalorder %s269, %s270
    %p281 = scmp.eq.s32.totalorder %s32, 0
    %p282 = por %p280, %p281
    %p283 = scmp.ne.s32.totalorder %s269, %s270
    %p284 = scmp.eq.s32.totalorder %s33, 1
    %p285 = por %p283, %p284
    %p287 = scmp.ne.s32.totalorder %s270, %s286
    %p288 = scmp.eq.s32.totalorder %s33, 0
    %p289 = por %p287, %p288
    %s290 = ssub.s32 %s27, %s34
    %p291 = scmp.eq.s32.totalorder %s290, 0
    %s293 = sadd.s32 %s292, 1
    %s294 = scalar_select %p291, %s292, %s293
    %p297 = pneg %p291
    %p298 = scmp.eq.s32.totalorder %s27, 1
    %p299 = por %p297, %p298
    %p300 = scmp.ne.s32.totalorder %s292, %s295
    %p301 = scmp.eq.s32.totalorder %s27, 0
    %p302 = por %p300, %p301
    %p303 = scmp.ne.s32.totalorder %s292, %s295
    %p304 = scmp.eq.s32.totalorder %s32, 1
    %p305 = por %p303, %p304
    %p306 = scmp.ne.s32.totalorder %s295, %s296
    %p307 = scmp.eq.s32.totalorder %s32, 0
    %p308 = por %p306, %p307
    %p309 = scmp.ne.s32.totalorder %s295, %s296
    %p310 = scmp.eq.s32.totalorder %s33, 1
    %p311 = por %p309, %p310
    %p313 = scmp.ne.s32.totalorder %s296, %s312
    %p314 = scmp.eq.s32.totalorder %s33, 0
    %p315 = por %p313, %p314
    %s316 = ssub.s32 %s27, %s34
    %p317 = scmp.eq.s32.totalorder %s316, 0
    %s319 = sadd.s32 %s318, 1
    %s320 = scalar_select %p317, %s318, %s319
    %p323 = pneg %p317
    %p324 = scmp.eq.s32.totalorder %s27, 1
    %p325 = por %p323, %p324
    %p326 = scmp.ne.s32.totalorder %s318, %s321
    %p327 = scmp.eq.s32.totalorder %s27, 0
    %p328 = por %p326, %p327
    %p329 = scmp.ne.s32.totalorder %s318, %s321
    %p330 = scmp.eq.s32.totalorder %s32, 1
    %p331 = por %p329, %p330
    %p332 = scmp.ne.s32.totalorder %s321, %s322
    %p333 = scmp.eq.s32.totalorder %s32, 0
    %p334 = por %p332, %p333
    %p335 = scmp.ne.s32.totalorder %s321, %s322
    %p336 = scmp.eq.s32.totalorder %s33, 1
    %p337 = por %p335, %p336
    %p339 = scmp.ne.s32.totalorder %s322, %s338
    %p340 = scmp.eq.s32.totalorder %s33, 0
    %p341 = por %p339, %p340
    %s342 = ssub.s32 %s27, %s34
    %p343 = scmp.eq.s32.totalorder %s342, 0
    %s345 = sadd.s32 %s344, 1
    %s346 = scalar_select %p343, %s344, %s345
    %p349 = pneg %p343
    %p350 = scmp.eq.s32.totalorder %s27, 1
    %p351 = por %p349, %p350
    %p352 = scmp.ne.s32.totalorder %s344, %s347
    %p353 = scmp.eq.s32.totalorder %s27, 0
    %p354 = por %p352, %p353
    %p355 = scmp.ne.s32.totalorder %s344, %s347
    %p356 = scmp.eq.s32.totalorder %s32, 1
    %p357 = por %p355, %p356
    %p358 = scmp.ne.s32.totalorder %s347, %s348
    %p359 = scmp.eq.s32.totalorder %s32, 0
    %p360 = por %p358, %p359
    %p361 = scmp.ne.s32.totalorder %s347, %s348
    %p362 = scmp.eq.s32.totalorder %s33, 1
    %p363 = por %p361, %p362
    %p365 = scmp.ne.s32.totalorder %s348, %s364
    %p366 = scmp.eq.s32.totalorder %s33, 0
    %p367 = por %p365, %p366
    %s368 = ssub.s32 %s27, %s34
    %p369 = scmp.eq.s32.totalorder %s368, 0
    %s371 = sadd.s32 %s370, 1
    %s372 = scalar_select %p369, %s370, %s371
    %p375 = pneg %p369
    %p376 = scmp.eq.s32.totalorder %s27, 1
    %p377 = por %p375, %p376
    %p378 = scmp.ne.s32.totalorder %s370, %s373
    %p379 = scmp.eq.s32.totalorder %s27, 0
    %p380 = por %p378, %p379
    %p381 = scmp.ne.s32.totalorder %s370, %s373
    %p382 = scmp.eq.s32.totalorder %s32, 1
    %p383 = por %p381, %p382
    %p384 = scmp.ne.s32.totalorder %s373, %s374
    %p385 = scmp.eq.s32.totalorder %s32, 0
    %p386 = por %p384, %p385
    %p387 = scmp.ne.s32.totalorder %s373, %s374
    %p388 = scmp.eq.s32.totalorder %s33, 1
    %p389 = por %p387, %p388
    %p391 = scmp.ne.s32.totalorder %s374, %s390
    %p392 = scmp.eq.s32.totalorder %s33, 0
    %p393 = por %p391, %p392
    %s394 = ssub.s32 %s27, %s34
    %p395 = scmp.eq.s32.totalorder %s394, 0
    %s397 = sadd.s32 %s396, 1
    %s398 = scalar_select %p395, %s396, %s397
    %p401 = pneg %p395
    %p402 = scmp.eq.s32.totalorder %s27, 1
    %p403 = por %p401, %p402
    %p404 = scmp.ne.s32.totalorder %s396, %s399
    %p405 = scmp.eq.s32.totalorder %s27, 0
    %p406 = por %p404, %p405
    %p407 = scmp.ne.s32.totalorder %s396, %s399
    %p408 = scmp.eq.s32.totalorder %s32, 1
    %p409 = por %p407, %p408
    %p410 = scmp.ne.s32.totalorder %s399, %s400
    %p411 = scmp.eq.s32.totalorder %s32, 0
    %p412 = por %p410, %p411
    %p413 = scmp.ne.s32.totalorder %s399, %s400
    %p414 = scmp.eq.s32.totalorder %s33, 1
    %p415 = por %p413, %p414
    %p417 = scmp.ne.s32.totalorder %s400, %s416
    %p418 = scmp.eq.s32.totalorder %s33, 0
    %p419 = por %p417, %p418
    %s420 = ssub.s32 %s27, %s34
    %p421 = scmp.eq.s32.totalorder %s420, 0
    %s423 = sadd.s32 %s422, 1
    %s424 = scalar_select %p421, %s422, %s423
    %p427 = pneg %p421
    %p428 = scmp.eq.s32.totalorder %s27, 1
    %p429 = por %p427, %p428
    %p430 = scmp.ne.s32.totalorder %s422, %s425
    %p431 = scmp.eq.s32.totalorder %s27, 0
    %p432 = por %p430, %p431
    %p433 = scmp.ne.s32.totalorder %s422, %s425
    %p434 = scmp.eq.s32.totalorder %s32, 1
    %p435 = por %p433, %p434
    %p436 = scmp.ne.s32.totalorder %s425, %s426
    %p437 = scmp.eq.s32.totalorder %s32, 0
    %p438 = por %p436, %p437
    %p439 = scmp.ne.s32.totalorder %s425, %s426
    %p440 = scmp.eq.s32.totalorder %s33, 1
    %p441 = por %p439, %p440
    %p443 = scmp.ne.s32.totalorder %s426, %s442
    %p444 = scmp.eq.s32.totalorder %s33, 0
    %p445 = por %p443, %p444
    %s446 = ssub.s32 %s27, %s34
    %p447 = scmp.eq.s32.totalorder %s446, 0
    %s449 = sadd.s32 %s448, 1
    %s450 = scalar_select %p447, %s448, %s449
    %p453 = pneg %p447
    %p454 = scmp.eq.s32.totalorder %s27, 1
    %p455 = por %p453, %p454
    %p456 = scmp.ne.s32.totalorder %s448, %s451
    %p457 = scmp.eq.s32.totalorder %s27, 0
    %p458 = por %p456, %p457
    %p459 = scmp.ne.s32.totalorder %s448, %s451
    %p460 = scmp.eq.s32.totalorder %s32, 1
    %p461 = por %p459, %p460
    %p462 = scmp.ne.s32.totalorder %s451, %s452
    %p463 = scmp.eq.s32.totalorder %s32, 0
    %p464 = por %p462, %p463
    %p465 = scmp.ne.s32.totalorder %s451, %s452
    %p466 = scmp.eq.s32.totalorder %s33, 1
    %p467 = por %p465, %p466
    %p469 = scmp.ne.s32.totalorder %s452, %s468
    %p470 = scmp.eq.s32.totalorder %s33, 0
    %p471 = por %p469, %p470
    %s472 = ssub.s32 %s27, %s34
    %p473 = scmp.eq.s32.totalorder %s472, 0
    %s475 = sadd.s32 %s474, 1
    %s476 = scalar_select %p473, %s474, %s475
    %p479 = pneg %p473
    %p480 = scmp.eq.s32.totalorder %s27, 1
    %p481 = por %p479, %p480
    %p482 = scmp.ne.s32.totalorder %s474, %s477
    %p483 = scmp.eq.s32.totalorder %s27, 0
    %p484 = por %p482, %p483
    %p485 = scmp.ne.s32.totalorder %s474, %s477
    %p486 = scmp.eq.s32.totalorder %s32, 1
    %p487 = por %p485, %p486
    %p488 = scmp.ne.s32.totalorder %s477, %s478
    %p489 = scmp.eq.s32.totalorder %s32, 0
    %p490 = por %p488, %p489
    %p491 = scmp.ne.s32.totalorder %s477, %s478
    %p492 = scmp.eq.s32.totalorder %s33, 1
    %p493 = por %p491, %p492
    %p495 = scmp.ne.s32.totalorder %s478, %s494
    %p496 = scmp.eq.s32.totalorder %s33, 0
    %p497 = por %p495, %p496
    %s498 = ssub.s32 %s27, %s34
    %p499 = scmp.eq.s32.totalorder %s498, 0
    %s501 = sadd.s32 %s500, 1
    %s502 = scalar_select %p499, %s500, %s501
    %p505 = pneg %p499
    %p506 = scmp.eq.s32.totalorder %s27, 1
    %p507 = por %p505, %p506
    %p508 = scmp.ne.s32.totalorder %s500, %s503
    %p509 = scmp.eq.s32.totalorder %s27, 0
    %p510 = por %p508, %p509
    %p511 = scmp.ne.s32.totalorder %s500, %s503
    %p512 = scmp.eq.s32.totalorder %s32, 1
    %p513 = por %p511, %p512
    %p514 = scmp.ne.s32.totalorder %s503, %s504
    %p515 = scmp.eq.s32.totalorder %s32, 0
    %p516 = por %p514, %p515
    %p517 = scmp.ne.s32.totalorder %s503, %s504
    %p518 = scmp.eq.s32.totalorder %s33, 1
    %p519 = por %p517, %p518
    %p521 = scmp.ne.s32.totalorder %s504, %s520
    %p522 = scmp.eq.s32.totalorder %s33, 0
    %p523 = por %p521, %p522
    %s524 = ssub.s32 %s27, %s34
    %p525 = scmp.eq.s32.totalorder %s524, 0
    %s527 = sadd.s32 %s526, 1
    %s528 = scalar_select %p525, %s526, %s527
    %p531 = pneg %p525
    %p532 = scmp.eq.s32.totalorder %s27, 1
    %p533 = por %p531, %p532
    %p534 = scmp.ne.s32.totalorder %s526, %s529
    %p535 = scmp.eq.s32.totalorder %s27, 0
    %p536 = por %p534, %p535
    %p537 = scmp.ne.s32.totalorder %s526, %s529
    %p538 = scmp.eq.s32.totalorder %s32, 1
    %p539 = por %p537, %p538
    %p540 = scmp.ne.s32.totalorder %s529, %s530
    %p541 = scmp.eq.s32.totalorder %s32, 0
    %p542 = por %p540, %p541
    %p543 = scmp.ne.s32.totalorder %s529, %s530
    %p544 = scmp.eq.s32.totalorder %s33, 1
    %p545 = por %p543, %p544
    %p547 = scmp.ne.s32.totalorder %s530, %s546
    %p548 = scmp.eq.s32.totalorder %s33, 0
    %p549 = por %p547, %p548
    %s550 = ssub.s32 %s27, %s34
    %p551 = scmp.eq.s32.totalorder %s550, 0
    %s553 = sadd.s32 %s552, 1
    %s554 = scalar_select %p551, %s552, %s553
    %p557 = pneg %p551
    %p558 = scmp.eq.s32.totalorder %s27, 1
    %p559 = por %p557, %p558
    %p560 = scmp.ne.s32.totalorder %s552, %s555
    %p561 = scmp.eq.s32.totalorder %s27, 0
    %p562 = por %p560, %p561
    %p563 = scmp.ne.s32.totalorder %s552, %s555
    %p564 = scmp.eq.s32.totalorder %s32, 1
    %p565 = por %p563, %p564
    %p566 = scmp.ne.s32.totalorder %s555, %s556
    %p567 = scmp.eq.s32.totalorder %s32, 0
    %p568 = por %p566, %p567
    %p569 = scmp.ne.s32.totalorder %s555, %s556
    %p570 = scmp.eq.s32.totalorder %s33, 1
    %p571 = por %p569, %p570
    %p573 = scmp.ne.s32.totalorder %s556, %s572
    %p574 = scmp.eq.s32.totalorder %s33, 0
    %p575 = por %p573, %p574
    %s576 = ssub.s32 %s27, %s34
    %p577 = scmp.eq.s32.totalorder %s576, 0
    %s579 = sadd.s32 %s578, 1
    %s580 = scalar_select %p577, %s578, %s579
    %p583 = pneg %p577
    %p584 = scmp.eq.s32.totalorder %s27, 1
    %p585 = por %p583, %p584
    %p586 = scmp.ne.s32.totalorder %s578, %s581
    %p587 = scmp.eq.s32.totalorder %s27, 0
    %p588 = por %p586, %p587
    %p589 = scmp.ne.s32.totalorder %s578, %s581
    %p590 = scmp.eq.s32.totalorder %s32, 1
    %p591 = por %p589, %p590
    %p592 = scmp.ne.s32.totalorder %s581, %s582
    %p593 = scmp.eq.s32.totalorder %s32, 0
    %p594 = por %p592, %p593
    %p595 = scmp.ne.s32.totalorder %s581, %s582
    %p596 = scmp.eq.s32.totalorder %s33, 1
    %p597 = por %p595, %p596
    %p599 = scmp.ne.s32.totalorder %s582, %s598
    %p600 = scmp.eq.s32.totalorder %s33, 0
    %p601 = por %p599, %p600
    %p602 = scmp.le.s32.totalorder 1, %s27
    %p603 = scmp.lt.s32.totalorder %s27, 3
    %p604 = pnand %p602, %p603
    %p605 = pneg %p604
    // Predicated region
    $region9: #{tssr_forward.6} parent=5 // pred_check
      _
    $region10: #{tssr_forward.6} parent=5 // pred_check_branch
      %607 = sbr.rel (%p604) target = $region12
    $region11: #{tssr_forward.6} parent=5 // pred_region
      %s608 = ssub.s32 %s27, 1
      // Predicated region
      $region13: #{tssr_forward.6} parent=11 // pred_check
        %p609 = pneg %p100
      $region14: #{tssr_forward.6} parent=11 // pred_check_branch
        %611 = sbr.rel (%p609) target = $region16
      $region15: #{tssr_forward.6} parent=11 // pred_region
        _
      $region16: #{tssr_forward.6} parent=11 // pred_fallthru
        _
    $region12: #{tssr_forward.6} parent=5 // pred_fallthru
      _
    %p612 = scmp.lt.s32.totalorder %s27, 2
    // Predicated region
    $region17: #{tssr_forward.6} parent=5 // pred_check
      %p613 = pneg %p612
    $region18: #{tssr_forward.6} parent=5 // pred_check_branch
      %615 = sbr.rel (%p613) target = $region20
    $region19: #{tssr_forward.6} parent=5 // pred_region
      // Predicated region
      $region21: #{tssr_forward.6} parent=19 // pred_check
        %p616 = pneg %p47
      $region22: #{tssr_forward.6} parent=19 // pred_check_branch
        %618 = sbr.rel (%p616) target = $region24
      $region23: #{tssr_forward.6} parent=19 // pred_region
        %p619 = scmp.lt.s32.totalorder %s27, 1
        %s620 = scalar_select %p619, %s27, 1
        %s621 = smul.addr %s620, 2
        %s622 = smul.addr %s621, 8
        %s623 = scalar_lea.vmem %s0, %s622
      $region24: #{tssr_forward.6} parent=19 // pred_fallthru
        _
      // Predicated region
      $region25: #{tssr_forward.6} parent=19 // pred_check
        %p624 = pneg %p73
      $region26: #{tssr_forward.6} parent=19 // pred_check_branch
        %626 = sbr.rel (%p624) target = $region28
      $region27: #{tssr_forward.6} parent=19 // pred_region
        %p627 = scmp.lt.s32.totalorder %s27, 1
        %s628 = scalar_select %p627, %s27, 1
        %s629 = smul.addr %s628, 2
        %s630 = smul.addr %s629, 8
        %s631 = scalar_lea.vmem %s1, %s630
      $region28: #{tssr_forward.6} parent=19 // pred_fallthru
        _
      // Predicated region
      $region29: #{tssr_forward.6} parent=19 // pred_check
        %p632 = pneg %p120
      $region30: #{tssr_forward.6} parent=19 // pred_check_branch
        %634 = sbr.rel (%p632) target = $region32
      $region31: #{tssr_forward.6} parent=19 // pred_region
        %p635 = scmp.lt.s32.totalorder %s27, 1
        %s636 = scalar_select %p635, %s27, 1
        %s637 = smul.addr %s636, 4
        %s638 = smul.addr %s637, 4
        %s639 = scalar_lea.vmem %s3, %s638
      $region32: #{tssr_forward.6} parent=19 // pred_fallthru
        _
      // Predicated region
      $region33: #{tssr_forward.6} parent=19 // pred_check
        %p640 = pneg %p146
      $region34: #{tssr_forward.6} parent=19 // pred_check_branch
        %642 = sbr.rel (%p640) target = $region36
      $region35: #{tssr_forward.6} parent=19 // pred_region
        %p643 = scmp.lt.s32.totalorder %s27, 1
        %s644 = scalar_select %p643, %s27, 1
        %s645 = scalar_lea.vmem %s4, %s644
      $region36: #{tssr_forward.6} parent=19 // pred_fallthru
        _
      // Predicated region
      $region37: #{tssr_forward.6} parent=19 // pred_check
        %p646 = pneg %p172
      $region38: #{tssr_forward.6} parent=19 // pred_check_branch
        %648 = sbr.rel (%p646) target = $region40
      $region39: #{tssr_forward.6} parent=19 // pred_region
        %p649 = scmp.lt.s32.totalorder %s27, 1
        %s650 = scalar_select %p649, %s27, 1
        %s651 = smul.addr %s650, 4
        %s652 = smul.addr %s651, 4
        %s653 = scalar_lea.vmem %s5, %s652
      $region40: #{tssr_forward.6} parent=19 // pred_fallthru
        _
      // Predicated region
      $region41: #{tssr_forward.6} parent=19 // pred_check
        %p654 = pneg %p198
      $region42: #{tssr_forward.6} parent=19 // pred_check_branch
        %656 = sbr.rel (%p654) target = $region44
      $region43: #{tssr_forward.6} parent=19 // pred_region
        %p657 = scmp.lt.s32.totalorder %s27, 1
        %s658 = scalar_select %p657, %s27, 1
        %s659 = scalar_lea.vmem %s6, %s658
      $region44: #{tssr_forward.6} parent=19 // pred_fallthru
        _
      // Predicated region
      $region45: #{tssr_forward.6} parent=19 // pred_check
        %p660 = pneg %p224
      $region46: #{tssr_forward.6} parent=19 // pred_check_branch
        %662 = sbr.rel (%p660) target = $region48
      $region47: #{tssr_forward.6} parent=19 // pred_region
        %p663 = scmp.lt.s32.totalorder %s27, 1
        %s664 = scalar_select %p663, %s27, 1
        %s665 = smul.addr %s664, 4
        %s666 = smul.addr %s665, 4
        %s667 = scalar_lea.vmem %s7, %s666
      $region48: #{tssr_forward.6} parent=19 // pred_fallthru
        _
      // Predicated region
      $region49: #{tssr_forward.6} parent=19 // pred_check
        %p668 = pneg %p250
      $region50: #{tssr_forward.6} parent=19 // pred_check_branch
        %670 = sbr.rel (%p668) target = $region52
      $region51: #{tssr_forward.6} parent=19 // pred_region
        %p671 = scmp.lt.s32.totalorder %s27, 1
        %s672 = scalar_select %p671, %s27, 1
        %s673 = scalar_lea.vmem %s8, %s672
      $region52: #{tssr_forward.6} parent=19 // pred_fallthru
        _
      // Predicated region
      $region53: #{tssr_forward.6} parent=19 // pred_check
        %p674 = pneg %p276
      $region54: #{tssr_forward.6} parent=19 // pred_check_branch
        %676 = sbr.rel (%p674) target = $region56
      $region55: #{tssr_forward.6} parent=19 // pred_region
        %p677 = scmp.lt.s32.totalorder %s27, 1
        %s678 = scalar_select %p677, %s27, 1
        %s679 = smul.addr %s678, 4
        %s680 = smul.addr %s679, 4
        %s681 = scalar_lea.vmem %s9, %s680
      $region56: #{tssr_forward.6} parent=19 // pred_fallthru
        _
      // Predicated region
      $region57: #{tssr_forward.6} parent=19 // pred_check
        %p682 = pneg %p302
      $region58: #{tssr_forward.6} parent=19 // pred_check_branch
        %684 = sbr.rel (%p682) target = $region60
      $region59: #{tssr_forward.6} parent=19 // pred_region
        %p685 = scmp.lt.s32.totalorder %s27, 1
        %s686 = scalar_select %p685, %s27, 1
        %s687 = scalar_lea.vmem %s10, %s686
      $region60: #{tssr_forward.6} parent=19 // pred_fallthru
        _
      // Predicated region
      $region61: #{tssr_forward.6} parent=19 // pred_check
        %p688 = pneg %p328
      $region62: #{tssr_forward.6} parent=19 // pred_check_branch
        %690 = sbr.rel (%p688) target = $region64
      $region63: #{tssr_forward.6} parent=19 // pred_region
        %p691 = scmp.lt.s32.totalorder %s27, 1
        %s692 = scalar_select %p691, %s27, 1
        %s693 = scalar_lea.vmem %s11, %s692
      $region64: #{tssr_forward.6} parent=19 // pred_fallthru
        _
      // Predicated region
      $region65: #{tssr_forward.6} parent=19 // pred_check
        %p694 = pneg %p354
      $region66: #{tssr_forward.6} parent=19 // pred_check_branch
        %696 = sbr.rel (%p694) target = $region68
      $region67: #{tssr_forward.6} parent=19 // pred_region
        %p697 = scmp.lt.s32.totalorder %s27, 1
        %s698 = scalar_select %p697, %s27, 1
        %s699 = scalar_lea.vmem %s12, %s698
      $region68: #{tssr_forward.6} parent=19 // pred_fallthru
        _
      // Predicated region
      $region69: #{tssr_forward.6} parent=19 // pred_check
        %p700 = pneg %p380
      $region70: #{tssr_forward.6} parent=19 // pred_check_branch
        %702 = sbr.rel (%p700) target = $region72
      $region71: #{tssr_forward.6} parent=19 // pred_region
        %p703 = scmp.lt.s32.totalorder %s27, 1
        %s704 = scalar_select %p703, %s27, 1
        %s705 = smul.addr %s704, 4
        %s706 = smul.addr %s705, 4
        %s707 = scalar_lea.vmem %s13, %s706
      $region72: #{tssr_forward.6} parent=19 // pred_fallthru
        _
      // Predicated region
      $region73: #{tssr_forward.6} parent=19 // pred_check
        %p708 = pneg %p406
      $region74: #{tssr_forward.6} parent=19 // pred_check_branch
        %710 = sbr.rel (%p708) target = $region76
      $region75: #{tssr_forward.6} parent=19 // pred_region
        %p711 = scmp.lt.s32.totalorder %s27, 1
        %s712 = scalar_select %p711, %s27, 1
        %s713 = scalar_lea.vmem %s14, %s712
      $region76: #{tssr_forward.6} parent=19 // pred_fallthru
        _
      // Predicated region
      $region77: #{tssr_forward.6} parent=19 // pred_check
        %p714 = pneg %p432
      $region78: #{tssr_forward.6} parent=19 // pred_check_branch
        %716 = sbr.rel (%p714) target = $region80
      $region79: #{tssr_forward.6} parent=19 // pred_region
        %p717 = scmp.lt.s32.totalorder %s27, 1
        %s718 = scalar_select %p717, %s27, 1
        %s719 = smul.addr %s718, 8
        %s720 = smul.addr %s719, 4
        %s721 = scalar_lea.vmem %s15, %s720
      $region80: #{tssr_forward.6} parent=19 // pred_fallthru
        _
      // Predicated region
      $region81: #{tssr_forward.6} parent=19 // pred_check
        %p722 = pneg %p458
      $region82: #{tssr_forward.6} parent=19 // pred_check_branch
        %724 = sbr.rel (%p722) target = $region84
      $region83: #{tssr_forward.6} parent=19 // pred_region
        %p725 = scmp.lt.s32.totalorder %s27, 1
        %s726 = scalar_select %p725, %s27, 1
        %s727 = scalar_lea.vmem %s16, %s726
      $region84: #{tssr_forward.6} parent=19 // pred_fallthru
        _
      // Predicated region
      $region85: #{tssr_forward.6} parent=19 // pred_check
        %p728 = pneg %p484
      $region86: #{tssr_forward.6} parent=19 // pred_check_branch
        %730 = sbr.rel (%p728) target = $region88
      $region87: #{tssr_forward.6} parent=19 // pred_region
        %p731 = scmp.lt.s32.totalorder %s27, 1
        %s732 = scalar_select %p731, %s27, 1
        %s733 = scalar_lea.vmem %s17, %s732
      $region88: #{tssr_forward.6} parent=19 // pred_fallthru
        _
      // Predicated region
      $region89: #{tssr_forward.6} parent=19 // pred_check
        %p734 = pneg %p510
      $region90: #{tssr_forward.6} parent=19 // pred_check_branch
        %736 = sbr.rel (%p734) target = $region92
      $region91: #{tssr_forward.6} parent=19 // pred_region
        %p737 = scmp.lt.s32.totalorder %s27, 1
        %s738 = scalar_select %p737, %s27, 1
        %s739 = scalar_lea.vmem %s18, %s738
      $region92: #{tssr_forward.6} parent=19 // pred_fallthru
        _
      // Predicated region
      $region93: #{tssr_forward.6} parent=19 // pred_check
        %p740 = pneg %p536
      $region94: #{tssr_forward.6} parent=19 // pred_check_branch
        %742 = sbr.rel (%p740) target = $region96
      $region95: #{tssr_forward.6} parent=19 // pred_region
        %p743 = scmp.lt.s32.totalorder %s27, 1
        %s744 = scalar_select %p743, %s27, 1
        %s745 = scalar_lea.vmem %s19, %s744
      $region96: #{tssr_forward.6} parent=19 // pred_fallthru
        _
      // Predicated region
      $region97: #{tssr_forward.6} parent=19 // pred_check
        %p746 = pneg %p562
      $region98: #{tssr_forward.6} parent=19 // pred_check_branch
        %748 = sbr.rel (%p746) target = $region100
      $region99: #{tssr_forward.6} parent=19 // pred_region
        %p749 = scmp.lt.s32.totalorder %s27, 1
        %s750 = scalar_select %p749, %s27, 1
        %s751 = scalar_lea.vmem %s20, %s750
      $region100: #{tssr_forward.6} parent=19 // pred_fallthru
        _
    $region20: #{tssr_forward.6} parent=5 // pred_fallthru
      _
    %p752 = scmp.le.s32.totalorder 1, %s27
    %p753 = scmp.lt.s32.totalorder %s27, 3
    %p754 = pnand %p752, %p753
    %p755 = pneg %p754
    // Predicated region
    $region101: #{tssr_forward.6} parent=5 // pred_check
      _
    $region102: #{tssr_forward.6} parent=5 // pred_check_branch
      %757 = sbr.rel (%p754) target = $region104
    $region103: #{tssr_forward.6} parent=5 // pred_region
      %s758 = ssub.s32 %s27, 1
      %p759 = scmp.lt.s32.totalorder %s32, 1
      %s760 = scalar_select %p759, %s32, 1
      %s761 = smul.addr %s760, 2
      %s762 = smul.addr %s761, 8
      %s763 = scalar_lea.vmem %s0, %s762
      %p764 = pneg %p53
      %p765 = pneg %p50
      %p766 = scmp.lt.s32.totalorder %s32, 1
      %s767 = scalar_select %p766, %s32, 1
      %s768 = smul.addr %s767, 2
      %s769 = smul.addr %s768, 8
      %s770 = scalar_lea.vmem %s1, %s769
      %p771 = pneg %p79
      %p772 = pneg %p76
      %p773 = pneg %p100
      %p774 = pneg %p97
      %p775 = scmp.lt.s32.totalorder %s32, 1
      %s776 = scalar_select %p775, %s32, 1
      %s777 = smul.addr %s776, 4
      %s778 = smul.addr %s777, 4
      %s779 = scalar_lea.vmem %s3, %s778
      %p780 = pneg %p126
      %p781 = pneg %p123
      %p782 = scmp.lt.s32.totalorder %s32, 1
      %s783 = scalar_select %p782, %s32, 1
      %s784 = scalar_lea.vmem %s4, %s783
      %p785 = pneg %p152
      %p786 = pneg %p149
      %p787 = scmp.lt.s32.totalorder %s32, 1
      %s788 = scalar_select %p787, %s32, 1
      %s789 = smul.addr %s788, 4
      %s790 = smul.addr %s789, 4
      %s791 = scalar_lea.vmem %s5, %s790
      %p792 = pneg %p178
      %p793 = pneg %p175
      %p794 = scmp.lt.s32.totalorder %s32, 1
      %s795 = scalar_select %p794, %s32, 1
      %s796 = scalar_lea.vmem %s6, %s795
      %p797 = pneg %p204
      %p798 = pneg %p201
      %p799 = scmp.lt.s32.totalorder %s32, 1
      %s800 = scalar_select %p799, %s32, 1
      %s801 = smul.addr %s800, 4
      %s802 = smul.addr %s801, 4
      %s803 = scalar_lea.vmem %s7, %s802
      %p804 = pneg %p230
      %p805 = pneg %p227
      %p806 = scmp.lt.s32.totalorder %s32, 1
      %s807 = scalar_select %p806, %s32, 1
      %s808 = scalar_lea.vmem %s8, %s807
      %p809 = pneg %p256
      %p810 = pneg %p253
      %p811 = scmp.lt.s32.totalorder %s32, 1
      %s812 = scalar_select %p811, %s32, 1
      %s813 = smul.addr %s812, 4
      %s814 = smul.addr %s813, 4
      %s815 = scalar_lea.vmem %s9, %s814
      %p816 = pneg %p282
      %p817 = pneg %p279
      %p818 = scmp.lt.s32.totalorder %s32, 1
      %s819 = scalar_select %p818, %s32, 1
      %s820 = scalar_lea.vmem %s10, %s819
      %p821 = pneg %p308
      %p822 = pneg %p305
      %p823 = scmp.lt.s32.totalorder %s32, 1
      %s824 = scalar_select %p823, %s32, 1
      %s825 = scalar_lea.vmem %s11, %s824
      %p826 = pneg %p334
      %p827 = pneg %p331
      %p828 = scmp.lt.s32.totalorder %s32, 1
      %s829 = scalar_select %p828, %s32, 1
      %s830 = scalar_lea.vmem %s12, %s829
      %p831 = pneg %p360
      %p832 = pneg %p357
      %p833 = scmp.lt.s32.totalorder %s32, 1
      %s834 = scalar_select %p833, %s32, 1
      %s835 = smul.addr %s834, 4
      %s836 = smul.addr %s835, 4
      %s837 = scalar_lea.vmem %s13, %s836
      %p838 = pneg %p386
      %p839 = pneg %p383
      %p840 = scmp.lt.s32.totalorder %s32, 1
      %s841 = scalar_select %p840, %s32, 1
      %s842 = scalar_lea.vmem %s14, %s841
      %p843 = pneg %p412
      %p844 = pneg %p409
      %p845 = scmp.lt.s32.totalorder %s32, 1
      %s846 = scalar_select %p845, %s32, 1
      %s847 = smul.addr %s846, 8
      %s848 = smul.addr %s847, 4
      %s849 = scalar_lea.vmem %s15, %s848
      %p850 = pneg %p438
      %p851 = pneg %p435
      %p852 = scmp.lt.s32.totalorder %s32, 1
      %s853 = scalar_select %p852, %s32, 1
      %s854 = scalar_lea.vmem %s16, %s853
      %p855 = pneg %p464
      %p856 = pneg %p461
      %p857 = scmp.lt.s32.totalorder %s32, 1
      %s858 = scalar_select %p857, %s32, 1
      %s859 = scalar_lea.vmem %s17, %s858
      %p860 = pneg %p490
      %p861 = pneg %p487
      %p862 = scmp.lt.s32.totalorder %s32, 1
      %s863 = scalar_select %p862, %s32, 1
      %s864 = scalar_lea.vmem %s18, %s863
      %p865 = pneg %p516
      %p866 = pneg %p513
      %p867 = scmp.lt.s32.totalorder %s32, 1
      %s868 = scalar_select %p867, %s32, 1
      %s869 = scalar_lea.vmem %s19, %s868
      %p870 = pneg %p542
      %p871 = pneg %p539
      %p872 = scmp.lt.s32.totalorder %s32, 1
      %s873 = scalar_select %p872, %s32, 1
      %s874 = scalar_lea.vmem %s20, %s873
      %p875 = pneg %p568
      %p876 = pneg %p565
      %p877 = pneg %p594
      %p878 = pneg %p591
      %p879 = scmp.lt.s32.totalorder %s32, 1
      %s880 = scalar_select %p879, %s32, 1
      %s881 = smul.addr %s880, 2
      %s882 = smul.addr %s881, 8
      %s883 = scalar_lea.vmem %s21, %s882
      %p884 = scmp.lt.s32.totalorder %s32, 1
      %s885 = scalar_select %p884, %s32, 1
      %s886 = smul.addr %s885, 2
      %s887 = smul.addr %s886, 8
      %s888 = scalar_lea.vmem %s0, %s887
      %p889 = scmp.lt.s32.totalorder %s32, 1
      %s890 = scalar_select %p889, %s32, 1
      %s891 = smul.addr %s890, 2
      %s892 = smul.addr %s891, 8
      %s893 = scalar_lea.vmem %s1, %s892
      %p894 = scmp.lt.s32.totalorder %s32, 1
      %s895 = scalar_select %p894, %s32, 1
      %s896 = smul.addr %s895, 4
      %s897 = smul.addr %s896, 4
      %s898 = scalar_lea.vmem %s3, %s897
      %p899 = scmp.lt.s32.totalorder %s32, 1
      %s900 = scalar_select %p899, %s32, 1
      %s901 = scalar_lea.vmem %s4, %s900
      %p902 = scmp.lt.s32.totalorder %s32, 1
      %s903 = scalar_select %p902, %s32, 1
      %s904 = smul.addr %s903, 4
      %s905 = smul.addr %s904, 4
      %s906 = scalar_lea.vmem %s5, %s905
      %p907 = scmp.lt.s32.totalorder %s32, 1
      %s908 = scalar_select %p907, %s32, 1
      %s909 = scalar_lea.vmem %s6, %s908
      %p910 = scmp.lt.s32.totalorder %s32, 1
      %s911 = scalar_select %p910, %s32, 1
      %s912 = smul.addr %s911, 4
      %s913 = smul.addr %s912, 4
      %s914 = scalar_lea.vmem %s7, %s913
      %p915 = scmp.lt.s32.totalorder %s32, 1
      %s916 = scalar_select %p915, %s32, 1
      %s917 = scalar_lea.vmem %s8, %s916
      %p918 = scmp.lt.s32.totalorder %s32, 1
      %s919 = scalar_select %p918, %s32, 1
      %s920 = smul.addr %s919, 4
      %s921 = smul.addr %s920, 4
      %s922 = scalar_lea.vmem %s9, %s921
      %p923 = scmp.lt.s32.totalorder %s32, 1
      %s924 = scalar_select %p923, %s32, 1
      %s925 = scalar_lea.vmem %s10, %s924
      %p926 = scmp.lt.s32.totalorder %s32, 1
      %s927 = scalar_select %p926, %s32, 1
      %s928 = scalar_lea.vmem %s11, %s927
      %p929 = scmp.lt.s32.totalorder %s32, 1
      %s930 = scalar_select %p929, %s32, 1
      %s931 = scalar_lea.vmem %s12, %s930
      %p932 = scmp.lt.s32.totalorder %s32, 1
      %s933 = scalar_select %p932, %s32, 1
      %s934 = smul.addr %s933, 4
      %s935 = smul.addr %s934, 4
      %s936 = scalar_lea.vmem %s13, %s935
      %p937 = scmp.lt.s32.totalorder %s32, 1
      %s938 = scalar_select %p937, %s32, 1
      %s939 = scalar_lea.vmem %s14, %s938
      %p940 = scmp.lt.s32.totalorder %s32, 1
      %s941 = scalar_select %p940, %s32, 1
      %s942 = smul.addr %s941, 8
      %s943 = smul.addr %s942, 4
      %s944 = scalar_lea.vmem %s15, %s943
      %p945 = scmp.lt.s32.totalorder %s32, 1
      %s946 = scalar_select %p945, %s32, 1
      %s947 = scalar_lea.vmem %s16, %s946
      %p948 = scmp.lt.s32.totalorder %s32, 1
      %s949 = scalar_select %p948, %s32, 1
      %s950 = scalar_lea.vmem %s17, %s949
      %p951 = scmp.lt.s32.totalorder %s32, 1
      %s952 = scalar_select %p951, %s32, 1
      %s953 = scalar_lea.vmem %s18, %s952
      %p954 = scmp.lt.s32.totalorder %s32, 1
      %s955 = scalar_select %p954, %s32, 1
      %s956 = scalar_lea.vmem %s19, %s955
      %p957 = scmp.lt.s32.totalorder %s32, 1
      %s958 = scalar_select %p957, %s32, 1
      %s959 = scalar_lea.vmem %s20, %s958
      %p960 = scmp.lt.s32.totalorder %s32, 1
      %s961 = scalar_select %p960, %s32, 1
      %s962 = smul.addr %s961, 2
      %s963 = smul.addr %s962, 8
      %s964 = scalar_lea.vmem %s21, %s963
      %v966 = vld [vmem:[%s888] sm:$0xff]
      %v967 = vld [vmem:[%s888 + $0x8] sm:$0xff]
      %v968 = vld [vmem:[%s893] sm:$0xff]
      %v969 = vld [vmem:[%s893 + $0x8] sm:$0xff]
      %v970 = vld [vmem:[%s2] sm:$0xff]
      %v971 = vld [vmem:[%s2 + $0x8] sm:$0xff]
      %v972 = vlaneseq
      %v973 = vand.u32 %v972, 127
      %v974 = vpack.c.bf16 %v967, %v966
      %v975 = vpack.c.bf16 %v969, %v968
      %v976 = vld [vmem:[%s898] sm:$0xf]
      %v977 = vld [vmem:[%s898 + $0x4] sm:$0xf]
      %v978 = vld [vmem:[%s898 + $0x8] sm:$0xf]
      %v979 = vld [vmem:[%s898 + $0xc] sm:$0xf]
      %v980 = vld [vmem:[%s901] sm:$0x1]
      %v982 = vperm.slane %v980, 0
      %v988 = vunpack.c.l.b16 %v976
      %v989 = vunpack.c.l.b16 %v977
      %v990 = vunpack.c.l.b16 %v978
      %v991 = vunpack.c.l.b16 %v979
      %v992 = vpack.c.b16 %v989, %v988
      %v993 = vpack.c.b16 %v991, %v990
      %vm996 = vcmask 261120
      %v998 = vsel %vm996, %v974, 0
      %1000 = vmatpush.bf16.msra.mxu0 0
      %1001 = vmatpush.bf16.msra.mxu0 0
      %1002 = vmatpush.bf16.msra.mxu0 0
      %1003 = vmatpush.bf16.msra.mxu0 0
      %1004 = vmatpush.bf16.msra.mxu0 0
      %1005 = vmatpush.bf16.msra.mxu0 0
      %1006 = vmatpush.bf16.msra.mxu0 %v993
      %1007 = vmatpush.bf16.msra.mxu0 %v992
      %1008 = vmatmul.bf16.gmra.mxu0 %v998
      %v1009 = vpop.f32.mrf.mxu0
      %v1010 = vadd.f32 %v982, %v1009
      %v1011 = vpop.f32.mrf.mxu0
      %v1012 = vadd.f32 %v982, %v1011
      %1013 = vdwg.mxu0
      %v1014 = vld [vmem:[%s906] sm:$0xf]
      %v1015 = vld [vmem:[%s906 + $0x4] sm:$0xf]
      %v1016 = vld [vmem:[%s906 + $0x8] sm:$0xf]
      %v1017 = vld [vmem:[%s906 + $0xc] sm:$0xf]
      %v1018 = vld [vmem:[%s909] sm:$0x1]
      %v1020 = vperm.slane %v1018, 0
      %v1026 = vunpack.c.l.b16 %v1014
      %v1027 = vunpack.c.l.b16 %v1015
      %v1028 = vunpack.c.l.b16 %v1016
      %v1029 = vunpack.c.l.b16 %v1017
      %v1030 = vpack.c.b16 %v1027, %v1026
      %v1031 = vpack.c.b16 %v1029, %v1028
      %v1035 = vsel %vm996, %v975, 0
      %1037 = vmatpush.bf16.msra.mxu0 0
      %1038 = vmatpush.bf16.msra.mxu0 0
      %1039 = vmatpush.bf16.msra.mxu0 0
      %1040 = vmatpush.bf16.msra.mxu0 0
      %1041 = vmatpush.bf16.msra.mxu0 0
      %1042 = vmatpush.bf16.msra.mxu0 0
      %1043 = vmatpush.bf16.msra.mxu0 %v1031
      %1044 = vmatpush.bf16.msra.mxu0 %v1030
      %1045 = vmatmul.bf16.gmra.mxu0 %v1035
      %v1046 = vpop.f32.mrf.mxu0
      %v1047 = vadd.f32 %v1020, %v1046
      %v1048 = vpop.f32.mrf.mxu0
      %v1049 = vadd.f32 %v1020, %v1048
      %1050 = vdwg.mxu0
      %v1051 = vld [vmem:[%s914] sm:$0xf]
      %v1052 = vld [vmem:[%s914 + $0x4] sm:$0xf]
      %v1053 = vld [vmem:[%s914 + $0x8] sm:$0xf]
      %v1054 = vld [vmem:[%s914 + $0xc] sm:$0xf]
      %v1055 = vld [vmem:[%s917] sm:$0x1]
      %v1057 = vperm.slane %v1055, 0
      %v1063 = vunpack.c.l.b16 %v1051
      %v1064 = vunpack.c.l.b16 %v1052
      %v1065 = vunpack.c.l.b16 %v1053
      %v1066 = vunpack.c.l.b16 %v1054
      %v1067 = vpack.c.b16 %v1064, %v1063
      %v1068 = vpack.c.b16 %v1066, %v1065
      %1071 = vmatpush.bf16.msra.mxu0 0
      %1072 = vmatpush.bf16.msra.mxu0 0
      %1073 = vmatpush.bf16.msra.mxu0 0
      %1074 = vmatpush.bf16.msra.mxu0 0
      %1075 = vmatpush.bf16.msra.mxu0 0
      %1076 = vmatpush.bf16.msra.mxu0 0
      %1077 = vmatpush.bf16.msra.mxu0 %v1068
      %1078 = vmatpush.bf16.msra.mxu0 %v1067
      %1079 = vmatmul.bf16.gmra.mxu0 %v1035
      %v1080 = vpop.f32.mrf.mxu0
      %v1081 = vadd.f32 %v1057, %v1080
      %v1082 = vpop.f32.mrf.mxu0
      %v1083 = vadd.f32 %v1057, %v1082
      %1084 = vdwg.mxu0
      %v1085 = vpack.c.bf16 %v1049, %v1047
      %v1086 = vpack.c.bf16 %v1083, %v1081
      %vm1087 = vcmp.ge.s32.totalorder %v973, 0
      %vm1088 = vcmp.lt.s32.totalorder %v973, 8
      %vm1089 = vmand %vm1087, %vm1088
      %v1090 = vsel %vm1089, %v1010, 0.0
      %v1091 = vsel %vm1089, %v1012, 0.0
      %v1092 = vpack.c.bf16 %v1091, %v1090
      %v1094 = vsel %vm996, %v1092, 0
      %v1097 = vsel %vm996, %v1085, 0
      %1099 = vmatpush.bf16.xpose.msra.mxu0 0
      %1100 = vmatpush.bf16.xpose.msra.mxu0 0
      %1101 = vmatpush.bf16.xpose.msra.mxu0 0
      %1102 = vmatpush.bf16.xpose.msra.mxu0 0
      %1103 = vmatpush.bf16.xpose.msra.mxu0 0
      %1104 = vmatpush.bf16.xpose.msra.mxu0 0
      %1105 = vmatpush.bf16.xpose.msra.mxu0 0
      %1106 = vmatpush.bf16.xpose.msra.mxu0 %v1097
      %1107 = vmatmul.bf16.gmra.mxu0 %v1094
      %v1108 = vpop.f32.mrf.mxu0
      %v1109 = vadd.f32 0.0, %v1108
      %v1110 = vpop.f32.mrf.mxu0
      %v1111 = vadd.f32 0.0, %v1110
      %1112 = vdwg.mxu0
      %v1113 = vmul.f32 %v1109, 0.35355338
      %v1114 = vmul.f32 %v1111, 0.35355338
      %v1115 = vadd.f32 %v1113, %v970
      %v1116 = vadd.f32 %v1114, %v971
      %vm1117 = vcmask 130048
      %v1118 = vsel %vm1117, %v1115, -inf
      %1119 = vmax.xlane.f32.xlu0 %v1118
      %v1120 = vpop.xlane.xlu0 %1119
      %v1121 = vsel %vm1117, %v1116, -inf
      %1122 = vmax.xlane.f32.xlu0 %v1121
      %v1123 = vpop.xlane.xlu0 %1122
      %v1124 = vsub.f32 %v1115, %v1120
      %v1125 = vsub.f32 %v1116, %v1123
      %v1126 = vmul.f32 %v1124, 1.442695
      %v1127 = vpow.pop %v1126
      %v1128 = vmul.f32 %v1125, 1.442695
      %v1129 = vpow.pop %v1128
      %v1130 = vsel %vm1117, %v1127, 0.0
      %1131 = vadd.xlane.f32.xlu0 %v1130
      %v1132 = vpop.xlane.xlu0 %1131
      %v1133 = vsel %vm1117, %v1129, 0.0
      %1134 = vadd.xlane.f32.xlu0 %v1133
      %v1135 = vpop.xlane.xlu0 %1134
      %v1136 = vrcp.pop %v1132
      %v1137 = vrcp.pop %v1135
      %v1138 = vmul.f32 %v1127, %v1136
      %v1139 = vmul.f32 %v1129, %v1137
      %v1140 = vpack.c.bf16 %v1139, %v1138
      %v1142 = vsel %vm1117, %v1140, 0
      %1144 = vmatpush.bf16.msra.mxu0 0
      %1145 = vmatpush.bf16.msra.mxu0 0
      %1146 = vmatpush.bf16.msra.mxu0 0
      %1147 = vmatpush.bf16.msra.mxu0 0
      %1148 = vmatpush.bf16.msra.mxu0 0
      %1149 = vmatpush.bf16.msra.mxu0 0
      %1150 = vmatpush.bf16.msra.mxu0 0
      %1151 = vmatpush.bf16.msra.mxu0 %v1086
      %1152 = vmatmul.bf16.gmra.mxu0 %v1142
      %v1153 = vpop.f32.mrf.mxu0
      %v1154 = vadd.f32 0.0, %v1153
      %v1155 = vpop.f32.mrf.mxu0
      %v1156 = vadd.f32 0.0, %v1155
      %1157 = vdwg.mxu0
      %v1158 = vsel %vm1089, %v1154, 0.0
      %v1159 = vsel %vm1089, %v1156, 0.0
      %v1160 = vadd.f32 %v1158, 0.0
      %v1161 = vadd.f32 %v1159, 0.0
      %vm1162 = vcmp.ge.s32.totalorder %v973, 8
      %vm1163 = vcmp.lt.s32.totalorder %v973, 16
      %vm1164 = vmand %vm1162, %vm1163
      %v1165 = vsel %vm1164, %v1010, 0.0
      %v1166 = vsel %vm1164, %v1012, 0.0
      %v1167 = vpack.c.bf16 %v1166, %v1165
      %v1169 = vsel %vm996, %v1167, 0
      %1171 = vmatpush.bf16.xpose.msra.mxu0 0
      %1172 = vmatpush.bf16.xpose.msra.mxu0 0
      %1173 = vmatpush.bf16.xpose.msra.mxu0 0
      %1174 = vmatpush.bf16.xpose.msra.mxu0 0
      %1175 = vmatpush.bf16.xpose.msra.mxu0 0
      %1176 = vmatpush.bf16.xpose.msra.mxu0 0
      %1177 = vmatpush.bf16.xpose.msra.mxu0 0
      %1178 = vmatpush.bf16.xpose.msra.mxu0 %v1097
      %1179 = vmatmul.bf16.gmra.mxu0 %v1169
      %v1180 = vpop.f32.mrf.mxu0
      %v1181 = vadd.f32 0.0, %v1180
      %v1182 = vpop.f32.mrf.mxu0
      %v1183 = vadd.f32 0.0, %v1182
      %1184 = vdwg.mxu0
      %v1185 = vmul.f32 %v1181, 0.35355338
      %v1186 = vmul.f32 %v1183, 0.35355338
      %v1187 = vadd.f32 %v1185, %v970
      %v1188 = vadd.f32 %v1186, %v971
      %v1189 = vsel %vm1117, %v1187, -inf
      %1190 = vmax.xlane.f32.xlu0 %v1189
      %v1191 = vpop.xlane.xlu0 %1190
      %v1192 = vsel %vm1117, %v1188, -inf
      %1193 = vmax.xlane.f32.xlu0 %v1192
      %v1194 = vpop.xlane.xlu0 %1193
      %v1195 = vsub.f32 %v1187, %v1191
      %v1196 = vsub.f32 %v1188, %v1194
      %v1197 = vmul.f32 %v1195, 1.442695
      %v1198 = vpow.pop %v1197
      %v1199 = vmul.f32 %v1196, 1.442695
      %v1200 = vpow.pop %v1199
      %v1201 = vsel %vm1117, %v1198, 0.0
      %1202 = vadd.xlane.f32.xlu0 %v1201
      %v1203 = vpop.xlane.xlu0 %1202
      %v1204 = vsel %vm1117, %v1200, 0.0
      %1205 = vadd.xlane.f32.xlu0 %v1204
      %v1206 = vpop.xlane.xlu0 %1205
      %v1207 = vrcp.pop %v1203
      %v1208 = vrcp.pop %v1206
      %v1209 = vmul.f32 %v1198, %v1207
      %v1210 = vmul.f32 %v1200, %v1208
      %v1211 = vpack.c.bf16 %v1210, %v1209
      %v1213 = vsel %vm1117, %v1211, 0
      %1215 = vmatpush.bf16.msra.mxu0 0
      %1216 = vmatpush.bf16.msra.mxu0 0
      %1217 = vmatpush.bf16.msra.mxu0 0
      %1218 = vmatpush.bf16.msra.mxu0 0
      %1219 = vmatpush.bf16.msra.mxu0 0
      %1220 = vmatpush.bf16.msra.mxu0 0
      %1221 = vmatpush.bf16.msra.mxu0 0
      %1222 = vmatpush.bf16.msra.mxu0 %v1086
      %1223 = vmatmul.bf16.gmra.mxu0 %v1213
      %v1224 = vpop.f32.mrf.mxu0
      %v1225 = vadd.f32 0.0, %v1224
      %v1226 = vpop.f32.mrf.mxu0
      %v1227 = vadd.f32 0.0, %v1226
      %1228 = vdwg.mxu0
      %v1229 = vsel %vm1164, %v1225, 0.0
      %v1230 = vsel %vm1164, %v1227, 0.0
      %v1231 = vadd.f32 %v1160, %v1229
      %v1232 = vadd.f32 %v1161, %v1230
      %vm1233 = vcmp.ge.s32.totalorder %v973, 16
      %vm1234 = vcmp.lt.s32.totalorder %v973, 24
      %vm1235 = vmand %vm1233, %vm1234
      %v1236 = vsel %vm1235, %v1010, 0.0
      %v1237 = vsel %vm1235, %v1012, 0.0
      %v1238 = vpack.c.bf16 %v1237, %v1236
      %v1240 = vsel %vm996, %v1238, 0
      %1242 = vmatpush.bf16.xpose.msra.mxu0 0
      %1243 = vmatpush.bf16.xpose.msra.mxu0 0
      %1244 = vmatpush.bf16.xpose.msra.mxu0 0
      %1245 = vmatpush.bf16.xpose.msra.mxu0 0
      %1246 = vmatpush.bf16.xpose.msra.mxu0 0
      %1247 = vmatpush.bf16.xpose.msra.mxu0 0
      %1248 = vmatpush.bf16.xpose.msra.mxu0 0
      %1249 = vmatpush.bf16.xpose.msra.mxu0 %v1097
      %1250 = vmatmul.bf16.gmra.mxu0 %v1240
      %v1251 = vpop.f32.mrf.mxu0
      %v1252 = vadd.f32 0.0, %v1251
      %v1253 = vpop.f32.mrf.mxu0
      %v1254 = vadd.f32 0.0, %v1253
      %1255 = vdwg.mxu0
      %v1256 = vmul.f32 %v1252, 0.35355338
      %v1257 = vmul.f32 %v1254, 0.35355338
      %v1258 = vadd.f32 %v1256, %v970
      %v1259 = vadd.f32 %v1257, %v971
      %v1260 = vsel %vm1117, %v1258, -inf
      %1261 = vmax.xlane.f32.xlu0 %v1260
      %v1262 = vpop.xlane.xlu0 %1261
      %v1263 = vsel %vm1117, %v1259, -inf
      %1264 = vmax.xlane.f32.xlu0 %v1263
      %v1265 = vpop.xlane.xlu0 %1264
      %v1266 = vsub.f32 %v1258, %v1262
      %v1267 = vsub.f32 %v1259, %v1265
      %v1268 = vmul.f32 %v1266, 1.442695
      %v1269 = vpow.pop %v1268
      %v1270 = vmul.f32 %v1267, 1.442695
      %v1271 = vpow.pop %v1270
      %v1272 = vsel %vm1117, %v1269, 0.0
      %1273 = vadd.xlane.f32.xlu0 %v1272
      %v1274 = vpop.xlane.xlu0 %1273
      %v1275 = vsel %vm1117, %v1271, 0.0
      %1276 = vadd.xlane.f32.xlu0 %v1275
      %v1277 = vpop.xlane.xlu0 %1276
      %v1278 = vrcp.pop %v1274
      %v1279 = vrcp.pop %v1277
      %v1280 = vmul.f32 %v1269, %v1278
      %v1281 = vmul.f32 %v1271, %v1279
      %v1282 = vpack.c.bf16 %v1281, %v1280
      %v1284 = vsel %vm1117, %v1282, 0
      %1286 = vmatpush.bf16.msra.mxu0 0
      %1287 = vmatpush.bf16.msra.mxu0 0
      %1288 = vmatpush.bf16.msra.mxu0 0
      %1289 = vmatpush.bf16.msra.mxu0 0
      %1290 = vmatpush.bf16.msra.mxu0 0
      %1291 = vmatpush.bf16.msra.mxu0 0
      %1292 = vmatpush.bf16.msra.mxu0 0
      %1293 = vmatpush.bf16.msra.mxu0 %v1086
      %1294 = vmatmul.bf16.gmra.mxu0 %v1284
      %v1295 = vpop.f32.mrf.mxu0
      %v1296 = vadd.f32 0.0, %v1295
      %v1297 = vpop.f32.mrf.mxu0
      %v1298 = vadd.f32 0.0, %v1297
      %1299 = vdwg.mxu0
      %v1300 = vsel %vm1235, %v1296, 0.0
      %v1301 = vsel %vm1235, %v1298, 0.0
      %v1302 = vadd.f32 %v1231, %v1300
      %v1303 = vadd.f32 %v1232, %v1301
      %vm1304 = vcmp.ge.s32.totalorder %v973, 24
      %vm1305 = vcmp.lt.s32.totalorder %v973, 32
      %vm1306 = vmand %vm1304, %vm1305
      %v1307 = vsel %vm1306, %v1010, 0.0
      %v1308 = vsel %vm1306, %v1012, 0.0
      %v1309 = vpack.c.bf16 %v1308, %v1307
      %v1311 = vsel %vm996, %v1309, 0
      %1313 = vmatpush.bf16.xpose.msra.mxu0 0
      %1314 = vmatpush.bf16.xpose.msra.mxu0 0
      %1315 = vmatpush.bf16.xpose.msra.mxu0 0
      %1316 = vmatpush.bf16.xpose.msra.mxu0 0
      %1317 = vmatpush.bf16.xpose.msra.mxu0 0
      %1318 = vmatpush.bf16.xpose.msra.mxu0 0
      %1319 = vmatpush.bf16.xpose.msra.mxu0 0
      %1320 = vmatpush.bf16.xpose.msra.mxu0 %v1097
      %1321 = vmatmul.bf16.gmra.mxu0 %v1311
      %v1322 = vpop.f32.mrf.mxu0
      %v1323 = vadd.f32 0.0, %v1322
      %v1324 = vpop.f32.mrf.mxu0
      %v1325 = vadd.f32 0.0, %v1324
      %1326 = vdwg.mxu0
      %v1327 = vmul.f32 %v1323, 0.35355338
      %v1328 = vmul.f32 %v1325, 0.35355338
      %v1329 = vadd.f32 %v1327, %v970
      %v1330 = vadd.f32 %v1328, %v971
      %v1331 = vsel %vm1117, %v1329, -inf
      %1332 = vmax.xlane.f32.xlu0 %v1331
      %v1333 = vpop.xlane.xlu0 %1332
      %v1334 = vsel %vm1117, %v1330, -inf
      %1335 = vmax.xlane.f32.xlu0 %v1334
      %v1336 = vpop.xlane.xlu0 %1335
      %v1337 = vsub.f32 %v1329, %v1333
      %v1338 = vsub.f32 %v1330, %v1336
      %v1339 = vmul.f32 %v1337, 1.442695
      %v1340 = vpow.pop %v1339
      %v1341 = vmul.f32 %v1338, 1.442695
      %v1342 = vpow.pop %v1341
      %v1343 = vsel %vm1117, %v1340, 0.0
      %1344 = vadd.xlane.f32.xlu0 %v1343
      %v1345 = vpop.xlane.xlu0 %1344
      %v1346 = vsel %vm1117, %v1342, 0.0
      %1347 = vadd.xlane.f32.xlu0 %v1346
      %v1348 = vpop.xlane.xlu0 %1347
      %v1349 = vrcp.pop %v1345
      %v1350 = vrcp.pop %v1348
      %v1351 = vmul.f32 %v1340, %v1349
      %v1352 = vmul.f32 %v1342, %v1350
      %v1353 = vpack.c.bf16 %v1352, %v1351
      %v1355 = vsel %vm1117, %v1353, 0
      %1357 = vmatpush.bf16.msra.mxu0 0
      %1358 = vmatpush.bf16.msra.mxu0 0
      %1359 = vmatpush.bf16.msra.mxu0 0
      %1360 = vmatpush.bf16.msra.mxu0 0
      %1361 = vmatpush.bf16.msra.mxu0 0
      %1362 = vmatpush.bf16.msra.mxu0 0
      %1363 = vmatpush.bf16.msra.mxu0 0
      %1364 = vmatpush.bf16.msra.mxu0 %v1086
      %1365 = vmatmul.bf16.gmra.mxu0 %v1355
      %v1366 = vpop.f32.mrf.mxu0
      %v1367 = vadd.f32 0.0, %v1366
      %v1368 = vpop.f32.mrf.mxu0
      %v1369 = vadd.f32 0.0, %v1368
      %1370 = vdwg.mxu0
      %v1371 = vsel %vm1306, %v1367, 0.0
      %v1372 = vsel %vm1306, %v1369, 0.0
      %v1373 = vadd.f32 %v1302, %v1371
      %v1374 = vadd.f32 %v1303, %v1372
      %v1375 = vpack.c.bf16 %v1374, %v1373
      %v1376 = vld [vmem:[%s922] sm:$0xf]
      %v1377 = vld [vmem:[%s922 + $0x4] sm:$0xf]
      %v1378 = vld [vmem:[%s922 + $0x8] sm:$0xf]
      %v1379 = vld [vmem:[%s922 + $0xc] sm:$0xf]
      %v1380 = vld [vmem:[%s925] sm:$0x1]
      %v1382 = vperm.slane %v1380, 0
      %v1388 = vunpack.c.l.b16 %v1376
      %v1389 = vunpack.c.l.b16 %v1377
      %v1390 = vunpack.c.l.b16 %v1378
      %v1391 = vunpack.c.l.b16 %v1379
      %v1392 = vpack.c.b16 %v1389, %v1388
      %v1393 = vpack.c.b16 %v1391, %v1390
      %v1397 = vsel %vm996, %v1375, 0
      %1399 = vmatpush.bf16.msra.mxu0 0
      %1400 = vmatpush.bf16.msra.mxu0 0
      %1401 = vmatpush.bf16.msra.mxu0 0
      %1402 = vmatpush.bf16.msra.mxu0 0
      %1403 = vmatpush.bf16.msra.mxu0 0
      %1404 = vmatpush.bf16.msra.mxu0 0
      %1405 = vmatpush.bf16.msra.mxu0 %v1393
      %1406 = vmatpush.bf16.msra.mxu0 %v1392
      %1407 = vmatmul.bf16.gmra.mxu0 %v1397
      %v1408 = vpop.f32.mrf.mxu0
      %v1409 = vadd.f32 %v1382, %v1408
      %v1410 = vpop.f32.mrf.mxu0
      %v1411 = vadd.f32 %v1382, %v1410
      %1412 = vdwg.mxu0
      %v1413 = vld [vmem:[%s956] sm:$0x1]
      %v1415 = vperm.slane %v1413, 0
      %1416 = vset.pattern.permute.xlu0 0
      %1417 = vperm.xlu0 %1416, %v1415
      %v1418 = vpop.permute.xlu0 %1417
      %v1420 = vmul.f32 %v1418, %v1409
      %v1421 = vmul.f32 %v1418, %v1411
      %v1422 = vadd.f32 %v966, %v1420
      %v1423 = vadd.f32 %v967, %v1421
      %v1424 = vld [vmem:[%s928] sm:$0x1]
      %v1425 = vld [vmem:[%s931] sm:$0x1]
      %v1426 = vsel %vm996, %v1422, 0.0
      %1427 = vadd.xlane.f32.xlu0 %v1426
      %v1428 = vpop.xlane.xlu0 %1427
      %v1429 = vsel %vm996, %v1423, 0.0
      %1430 = vadd.xlane.f32.xlu0 %v1429
      %v1431 = vpop.xlane.xlu0 %1430
      %v1432 = vrcp.pop 32.0
      %v1433 = vmul.f32 32.0, %v1432
      %v1434 = vsub.f32 1.0, %v1433
      %v1435 = vmul.f32 %v1432, %v1434
      %v1436 = vadd.f32 %v1432, %v1435
      %vm1437 = vweird.f32 %v1432
      %v1438 = vsel %vm1437, %v1432, %v1436
      %v1439 = vmul.f32 %v1428, %v1438
      %v1440 = vmul.f32 %v1431, %v1438
      %v1441 = vsub.f32 %v1422, %v1439
      %v1442 = vsub.f32 %v1423, %v1440
      %v1443 = vmul.f32 %v1441, %v1441
      %v1444 = vmul.f32 %v1442, %v1442
      %v1445 = vsel %vm996, %v1443, 0.0
      %1446 = vadd.xlane.f32.xlu0 %v1445
      %v1447 = vpop.xlane.xlu0 %1446
      %v1448 = vsel %vm996, %v1444, 0.0
      %1449 = vadd.xlane.f32.xlu0 %v1448
      %v1450 = vpop.xlane.xlu0 %1449
      %v1451 = vmul.f32 %v1447, %v1438
      %v1452 = vmul.f32 %v1450, %v1438
      %v1453 = vadd.f32 %v1451, 1e-05
      %v1454 = vadd.f32 %v1452, 1e-05
      %v1455 = vrsqrt.pop %v1453
      %v1456 = vmul.f32 %v1455, %v1453
      %v1457 = vmul.f32 %v1456, %v1455
      %v1458 = vmul.f32 0.5, %v1457
      %v1459 = vsub.f32 1.5, %v1458
      %v1460 = vmul.f32 %v1455, %v1459
      %vm1461 = vweird.f32 %v1453
      %vm1462 = vweird.f32 %v1455
      %vm1463 = vmor %vm1461, %vm1462
      %v1464 = vsel %vm1463, %v1455, %v1460
      %v1465 = vrsqrt.pop %v1454
      %v1466 = vmul.f32 %v1465, %v1454
      %v1467 = vmul.f32 %v1466, %v1465
      %v1468 = vmul.f32 0.5, %v1467
      %v1469 = vsub.f32 1.5, %v1468
      %v1470 = vmul.f32 %v1465, %v1469
      %vm1471 = vweird.f32 %v1454
      %vm1472 = vweird.f32 %v1465
      %vm1473 = vmor %vm1471, %vm1472
      %v1474 = vsel %vm1473, %v1465, %v1470
      %v1475 = vmul.f32 %v1441, %v1464
      %v1476 = vmul.f32 %v1442, %v1474
      %v1478 = vperm.slane %v1424, 0
      %v1480 = vmul.f32 %v1475, %v1478
      %v1481 = vmul.f32 %v1476, %v1478
      %v1483 = vperm.slane %v1425, 0
      %v1485 = vadd.f32 %v1480, %v1483
      %v1486 = vadd.f32 %v1481, %v1483
      %v1487 = vpack.c.bf16 %v1486, %v1485
      %v1488 = vld [vmem:[%s936] sm:$0xf]
      %v1489 = vld [vmem:[%s936 + $0x4] sm:$0xf]
      %v1490 = vld [vmem:[%s936 + $0x8] sm:$0xf]
      %v1491 = vld [vmem:[%s936 + $0xc] sm:$0xf]
      %v1492 = vld [vmem:[%s939] sm:$0x1]
      %v1494 = vperm.slane %v1492, 0
      %v1500 = vunpack.c.l.b16 %v1488
      %v1501 = vunpack.c.l.b16 %v1489
      %v1502 = vunpack.c.l.b16 %v1490
      %v1503 = vunpack.c.l.b16 %v1491
      %v1504 = vpack.c.b16 %v1501, %v1500
      %v1505 = vpack.c.b16 %v1503, %v1502
      %v1509 = vsel %vm996, %v1487, 0
      %1511 = vmatpush.bf16.msra.mxu0 0
      %1512 = vmatpush.bf16.msra.mxu0 0
      %1513 = vmatpush.bf16.msra.mxu0 0
      %1514 = vmatpush.bf16.msra.mxu0 0
      %1515 = vmatpush.bf16.msra.mxu0 0
      %1516 = vmatpush.bf16.msra.mxu0 0
      %1517 = vmatpush.bf16.msra.mxu0 %v1505
      %1518 = vmatpush.bf16.msra.mxu0 %v1504
      %1519 = vmatmul.bf16.gmra.mxu0 %v1509
      %v1520 = vpop.f32.mrf.mxu0
      %v1521 = vadd.f32 %v1494, %v1520
      %v1522 = vpop.f32.mrf.mxu0
      %v1523 = vadd.f32 %v1494, %v1522
      %1524 = vdwg.mxu0
      %v1525 = vmul.f32 %v1521, %v1521
      %v1526 = vmul.f32 %v1523, %v1523
      %v1527 = vmul.f32 %v1521, %v1525
      %v1528 = vmul.f32 %v1523, %v1526
      %v1529 = vmul.f32 %v1527, 0.044715
      %v1530 = vmul.f32 %v1528, 0.044715
      %v1531 = vadd.f32 %v1521, %v1529
      %v1532 = vadd.f32 %v1523, %v1530
      %v1533 = vmul.f32 %v1531, 0.7978846
      %v1534 = vmul.f32 %v1532, 0.7978846
      %v1535 = vtanh.pop %v1533
      %v1536 = vtanh.pop %v1534
      %v1537 = vadd.f32 %v1535, 1.0
      %v1538 = vadd.f32 %v1536, 1.0
      %v1539 = vmul.f32 %v1537, 0.5
      %v1540 = vmul.f32 %v1538, 0.5
      %v1541 = vmul.f32 %v1521, %v1539
      %v1542 = vmul.f32 %v1523, %v1540
      %v1543 = vpack.c.bf16 %v1542, %v1541
      %v1544 = vld [vmem:[%s944] sm:$0xf]
      %v1545 = vld [vmem:[%s944 + $0x4] sm:$0xf]
      %v1546 = vld [vmem:[%s944 + $0x8] sm:$0xf]
      %v1547 = vld [vmem:[%s944 + $0xc] sm:$0xf]
      %v1548 = vld [vmem:[%s944 + $0x10] sm:$0xf]
      %v1549 = vld [vmem:[%s944 + $0x14] sm:$0xf]
      %v1550 = vld [vmem:[%s944 + $0x18] sm:$0xf]
      %v1551 = vld [vmem:[%s944 + $0x1c] sm:$0xf]
      %v1552 = vld [vmem:[%s947] sm:$0x1]
      %v1554 = vperm.slane %v1552, 0
      %v1564 = vunpack.c.l.b16 %v1544
      %v1565 = vunpack.c.l.b16 %v1545
      %v1566 = vunpack.c.l.b16 %v1546
      %v1567 = vunpack.c.l.b16 %v1547
      %v1568 = vunpack.c.l.b16 %v1548
      %v1569 = vunpack.c.l.b16 %v1549
      %v1570 = vunpack.c.l.b16 %v1550
      %v1571 = vunpack.c.l.b16 %v1551
      %v1572 = vpack.c.b16 %v1565, %v1564
      %v1573 = vpack.c.b16 %v1567, %v1566
      %v1574 = vpack.c.b16 %v1569, %v1568
      %v1575 = vpack.c.b16 %v1571, %v1570
      %vm1580 = vcmask 523264
      %v1582 = vsel %vm1580, %v1543, 0
      %1584 = vmatpush.bf16.msra.mxu0 0
      %1585 = vmatpush.bf16.msra.mxu0 0
      %1586 = vmatpush.bf16.msra.mxu0 0
      %1587 = vmatpush.bf16.msra.mxu0 0
      %1588 = vmatpush.bf16.msra.mxu0 %v1575
      %1589 = vmatpush.bf16.msra.mxu0 %v1574
      %1590 = vmatpush.bf16.msra.mxu0 %v1573
      %1591 = vmatpush.bf16.msra.mxu0 %v1572
      %1592 = vmatmul.bf16.gmra.mxu0 %v1582
      %v1593 = vpop.f32.mrf.mxu0
      %v1594 = vadd.f32 %v1554, %v1593
      %v1595 = vpop.f32.mrf.mxu0
      %v1596 = vadd.f32 %v1554, %v1595
      %1597 = vdwg.mxu0
      %v1598 = vld [vmem:[%s959] sm:$0x1]
      %v1600 = vperm.slane %v1598, 0
      %1601 = vset.pattern.permute.xlu0 0
      %1602 = vperm.xlu0 %1601, %v1600
      %v1603 = vpop.permute.xlu0 %1602
      %v1605 = vmul.f32 %v1603, %v1594
      %v1606 = vmul.f32 %v1603, %v1596
      %v1607 = vadd.f32 %v1485, %v1605
      %v1608 = vadd.f32 %v1486, %v1606
      %v1609 = vld [vmem:[%s950] sm:$0x1]
      %v1610 = vld [vmem:[%s953] sm:$0x1]
      %v1611 = vsel %vm996, %v1607, 0.0
      %1612 = vadd.xlane.f32.xlu0 %v1611
      %v1613 = vpop.xlane.xlu0 %1612
      %v1614 = vsel %vm996, %v1608, 0.0
      %1615 = vadd.xlane.f32.xlu0 %v1614
      %v1616 = vpop.xlane.xlu0 %1615
      %v1617 = vmul.f32 %v1613, %v1438
      %v1618 = vmul.f32 %v1616, %v1438
      %v1619 = vsub.f32 %v1607, %v1617
      %v1620 = vsub.f32 %v1608, %v1618
      %v1621 = vmul.f32 %v1619, %v1619
      %v1622 = vmul.f32 %v1620, %v1620
      %v1623 = vsel %vm996, %v1621, 0.0
      %1624 = vadd.xlane.f32.xlu0 %v1623
      %v1625 = vpop.xlane.xlu0 %1624
      %v1626 = vsel %vm996, %v1622, 0.0
      %1627 = vadd.xlane.f32.xlu0 %v1626
      %v1628 = vpop.xlane.xlu0 %1627
      %v1629 = vmul.f32 %v1625, %v1438
      %v1630 = vmul.f32 %v1628, %v1438
      %v1631 = vadd.f32 %v1629, 1e-05
      %v1632 = vadd.f32 %v1630, 1e-05
      %v1633 = vrsqrt.pop %v1631
      %v1634 = vmul.f32 %v1633, %v1631
      %v1635 = vmul.f32 %v1634, %v1633
      %v1636 = vmul.f32 0.5, %v1635
      %v1637 = vsub.f32 1.5, %v1636
      %v1638 = vmul.f32 %v1633, %v1637
      %vm1639 = vweird.f32 %v1631
      %vm1640 = vweird.f32 %v1633
      %vm1641 = vmor %vm1639, %vm1640
      %v1642 = vsel %vm1641, %v1633, %v1638
      %v1643 = vrsqrt.pop %v1632
      %v1644 = vmul.f32 %v1643, %v1632
      %v1645 = vmul.f32 %v1644, %v1643
      %v1646 = vmul.f32 0.5, %v1645
      %v1647 = vsub.f32 1.5, %v1646
      %v1648 = vmul.f32 %v1643, %v1647
      %vm1649 = vweird.f32 %v1632
      %vm1650 = vweird.f32 %v1643
      %vm1651 = vmor %vm1649, %vm1650
      %v1652 = vsel %vm1651, %v1643, %v1648
      %v1653 = vmul.f32 %v1619, %v1642
      %v1654 = vmul.f32 %v1620, %v1652
      %v1656 = vperm.slane %v1609, 0
      %v1658 = vmul.f32 %v1653, %v1656
      %v1659 = vmul.f32 %v1654, %v1656
      %v1661 = vperm.slane %v1610, 0
      %v1663 = vadd.f32 %v1658, %v1661
      %v1664 = vadd.f32 %v1659, %v1661
      %1665 = vst.msk [vmem:[%s964] sm:$0xff] %vm996, %v1663
      %1666 = vst.msk [vmem:[%s964 + $0x8] sm:$0xff] %vm996, %v1664
      %p1667 = scmp.lt.s32.totalorder %s32, 1
      %s1668 = scalar_select %p1667, %s32, 1
      %s1669 = smul.addr %s1668, 2
      %s1670 = smul.addr %s1669, 8
      %s1671 = scalar_lea.vmem %s21, %s1670
      // Predicated region
      $region105: #{tssr_forward.6} parent=103 // pred_check
        %p1672 = pneg %p591
      $region106: #{tssr_forward.6} parent=103 // pred_check_branch
        %1674 = sbr.rel (%p1672) target = $region108
      $region107: #{tssr_forward.6} parent=103 // pred_region
        _
      $region108: #{tssr_forward.6} parent=103 // pred_fallthru
        _
    $region104: #{tssr_forward.6} parent=5 // pred_fallthru
      _
    %p1675 = scmp.le.s32.totalorder 2, %s27
    // Predicated region
    $region109: #{tssr_forward.6} parent=5 // pred_check
      %p1676 = pneg %p1675
    $region110: #{tssr_forward.6} parent=5 // pred_check_branch
      %1678 = sbr.rel (%p1676) target = $region112
    $region111: #{tssr_forward.6} parent=5 // pred_region
      %s1679 = ssub.s32 %s27, 2
      // Predicated region
      $region113: #{tssr_forward.6} parent=111 // pred_check
        %p1680 = pneg %p597
      $region114: #{tssr_forward.6} parent=111 // pred_check_branch
        %1682 = sbr.rel (%p1680) target = $region116
      $region115: #{tssr_forward.6} parent=111 // pred_region
        %p1683 = scmp.lt.s32.totalorder %s33, 1
        %s1684 = scalar_select %p1683, %s33, 1
        %s1685 = smul.addr %s1684, 2
        %s1686 = smul.addr %s1685, 8
        %s1687 = scalar_lea.vmem %s21, %s1686
      $region116: #{tssr_forward.6} parent=111 // pred_fallthru
        _
    $region112: #{tssr_forward.6} parent=5 // pred_fallthru
      _
  $region6: #{tssr_forward.6} parent=0 // loop_footer
    %s31 = sadd.s32 1, %s27
  $region7: #{tssr_forward.6} parent=0 // loop_footer_branch
    %26 = sbr.rel target = $region3
  $region8: #{tssr_forward.6} parent=0 // loop_exit
    _

</llo_original>
